<compile_context>
chip_gen: v5e
topology: v5e:2x2
jax: 0.10.0
libtpu: 0.0.40
codegen_flags: <defaults>
</compile_context>

<pallas_src>
import functools

import jax
import jax.numpy as jnp
from jax.experimental import pallas as pl
from jax.experimental.pallas import tpu as pltpu


# ----------------------------- shared helpers -------------------------------

def _layernorm(x, g, b, eps=1e-6):
    # Reference uses nn.LayerNorm(eps=1e-06) everywhere.
    mu = jnp.mean(x, axis=-1, keepdims=True)
    xc = x - mu
    var = jnp.mean(xc * xc, axis=-1, keepdims=True)
    return xc * jax.lax.rsqrt(var + eps) * g + b


def _gelu(x):
    # TODO(synk): nn.GELU() default is the exact erf form; the tanh
    # approximation (max dev ~1e-3) is used because it lowers to mul/tanh,
    # which Mosaic supports unconditionally.  Same form used in the reference.
    return jax.nn.gelu(x, approximate=True)


def _softshrink(x, lam):
    return jnp.where(x > lam, x - lam, jnp.where(x < -lam, x + lam, 0.0))


def _dot(a, b):
    return jnp.dot(a, b, preferred_element_type=jnp.float32)


# ----------------------------- Pallas kernels -------------------------------

def afnonet_kernel(p_ref, pw_ref, pos_ref, fdft_ref, idr_ref, idi_ref,
                   ln1g_ref, ln1b_ref, w1p_ref, b1p_ref, w2p_ref, b2p_ref,
                   ln2g_ref, ln2b_ref, mw1_ref, mb1_ref, mw2_ref, mb2_ref,
                   nrmg_ref, nrmb_ref, hw1_ref, hw2_ref,
                   o_ref, *, depth, lam, sfp):
    """Whole network fused: PatchEmbed -> depth x (LN1 + AFNO2D + LN2 + MLP)
    -> final LN -> head.  One grid step per batch element; every weight is
    VMEM-resident, no HBM round-trips between layers."""
    D = pw_ref.shape[-1]

    # PatchEmbed (stride=patch conv expressed as im2col matmul); the conv bias
    # is pre-folded into pos_ref.
    x = _dot(p_ref[0], pw_ref[...]) + pos_ref[...]               # (S, D)

    for d in range(depth):                                       # static unroll
        # --- norm1 + AFNO2D spectral filter --------------------------------
        xn = _layernorm(x, ln1g_ref[d], ln1b_ref[d])
        # rfft2 (ortho): real & imag halves in ONE stacked DFT matmul.
        g = _dot(fdft_ref[...], xn)                              # (2*Sfp, D) = [xr; xi]
        z = jnp.concatenate([g[:sfp], g[sfp:]], axis=1)          # (Sfp, 2D)  = [xr | xi]
        # packed complex block-diagonal MLP:  [xr|xi] @ [[wr, wi], [-wi, wr]]
        h1 = jnp.maximum(_dot(z, w1p_ref[d]) + b1p_ref[d], 0.0)
        o2 = _softshrink(_dot(h1, w2p_ref[d]) + b2p_ref[d], lam)
        # irfft2 (ortho); hard-threshold mask folded into idr/idi columns.
        filt = _dot(idr_ref[...], o2[:, :D]) + _dot(idi_ref[...], o2[:, D:])
        # AFNO2D adds its own input (xn); Block adds the pre-norm residual.
        x = filt + xn + x

        # --- norm2 + MLP -----------------------------------------------------
        h = _layernorm(x, ln2g_ref[d], ln2b_ref[d])
        h = _gelu(_dot(h, mw1_ref[d]) + mb1_ref[d])
        x = x + _dot(h, mw2_ref[d]) + mb2_ref[d]

    # --- final norm + head (Linear -> GELU -> Linear, both bias-free) --------
    xn = _layernorm(x, nrmg_ref[...], nrmb_ref[...])
    hid = _gelu(_dot(xn, hw1_ref[...]))                          # (S, 8192)
    o_ref[0] = _dot(hid, hw2_ref[...])                           # (S, P)


def outproj_softmax_kernel(x_ref, w_ref, b_ref, o_ref):
    # out_proj (rearrange permutation pre-folded into weight rows) + softmax.
    logits = _dot(x_ref[...], w_ref[...]) + b_ref[...]
    m = jnp.max(logits, axis=-1, keepdims=True)
    e = jnp.exp(logits - m)
    o_ref[...] = e / jnp.sum(e, axis=-1, keepdims=True)


# ----------------------------- constant operators ---------------------------

def make_spectral_operators(h, w, kept_modes):
    """Exact ortho rfft2 / irfft2 as small real matrices.

    fdft : (2*Sfp, S)  stacked [real; imag] forward DFT (Sfp = Sf padded to a
                       sublane multiple with zero rows).
    idr/idi : (S, Sfp) inverse DFT responses to unit real/imag per mode, with
                       the reference's hard-threshold mask folded in (so the
                       kernel never needs an explicit mode mask)."""
    wf = w // 2 + 1
    S, Sf = h * w, h * wf
    Sfp = ((Sf + 7) // 8) * 8                       # sublane-aligned padding

    eye_s = jnp.eye(S, dtype=jnp.float32).reshape(S, h, w)
    fwd = jnp.fft.rfft2(eye_s, axes=(1, 2), norm="ortho").reshape(S, Sf)
    fwd = jnp.pad(fwd, ((0, 0), (0, Sfp - Sf)))
    fdft = jnp.concatenate([jnp.real(fwd).T, jnp.imag(fwd).T], axis=0)  # (2*Sfp, S)

    eye_f = jnp.eye(Sf, dtype=jnp.complex64).reshape(Sf, h, wf)
    dr = jnp.fft.irfft2(eye_f, s=(h, w), axes=(1, 2),
                        norm="ortho").reshape(Sf, S).T              # (S, Sf)
    di = jnp.fft.irfft2(1j * eye_f, s=(h, w), axes=(1, 2),
                        norm="ortho").reshape(Sf, S).T
    # Mode-keeping mask exactly as the reference indexes: o[:, -kept:, :kept].
    row_keep = jnp.arange(h) >= (h - kept_modes)
    col_keep = jnp.arange(wf) < kept_modes
    mask = (row_keep[:, None] & col_keep[None, :]).reshape(1, Sf)
    mask = mask.astype(jnp.float32)
    idr = jnp.pad(dr * mask, ((0, 0), (0, Sfp - Sf)))               # (S, Sfp)
    idi = jnp.pad(di * mask, ((0, 0), (0, Sfp - Sf)))
    return dict(fdft=fdft.astype(jnp.float32),
                idr=idr.astype(jnp.float32),
                idi=idi.astype(jnp.float32))


# ----------------------------- parameter init -------------------------------

def _block_diag(wb):
    # (nb, bi, bo) per-block weights -> dense (nb*bi, nb*bo) block-diagonal.
    nb, bi, bo = wb.shape
    eye = jnp.eye(nb, dtype=wb.dtype)
    return (eye[:, None, :, None] * wb[:, :, None, :]).reshape(nb * bi, nb * bo)


def init_params(key, cfg):
    H, W = cfg["img_size"]
    p1, p2 = cfg["patch_size"]
    C, D = cfg["in_chans"], cfg["embed_dim"]
    h, w = H // p1, W // p2
    S, P = h * w, p1 * p2
    nb = cfg["num_blocks"]
    bs = D // nb
    Dm = int(D * cfg["mlp_ratio"])
    depth = cfg["depth"]

    keys = iter(jax.random.split(key, 64))
    nrm = lambda shape, std=0.02: std * jax.random.normal(next(keys), shape,
                                                          jnp.float32)

    raw = {}
    conv_w = nrm((D, C, p1, p2))
    raw["patch_w"] = conv_w.reshape(D, C * P).T                 # (Cp, D)
    raw["patch_b"] = nrm((1, D))
    raw["pos_embed"] = nrm((S, D))

    raw["blocks"] = []
    for _ in range(depth):
        blk = dict(
            ln1_g=jnp.ones((1, D), jnp.float32), ln1_b=jnp.zeros((1, D), jnp.float32),
            w1=nrm((2, nb, bs, bs)), b1=nrm((2, nb, bs)),
            w2=nrm((2, nb, bs, bs)), b2=nrm((2, nb, bs)),
            ln2_g=jnp.ones((1, D), jnp.float32), ln2_b=jnp.zeros((1, D), jnp.float32),
            mlp_w1=nrm((D, Dm)), mlp_b1=jnp.zeros((1, Dm), jnp.float32),
            mlp_w2=nrm((Dm, D)), mlp_b2=jnp.zeros((1, D), jnp.float32))
        raw["blocks"].append(blk)

    raw["norm_g"] = jnp.ones((1, D), jnp.float32)
    raw["norm_b"] = jnp.zeros((1, D), jnp.float32)
    raw["head_w1"] = nrm((D, cfg["head_hidden"]))
    raw["head_w2"] = nrm((cfg["head_hidden"], P))
    raw["outproj_w"] = nrm((H * W, cfg["out_dim"]))
    raw["outproj_b"] = jnp.zeros((1, cfg["out_dim"]), jnp.float32)

    # ---- kernel-shaped params (packed / stacked / permuted, all f32) -------
    params = {}
    params["patch_w"] = raw["patch_w"]
    params["pos_bias"] = raw["pos_embed"] + raw["patch_b"]      # conv bias folded

    def packw(wr, wi):
        return jnp.concatenate(
            [jnp.concatenate([wr, wi], 1),
             jnp.concatenate([-wi, wr], 1)], 0)

    stacks = {k: [] for k in ("ln1_g", "ln1_b", "w1p", "b1p", "w2p", "b2p",
                              "ln2_g", "ln2_b", "mlp_w1", "mlp_b1",
                              "mlp_w2", "mlp_b2")}
    for blk in raw["blocks"]:
        stacks["ln1_g"].append(blk["ln1_g"]); stacks["ln1_b"].append(blk["ln1_b"])
        stacks["ln2_g"].append(blk["ln2_g"]); stacks["ln2_b"].append(blk["ln2_b"])
        stacks["w1p"].append(packw(_block_diag(blk["w1"][0]),
                                   _block_diag(blk["w1"][1])))
        stacks["w2p"].append(packw(_block_diag(blk["w2"][0]),
                                   _block_diag(blk["w2"][1])))
        stacks["b1p"].append(jnp.concatenate([blk["b1"][0].reshape(1, -1),
                                              blk["b1"][1].reshape(1, -1)], 1))
        stacks["b2p"].append(jnp.concatenate([blk["b2"][0].reshape(1, -1),
                                              blk["b2"][1].reshape(1, -1)], 1))
        stacks["mlp_w1"].append(blk["mlp_w1"]); stacks["mlp_b1"].append(blk["mlp_b1"])
        stacks["mlp_w2"].append(blk["mlp_w2"]); stacks["mlp_b2"].append(blk["mlp_b2"])
    for k, v in stacks.items():
        params[k] = jnp.stack(v, axis=0).astype(jnp.float32)

    params["norm_g"], params["norm_b"] = raw["norm_g"], raw["norm_b"]
    params["head_w1"], params["head_w2"] = raw["head_w1"], raw["head_w2"]

    # 'b h w (p1 p2) -> b 1 (h p1) (w p2)' rearrange folded into a row
    # permutation of the out_proj weight (pure layout, computed once here).
    nat2torch = (jnp.arange(H * W).reshape(h, p1, w, p2)
                 .transpose(0, 2, 1, 3).reshape(-1))
    params["outproj_w"] = raw["outproj_w"][nat2torch]
    params["outproj_b"] = raw["outproj_b"]

    kept = int((h // 2 + 1) * cfg["hard_thresholding_fraction"])
    params["consts"] = make_spectral_operators(h, w, kept)
    return params, raw


# ----------------------------- forward pass ---------------------------------

def _whole(arr):
    """Whole-array block, constant index map."""
    zeros = (0,) * arr.ndim
    return pl.BlockSpec(arr.shape, lambda *_: zeros)


def forward(params, x, cfg):
    B, C, H, W = x.shape
    p1, p2 = cfg["patch_size"]
    h, w = H // p1, W // p2
    D = cfg["embed_dim"]
    S, P = h * w, p1 * p2
    Cp = C * P
    depth = cfg["depth"]
    x = x.astype(jnp.float32)

    # im2col for the stride=patch conv (pure layout, XLA).
    patches = (x.reshape(B, C, h, p1, w, p2)
                .transpose(0, 2, 4, 1, 3, 5)
                .reshape(B, S, Cp))

    cst = params["consts"]
    sfp = cst["fdft"].shape[0] // 2
    ins = (patches, params["patch_w"], params["pos_bias"],
           cst["fdft"], cst["idr"], cst["idi"],
           params["ln1_g"], params["ln1_b"], params["w1p"], params["b1p"],
           params["w2p"], params["b2p"], params["ln2_g"], params["ln2_b"],
           params["mlp_w1"], params["mlp_b1"], params["mlp_w2"],
           params["mlp_b2"], params["norm_g"], params["norm_b"],
           params["head_w1"], params["head_w2"])
    in_specs = ([pl.BlockSpec((1, S, Cp), lambda b: (b, 0, 0))]
                + [_whole(a) for a in ins[1:]])

    kern = functools.partial(afnonet_kernel, depth=depth,
                             lam=cfg["sparsity_threshold"], sfp=sfp)
    ph = pl.pallas_call(
        kern,
        out_shape=jax.ShapeDtypeStruct((B, S, P), jnp.float32),
        grid=(B,),
        in_specs=in_specs,
        out_specs=pl.BlockSpec((1, S, P), lambda b: (b, 0, 0)),
        compiler_params=pltpu.CompilerParams(
            dimension_semantics=("parallel",)),
    )(*ins)

    # Contiguous flatten; the torch-order rearrange is already folded into the
    # out_proj weight rows, so no transpose is needed here.
    flat = ph.reshape(B, S * P)
    out = pl.pallas_call(
        outproj_softmax_kernel,
        out_shape=jax.ShapeDtypeStruct((B, cfg["out_dim"]), jnp.float32),
        in_specs=[pl.BlockSpec(memory_space=pltpu.MemorySpace.VMEM)] * 3,
        out_specs=pl.BlockSpec(memory_space=pltpu.MemorySpace.VMEM),
    )(flat, params["outproj_w"], params["outproj_b"])
    return out, flat


# ----------------------------- pure-JAX reference ---------------------------

def reference_forward(raw, x, cfg):
    """Literal jnp mirror of the PyTorch module (jnp.fft + einsum)."""
    B, C, H, W = x.shape
    p1, p2 = cfg["patch_size"]
    h, w = H // p1, W // p2
    D = cfg["embed_dim"]
    nb = cfg["num_blocks"]
    lam = cfg["sparsity_threshold"]
    wf = w // 2 + 1
    x = x.astype(jnp.float32)

    patches = (x.reshape(B, C, h, p1, w, p2)
                .transpose(0, 2, 4, 1, 3, 5)
                .reshape(B, h * w, C * p1 * p2))
    tok = patches @ raw["patch_w"] + raw["patch_b"] + raw["pos_embed"]
    xx = tok.reshape(B, h, w, D)

    kept = int((h // 2 + 1) * cfg["hard_thresholding_fraction"])
    sl = (slice(None), slice(h - kept, None), slice(0, kept))
    for blk in raw["blocks"]:
        residual = xx
        xn = _layernorm(xx, blk["ln1_g"], blk["ln1_b"])
        Xf = jnp.fft.rfft2(xn, axes=(1, 2), norm="ortho").reshape(
            B, h, wf, nb, D // nb)
        w1, b1, w2, b2 = blk["w1"], blk["b1"], blk["w2"], blk["b2"]
        xr, xi = Xf.real[sl], Xf.imag[sl]
        o1r = jax.nn.relu(jnp.einsum('...bi,bio->...bo', xr, w1[0])
                          - jnp.einsum('...bi,bio->...bo', xi, w1[1]) + b1[0])
        o1i = jax.nn.relu(jnp.einsum('...bi,bio->...bo', xi, w1[0])
                          + jnp.einsum('...bi,bio->...bo', xr, w1[1]) + b1[1])
        t2r = (jnp.einsum('...bi,bio->...bo', o1r, w2[0])
               - jnp.einsum('...bi,bio->...bo', o1i, w2[1]) + b2[0])
        t2i = (jnp.einsum('...bi,bio->...bo', o1i, w2[0])
               + jnp.einsum('...bi,bio->...bo', o1r, w2[1]) + b2[1])
        o2r = _softshrink(jnp.zeros(Xf.shape, jnp.float32).at[sl].set(t2r), lam)
        o2i = _softshrink(jnp.zeros(Xf.shape, jnp.float32).at[sl].set(t2i), lam)
        filt = jnp.fft.irfft2((o2r + 1j * o2i).reshape(B, h, wf, D),
                              s=(h, w), axes=(1, 2), norm="ortho")
        xx = filt + xn + residual
        hm = _layernorm(xx, blk["ln2_g"], blk["ln2_b"])
        hm = _gelu(hm @ blk["mlp_w1"] + blk["mlp_b1"])
        xx = xx + hm @ blk["mlp_w2"] + blk["mlp_b2"]

    xx = _layernorm(xx, raw["norm_g"], raw["norm_b"])
    head = _gelu(xx @ raw["head_w1"]) @ raw["head_w2"]            # (B, h, w, P)
    head_nat = head.reshape(B, h * w * p1 * p2)                   # kernel order
    flat = (head.reshape(B, h, w, p1, p2)
                .transpose(0, 1, 3, 2, 4).reshape(B, H * W))      # torch order
    logits = flat @ raw["outproj_w"] + raw["outproj_b"]
    return head_nat, jax.nn.softmax(logits, axis=-1)


# ----------------------------- main ------------------------------------------

if __name__ == "__main__":
    cfg = dict(
        img_size=(16, 16),
        patch_size=(4, 4),
        in_chans=3,
        embed_dim=32,
        depth=2,
        mlp_ratio=4.0,
        num_blocks=4,
        sparsity_threshold=0.01,
        hard_thresholding_fraction=1.0,
        out_dim=64,
        head_hidden=8192,   # hidden_dim=8192 is hardcoded in the module head
    )

    key = jax.random.PRNGKey(0)
    pkey, xkey = jax.random.split(key)
    params, raw = init_params(pkey, cfg)
    x = jax.random.normal(xkey, (2, cfg["in_chans"], *cfg["img_size"]),
                          jnp.float32)

    fwd = jax.jit(lambda p, xx: forward(p, xx, cfg))
    out, head_flat = jax.block_until_ready(fwd(params, x))

    assert out.shape == (2, cfg["out_dim"])
    assert bool(jnp.all(jnp.isfinite(out)))
    assert bool(jnp.allclose(jnp.sum(out, axis=1), 1.0, atol=1e-5))

    # Pure-JAX reference check (fft/einsum path, high-precision matmuls).
    with jax.default_matmul_precision("highest"):
        ref_head, ref_out = reference_forward(raw, x, cfg)
    head_err = float(jnp.max(jnp.abs(head_flat - ref_head)))
    out_err = float(jnp.max(jnp.abs(out - ref_out)))
    assert head_err < 5e-3, f"head mismatch vs reference: {head_err}"
    assert out_err < 2e-4, f"output mismatch vs reference: {out_err}"

    print("KERNEL_OK")
</pallas_src>

<mosaic_0001>
module attributes {stable_mosaic.version = 11 : i64} {
  func.func @afnonet_kernel(%arg0: i32, %arg1: memref<1x16x48xf32, #tpu.memory_space<vmem>>, %arg2: memref<48x32xf32, #tpu.memory_space<vmem>>, %arg3: memref<16x32xf32, #tpu.memory_space<vmem>>, %arg4: memref<32x16xf32, #tpu.memory_space<vmem>>, %arg5: memref<16x16xf32, #tpu.memory_space<vmem>>, %arg6: memref<16x16xf32, #tpu.memory_space<vmem>>, %arg7: memref<2x1x32xf32, #tpu.memory_space<vmem>>, %arg8: memref<2x1x32xf32, #tpu.memory_space<vmem>>, %arg9: memref<2x64x64xf32, #tpu.memory_space<vmem>>, %arg10: memref<2x1x64xf32, #tpu.memory_space<vmem>>, %arg11: memref<2x64x64xf32, #tpu.memory_space<vmem>>, %arg12: memref<2x1x64xf32, #tpu.memory_space<vmem>>, %arg13: memref<2x1x32xf32, #tpu.memory_space<vmem>>, %arg14: memref<2x1x32xf32, #tpu.memory_space<vmem>>, %arg15: memref<2x32x128xf32, #tpu.memory_space<vmem>>, %arg16: memref<2x1x128xf32, #tpu.memory_space<vmem>>, %arg17: memref<2x128x32xf32, #tpu.memory_space<vmem>>, %arg18: memref<2x1x32xf32, #tpu.memory_space<vmem>>, %arg19: memref<1x32xf32, #tpu.memory_space<vmem>>, %arg20: memref<1x32xf32, #tpu.memory_space<vmem>>, %arg21: memref<32x8192xf32, #tpu.memory_space<vmem>>, %arg22: memref<8192x16xf32, #tpu.memory_space<vmem>>, %arg23: memref<1x16x16xf32, #tpu.memory_space<vmem>>) attributes {dimension_semantics = [#tpu.dimension_semantics<parallel>], iteration_bounds = array<i64: 2>, scalar_prefetch = 0 : i64, scratch_operands = 0 : i64, tpu.core_type = #tpu.core_type<tc>, window_params = [{transform_indices = @transform_0, window_bounds = array<i64: 1, 16, 48>}, {pipeline_mode = #tpu.pipeline_mode<synchronous>, transform_indices = @transform_1, window_bounds = array<i64: 48, 32>}, {pipeline_mode = #tpu.pipeline_mode<synchronous>, transform_indices = @transform_2, window_bounds = array<i64: 16, 32>}, {pipeline_mode = #tpu.pipeline_mode<synchronous>, transform_indices = @transform_3, window_bounds = array<i64: 32, 16>}, {pipeline_mode = #tpu.pipeline_mode<synchronous>, transform_indices = @transform_4, window_bounds = array<i64: 16, 16>}, {pipeline_mode = #tpu.pipeline_mode<synchronous>, transform_indices = @transform_5, window_bounds = array<i64: 16, 16>}, {pipeline_mode = #tpu.pipeline_mode<synchronous>, transform_indices = @transform_6, window_bounds = array<i64: 2, 1, 32>}, {pipeline_mode = #tpu.pipeline_mode<synchronous>, transform_indices = @transform_7, window_bounds = array<i64: 2, 1, 32>}, {pipeline_mode = #tpu.pipeline_mode<synchronous>, transform_indices = @transform_8, window_bounds = array<i64: 2, 64, 64>}, {pipeline_mode = #tpu.pipeline_mode<synchronous>, transform_indices = @transform_9, window_bounds = array<i64: 2, 1, 64>}, {pipeline_mode = #tpu.pipeline_mode<synchronous>, transform_indices = @transform_10, window_bounds = array<i64: 2, 64, 64>}, {pipeline_mode = #tpu.pipeline_mode<synchronous>, transform_indices = @transform_11, window_bounds = array<i64: 2, 1, 64>}, {pipeline_mode = #tpu.pipeline_mode<synchronous>, transform_indices = @transform_12, window_bounds = array<i64: 2, 1, 32>}, {pipeline_mode = #tpu.pipeline_mode<synchronous>, transform_indices = @transform_13, window_bounds = array<i64: 2, 1, 32>}, {pipeline_mode = #tpu.pipeline_mode<synchronous>, transform_indices = @transform_14, window_bounds = array<i64: 2, 32, 128>}, {pipeline_mode = #tpu.pipeline_mode<synchronous>, transform_indices = @transform_15, window_bounds = array<i64: 2, 1, 128>}, {pipeline_mode = #tpu.pipeline_mode<synchronous>, transform_indices = @transform_16, window_bounds = array<i64: 2, 128, 32>}, {pipeline_mode = #tpu.pipeline_mode<synchronous>, transform_indices = @transform_17, window_bounds = array<i64: 2, 1, 32>}, {pipeline_mode = #tpu.pipeline_mode<synchronous>, transform_indices = @transform_18, window_bounds = array<i64: 1, 32>}, {pipeline_mode = #tpu.pipeline_mode<synchronous>, transform_indices = @transform_19, window_bounds = array<i64: 1, 32>}, {pipeline_mode = #tpu.pipeline_mode<synchronous>, transform_indices = @transform_20, window_bounds = array<i64: 32, 8192>}, {pipeline_mode = #tpu.pipeline_mode<synchronous>, transform_indices = @transform_21, window_bounds = array<i64: 8192, 16>}, {transform_indices = @transform_22, window_bounds = array<i64: 1, 16, 16>}]} {
    %c0 = arith.constant 0 : index
    %c0_0 = arith.constant 0 : index
    %c0_1 = arith.constant 0 : index
    %0 = vector.load %arg1[%c0, %c0_0, %c0_1] : memref<1x16x48xf32, #tpu.memory_space<vmem>>, vector<1x16x48xf32>
    %1 = vector.shape_cast %0 : vector<1x16x48xf32> to vector<16x48xf32>
    %c0_2 = arith.constant 0 : index
    %c0_3 = arith.constant 0 : index
    %2 = vector.load %arg2[%c0_2, %c0_3] : memref<48x32xf32, #tpu.memory_space<vmem>>, vector<48x32xf32>
    %cst = arith.constant dense<0.000000e+00> : vector<16x32xf32>
    %3 = tpu.matmul %1, %2, %cst {dimension_numbers = #tpu.dot_dimension_numbers<[1], [0], [0], [1], [0, 0, 1, 1], [], []>} : vector<16x48xf32>, vector<48x32xf32>, vector<16x32xf32> -> vector<16x32xf32>
    %c0_4 = arith.constant 0 : index
    %c0_5 = arith.constant 0 : index
    %4 = vector.load %arg3[%c0_4, %c0_5] : memref<16x32xf32, #tpu.memory_space<vmem>>, vector<16x32xf32>
    %5 = arith.addf %3, %4 : vector<16x32xf32>
    %c0_6 = arith.constant 0 : index
    %c0_7 = arith.constant 0 : index
    %c0_8 = arith.constant 0 : index
    %6 = vector.load %arg7[%c0_6, %c0_7, %c0_8] : memref<2x1x32xf32, #tpu.memory_space<vmem>>, vector<1x1x32xf32>
    %7 = vector.shape_cast %6 : vector<1x1x32xf32> to vector<1x32xf32>
    %c0_9 = arith.constant 0 : index
    %c0_10 = arith.constant 0 : index
    %c0_11 = arith.constant 0 : index
    %8 = vector.load %arg8[%c0_9, %c0_10, %c0_11] : memref<2x1x32xf32, #tpu.memory_space<vmem>>, vector<1x1x32xf32>
    %9 = vector.shape_cast %8 : vector<1x1x32xf32> to vector<1x32xf32>
    %cst_12 = arith.constant dense<0.000000e+00> : vector<16xf32>
    %10 = vector.multi_reduction <add>, %5, %cst_12 [1] : vector<16x32xf32> to vector<16xf32>
    %11 = vector.shape_cast %10 : vector<16xf32> to vector<16x1xf32>
    %cst_13 = arith.constant 3.200000e+01 : f32
    %12 = vector.broadcast %cst_13 : f32 to vector<16x1xf32>
    %13 = arith.divf %11, %12 : vector<16x1xf32>
    %14 = vector.broadcast %13 : vector<16x1xf32> to vector<16x32xf32>
    %15 = arith.subf %5, %14 : vector<16x32xf32>
    %16 = arith.mulf %15, %15 : vector<16x32xf32>
    %cst_14 = arith.constant dense<0.000000e+00> : vector<16xf32>
    %17 = vector.multi_reduction <add>, %16, %cst_14 [1] : vector<16x32xf32> to vector<16xf32>
    %18 = vector.shape_cast %17 : vector<16xf32> to vector<16x1xf32>
    %cst_15 = arith.constant 3.200000e+01 : f32
    %19 = vector.broadcast %cst_15 : f32 to vector<16x1xf32>
    %20 = arith.divf %18, %19 : vector<16x1xf32>
    %cst_16 = arith.constant 9.99999997E-7 : f32
    %21 = vector.broadcast %cst_16 : f32 to vector<16x1xf32>
    %22 = arith.addf %20, %21 : vector<16x1xf32>
    %23 = math.rsqrt %22 : vector<16x1xf32>
    %24 = vector.broadcast %23 : vector<16x1xf32> to vector<16x32xf32>
    %25 = arith.mulf %15, %24 : vector<16x32xf32>
    %26 = vector.broadcast %7 : vector<1x32xf32> to vector<16x32xf32>
    %27 = arith.mulf %25, %26 : vector<16x32xf32>
    %28 = vector.broadcast %9 : vector<1x32xf32> to vector<16x32xf32>
    %29 = arith.addf %27, %28 : vector<16x32xf32>
    %c0_17 = arith.constant 0 : index
    %c0_18 = arith.constant 0 : index
    %30 = vector.load %arg4[%c0_17, %c0_18] : memref<32x16xf32, #tpu.memory_space<vmem>>, vector<32x16xf32>
    %cst_19 = arith.constant dense<0.000000e+00> : vector<32x32xf32>
    %31 = tpu.matmul %30, %29, %cst_19 {dimension_numbers = #tpu.dot_dimension_numbers<[1], [0], [0], [1], [0, 0, 1, 1], [], []>} : vector<32x16xf32>, vector<16x32xf32>, vector<32x32xf32> -> vector<32x32xf32>
    %32 = vector.extract_strided_slice %31 {offsets = [0, 0], sizes = [16, 32], strides = [1, 1]} : vector<32x32xf32> to vector<16x32xf32>
    %33 = vector.extract_strided_slice %31 {offsets = [16, 0], sizes = [16, 32], strides = [1, 1]} : vector<32x32xf32> to vector<16x32xf32>
    %34 = tpu.concatenate %32, %33 in 1 : vector<16x32xf32>, vector<16x32xf32> -> vector<16x64xf32>
    %c0_20 = arith.constant 0 : index
    %c0_21 = arith.constant 0 : index
    %c0_22 = arith.constant 0 : index
    %35 = vector.load %arg9[%c0_20, %c0_21, %c0_22] : memref<2x64x64xf32, #tpu.memory_space<vmem>>, vector<1x64x64xf32>
    %36 = vector.shape_cast %35 : vector<1x64x64xf32> to vector<64x64xf32>
    %cst_23 = arith.constant dense<0.000000e+00> : vector<16x64xf32>
    %37 = tpu.matmul %34, %36, %cst_23 {dimension_numbers = #tpu.dot_dimension_numbers<[1], [0], [0], [1], [0, 0, 1, 1], [], []>} : vector<16x64xf32>, vector<64x64xf32>, vector<16x64xf32> -> vector<16x64xf32>
    %c0_24 = arith.constant 0 : index
    %c0_25 = arith.constant 0 : index
    %c0_26 = arith.constant 0 : index
    %38 = vector.load %arg10[%c0_24, %c0_25, %c0_26] : memref<2x1x64xf32, #tpu.memory_space<vmem>>, vector<1x1x64xf32>
    %39 = vector.shape_cast %38 : vector<1x1x64xf32> to vector<1x64xf32>
    %40 = vector.broadcast %39 : vector<1x64xf32> to vector<16x64xf32>
    %41 = arith.addf %37, %40 : vector<16x64xf32>
    %cst_27 = arith.constant 0.000000e+00 : f32
    %42 = vector.broadcast %cst_27 : f32 to vector<16x64xf32>
    %43 = arith.maximumf %41, %42 : vector<16x64xf32>
    %c0_28 = arith.constant 0 : index
    %c0_29 = arith.constant 0 : index
    %c0_30 = arith.constant 0 : index
    %44 = vector.load %arg11[%c0_28, %c0_29, %c0_30] : memref<2x64x64xf32, #tpu.memory_space<vmem>>, vector<1x64x64xf32>
    %45 = vector.shape_cast %44 : vector<1x64x64xf32> to vector<64x64xf32>
    %cst_31 = arith.constant dense<0.000000e+00> : vector<16x64xf32>
    %46 = tpu.matmul %43, %45, %cst_31 {dimension_numbers = #tpu.dot_dimension_numbers<[1], [0], [0], [1], [0, 0, 1, 1], [], []>} : vector<16x64xf32>, vector<64x64xf32>, vector<16x64xf32> -> vector<16x64xf32>
    %c0_32 = arith.constant 0 : index
    %c0_33 = arith.constant 0 : index
    %c0_34 = arith.constant 0 : index
    %47 = vector.load %arg12[%c0_32, %c0_33, %c0_34] : memref<2x1x64xf32, #tpu.memory_space<vmem>>, vector<1x1x64xf32>
    %48 = vector.shape_cast %47 : vector<1x1x64xf32> to vector<1x64xf32>
    %49 = vector.broadcast %48 : vector<1x64xf32> to vector<16x64xf32>
    %50 = arith.addf %46, %49 : vector<16x64xf32>
    %cst_35 = arith.constant 0.00999999977 : f32
    %51 = vector.broadcast %cst_35 : f32 to vector<16x64xf32>
    %52 = arith.cmpf ogt, %50, %51 : vector<16x64xf32>
    %cst_36 = arith.constant 0.00999999977 : f32
    %53 = vector.broadcast %cst_36 : f32 to vector<16x64xf32>
    %54 = arith.subf %50, %53 : vector<16x64xf32>
    %cst_37 = arith.constant -0.00999999977 : f32
    %55 = vector.broadcast %cst_37 : f32 to vector<16x64xf32>
    %56 = arith.cmpf olt, %50, %55 : vector<16x64xf32>
    %cst_38 = arith.constant 0.00999999977 : f32
    %57 = vector.broadcast %cst_38 : f32 to vector<16x64xf32>
    %58 = arith.addf %50, %57 : vector<16x64xf32>
    %cst_39 = arith.constant 0.000000e+00 : f32
    %59 = vector.broadcast %cst_39 : f32 to vector<16x64xf32>
    %60 = arith.select %56, %58, %59 : vector<16x64xi1>, vector<16x64xf32>
    %61 = arith.select %52, %54, %60 : vector<16x64xi1>, vector<16x64xf32>
    %c0_40 = arith.constant 0 : index
    %c0_41 = arith.constant 0 : index
    %62 = vector.load %arg5[%c0_40, %c0_41] : memref<16x16xf32, #tpu.memory_space<vmem>>, vector<16x16xf32>
    %63 = vector.extract_strided_slice %61 {offsets = [0, 0], sizes = [16, 32], strides = [1, 1]} : vector<16x64xf32> to vector<16x32xf32>
    %cst_42 = arith.constant dense<0.000000e+00> : vector<16x32xf32>
    %64 = tpu.matmul %62, %63, %cst_42 {dimension_numbers = #tpu.dot_dimension_numbers<[1], [0], [0], [1], [0, 0, 1, 1], [], []>} : vector<16x16xf32>, vector<16x32xf32>, vector<16x32xf32> -> vector<16x32xf32>
    %c0_43 = arith.constant 0 : index
    %c0_44 = arith.constant 0 : index
    %65 = vector.load %arg6[%c0_43, %c0_44] : memref<16x16xf32, #tpu.memory_space<vmem>>, vector<16x16xf32>
    %66 = vector.extract_strided_slice %61 {offsets = [0, 32], sizes = [16, 32], strides = [1, 1]} : vector<16x64xf32> to vector<16x32xf32>
    %cst_45 = arith.constant dense<0.000000e+00> : vector<16x32xf32>
    %67 = tpu.matmul %65, %66, %cst_45 {dimension_numbers = #tpu.dot_dimension_numbers<[1], [0], [0], [1], [0, 0, 1, 1], [], []>} : vector<16x16xf32>, vector<16x32xf32>, vector<16x32xf32> -> vector<16x32xf32>
    %68 = arith.addf %64, %67 : vector<16x32xf32>
    %69 = arith.addf %68, %29 : vector<16x32xf32>
    %70 = arith.addf %69, %5 : vector<16x32xf32>
    %c0_46 = arith.constant 0 : index
    %c0_47 = arith.constant 0 : index
    %c0_48 = arith.constant 0 : index
    %71 = vector.load %arg13[%c0_46, %c0_47, %c0_48] : memref<2x1x32xf32, #tpu.memory_space<vmem>>, vector<1x1x32xf32>
    %72 = vector.shape_cast %71 : vector<1x1x32xf32> to vector<1x32xf32>
    %c0_49 = arith.constant 0 : index
    %c0_50 = arith.constant 0 : index
    %c0_51 = arith.constant 0 : index
    %73 = vector.load %arg14[%c0_49, %c0_50, %c0_51] : memref<2x1x32xf32, #tpu.memory_space<vmem>>, vector<1x1x32xf32>
    %74 = vector.shape_cast %73 : vector<1x1x32xf32> to vector<1x32xf32>
    %cst_52 = arith.constant dense<0.000000e+00> : vector<16xf32>
    %75 = vector.multi_reduction <add>, %70, %cst_52 [1] : vector<16x32xf32> to vector<16xf32>
    %76 = vector.shape_cast %75 : vector<16xf32> to vector<16x1xf32>
    %cst_53 = arith.constant 3.200000e+01 : f32
    %77 = vector.broadcast %cst_53 : f32 to vector<16x1xf32>
    %78 = arith.divf %76, %77 : vector<16x1xf32>
    %79 = vector.broadcast %78 : vector<16x1xf32> to vector<16x32xf32>
    %80 = arith.subf %70, %79 : vector<16x32xf32>
    %81 = arith.mulf %80, %80 : vector<16x32xf32>
    %cst_54 = arith.constant dense<0.000000e+00> : vector<16xf32>
    %82 = vector.multi_reduction <add>, %81, %cst_54 [1] : vector<16x32xf32> to vector<16xf32>
    %83 = vector.shape_cast %82 : vector<16xf32> to vector<16x1xf32>
    %cst_55 = arith.constant 3.200000e+01 : f32
    %84 = vector.broadcast %cst_55 : f32 to vector<16x1xf32>
    %85 = arith.divf %83, %84 : vector<16x1xf32>
    %cst_56 = arith.constant 9.99999997E-7 : f32
    %86 = vector.broadcast %cst_56 : f32 to vector<16x1xf32>
    %87 = arith.addf %85, %86 : vector<16x1xf32>
    %88 = math.rsqrt %87 : vector<16x1xf32>
    %89 = vector.broadcast %88 : vector<16x1xf32> to vector<16x32xf32>
    %90 = arith.mulf %80, %89 : vector<16x32xf32>
    %91 = vector.broadcast %72 : vector<1x32xf32> to vector<16x32xf32>
    %92 = arith.mulf %90, %91 : vector<16x32xf32>
    %93 = vector.broadcast %74 : vector<1x32xf32> to vector<16x32xf32>
    %94 = arith.addf %92, %93 : vector<16x32xf32>
    %c0_57 = arith.constant 0 : index
    %c0_58 = arith.constant 0 : index
    %c0_59 = arith.constant 0 : index
    %95 = vector.load %arg15[%c0_57, %c0_58, %c0_59] : memref<2x32x128xf32, #tpu.memory_space<vmem>>, vector<1x32x128xf32>
    %96 = vector.shape_cast %95 : vector<1x32x128xf32> to vector<32x128xf32>
    %cst_60 = arith.constant dense<0.000000e+00> : vector<16x128xf32>
    %97 = tpu.matmul %94, %96, %cst_60 {dimension_numbers = #tpu.dot_dimension_numbers<[1], [0], [0], [1], [0, 0, 1, 1], [], []>} : vector<16x32xf32>, vector<32x128xf32>, vector<16x128xf32> -> vector<16x128xf32>
    %c0_61 = arith.constant 0 : index
    %c0_62 = arith.constant 0 : index
    %c0_63 = arith.constant 0 : index
    %98 = vector.load %arg16[%c0_61, %c0_62, %c0_63] : memref<2x1x128xf32, #tpu.memory_space<vmem>>, vector<1x1x128xf32>
    %99 = vector.shape_cast %98 : vector<1x1x128xf32> to vector<1x128xf32>
    %100 = vector.broadcast %99 : vector<1x128xf32> to vector<16x128xf32>
    %101 = arith.addf %97, %100 : vector<16x128xf32>
    %102 = arith.mulf %101, %101 : vector<16x128xf32>
    %103 = arith.mulf %101, %102 : vector<16x128xf32>
    %cst_64 = arith.constant 4.471500e-02 : f32
    %104 = vector.broadcast %cst_64 : f32 to vector<16x128xf32>
    %105 = arith.mulf %104, %103 : vector<16x128xf32>
    %106 = arith.addf %101, %105 : vector<16x128xf32>
    %cst_65 = arith.constant 0.797884583 : f32
    %107 = vector.broadcast %cst_65 : f32 to vector<16x128xf32>
    %108 = arith.mulf %107, %106 : vector<16x128xf32>
    %109 = math.tanh %108 : vector<16x128xf32>
    %cst_66 = arith.constant 1.000000e+00 : f32
    %110 = vector.broadcast %cst_66 : f32 to vector<16x128xf32>
    %111 = arith.addf %110, %109 : vector<16x128xf32>
    %cst_67 = arith.constant 5.000000e-01 : f32
    %112 = vector.broadcast %cst_67 : f32 to vector<16x128xf32>
    %113 = arith.mulf %112, %111 : vector<16x128xf32>
    %114 = arith.mulf %101, %113 : vector<16x128xf32>
    %c0_68 = arith.constant 0 : index
    %c0_69 = arith.constant 0 : index
    %c0_70 = arith.constant 0 : index
    %115 = vector.load %arg17[%c0_68, %c0_69, %c0_70] : memref<2x128x32xf32, #tpu.memory_space<vmem>>, vector<1x128x32xf32>
    %116 = vector.shape_cast %115 : vector<1x128x32xf32> to vector<128x32xf32>
    %cst_71 = arith.constant dense<0.000000e+00> : vector<16x32xf32>
    %117 = tpu.matmul %114, %116, %cst_71 {dimension_numbers = #tpu.dot_dimension_numbers<[1], [0], [0], [1], [0, 0, 1, 1], [], []>} : vector<16x128xf32>, vector<128x32xf32>, vector<16x32xf32> -> vector<16x32xf32>
    %118 = arith.addf %70, %117 : vector<16x32xf32>
    %c0_72 = arith.constant 0 : index
    %c0_73 = arith.constant 0 : index
    %c0_74 = arith.constant 0 : index
    %119 = vector.load %arg18[%c0_72, %c0_73, %c0_74] : memref<2x1x32xf32, #tpu.memory_space<vmem>>, vector<1x1x32xf32>
    %120 = vector.shape_cast %119 : vector<1x1x32xf32> to vector<1x32xf32>
    %121 = vector.broadcast %120 : vector<1x32xf32> to vector<16x32xf32>
    %122 = arith.addf %118, %121 : vector<16x32xf32>
    %c1 = arith.constant 1 : index
    %c0_75 = arith.constant 0 : index
    %c0_76 = arith.constant 0 : index
    %123 = vector.load %arg7[%c1, %c0_75, %c0_76] : memref<2x1x32xf32, #tpu.memory_space<vmem>>, vector<1x1x32xf32>
    %124 = vector.shape_cast %123 : vector<1x1x32xf32> to vector<1x32xf32>
    %c1_77 = arith.constant 1 : index
    %c0_78 = arith.constant 0 : index
    %c0_79 = arith.constant 0 : index
    %125 = vector.load %arg8[%c1_77, %c0_78, %c0_79] : memref<2x1x32xf32, #tpu.memory_space<vmem>>, vector<1x1x32xf32>
    %126 = vector.shape_cast %125 : vector<1x1x32xf32> to vector<1x32xf32>
    %cst_80 = arith.constant dense<0.000000e+00> : vector<16xf32>
    %127 = vector.multi_reduction <add>, %122, %cst_80 [1] : vector<16x32xf32> to vector<16xf32>
    %128 = vector.shape_cast %127 : vector<16xf32> to vector<16x1xf32>
    %cst_81 = arith.constant 3.200000e+01 : f32
    %129 = vector.broadcast %cst_81 : f32 to vector<16x1xf32>
    %130 = arith.divf %128, %129 : vector<16x1xf32>
    %131 = vector.broadcast %130 : vector<16x1xf32> to vector<16x32xf32>
    %132 = arith.subf %122, %131 : vector<16x32xf32>
    %133 = arith.mulf %132, %132 : vector<16x32xf32>
    %cst_82 = arith.constant dense<0.000000e+00> : vector<16xf32>
    %134 = vector.multi_reduction <add>, %133, %cst_82 [1] : vector<16x32xf32> to vector<16xf32>
    %135 = vector.shape_cast %134 : vector<16xf32> to vector<16x1xf32>
    %cst_83 = arith.constant 3.200000e+01 : f32
    %136 = vector.broadcast %cst_83 : f32 to vector<16x1xf32>
    %137 = arith.divf %135, %136 : vector<16x1xf32>
    %cst_84 = arith.constant 9.99999997E-7 : f32
    %138 = vector.broadcast %cst_84 : f32 to vector<16x1xf32>
    %139 = arith.addf %137, %138 : vector<16x1xf32>
    %140 = math.rsqrt %139 : vector<16x1xf32>
    %141 = vector.broadcast %140 : vector<16x1xf32> to vector<16x32xf32>
    %142 = arith.mulf %132, %141 : vector<16x32xf32>
    %143 = vector.broadcast %124 : vector<1x32xf32> to vector<16x32xf32>
    %144 = arith.mulf %142, %143 : vector<16x32xf32>
    %145 = vector.broadcast %126 : vector<1x32xf32> to vector<16x32xf32>
    %146 = arith.addf %144, %145 : vector<16x32xf32>
    %c0_85 = arith.constant 0 : index
    %c0_86 = arith.constant 0 : index
    %147 = vector.load %arg4[%c0_85, %c0_86] : memref<32x16xf32, #tpu.memory_space<vmem>>, vector<32x16xf32>
    %cst_87 = arith.constant dense<0.000000e+00> : vector<32x32xf32>
    %148 = tpu.matmul %147, %146, %cst_87 {dimension_numbers = #tpu.dot_dimension_numbers<[1], [0], [0], [1], [0, 0, 1, 1], [], []>} : vector<32x16xf32>, vector<16x32xf32>, vector<32x32xf32> -> vector<32x32xf32>
    %149 = vector.extract_strided_slice %148 {offsets = [0, 0], sizes = [16, 32], strides = [1, 1]} : vector<32x32xf32> to vector<16x32xf32>
    %150 = vector.extract_strided_slice %148 {offsets = [16, 0], sizes = [16, 32], strides = [1, 1]} : vector<32x32xf32> to vector<16x32xf32>
    %151 = tpu.concatenate %149, %150 in 1 : vector<16x32xf32>, vector<16x32xf32> -> vector<16x64xf32>
    %c1_88 = arith.constant 1 : index
    %c0_89 = arith.constant 0 : index
    %c0_90 = arith.constant 0 : index
    %152 = vector.load %arg9[%c1_88, %c0_89, %c0_90] : memref<2x64x64xf32, #tpu.memory_space<vmem>>, vector<1x64x64xf32>
    %153 = vector.shape_cast %152 : vector<1x64x64xf32> to vector<64x64xf32>
    %cst_91 = arith.constant dense<0.000000e+00> : vector<16x64xf32>
    %154 = tpu.matmul %151, %153, %cst_91 {dimension_numbers = #tpu.dot_dimension_numbers<[1], [0], [0], [1], [0, 0, 1, 1], [], []>} : vector<16x64xf32>, vector<64x64xf32>, vector<16x64xf32> -> vector<16x64xf32>
    %c1_92 = arith.constant 1 : index
    %c0_93 = arith.constant 0 : index
    %c0_94 = arith.constant 0 : index
    %155 = vector.load %arg10[%c1_92, %c0_93, %c0_94] : memref<2x1x64xf32, #tpu.memory_space<vmem>>, vector<1x1x64xf32>
    %156 = vector.shape_cast %155 : vector<1x1x64xf32> to vector<1x64xf32>
    %157 = vector.broadcast %156 : vector<1x64xf32> to vector<16x64xf32>
    %158 = arith.addf %154, %157 : vector<16x64xf32>
    %cst_95 = arith.constant 0.000000e+00 : f32
    %159 = vector.broadcast %cst_95 : f32 to vector<16x64xf32>
    %160 = arith.maximumf %158, %159 : vector<16x64xf32>
    %c1_96 = arith.constant 1 : index
    %c0_97 = arith.constant 0 : index
    %c0_98 = arith.constant 0 : index
    %161 = vector.load %arg11[%c1_96, %c0_97, %c0_98] : memref<2x64x64xf32, #tpu.memory_space<vmem>>, vector<1x64x64xf32>
    %162 = vector.shape_cast %161 : vector<1x64x64xf32> to vector<64x64xf32>
    %cst_99 = arith.constant dense<0.000000e+00> : vector<16x64xf32>
    %163 = tpu.matmul %160, %162, %cst_99 {dimension_numbers = #tpu.dot_dimension_numbers<[1], [0], [0], [1], [0, 0, 1, 1], [], []>} : vector<16x64xf32>, vector<64x64xf32>, vector<16x64xf32> -> vector<16x64xf32>
    %c1_100 = arith.constant 1 : index
    %c0_101 = arith.constant 0 : index
    %c0_102 = arith.constant 0 : index
    %164 = vector.load %arg12[%c1_100, %c0_101, %c0_102] : memref<2x1x64xf32, #tpu.memory_space<vmem>>, vector<1x1x64xf32>
    %165 = vector.shape_cast %164 : vector<1x1x64xf32> to vector<1x64xf32>
    %166 = vector.broadcast %165 : vector<1x64xf32> to vector<16x64xf32>
    %167 = arith.addf %163, %166 : vector<16x64xf32>
    %cst_103 = arith.constant 0.00999999977 : f32
    %168 = vector.broadcast %cst_103 : f32 to vector<16x64xf32>
    %169 = arith.cmpf ogt, %167, %168 : vector<16x64xf32>
    %cst_104 = arith.constant 0.00999999977 : f32
    %170 = vector.broadcast %cst_104 : f32 to vector<16x64xf32>
    %171 = arith.subf %167, %170 : vector<16x64xf32>
    %cst_105 = arith.constant -0.00999999977 : f32
    %172 = vector.broadcast %cst_105 : f32 to vector<16x64xf32>
    %173 = arith.cmpf olt, %167, %172 : vector<16x64xf32>
    %cst_106 = arith.constant 0.00999999977 : f32
    %174 = vector.broadcast %cst_106 : f32 to vector<16x64xf32>
    %175 = arith.addf %167, %174 : vector<16x64xf32>
    %cst_107 = arith.constant 0.000000e+00 : f32
    %176 = vector.broadcast %cst_107 : f32 to vector<16x64xf32>
    %177 = arith.select %173, %175, %176 : vector<16x64xi1>, vector<16x64xf32>
    %178 = arith.select %169, %171, %177 : vector<16x64xi1>, vector<16x64xf32>
    %c0_108 = arith.constant 0 : index
    %c0_109 = arith.constant 0 : index
    %179 = vector.load %arg5[%c0_108, %c0_109] : memref<16x16xf32, #tpu.memory_space<vmem>>, vector<16x16xf32>
    %180 = vector.extract_strided_slice %178 {offsets = [0, 0], sizes = [16, 32], strides = [1, 1]} : vector<16x64xf32> to vector<16x32xf32>
    %cst_110 = arith.constant dense<0.000000e+00> : vector<16x32xf32>
    %181 = tpu.matmul %179, %180, %cst_110 {dimension_numbers = #tpu.dot_dimension_numbers<[1], [0], [0], [1], [0, 0, 1, 1], [], []>} : vector<16x16xf32>, vector<16x32xf32>, vector<16x32xf32> -> vector<16x32xf32>
    %c0_111 = arith.constant 0 : index
    %c0_112 = arith.constant 0 : index
    %182 = vector.load %arg6[%c0_111, %c0_112] : memref<16x16xf32, #tpu.memory_space<vmem>>, vector<16x16xf32>
    %183 = vector.extract_strided_slice %178 {offsets = [0, 32], sizes = [16, 32], strides = [1, 1]} : vector<16x64xf32> to vector<16x32xf32>
    %cst_113 = arith.constant dense<0.000000e+00> : vector<16x32xf32>
    %184 = tpu.matmul %182, %183, %cst_113 {dimension_numbers = #tpu.dot_dimension_numbers<[1], [0], [0], [1], [0, 0, 1, 1], [], []>} : vector<16x16xf32>, vector<16x32xf32>, vector<16x32xf32> -> vector<16x32xf32>
    %185 = arith.addf %181, %184 : vector<16x32xf32>
    %186 = arith.addf %185, %146 : vector<16x32xf32>
    %187 = arith.addf %186, %122 : vector<16x32xf32>
    %c1_114 = arith.constant 1 : index
    %c0_115 = arith.constant 0 : index
    %c0_116 = arith.constant 0 : index
    %188 = vector.load %arg13[%c1_114, %c0_115, %c0_116] : memref<2x1x32xf32, #tpu.memory_space<vmem>>, vector<1x1x32xf32>
    %189 = vector.shape_cast %188 : vector<1x1x32xf32> to vector<1x32xf32>
    %c1_117 = arith.constant 1 : index
    %c0_118 = arith.constant 0 : index
    %c0_119 = arith.constant 0 : index
    %190 = vector.load %arg14[%c1_117, %c0_118, %c0_119] : memref<2x1x32xf32, #tpu.memory_space<vmem>>, vector<1x1x32xf32>
    %191 = vector.shape_cast %190 : vector<1x1x32xf32> to vector<1x32xf32>
    %cst_120 = arith.constant dense<0.000000e+00> : vector<16xf32>
    %192 = vector.multi_reduction <add>, %187, %cst_120 [1] : vector<16x32xf32> to vector<16xf32>
    %193 = vector.shape_cast %192 : vector<16xf32> to vector<16x1xf32>
    %cst_121 = arith.constant 3.200000e+01 : f32
    %194 = vector.broadcast %cst_121 : f32 to vector<16x1xf32>
    %195 = arith.divf %193, %194 : vector<16x1xf32>
    %196 = vector.broadcast %195 : vector<16x1xf32> to vector<16x32xf32>
    %197 = arith.subf %187, %196 : vector<16x32xf32>
    %198 = arith.mulf %197, %197 : vector<16x32xf32>
    %cst_122 = arith.constant dense<0.000000e+00> : vector<16xf32>
    %199 = vector.multi_reduction <add>, %198, %cst_122 [1] : vector<16x32xf32> to vector<16xf32>
    %200 = vector.shape_cast %199 : vector<16xf32> to vector<16x1xf32>
    %cst_123 = arith.constant 3.200000e+01 : f32
    %201 = vector.broadcast %cst_123 : f32 to vector<16x1xf32>
    %202 = arith.divf %200, %201 : vector<16x1xf32>
    %cst_124 = arith.constant 9.99999997E-7 : f32
    %203 = vector.broadcast %cst_124 : f32 to vector<16x1xf32>
    %204 = arith.addf %202, %203 : vector<16x1xf32>
    %205 = math.rsqrt %204 : vector<16x1xf32>
    %206 = vector.broadcast %205 : vector<16x1xf32> to vector<16x32xf32>
    %207 = arith.mulf %197, %206 : vector<16x32xf32>
    %208 = vector.broadcast %189 : vector<1x32xf32> to vector<16x32xf32>
    %209 = arith.mulf %207, %208 : vector<16x32xf32>
    %210 = vector.broadcast %191 : vector<1x32xf32> to vector<16x32xf32>
    %211 = arith.addf %209, %210 : vector<16x32xf32>
    %c1_125 = arith.constant 1 : index
    %c0_126 = arith.constant 0 : index
    %c0_127 = arith.constant 0 : index
    %212 = vector.load %arg15[%c1_125, %c0_126, %c0_127] : memref<2x32x128xf32, #tpu.memory_space<vmem>>, vector<1x32x128xf32>
    %213 = vector.shape_cast %212 : vector<1x32x128xf32> to vector<32x128xf32>
    %cst_128 = arith.constant dense<0.000000e+00> : vector<16x128xf32>
    %214 = tpu.matmul %211, %213, %cst_128 {dimension_numbers = #tpu.dot_dimension_numbers<[1], [0], [0], [1], [0, 0, 1, 1], [], []>} : vector<16x32xf32>, vector<32x128xf32>, vector<16x128xf32> -> vector<16x128xf32>
    %c1_129 = arith.constant 1 : index
    %c0_130 = arith.constant 0 : index
    %c0_131 = arith.constant 0 : index
    %215 = vector.load %arg16[%c1_129, %c0_130, %c0_131] : memref<2x1x128xf32, #tpu.memory_space<vmem>>, vector<1x1x128xf32>
    %216 = vector.shape_cast %215 : vector<1x1x128xf32> to vector<1x128xf32>
    %217 = vector.broadcast %216 : vector<1x128xf32> to vector<16x128xf32>
    %218 = arith.addf %214, %217 : vector<16x128xf32>
    %219 = arith.mulf %218, %218 : vector<16x128xf32>
    %220 = arith.mulf %218, %219 : vector<16x128xf32>
    %cst_132 = arith.constant 4.471500e-02 : f32
    %221 = vector.broadcast %cst_132 : f32 to vector<16x128xf32>
    %222 = arith.mulf %221, %220 : vector<16x128xf32>
    %223 = arith.addf %218, %222 : vector<16x128xf32>
    %cst_133 = arith.constant 0.797884583 : f32
    %224 = vector.broadcast %cst_133 : f32 to vector<16x128xf32>
    %225 = arith.mulf %224, %223 : vector<16x128xf32>
    %226 = math.tanh %225 : vector<16x128xf32>
    %cst_134 = arith.constant 1.000000e+00 : f32
    %227 = vector.broadcast %cst_134 : f32 to vector<16x128xf32>
    %228 = arith.addf %227, %226 : vector<16x128xf32>
    %cst_135 = arith.constant 5.000000e-01 : f32
    %229 = vector.broadcast %cst_135 : f32 to vector<16x128xf32>
    %230 = arith.mulf %229, %228 : vector<16x128xf32>
    %231 = arith.mulf %218, %230 : vector<16x128xf32>
    %c1_136 = arith.constant 1 : index
    %c0_137 = arith.constant 0 : index
    %c0_138 = arith.constant 0 : index
    %232 = vector.load %arg17[%c1_136, %c0_137, %c0_138] : memref<2x128x32xf32, #tpu.memory_space<vmem>>, vector<1x128x32xf32>
    %233 = vector.shape_cast %232 : vector<1x128x32xf32> to vector<128x32xf32>
    %cst_139 = arith.constant dense<0.000000e+00> : vector<16x32xf32>
    %234 = tpu.matmul %231, %233, %cst_139 {dimension_numbers = #tpu.dot_dimension_numbers<[1], [0], [0], [1], [0, 0, 1, 1], [], []>} : vector<16x128xf32>, vector<128x32xf32>, vector<16x32xf32> -> vector<16x32xf32>
    %235 = arith.addf %187, %234 : vector<16x32xf32>
    %c1_140 = arith.constant 1 : index
    %c0_141 = arith.constant 0 : index
    %c0_142 = arith.constant 0 : index
    %236 = vector.load %arg18[%c1_140, %c0_141, %c0_142] : memref<2x1x32xf32, #tpu.memory_space<vmem>>, vector<1x1x32xf32>
    %237 = vector.shape_cast %236 : vector<1x1x32xf32> to vector<1x32xf32>
    %238 = vector.broadcast %237 : vector<1x32xf32> to vector<16x32xf32>
    %239 = arith.addf %235, %238 : vector<16x32xf32>
    %c0_143 = arith.constant 0 : index
    %c0_144 = arith.constant 0 : index
    %240 = vector.load %arg19[%c0_143, %c0_144] : memref<1x32xf32, #tpu.memory_space<vmem>>, vector<1x32xf32>
    %c0_145 = arith.constant 0 : index
    %c0_146 = arith.constant 0 : index
    %241 = vector.load %arg20[%c0_145, %c0_146] : memref<1x32xf32, #tpu.memory_space<vmem>>, vector<1x32xf32>
    %cst_147 = arith.constant dense<0.000000e+00> : vector<16xf32>
    %242 = vector.multi_reduction <add>, %239, %cst_147 [1] : vector<16x32xf32> to vector<16xf32>
    %243 = vector.shape_cast %242 : vector<16xf32> to vector<16x1xf32>
    %cst_148 = arith.constant 3.200000e+01 : f32
    %244 = vector.broadcast %cst_148 : f32 to vector<16x1xf32>
    %245 = arith.divf %243, %244 : vector<16x1xf32>
    %246 = vector.broadcast %245 : vector<16x1xf32> to vector<16x32xf32>
    %247 = arith.subf %239, %246 : vector<16x32xf32>
    %248 = arith.mulf %247, %247 : vector<16x32xf32>
    %cst_149 = arith.constant dense<0.000000e+00> : vector<16xf32>
    %249 = vector.multi_reduction <add>, %248, %cst_149 [1] : vector<16x32xf32> to vector<16xf32>
    %250 = vector.shape_cast %249 : vector<16xf32> to vector<16x1xf32>
    %cst_150 = arith.constant 3.200000e+01 : f32
    %251 = vector.broadcast %cst_150 : f32 to vector<16x1xf32>
    %252 = arith.divf %250, %251 : vector<16x1xf32>
    %cst_151 = arith.constant 9.99999997E-7 : f32
    %253 = vector.broadcast %cst_151 : f32 to vector<16x1xf32>
    %254 = arith.addf %252, %253 : vector<16x1xf32>
    %255 = math.rsqrt %254 : vector<16x1xf32>
    %256 = vector.broadcast %255 : vector<16x1xf32> to vector<16x32xf32>
    %257 = arith.mulf %247, %256 : vector<16x32xf32>
    %258 = vector.broadcast %240 : vector<1x32xf32> to vector<16x32xf32>
    %259 = arith.mulf %257, %258 : vector<16x32xf32>
    %260 = vector.broadcast %241 : vector<1x32xf32> to vector<16x32xf32>
    %261 = arith.addf %259, %260 : vector<16x32xf32>
    %c0_152 = arith.constant 0 : index
    %c0_153 = arith.constant 0 : index
    %262 = vector.load %arg21[%c0_152, %c0_153] : memref<32x8192xf32, #tpu.memory_space<vmem>>, vector<32x8192xf32>
    %cst_154 = arith.constant dense<0.000000e+00> : vector<16x8192xf32>
    %263 = tpu.matmul %261, %262, %cst_154 {dimension_numbers = #tpu.dot_dimension_numbers<[1], [0], [0], [1], [0, 0, 1, 1], [], []>} : vector<16x32xf32>, vector<32x8192xf32>, vector<16x8192xf32> -> vector<16x8192xf32>
    %264 = arith.mulf %263, %263 : vector<16x8192xf32>
    %265 = arith.mulf %263, %264 : vector<16x8192xf32>
    %cst_155 = arith.constant 4.471500e-02 : f32
    %266 = vector.broadcast %cst_155 : f32 to vector<16x8192xf32>
    %267 = arith.mulf %266, %265 : vector<16x8192xf32>
    %268 = arith.addf %263, %267 : vector<16x8192xf32>
    %cst_156 = arith.constant 0.797884583 : f32
    %269 = vector.broadcast %cst_156 : f32 to vector<16x8192xf32>
    %270 = arith.mulf %269, %268 : vector<16x8192xf32>
    %271 = math.tanh %270 : vector<16x8192xf32>
    %cst_157 = arith.constant 1.000000e+00 : f32
    %272 = vector.broadcast %cst_157 : f32 to vector<16x8192xf32>
    %273 = arith.addf %272, %271 : vector<16x8192xf32>
    %cst_158 = arith.constant 5.000000e-01 : f32
    %274 = vector.broadcast %cst_158 : f32 to vector<16x8192xf32>
    %275 = arith.mulf %274, %273 : vector<16x8192xf32>
    %276 = arith.mulf %263, %275 : vector<16x8192xf32>
    %c0_159 = arith.constant 0 : index
    %c0_160 = arith.constant 0 : index
    %277 = vector.load %arg22[%c0_159, %c0_160] : memref<8192x16xf32, #tpu.memory_space<vmem>>, vector<8192x16xf32>
    %cst_161 = arith.constant dense<0.000000e+00> : vector<16x16xf32>
    %278 = tpu.matmul %276, %277, %cst_161 {dimension_numbers = #tpu.dot_dimension_numbers<[1], [0], [0], [1], [0, 0, 1, 1], [], []>} : vector<16x8192xf32>, vector<8192x16xf32>, vector<16x16xf32> -> vector<16x16xf32>
    %c0_162 = arith.constant 0 : index
    %c0_163 = arith.constant 0 : index
    %c0_164 = arith.constant 0 : index
    %279 = vector.load %arg23[%c0_162, %c0_163, %c0_164] : memref<1x16x16xf32, #tpu.memory_space<vmem>>, vector<1x16x16xf32>
    %280 = vector.shape_cast %279 : vector<1x16x16xf32> to vector<16x16xf32>
    %281 = vector.shape_cast %278 : vector<16x16xf32> to vector<1x16x16xf32>
    tpu.vector_store %arg23[%c0_162, %c0_163, %c0_164], %281 {strides = array<i32>} : memref<1x16x16xf32, #tpu.memory_space<vmem>>, vector<1x16x16xf32>,
    return
  }
  func.func @transform_0(%arg0: i32) -> (i32, i32, i32) {
    %c0_i32 = arith.constant 0 : i32
    %c0_i32_0 = arith.constant 0 : i32
    %c0_i32_1 = arith.constant 0 : i32
    return %arg0, %c0_i32, %c0_i32_0 : i32, i32, i32
  }
  func.func @transform_1(%arg0: i32) -> (i32, i32) {
    %c0_i32 = arith.constant 0 : i32
    %c0_i32_0 = arith.constant 0 : i32
    %c0_i32_1 = arith.constant 0 : i32
    return %c0_i32, %c0_i32_0 : i32, i32
  }
  func.func @transform_2(%arg0: i32) -> (i32, i32) {
    %c0_i32 = arith.constant 0 : i32
    %c0_i32_0 = arith.constant 0 : i32
    %c0_i32_1 = arith.constant 0 : i32
    return %c0_i32, %c0_i32_0 : i32, i32
  }
  func.func @transform_3(%arg0: i32) -> (i32, i32) {
    %c0_i32 = arith.constant 0 : i32
    %c0_i32_0 = arith.constant 0 : i32
    %c0_i32_1 = arith.constant 0 : i32
    return %c0_i32, %c0_i32_0 : i32, i32
  }
  func.func @transform_4(%arg0: i32) -> (i32, i32) {
    %c0_i32 = arith.constant 0 : i32
    %c0_i32_0 = arith.constant 0 : i32
    %c0_i32_1 = arith.constant 0 : i32
    return %c0_i32, %c0_i32_0 : i32, i32
  }
  func.func @transform_5(%arg0: i32) -> (i32, i32) {
    %c0_i32 = arith.constant 0 : i32
    %c0_i32_0 = arith.constant 0 : i32
    %c0_i32_1 = arith.constant 0 : i32
    return %c0_i32, %c0_i32_0 : i32, i32
  }
  func.func @transform_6(%arg0: i32) -> (i32, i32, i32) {
    %c0_i32 = arith.constant 0 : i32
    %c0_i32_0 = arith.constant 0 : i32
    %c0_i32_1 = arith.constant 0 : i32
    %c0_i32_2 = arith.constant 0 : i32
    return %c0_i32, %c0_i32_0, %c0_i32_1 : i32, i32, i32
  }
  func.func @transform_7(%arg0: i32) -> (i32, i32, i32) {
    %c0_i32 = arith.constant 0 : i32
    %c0_i32_0 = arith.constant 0 : i32
    %c0_i32_1 = arith.constant 0 : i32
    %c0_i32_2 = arith.constant 0 : i32
    return %c0_i32, %c0_i32_0, %c0_i32_1 : i32, i32, i32
  }
  func.func @transform_8(%arg0: i32) -> (i32, i32, i32) {
    %c0_i32 = arith.constant 0 : i32
    %c0_i32_0 = arith.constant 0 : i32
    %c0_i32_1 = arith.constant 0 : i32
    %c0_i32_2 = arith.constant 0 : i32
    return %c0_i32, %c0_i32_0, %c0_i32_1 : i32, i32, i32
  }
  func.func @transform_9(%arg0: i32) -> (i32, i32, i32) {
    %c0_i32 = arith.constant 0 : i32
    %c0_i32_0 = arith.constant 0 : i32
    %c0_i32_1 = arith.constant 0 : i32
    %c0_i32_2 = arith.constant 0 : i32
    return %c0_i32, %c0_i32_0, %c0_i32_1 : i32, i32, i32
  }
  func.func @transform_10(%arg0: i32) -> (i32, i32, i32) {
    %c0_i32 = arith.constant 0 : i32
    %c0_i32_0 = arith.constant 0 : i32
    %c0_i32_1 = arith.constant 0 : i32
    %c0_i32_2 = arith.constant 0 : i32
    return %c0_i32, %c0_i32_0, %c0_i32_1 : i32, i32, i32
  }
  func.func @transform_11(%arg0: i32) -> (i32, i32, i32) {
    %c0_i32 = arith.constant 0 : i32
    %c0_i32_0 = arith.constant 0 : i32
    %c0_i32_1 = arith.constant 0 : i32
    %c0_i32_2 = arith.constant 0 : i32
    return %c0_i32, %c0_i32_0, %c0_i32_1 : i32, i32, i32
  }
  func.func @transform_12(%arg0: i32) -> (i32, i32, i32) {
    %c0_i32 = arith.constant 0 : i32
    %c0_i32_0 = arith.constant 0 : i32
    %c0_i32_1 = arith.constant 0 : i32
    %c0_i32_2 = arith.constant 0 : i32
    return %c0_i32, %c0_i32_0, %c0_i32_1 : i32, i32, i32
  }
  func.func @transform_13(%arg0: i32) -> (i32, i32, i32) {
    %c0_i32 = arith.constant 0 : i32
    %c0_i32_0 = arith.constant 0 : i32
    %c0_i32_1 = arith.constant 0 : i32
    %c0_i32_2 = arith.constant 0 : i32
    return %c0_i32, %c0_i32_0, %c0_i32_1 : i32, i32, i32
  }
  func.func @transform_14(%arg0: i32) -> (i32, i32, i32) {
    %c0_i32 = arith.constant 0 : i32
    %c0_i32_0 = arith.constant 0 : i32
    %c0_i32_1 = arith.constant 0 : i32
    %c0_i32_2 = arith.constant 0 : i32
    return %c0_i32, %c0_i32_0, %c0_i32_1 : i32, i32, i32
  }
  func.func @transform_15(%arg0: i32) -> (i32, i32, i32) {
    %c0_i32 = arith.constant 0 : i32
    %c0_i32_0 = arith.constant 0 : i32
    %c0_i32_1 = arith.constant 0 : i32
    %c0_i32_2 = arith.constant 0 : i32
    return %c0_i32, %c0_i32_0, %c0_i32_1 : i32, i32, i32
  }
  func.func @transform_16(%arg0: i32) -> (i32, i32, i32) {
    %c0_i32 = arith.constant 0 : i32
    %c0_i32_0 = arith.constant 0 : i32
    %c0_i32_1 = arith.constant 0 : i32
    %c0_i32_2 = arith.constant 0 : i32
    return %c0_i32, %c0_i32_0, %c0_i32_1 : i32, i32, i32
  }
  func.func @transform_17(%arg0: i32) -> (i32, i32, i32) {
    %c0_i32 = arith.constant 0 : i32
    %c0_i32_0 = arith.constant 0 : i32
    %c0_i32_1 = arith.constant 0 : i32
    %c0_i32_2 = arith.constant 0 : i32
    return %c0_i32, %c0_i32_0, %c0_i32_1 : i32, i32, i32
  }
  func.func @transform_18(%arg0: i32) -> (i32, i32) {
    %c0_i32 = arith.constant 0 : i32
    %c0_i32_0 = arith.constant 0 : i32
    %c0_i32_1 = arith.constant 0 : i32
    return %c0_i32, %c0_i32_0 : i32, i32
  }
  func.func @transform_19(%arg0: i32) -> (i32, i32) {
    %c0_i32 = arith.constant 0 : i32
    %c0_i32_0 = arith.constant 0 : i32
    %c0_i32_1 = arith.constant 0 : i32
    return %c0_i32, %c0_i32_0 : i32, i32
  }
  func.func @transform_20(%arg0: i32) -> (i32, i32) {
    %c0_i32 = arith.constant 0 : i32
    %c0_i32_0 = arith.constant 0 : i32
    %c0_i32_1 = arith.constant 0 : i32
    return %c0_i32, %c0_i32_0 : i32, i32
  }
  func.func @transform_21(%arg0: i32) -> (i32, i32) {
    %c0_i32 = arith.constant 0 : i32
    %c0_i32_0 = arith.constant 0 : i32
    %c0_i32_1 = arith.constant 0 : i32
    return %c0_i32, %c0_i32_0 : i32, i32
  }
  func.func @transform_22(%arg0: i32) -> (i32, i32, i32) {
    %c0_i32 = arith.constant 0 : i32
    %c0_i32_0 = arith.constant 0 : i32
    %c0_i32_1 = arith.constant 0 : i32
    return %arg0, %c0_i32, %c0_i32_0 : i32, i32, i32
  }
}

module attributes {stable_mosaic.version = 11 : i64} {
  func.func @outproj_softmax_kernel(%arg0: memref<2x256xf32, #tpu.memory_space<vmem>>, %arg1: memref<256x64xf32, #tpu.memory_space<vmem>>, %arg2: memref<1x64xf32, #tpu.memory_space<vmem>>, %arg3: memref<2x64xf32, #tpu.memory_space<vmem>>) attributes {dimension_semantics = [], scalar_prefetch = 0 : i64, scratch_operands = 0 : i64, tpu.core_type = #tpu.core_type<tc>} {
    %c0 = arith.constant 0 : index
    %c0_0 = arith.constant 0 : index
    %0 = vector.load %arg0[%c0, %c0_0] : memref<2x256xf32, #tpu.memory_space<vmem>>, vector<2x256xf32>
    %c0_1 = arith.constant 0 : index
    %c0_2 = arith.constant 0 : index
    %1 = vector.load %arg1[%c0_1, %c0_2] : memref<256x64xf32, #tpu.memory_space<vmem>>, vector<256x64xf32>
    %cst = arith.constant dense<0.000000e+00> : vector<2x64xf32>
    %2 = tpu.matmul %0, %1, %cst {dimension_numbers = #tpu.dot_dimension_numbers<[1], [0], [0], [1], [0, 0, 1, 1], [], []>} : vector<2x256xf32>, vector<256x64xf32>, vector<2x64xf32> -> vector<2x64xf32>
    %c0_3 = arith.constant 0 : index
    %c0_4 = arith.constant 0 : index
    %3 = vector.load %arg2[%c0_3, %c0_4] : memref<1x64xf32, #tpu.memory_space<vmem>>, vector<1x64xf32>
    %4 = vector.broadcast %3 : vector<1x64xf32> to vector<2x64xf32>
    %5 = arith.addf %2, %4 : vector<2x64xf32>
    %cst_5 = arith.constant dense<0xFF800000> : vector<2xf32>
    %6 = vector.multi_reduction <maximumf>, %5, %cst_5 [1] : vector<2x64xf32> to vector<2xf32>
    %7 = vector.shape_cast %6 : vector<2xf32> to vector<2x1xf32>
    %8 = vector.broadcast %7 : vector<2x1xf32> to vector<2x64xf32>
    %9 = arith.subf %5, %8 : vector<2x64xf32>
    %10 = math.exp %9 : vector<2x64xf32>
    %cst_6 = arith.constant dense<0.000000e+00> : vector<2xf32>
    %11 = vector.multi_reduction <add>, %10, %cst_6 [1] : vector<2x64xf32> to vector<2xf32>
    %12 = vector.shape_cast %11 : vector<2xf32> to vector<2x1xf32>
    %13 = vector.broadcast %12 : vector<2x1xf32> to vector<2x64xf32>
    %14 = arith.divf %10, %13 : vector<2x64xf32>
    %c0_7 = arith.constant 0 : index
    %c0_8 = arith.constant 0 : index
    %15 = vector.load %arg3[%c0_7, %c0_8] : memref<2x64xf32, #tpu.memory_space<vmem>>, vector<2x64xf32>
    tpu.vector_store %arg3[%c0_7, %c0_8], %14 {strides = array<i32>} : memref<2x64xf32, #tpu.memory_space<vmem>>, vector<2x64xf32>,
    return
  }
}

</mosaic_0001>

<llo_original>
// kernel: _lambda_.3
$region0: #{_lambda_.3}
  #allocation0 [shape = 'u32[]', space=smem, size = 0x4, offset = 0x4, fixed_abs, tag = 'smem constant byte address 0x4 - core index']
  #allocation1 [shape = 'u32[72,128]{1,0:T(1,128)}', space=vmem, size = 0x9000, scoped, tag = 'internal scratch']
  %s0 = inlined_call_operand.vmem [shape: f32[2,256], index: 0, kind: input, shape index: {}]
  %s1 = inlined_call_operand.vmem [shape: f32[256,64], index: 1, kind: input, shape index: {}]
  %s2 = inlined_call_operand.vmem [shape: f32[1,64], index: 2, kind: input, shape index: {}]
  %s3 = inlined_call_operand.hbm [shape: f32[2,64], index: 3, kind: output, shape index: {}]
  %s4 = sld [smem:[#allocation0]]
  $region22: #{_lambda_.3} parent=0
    _
  %s6 = ssub.s32 1, %s4
  %s7 = scalar_select 0, %s6, %s4
  $region1: #{_lambda_.3} parent=0
    #allocation2 [shape = 'u8[1024]{0}', space=vmem, size = 0x400, scoped, tag = 'output window, operand 0, single buffered']
    #allocation3 [shape = 's32[1]{0}', space=sflag, size = 0x4, scoped, tag = 'scoped memory for _lambda_.3']
    %8 = vsyncpa [#allocation3], 0
    // Predicated region
    $region2: #{_lambda_.3} parent=1 // pred_check
      _
    $region3: #{_lambda_.3} parent=1 // pred_check_branch
      %10 = sbr.rel (0) target = $region5
    $region4: #{_lambda_.3} parent=1 // pred_region
      _
    $region5: #{_lambda_.3} parent=1 // pred_fallthru
      _
    // Predicated region
    $region6: #{_lambda_.3} parent=1 // pred_check
      _
    $region7: #{_lambda_.3} parent=1 // pred_check_branch
      %12 = sbr.rel (0) target = $region9
    $region8: #{_lambda_.3} parent=1 // pred_region
      _
    $region9: #{_lambda_.3} parent=1 // pred_fallthru
      _
    // Predicated region
    $region10: #{_lambda_.3} parent=1 // pred_check
      _
    $region11: #{_lambda_.3} parent=1 // pred_check_branch
      %14 = sbr.rel (0) target = $region13
    $region12: #{_lambda_.3} parent=1 // pred_region
      _
    $region13: #{_lambda_.3} parent=1 // pred_fallthru
      _
    %v15 = vld [vmem:[%s0] sm:$0xf]
    %v16 = vld [vmem:[%s1] sm:$0xff]
    %v17 = vld [vmem:[%s1 + $0x8] sm:$0xff]
    %v18 = vld [vmem:[%s1 + $0x10] sm:$0xff]
    %v19 = vld [vmem:[%s1 + $0x18] sm:$0xff]
    %v20 = vld [vmem:[%s1 + $0x20] sm:$0xff]
    %v21 = vld [vmem:[%s1 + $0x28] sm:$0xff]
    %v22 = vld [vmem:[%s1 + $0x30] sm:$0xff]
    %v23 = vld [vmem:[%s1 + $0x38] sm:$0xff]
    %v24 = vld [vmem:[%s1 + $0x40] sm:$0xff]
    %v25 = vld [vmem:[%s1 + $0x48] sm:$0xff]
    %v26 = vld [vmem:[%s1 + $0x50] sm:$0xff]
    %v27 = vld [vmem:[%s1 + $0x58] sm:$0xff]
    %v28 = vld [vmem:[%s1 + $0x60] sm:$0xff]
    %v29 = vld [vmem:[%s1 + $0x68] sm:$0xff]
    %v30 = vld [vmem:[%s1 + $0x70] sm:$0xff]
    %v31 = vld [vmem:[%s1 + $0x78] sm:$0xff]
    %v32 = vld [vmem:[%s1 + $0x80] sm:$0xff]
    %v33 = vld [vmem:[%s1 + $0x88] sm:$0xff]
    %v34 = vld [vmem:[%s1 + $0x90] sm:$0xff]
    %v35 = vld [vmem:[%s1 + $0x98] sm:$0xff]
    %v36 = vld [vmem:[%s1 + $0xa0] sm:$0xff]
    %v37 = vld [vmem:[%s1 + $0xa8] sm:$0xff]
    %v38 = vld [vmem:[%s1 + $0xb0] sm:$0xff]
    %v39 = vld [vmem:[%s1 + $0xb8] sm:$0xff]
    %v40 = vld [vmem:[%s1 + $0xc0] sm:$0xff]
    %v41 = vld [vmem:[%s1 + $0xc8] sm:$0xff]
    %v42 = vld [vmem:[%s1 + $0xd0] sm:$0xff]
    %v43 = vld [vmem:[%s1 + $0xd8] sm:$0xff]
    %v44 = vld [vmem:[%s1 + $0xe0] sm:$0xff]
    %v45 = vld [vmem:[%s1 + $0xe8] sm:$0xff]
    %v46 = vld [vmem:[%s1 + $0xf0] sm:$0xff]
    %v47 = vld [vmem:[%s1 + $0xf8] sm:$0xff]
    %v48 = vld [vmem:[%s2] sm:$0x1]
    %v50 = vperm.slane %v48, 0
    %53 = vst [vmem:[#allocation1] ss:$4 sm:$0xff] %v15
    %v54 = vld.sshfl [vmem:[#allocation1] sm:$0xff pattern:$0x73625140]
    %v55 = vld.sshfl [vmem:[#allocation1 + $0x8] sm:$0xff pattern:$0x73625140]
    %58 = vmatpush.msra.mxu0 %v31
    %59 = vmatpush.msra.mxu0 %v30
    %60 = vmatpush.msra.mxu0 %v29
    %61 = vmatpush.msra.mxu0 %v28
    %62 = vmatpush.msra.mxu0 %v27
    %63 = vmatpush.msra.mxu0 %v26
    %64 = vmatpush.msra.mxu0 %v25
    %65 = vmatpush.msra.mxu0 %v24
    %66 = vmatpush.msra.mxu0 %v23
    %67 = vmatpush.msra.mxu0 %v22
    %68 = vmatpush.msra.mxu0 %v21
    %69 = vmatpush.msra.mxu0 %v20
    %70 = vmatpush.msra.mxu0 %v19
    %71 = vmatpush.msra.mxu0 %v18
    %72 = vmatpush.msra.mxu0 %v17
    %73 = vmatpush.msra.mxu0 %v16
    %74 = vmatmul.f32.gmra.mxu0 %v54
    %v75 = vpop.f32.mrf.mxu0
    %v76 = vadd.f32 %v50, %v75
    %77 = vdwg.mxu0
    %78 = vmatpush.msra.mxu0 %v47
    %79 = vmatpush.msra.mxu0 %v46
    %80 = vmatpush.msra.mxu0 %v45
    %81 = vmatpush.msra.mxu0 %v44
    %82 = vmatpush.msra.mxu0 %v43
    %83 = vmatpush.msra.mxu0 %v42
    %84 = vmatpush.msra.mxu0 %v41
    %85 = vmatpush.msra.mxu0 %v40
    %86 = vmatpush.msra.mxu0 %v39
    %87 = vmatpush.msra.mxu0 %v38
    %88 = vmatpush.msra.mxu0 %v37
    %89 = vmatpush.msra.mxu0 %v36
    %90 = vmatpush.msra.mxu0 %v35
    %91 = vmatpush.msra.mxu0 %v34
    %92 = vmatpush.msra.mxu0 %v33
    %93 = vmatpush.msra.mxu0 %v32
    %94 = vmatmul.f32.gmra.mxu0 %v55
    %v95 = vpop.f32.mrf.mxu0
    %v96 = vadd.f32 %v76, %v95
    %97 = vdwg.mxu0
    %vm98 = vcmask 517120
    %v99 = vsel %vm98, %v96, -inf
    %100 = vmax.xlane.f32.xlu0 %v99
    %v101 = vpop.xlane.xlu0 %100
    %v102 = vsub.f32 %v96, %v101
    %v103 = vmul.f32 %v102, 1.442695
    %v104 = vpow.pop %v103
    %v105 = vsel %vm98, %v104, 0.0
    %106 = vadd.xlane.f32.xlu0 %v105
    %v107 = vpop.xlane.xlu0 %106
    %v108 = vrcp.pop %v107
    %v109 = vmul.f32 %v107, %v108
    %v110 = vsub.f32 1.0, %v109
    %v111 = vmul.f32 %v108, %v110
    %v112 = vadd.f32 %v108, %v111
    %vm113 = vweird.f32 %v107
    %vm114 = vweird.f32 %v108
    %vm115 = vmor %vm113, %vm114
    %v116 = vsel %vm115, %v108, %v112
    %v117 = vand.u32 2147483647, %v107
    %vm118 = vcmp.eq.f32.partialorder %v117, 8.507059e+37
    %v119 = vand.u32 %v107, 2147483648
    %v120 = vor.u32 1.1754944e-38, %v119
    %v121 = vsel %vm118, %v120, %v116
    %v122 = vmul.f32 %v104, %v121
    %123 = vst.msk [vmem:[#allocation2] sm:$0x3] %vm98, %v122
    // Predicated region
    $region14: #{_lambda_.3} parent=1 // pred_check
      _
    $region15: #{_lambda_.3} parent=1 // pred_check_branch
      %125 = sbr.rel (0) target = $region17
    $region16: #{_lambda_.3} parent=1 // pred_region
      %127 = vsyncadd [#allocation3], 0
      %s129 = sshll.u32 [#allocation2], 4
      %s130 = int_to_ptr.vmem [resolvable:$true] %s129
      %s131 = sshll.u32 %s3, 4
      %s132 = int_to_ptr.hbm [resolvable:$true] %s131
      %134 = dma.vmem_to_hbm [thread:$0]  %s130, 32, %s132, [#allocation3]
    $region17: #{_lambda_.3} parent=1 // pred_fallthru
      _
    // Predicated region
    $region18: #{_lambda_.3} parent=1 // pred_check
      _
    $region19: #{_lambda_.3} parent=1 // pred_check_branch
      %136 = sbr.rel (0) target = $region21
    $region20: #{_lambda_.3} parent=1 // pred_region
      %138 = dma.done [#allocation3], 32
    $region21: #{_lambda_.3} parent=1 // pred_fallthru
      _
    %139 = vsyncpa [#allocation3], 1

// kernel: _lambda_.2
$region0: #{_lambda_.2}
  #allocation0 [shape = 'u32[]', space=smem, size = 0x4, offset = 0x4, fixed_abs, tag = 'smem constant byte address 0x4 - core index']
  #allocation1 [shape = 'u32[72,128]{1,0:T(1,128)}', space=vmem, size = 0x9000, scoped, tag = 'internal scratch']
  %s0 = inlined_call_operand.vmem [shape: f32[2,16,48], index: 0, kind: input, shape index: {}]
  %s1 = inlined_call_operand.vmem [shape: f32[48,32], index: 1, kind: input, shape index: {}]
  %s2 = inlined_call_operand.vmem [shape: f32[16,32], index: 2, kind: input, shape index: {}]
  %s3 = inlined_call_operand.vmem [shape: f32[32,16], index: 3, kind: input, shape index: {}]
  %s4 = inlined_call_operand.vmem [shape: f32[16,16], index: 4, kind: input, shape index: {}]
  %s5 = inlined_call_operand.vmem [shape: f32[16,16], index: 5, kind: input, shape index: {}]
  %s6 = inlined_call_operand.vmem [shape: f32[2,1,32], index: 6, kind: input, shape index: {}]
  %s7 = inlined_call_operand.vmem [shape: f32[2,1,32], index: 7, kind: input, shape index: {}]
  %s8 = inlined_call_operand.vmem [shape: f32[2,64,64], index: 8, kind: input, shape index: {}]
  %s9 = inlined_call_operand.vmem [shape: f32[2,1,64], index: 9, kind: input, shape index: {}]
  %s10 = inlined_call_operand.vmem [shape: f32[2,64,64], index: 10, kind: input, shape index: {}]
  %s11 = inlined_call_operand.vmem [shape: f32[2,1,64], index: 11, kind: input, shape index: {}]
  %s12 = inlined_call_operand.vmem [shape: f32[2,1,32], index: 12, kind: input, shape index: {}]
  %s13 = inlined_call_operand.vmem [shape: f32[2,1,32], index: 13, kind: input, shape index: {}]
  %s14 = inlined_call_operand.vmem [shape: f32[2,32,128], index: 14, kind: input, shape index: {}]
  %s15 = inlined_call_operand.vmem [shape: f32[2,1,128], index: 15, kind: input, shape index: {}]
  %s16 = inlined_call_operand.vmem [shape: f32[2,128,32], index: 16, kind: input, shape index: {}]
  %s17 = inlined_call_operand.vmem [shape: f32[2,1,32], index: 17, kind: input, shape index: {}]
  %s18 = inlined_call_operand.vmem [shape: f32[1,32], index: 18, kind: input, shape index: {}]
  %s19 = inlined_call_operand.vmem [shape: f32[1,32], index: 19, kind: input, shape index: {}]
  %s20 = inlined_call_operand.vmem [shape: f32[32,8192], index: 20, kind: input, shape index: {}]
  %s21 = inlined_call_operand.vmem [shape: f32[8192,16], index: 21, kind: input, shape index: {}]
  %s22 = inlined_call_operand.vmem [shape: f32[2,16,16], index: 22, kind: output, shape index: {}]
  %s23 = sld [smem:[#allocation0]]
  $region121: #{_lambda_.2} parent=0
    _
  %s25 = ssub.s32 1, %s23
  %s26 = scalar_select 0, %s25, %s23
  loop: start=0, step=1, limit=4
  $region2: #{_lambda_.2} parent=0 // loop_pre_header
    _
  $region3: #{_lambda_.2} parent=0 // loop_header
    %s28 = sphi 0, %s32
    %p29 = scmp.ge.s32.totalorder %s28, 4
    %s38 = sphi 0, %s40
    %s41 = sphi 0, %s38
    %s42 = sphi 0, %s41
    %s58 = sphi 0, %s42
    %s62 = sphi 0, %s62
    %s64 = sphi 0, %s62
    %s65 = sphi 0, %s64
    %s79 = sphi 0, %s65
    %s83 = sphi 0, %s83
    %s85 = sphi 0, %s83
    %s86 = sphi 0, %s85
    %s100 = sphi 0, %s86
    %s104 = sphi 0, %s104
    %s106 = sphi 0, %s104
    %s107 = sphi 0, %s106
    %s121 = sphi 0, %s107
    %s125 = sphi 0, %s125
    %s127 = sphi 0, %s125
    %s128 = sphi 0, %s127
    %s142 = sphi 0, %s128
    %s146 = sphi 0, %s146
    %s148 = sphi 0, %s146
    %s149 = sphi 0, %s148
    %s163 = sphi 0, %s149
    %s167 = sphi 0, %s167
    %s169 = sphi 0, %s167
    %s170 = sphi 0, %s169
    %s184 = sphi 0, %s170
    %s188 = sphi 0, %s188
    %s190 = sphi 0, %s188
    %s191 = sphi 0, %s190
    %s205 = sphi 0, %s191
    %s209 = sphi 0, %s209
    %s211 = sphi 0, %s209
    %s212 = sphi 0, %s211
    %s226 = sphi 0, %s212
    %s230 = sphi 0, %s230
    %s232 = sphi 0, %s230
    %s233 = sphi 0, %s232
    %s247 = sphi 0, %s233
    %s251 = sphi 0, %s251
    %s253 = sphi 0, %s251
    %s254 = sphi 0, %s253
    %s268 = sphi 0, %s254
    %s272 = sphi 0, %s272
    %s274 = sphi 0, %s272
    %s275 = sphi 0, %s274
    %s289 = sphi 0, %s275
    %s293 = sphi 0, %s293
    %s295 = sphi 0, %s293
    %s296 = sphi 0, %s295
    %s310 = sphi 0, %s296
    %s314 = sphi 0, %s314
    %s316 = sphi 0, %s314
    %s317 = sphi 0, %s316
    %s331 = sphi 0, %s317
    %s335 = sphi 0, %s335
    %s337 = sphi 0, %s335
    %s338 = sphi 0, %s337
    %s352 = sphi 0, %s338
    %s356 = sphi 0, %s356
    %s358 = sphi 0, %s356
    %s359 = sphi 0, %s358
    %s373 = sphi 0, %s359
    %s377 = sphi 0, %s377
    %s379 = sphi 0, %s377
    %s380 = sphi 0, %s379
    %s394 = sphi 0, %s380
    %s398 = sphi 0, %s398
    %s400 = sphi 0, %s398
    %s401 = sphi 0, %s400
    %s415 = sphi 0, %s401
    %s419 = sphi 0, %s419
    %s421 = sphi 0, %s419
    %s422 = sphi 0, %s421
    %s436 = sphi 0, %s422
    %s440 = sphi 0, %s440
    %s442 = sphi 0, %s440
    %s443 = sphi 0, %s442
    %s457 = sphi 0, %s443
    %s461 = sphi 0, %s461
    %s463 = sphi 0, %s461
    %s464 = sphi 0, %s463
    %s478 = sphi 0, %s464
    %s482 = sphi 0, %s482
    %s484 = sphi 0, %s482
    %s485 = sphi 0, %s484
    %s499 = sphi 0, %s485
    %s505 = sphi 0, %s507
    %s508 = sphi 0, %s505
    %s509 = sphi 0, %s508
    %s525 = sphi 0, %s509
  $region4: #{_lambda_.2} parent=0 // loop_header_branch
    %31 = sbr.rel (%p29) target = $region8
  $region5: #{_lambda_.2} parent=0 // loop_body
    %s33 = ssub.s32 %s28, 1
    %s34 = ssub.s32 %s28, 2
    %s35 = sadd.s32 %s28, 1
    %s36 = ssub.s32 %s28, %s35
    %p37 = scmp.eq.s32.totalorder %s36, 0
    %s39 = sadd.s32 %s38, 1
    %s40 = scalar_select %p37, %s38, %s39
    %p43 = pneg %p37
    %p44 = scmp.eq.s32.totalorder %s28, 1
    %p45 = por %p43, %p44
    %p46 = scmp.ne.s32.totalorder %s38, %s41
    %p47 = scmp.eq.s32.totalorder %s28, 0
    %p48 = por %p46, %p47
    %p49 = scmp.ne.s32.totalorder %s38, %s41
    %p50 = scmp.eq.s32.totalorder %s33, 1
    %p51 = por %p49, %p50
    %p52 = scmp.ne.s32.totalorder %s41, %s42
    %p53 = scmp.eq.s32.totalorder %s33, 0
    %p54 = por %p52, %p53
    %p55 = scmp.ne.s32.totalorder %s41, %s42
    %p56 = scmp.eq.s32.totalorder %s34, 1
    %p57 = por %p55, %p56
    %p59 = scmp.ne.s32.totalorder %s42, %s58
    %p60 = scmp.eq.s32.totalorder %s34, 0
    %p61 = por %p59, %p60
    %s63 = sadd.s32 %s62, 1
    %p66 = scmp.eq.s32.totalorder %s28, 1
    %p67 = scmp.ne.s32.totalorder %s62, %s64
    %p68 = scmp.eq.s32.totalorder %s28, 0
    %p69 = por %p67, %p68
    %p70 = scmp.ne.s32.totalorder %s62, %s64
    %p71 = scmp.eq.s32.totalorder %s33, 1
    %p72 = por %p70, %p71
    %p73 = scmp.ne.s32.totalorder %s64, %s65
    %p74 = scmp.eq.s32.totalorder %s33, 0
    %p75 = por %p73, %p74
    %p76 = scmp.ne.s32.totalorder %s64, %s65
    %p77 = scmp.eq.s32.totalorder %s34, 1
    %p78 = por %p76, %p77
    %p80 = scmp.ne.s32.totalorder %s65, %s79
    %p81 = scmp.eq.s32.totalorder %s34, 0
    %p82 = por %p80, %p81
    %s84 = sadd.s32 %s83, 1
    %p87 = scmp.eq.s32.totalorder %s28, 1
    %p88 = scmp.ne.s32.totalorder %s83, %s85
    %p89 = scmp.eq.s32.totalorder %s28, 0
    %p90 = por %p88, %p89
    %p91 = scmp.ne.s32.totalorder %s83, %s85
    %p92 = scmp.eq.s32.totalorder %s33, 1
    %p93 = por %p91, %p92
    %p94 = scmp.ne.s32.totalorder %s85, %s86
    %p95 = scmp.eq.s32.totalorder %s33, 0
    %p96 = por %p94, %p95
    %p97 = scmp.ne.s32.totalorder %s85, %s86
    %p98 = scmp.eq.s32.totalorder %s34, 1
    %p99 = por %p97, %p98
    %p101 = scmp.ne.s32.totalorder %s86, %s100
    %p102 = scmp.eq.s32.totalorder %s34, 0
    %p103 = por %p101, %p102
    %s105 = sadd.s32 %s104, 1
    %p108 = scmp.eq.s32.totalorder %s28, 1
    %p109 = scmp.ne.s32.totalorder %s104, %s106
    %p110 = scmp.eq.s32.totalorder %s28, 0
    %p111 = por %p109, %p110
    %p112 = scmp.ne.s32.totalorder %s104, %s106
    %p113 = scmp.eq.s32.totalorder %s33, 1
    %p114 = por %p112, %p113
    %p115 = scmp.ne.s32.totalorder %s106, %s107
    %p116 = scmp.eq.s32.totalorder %s33, 0
    %p117 = por %p115, %p116
    %p118 = scmp.ne.s32.totalorder %s106, %s107
    %p119 = scmp.eq.s32.totalorder %s34, 1
    %p120 = por %p118, %p119
    %p122 = scmp.ne.s32.totalorder %s107, %s121
    %p123 = scmp.eq.s32.totalorder %s34, 0
    %p124 = por %p122, %p123
    %s126 = sadd.s32 %s125, 1
    %p129 = scmp.eq.s32.totalorder %s28, 1
    %p130 = scmp.ne.s32.totalorder %s125, %s127
    %p131 = scmp.eq.s32.totalorder %s28, 0
    %p132 = por %p130, %p131
    %p133 = scmp.ne.s32.totalorder %s125, %s127
    %p134 = scmp.eq.s32.totalorder %s33, 1
    %p135 = por %p133, %p134
    %p136 = scmp.ne.s32.totalorder %s127, %s128
    %p137 = scmp.eq.s32.totalorder %s33, 0
    %p138 = por %p136, %p137
    %p139 = scmp.ne.s32.totalorder %s127, %s128
    %p140 = scmp.eq.s32.totalorder %s34, 1
    %p141 = por %p139, %p140
    %p143 = scmp.ne.s32.totalorder %s128, %s142
    %p144 = scmp.eq.s32.totalorder %s34, 0
    %p145 = por %p143, %p144
    %s147 = sadd.s32 %s146, 1
    %p150 = scmp.eq.s32.totalorder %s28, 1
    %p151 = scmp.ne.s32.totalorder %s146, %s148
    %p152 = scmp.eq.s32.totalorder %s28, 0
    %p153 = por %p151, %p152
    %p154 = scmp.ne.s32.totalorder %s146, %s148
    %p155 = scmp.eq.s32.totalorder %s33, 1
    %p156 = por %p154, %p155
    %p157 = scmp.ne.s32.totalorder %s148, %s149
    %p158 = scmp.eq.s32.totalorder %s33, 0
    %p159 = por %p157, %p158
    %p160 = scmp.ne.s32.totalorder %s148, %s149
    %p161 = scmp.eq.s32.totalorder %s34, 1
    %p162 = por %p160, %p161
    %p164 = scmp.ne.s32.totalorder %s149, %s163
    %p165 = scmp.eq.s32.totalorder %s34, 0
    %p166 = por %p164, %p165
    %s168 = sadd.s32 %s167, 1
    %p171 = scmp.eq.s32.totalorder %s28, 1
    %p172 = scmp.ne.s32.totalorder %s167, %s169
    %p173 = scmp.eq.s32.totalorder %s28, 0
    %p174 = por %p172, %p173
    %p175 = scmp.ne.s32.totalorder %s167, %s169
    %p176 = scmp.eq.s32.totalorder %s33, 1
    %p177 = por %p175, %p176
    %p178 = scmp.ne.s32.totalorder %s169, %s170
    %p179 = scmp.eq.s32.totalorder %s33, 0
    %p180 = por %p178, %p179
    %p181 = scmp.ne.s32.totalorder %s169, %s170
    %p182 = scmp.eq.s32.totalorder %s34, 1
    %p183 = por %p181, %p182
    %p185 = scmp.ne.s32.totalorder %s170, %s184
    %p186 = scmp.eq.s32.totalorder %s34, 0
    %p187 = por %p185, %p186
    %s189 = sadd.s32 %s188, 1
    %p192 = scmp.eq.s32.totalorder %s28, 1
    %p193 = scmp.ne.s32.totalorder %s188, %s190
    %p194 = scmp.eq.s32.totalorder %s28, 0
    %p195 = por %p193, %p194
    %p196 = scmp.ne.s32.totalorder %s188, %s190
    %p197 = scmp.eq.s32.totalorder %s33, 1
    %p198 = por %p196, %p197
    %p199 = scmp.ne.s32.totalorder %s190, %s191
    %p200 = scmp.eq.s32.totalorder %s33, 0
    %p201 = por %p199, %p200
    %p202 = scmp.ne.s32.totalorder %s190, %s191
    %p203 = scmp.eq.s32.totalorder %s34, 1
    %p204 = por %p202, %p203
    %p206 = scmp.ne.s32.totalorder %s191, %s205
    %p207 = scmp.eq.s32.totalorder %s34, 0
    %p208 = por %p206, %p207
    %s210 = sadd.s32 %s209, 1
    %p213 = scmp.eq.s32.totalorder %s28, 1
    %p214 = scmp.ne.s32.totalorder %s209, %s211
    %p215 = scmp.eq.s32.totalorder %s28, 0
    %p216 = por %p214, %p215
    %p217 = scmp.ne.s32.totalorder %s209, %s211
    %p218 = scmp.eq.s32.totalorder %s33, 1
    %p219 = por %p217, %p218
    %p220 = scmp.ne.s32.totalorder %s211, %s212
    %p221 = scmp.eq.s32.totalorder %s33, 0
    %p222 = por %p220, %p221
    %p223 = scmp.ne.s32.totalorder %s211, %s212
    %p224 = scmp.eq.s32.totalorder %s34, 1
    %p225 = por %p223, %p224
    %p227 = scmp.ne.s32.totalorder %s212, %s226
    %p228 = scmp.eq.s32.totalorder %s34, 0
    %p229 = por %p227, %p228
    %s231 = sadd.s32 %s230, 1
    %p234 = scmp.eq.s32.totalorder %s28, 1
    %p235 = scmp.ne.s32.totalorder %s230, %s232
    %p236 = scmp.eq.s32.totalorder %s28, 0
    %p237 = por %p235, %p236
    %p238 = scmp.ne.s32.totalorder %s230, %s232
    %p239 = scmp.eq.s32.totalorder %s33, 1
    %p240 = por %p238, %p239
    %p241 = scmp.ne.s32.totalorder %s232, %s233
    %p242 = scmp.eq.s32.totalorder %s33, 0
    %p243 = por %p241, %p242
    %p244 = scmp.ne.s32.totalorder %s232, %s233
    %p245 = scmp.eq.s32.totalorder %s34, 1
    %p246 = por %p244, %p245
    %p248 = scmp.ne.s32.totalorder %s233, %s247
    %p249 = scmp.eq.s32.totalorder %s34, 0
    %p250 = por %p248, %p249
    %s252 = sadd.s32 %s251, 1
    %p255 = scmp.eq.s32.totalorder %s28, 1
    %p256 = scmp.ne.s32.totalorder %s251, %s253
    %p257 = scmp.eq.s32.totalorder %s28, 0
    %p258 = por %p256, %p257
    %p259 = scmp.ne.s32.totalorder %s251, %s253
    %p260 = scmp.eq.s32.totalorder %s33, 1
    %p261 = por %p259, %p260
    %p262 = scmp.ne.s32.totalorder %s253, %s254
    %p263 = scmp.eq.s32.totalorder %s33, 0
    %p264 = por %p262, %p263
    %p265 = scmp.ne.s32.totalorder %s253, %s254
    %p266 = scmp.eq.s32.totalorder %s34, 1
    %p267 = por %p265, %p266
    %p269 = scmp.ne.s32.totalorder %s254, %s268
    %p270 = scmp.eq.s32.totalorder %s34, 0
    %p271 = por %p269, %p270
    %s273 = sadd.s32 %s272, 1
    %p276 = scmp.eq.s32.totalorder %s28, 1
    %p277 = scmp.ne.s32.totalorder %s272, %s274
    %p278 = scmp.eq.s32.totalorder %s28, 0
    %p279 = por %p277, %p278
    %p280 = scmp.ne.s32.totalorder %s272, %s274
    %p281 = scmp.eq.s32.totalorder %s33, 1
    %p282 = por %p280, %p281
    %p283 = scmp.ne.s32.totalorder %s274, %s275
    %p284 = scmp.eq.s32.totalorder %s33, 0
    %p285 = por %p283, %p284
    %p286 = scmp.ne.s32.totalorder %s274, %s275
    %p287 = scmp.eq.s32.totalorder %s34, 1
    %p288 = por %p286, %p287
    %p290 = scmp.ne.s32.totalorder %s275, %s289
    %p291 = scmp.eq.s32.totalorder %s34, 0
    %p292 = por %p290, %p291
    %s294 = sadd.s32 %s293, 1
    %p297 = scmp.eq.s32.totalorder %s28, 1
    %p298 = scmp.ne.s32.totalorder %s293, %s295
    %p299 = scmp.eq.s32.totalorder %s28, 0
    %p300 = por %p298, %p299
    %p301 = scmp.ne.s32.totalorder %s293, %s295
    %p302 = scmp.eq.s32.totalorder %s33, 1
    %p303 = por %p301, %p302
    %p304 = scmp.ne.s32.totalorder %s295, %s296
    %p305 = scmp.eq.s32.totalorder %s33, 0
    %p306 = por %p304, %p305
    %p307 = scmp.ne.s32.totalorder %s295, %s296
    %p308 = scmp.eq.s32.totalorder %s34, 1
    %p309 = por %p307, %p308
    %p311 = scmp.ne.s32.totalorder %s296, %s310
    %p312 = scmp.eq.s32.totalorder %s34, 0
    %p313 = por %p311, %p312
    %s315 = sadd.s32 %s314, 1
    %p318 = scmp.eq.s32.totalorder %s28, 1
    %p319 = scmp.ne.s32.totalorder %s314, %s316
    %p320 = scmp.eq.s32.totalorder %s28, 0
    %p321 = por %p319, %p320
    %p322 = scmp.ne.s32.totalorder %s314, %s316
    %p323 = scmp.eq.s32.totalorder %s33, 1
    %p324 = por %p322, %p323
    %p325 = scmp.ne.s32.totalorder %s316, %s317
    %p326 = scmp.eq.s32.totalorder %s33, 0
    %p327 = por %p325, %p326
    %p328 = scmp.ne.s32.totalorder %s316, %s317
    %p329 = scmp.eq.s32.totalorder %s34, 1
    %p330 = por %p328, %p329
    %p332 = scmp.ne.s32.totalorder %s317, %s331
    %p333 = scmp.eq.s32.totalorder %s34, 0
    %p334 = por %p332, %p333
    %s336 = sadd.s32 %s335, 1
    %p339 = scmp.eq.s32.totalorder %s28, 1
    %p340 = scmp.ne.s32.totalorder %s335, %s337
    %p341 = scmp.eq.s32.totalorder %s28, 0
    %p342 = por %p340, %p341
    %p343 = scmp.ne.s32.totalorder %s335, %s337
    %p344 = scmp.eq.s32.totalorder %s33, 1
    %p345 = por %p343, %p344
    %p346 = scmp.ne.s32.totalorder %s337, %s338
    %p347 = scmp.eq.s32.totalorder %s33, 0
    %p348 = por %p346, %p347
    %p349 = scmp.ne.s32.totalorder %s337, %s338
    %p350 = scmp.eq.s32.totalorder %s34, 1
    %p351 = por %p349, %p350
    %p353 = scmp.ne.s32.totalorder %s338, %s352
    %p354 = scmp.eq.s32.totalorder %s34, 0
    %p355 = por %p353, %p354
    %s357 = sadd.s32 %s356, 1
    %p360 = scmp.eq.s32.totalorder %s28, 1
    %p361 = scmp.ne.s32.totalorder %s356, %s358
    %p362 = scmp.eq.s32.totalorder %s28, 0
    %p363 = por %p361, %p362
    %p364 = scmp.ne.s32.totalorder %s356, %s358
    %p365 = scmp.eq.s32.totalorder %s33, 1
    %p366 = por %p364, %p365
    %p367 = scmp.ne.s32.totalorder %s358, %s359
    %p368 = scmp.eq.s32.totalorder %s33, 0
    %p369 = por %p367, %p368
    %p370 = scmp.ne.s32.totalorder %s358, %s359
    %p371 = scmp.eq.s32.totalorder %s34, 1
    %p372 = por %p370, %p371
    %p374 = scmp.ne.s32.totalorder %s359, %s373
    %p375 = scmp.eq.s32.totalorder %s34, 0
    %p376 = por %p374, %p375
    %s378 = sadd.s32 %s377, 1
    %p381 = scmp.eq.s32.totalorder %s28, 1
    %p382 = scmp.ne.s32.totalorder %s377, %s379
    %p383 = scmp.eq.s32.totalorder %s28, 0
    %p384 = por %p382, %p383
    %p385 = scmp.ne.s32.totalorder %s377, %s379
    %p386 = scmp.eq.s32.totalorder %s33, 1
    %p387 = por %p385, %p386
    %p388 = scmp.ne.s32.totalorder %s379, %s380
    %p389 = scmp.eq.s32.totalorder %s33, 0
    %p390 = por %p388, %p389
    %p391 = scmp.ne.s32.totalorder %s379, %s380
    %p392 = scmp.eq.s32.totalorder %s34, 1
    %p393 = por %p391, %p392
    %p395 = scmp.ne.s32.totalorder %s380, %s394
    %p396 = scmp.eq.s32.totalorder %s34, 0
    %p397 = por %p395, %p396
    %s399 = sadd.s32 %s398, 1
    %p402 = scmp.eq.s32.totalorder %s28, 1
    %p403 = scmp.ne.s32.totalorder %s398, %s400
    %p404 = scmp.eq.s32.totalorder %s28, 0
    %p405 = por %p403, %p404
    %p406 = scmp.ne.s32.totalorder %s398, %s400
    %p407 = scmp.eq.s32.totalorder %s33, 1
    %p408 = por %p406, %p407
    %p409 = scmp.ne.s32.totalorder %s400, %s401
    %p410 = scmp.eq.s32.totalorder %s33, 0
    %p411 = por %p409, %p410
    %p412 = scmp.ne.s32.totalorder %s400, %s401
    %p413 = scmp.eq.s32.totalorder %s34, 1
    %p414 = por %p412, %p413
    %p416 = scmp.ne.s32.totalorder %s401, %s415
    %p417 = scmp.eq.s32.totalorder %s34, 0
    %p418 = por %p416, %p417
    %s420 = sadd.s32 %s419, 1
    %p423 = scmp.eq.s32.totalorder %s28, 1
    %p424 = scmp.ne.s32.totalorder %s419, %s421
    %p425 = scmp.eq.s32.totalorder %s28, 0
    %p426 = por %p424, %p425
    %p427 = scmp.ne.s32.totalorder %s419, %s421
    %p428 = scmp.eq.s32.totalorder %s33, 1
    %p429 = por %p427, %p428
    %p430 = scmp.ne.s32.totalorder %s421, %s422
    %p431 = scmp.eq.s32.totalorder %s33, 0
    %p432 = por %p430, %p431
    %p433 = scmp.ne.s32.totalorder %s421, %s422
    %p434 = scmp.eq.s32.totalorder %s34, 1
    %p435 = por %p433, %p434
    %p437 = scmp.ne.s32.totalorder %s422, %s436
    %p438 = scmp.eq.s32.totalorder %s34, 0
    %p439 = por %p437, %p438
    %s441 = sadd.s32 %s440, 1
    %p444 = scmp.eq.s32.totalorder %s28, 1
    %p445 = scmp.ne.s32.totalorder %s440, %s442
    %p446 = scmp.eq.s32.totalorder %s28, 0
    %p447 = por %p445, %p446
    %p448 = scmp.ne.s32.totalorder %s440, %s442
    %p449 = scmp.eq.s32.totalorder %s33, 1
    %p450 = por %p448, %p449
    %p451 = scmp.ne.s32.totalorder %s442, %s443
    %p452 = scmp.eq.s32.totalorder %s33, 0
    %p453 = por %p451, %p452
    %p454 = scmp.ne.s32.totalorder %s442, %s443
    %p455 = scmp.eq.s32.totalorder %s34, 1
    %p456 = por %p454, %p455
    %p458 = scmp.ne.s32.totalorder %s443, %s457
    %p459 = scmp.eq.s32.totalorder %s34, 0
    %p460 = por %p458, %p459
    %s462 = sadd.s32 %s461, 1
    %p465 = scmp.eq.s32.totalorder %s28, 1
    %p466 = scmp.ne.s32.totalorder %s461, %s463
    %p467 = scmp.eq.s32.totalorder %s28, 0
    %p468 = por %p466, %p467
    %p469 = scmp.ne.s32.totalorder %s461, %s463
    %p470 = scmp.eq.s32.totalorder %s33, 1
    %p471 = por %p469, %p470
    %p472 = scmp.ne.s32.totalorder %s463, %s464
    %p473 = scmp.eq.s32.totalorder %s33, 0
    %p474 = por %p472, %p473
    %p475 = scmp.ne.s32.totalorder %s463, %s464
    %p476 = scmp.eq.s32.totalorder %s34, 1
    %p477 = por %p475, %p476
    %p479 = scmp.ne.s32.totalorder %s464, %s478
    %p480 = scmp.eq.s32.totalorder %s34, 0
    %p481 = por %p479, %p480
    %s483 = sadd.s32 %s482, 1
    %p486 = scmp.eq.s32.totalorder %s28, 1
    %p487 = scmp.ne.s32.totalorder %s482, %s484
    %p488 = scmp.eq.s32.totalorder %s28, 0
    %p489 = por %p487, %p488
    %p490 = scmp.ne.s32.totalorder %s482, %s484
    %p491 = scmp.eq.s32.totalorder %s33, 1
    %p492 = por %p490, %p491
    %p493 = scmp.ne.s32.totalorder %s484, %s485
    %p494 = scmp.eq.s32.totalorder %s33, 0
    %p495 = por %p493, %p494
    %p496 = scmp.ne.s32.totalorder %s484, %s485
    %p497 = scmp.eq.s32.totalorder %s34, 1
    %p498 = por %p496, %p497
    %p500 = scmp.ne.s32.totalorder %s485, %s499
    %p501 = scmp.eq.s32.totalorder %s34, 0
    %p502 = por %p500, %p501
    %s503 = ssub.s32 %s28, %s35
    %p504 = scmp.eq.s32.totalorder %s503, 0
    %s506 = sadd.s32 %s505, 1
    %s507 = scalar_select %p504, %s505, %s506
    %p510 = pneg %p504
    %p511 = scmp.eq.s32.totalorder %s28, 1
    %p512 = por %p510, %p511
    %p513 = scmp.ne.s32.totalorder %s505, %s508
    %p514 = scmp.eq.s32.totalorder %s28, 0
    %p515 = por %p513, %p514
    %p516 = scmp.ne.s32.totalorder %s505, %s508
    %p517 = scmp.eq.s32.totalorder %s33, 1
    %p518 = por %p516, %p517
    %p519 = scmp.ne.s32.totalorder %s508, %s509
    %p520 = scmp.eq.s32.totalorder %s33, 0
    %p521 = por %p519, %p520
    %p522 = scmp.ne.s32.totalorder %s508, %s509
    %p523 = scmp.eq.s32.totalorder %s34, 1
    %p524 = por %p522, %p523
    %p526 = scmp.ne.s32.totalorder %s509, %s525
    %p527 = scmp.eq.s32.totalorder %s34, 0
    %p528 = por %p526, %p527
    %p529 = scmp.le.s32.totalorder 1, %s28
    %p530 = scmp.lt.s32.totalorder %s28, 3
    %p531 = pnand %p529, %p530
    %p532 = pneg %p531
    // Predicated region
    $region9: #{_lambda_.2} parent=5 // pred_check
      _
    $region10: #{_lambda_.2} parent=5 // pred_check_branch
      %534 = sbr.rel (%p531) target = $region12
    $region11: #{_lambda_.2} parent=5 // pred_region
      %s535 = ssub.s32 %s28, 1
      // Predicated region
      $region13: #{_lambda_.2} parent=11 // pred_check
        %p536 = pneg %p75
      $region14: #{_lambda_.2} parent=11 // pred_check_branch
        %538 = sbr.rel (%p536) target = $region16
      $region15: #{_lambda_.2} parent=11 // pred_region
        _
      $region16: #{_lambda_.2} parent=11 // pred_fallthru
        _
      // Predicated region
      $region17: #{_lambda_.2} parent=11 // pred_check
        %p539 = pneg %p96
      $region18: #{_lambda_.2} parent=11 // pred_check_branch
        %541 = sbr.rel (%p539) target = $region20
      $region19: #{_lambda_.2} parent=11 // pred_region
        _
      $region20: #{_lambda_.2} parent=11 // pred_fallthru
        _
      // Predicated region
      $region21: #{_lambda_.2} parent=11 // pred_check
        %p542 = pneg %p117
      $region22: #{_lambda_.2} parent=11 // pred_check_branch
        %544 = sbr.rel (%p542) target = $region24
      $region23: #{_lambda_.2} parent=11 // pred_region
        _
      $region24: #{_lambda_.2} parent=11 // pred_fallthru
        _
      // Predicated region
      $region25: #{_lambda_.2} parent=11 // pred_check
        %p545 = pneg %p138
      $region26: #{_lambda_.2} parent=11 // pred_check_branch
        %547 = sbr.rel (%p545) target = $region28
      $region27: #{_lambda_.2} parent=11 // pred_region
        _
      $region28: #{_lambda_.2} parent=11 // pred_fallthru
        _
      // Predicated region
      $region29: #{_lambda_.2} parent=11 // pred_check
        %p548 = pneg %p159
      $region30: #{_lambda_.2} parent=11 // pred_check_branch
        %550 = sbr.rel (%p548) target = $region32
      $region31: #{_lambda_.2} parent=11 // pred_region
        _
      $region32: #{_lambda_.2} parent=11 // pred_fallthru
        _
      // Predicated region
      $region33: #{_lambda_.2} parent=11 // pred_check
        %p551 = pneg %p180
      $region34: #{_lambda_.2} parent=11 // pred_check_branch
        %553 = sbr.rel (%p551) target = $region36
      $region35: #{_lambda_.2} parent=11 // pred_region
        _
      $region36: #{_lambda_.2} parent=11 // pred_fallthru
        _
      // Predicated region
      $region37: #{_lambda_.2} parent=11 // pred_check
        %p554 = pneg %p201
      $region38: #{_lambda_.2} parent=11 // pred_check_branch
        %556 = sbr.rel (%p554) target = $region40
      $region39: #{_lambda_.2} parent=11 // pred_region
        _
      $region40: #{_lambda_.2} parent=11 // pred_fallthru
        _
      // Predicated region
      $region41: #{_lambda_.2} parent=11 // pred_check
        %p557 = pneg %p222
      $region42: #{_lambda_.2} parent=11 // pred_check_branch
        %559 = sbr.rel (%p557) target = $region44
      $region43: #{_lambda_.2} parent=11 // pred_region
        _
      $region44: #{_lambda_.2} parent=11 // pred_fallthru
        _
      // Predicated region
      $region45: #{_lambda_.2} parent=11 // pred_check
        %p560 = pneg %p243
      $region46: #{_lambda_.2} parent=11 // pred_check_branch
        %562 = sbr.rel (%p560) target = $region48
      $region47: #{_lambda_.2} parent=11 // pred_region
        _
      $region48: #{_lambda_.2} parent=11 // pred_fallthru
        _
      // Predicated region
      $region49: #{_lambda_.2} parent=11 // pred_check
        %p563 = pneg %p264
      $region50: #{_lambda_.2} parent=11 // pred_check_branch
        %565 = sbr.rel (%p563) target = $region52
      $region51: #{_lambda_.2} parent=11 // pred_region
        _
      $region52: #{_lambda_.2} parent=11 // pred_fallthru
        _
      // Predicated region
      $region53: #{_lambda_.2} parent=11 // pred_check
        %p566 = pneg %p285
      $region54: #{_lambda_.2} parent=11 // pred_check_branch
        %568 = sbr.rel (%p566) target = $region56
      $region55: #{_lambda_.2} parent=11 // pred_region
        _
      $region56: #{_lambda_.2} parent=11 // pred_fallthru
        _
      // Predicated region
      $region57: #{_lambda_.2} parent=11 // pred_check
        %p569 = pneg %p306
      $region58: #{_lambda_.2} parent=11 // pred_check_branch
        %571 = sbr.rel (%p569) target = $region60
      $region59: #{_lambda_.2} parent=11 // pred_region
        _
      $region60: #{_lambda_.2} parent=11 // pred_fallthru
        _
      // Predicated region
      $region61: #{_lambda_.2} parent=11 // pred_check
        %p572 = pneg %p327
      $region62: #{_lambda_.2} parent=11 // pred_check_branch
        %574 = sbr.rel (%p572) target = $region64
      $region63: #{_lambda_.2} parent=11 // pred_region
        _
      $region64: #{_lambda_.2} parent=11 // pred_fallthru
        _
      // Predicated region
      $region65: #{_lambda_.2} parent=11 // pred_check
        %p575 = pneg %p348
      $region66: #{_lambda_.2} parent=11 // pred_check_branch
        %577 = sbr.rel (%p575) target = $region68
      $region67: #{_lambda_.2} parent=11 // pred_region
        _
      $region68: #{_lambda_.2} parent=11 // pred_fallthru
        _
      // Predicated region
      $region69: #{_lambda_.2} parent=11 // pred_check
        %p578 = pneg %p369
      $region70: #{_lambda_.2} parent=11 // pred_check_branch
        %580 = sbr.rel (%p578) target = $region72
      $region71: #{_lambda_.2} parent=11 // pred_region
        _
      $region72: #{_lambda_.2} parent=11 // pred_fallthru
        _
      // Predicated region
      $region73: #{_lambda_.2} parent=11 // pred_check
        %p581 = pneg %p390
      $region74: #{_lambda_.2} parent=11 // pred_check_branch
        %583 = sbr.rel (%p581) target = $region76
      $region75: #{_lambda_.2} parent=11 // pred_region
        _
      $region76: #{_lambda_.2} parent=11 // pred_fallthru
        _
      // Predicated region
      $region77: #{_lambda_.2} parent=11 // pred_check
        %p584 = pneg %p411
      $region78: #{_lambda_.2} parent=11 // pred_check_branch
        %586 = sbr.rel (%p584) target = $region80
      $region79: #{_lambda_.2} parent=11 // pred_region
        _
      $region80: #{_lambda_.2} parent=11 // pred_fallthru
        _
      // Predicated region
      $region81: #{_lambda_.2} parent=11 // pred_check
        %p587 = pneg %p432
      $region82: #{_lambda_.2} parent=11 // pred_check_branch
        %589 = sbr.rel (%p587) target = $region84
      $region83: #{_lambda_.2} parent=11 // pred_region
        _
      $region84: #{_lambda_.2} parent=11 // pred_fallthru
        _
      // Predicated region
      $region85: #{_lambda_.2} parent=11 // pred_check
        %p590 = pneg %p453
      $region86: #{_lambda_.2} parent=11 // pred_check_branch
        %592 = sbr.rel (%p590) target = $region88
      $region87: #{_lambda_.2} parent=11 // pred_region
        _
      $region88: #{_lambda_.2} parent=11 // pred_fallthru
        _
      // Predicated region
      $region89: #{_lambda_.2} parent=11 // pred_check
        %p593 = pneg %p474
      $region90: #{_lambda_.2} parent=11 // pred_check_branch
        %595 = sbr.rel (%p593) target = $region92
      $region91: #{_lambda_.2} parent=11 // pred_region
        _
      $region92: #{_lambda_.2} parent=11 // pred_fallthru
        _
      // Predicated region
      $region93: #{_lambda_.2} parent=11 // pred_check
        %p596 = pneg %p495
      $region94: #{_lambda_.2} parent=11 // pred_check_branch
        %598 = sbr.rel (%p596) target = $region96
      $region95: #{_lambda_.2} parent=11 // pred_region
        _
      $region96: #{_lambda_.2} parent=11 // pred_fallthru
        _
    $region12: #{_lambda_.2} parent=5 // pred_fallthru
      _
    %p599 = scmp.lt.s32.totalorder %s28, 2
    // Predicated region
    $region97: #{_lambda_.2} parent=5 // pred_check
      %p600 = pneg %p599
    $region98: #{_lambda_.2} parent=5 // pred_check_branch
      %602 = sbr.rel (%p600) target = $region100
    $region99: #{_lambda_.2} parent=5 // pred_region
      // Predicated region
      $region101: #{_lambda_.2} parent=99 // pred_check
        %p603 = pneg %p48
      $region102: #{_lambda_.2} parent=99 // pred_check_branch
        %605 = sbr.rel (%p603) target = $region104
      $region103: #{_lambda_.2} parent=99 // pred_region
        %p606 = scmp.lt.s32.totalorder %s28, 1
        %s607 = scalar_select %p606, %s28, 1
        %s608 = smul.addr %s607, 2
        %s609 = smul.addr %s608, 8
        %s610 = scalar_lea.vmem %s0, %s609
      $region104: #{_lambda_.2} parent=99 // pred_fallthru
        _
    $region100: #{_lambda_.2} parent=5 // pred_fallthru
      _
    %p611 = scmp.le.s32.totalorder 1, %s28
    %p612 = scmp.lt.s32.totalorder %s28, 3
    %p613 = pnand %p611, %p612
    %p614 = pneg %p613
    // Predicated region
    $region105: #{_lambda_.2} parent=5 // pred_check
      _
    $region106: #{_lambda_.2} parent=5 // pred_check_branch
      %616 = sbr.rel (%p613) target = $region108
    $region107: #{_lambda_.2} parent=5 // pred_region
      %s617 = ssub.s32 %s28, 1
      %p618 = scmp.lt.s32.totalorder %s33, 1
      %s619 = scalar_select %p618, %s33, 1
      %s620 = smul.addr %s619, 2
      %s621 = smul.addr %s620, 8
      %s622 = scalar_lea.vmem %s0, %s621
      %p623 = pneg %p54
      %p624 = pneg %p51
      %p625 = pneg %p75
      %p626 = pneg %p72
      %p627 = pneg %p96
      %p628 = pneg %p93
      %p629 = pneg %p117
      %p630 = pneg %p114
      %p631 = pneg %p138
      %p632 = pneg %p135
      %p633 = pneg %p159
      %p634 = pneg %p156
      %p635 = pneg %p180
      %p636 = pneg %p177
      %p637 = pneg %p201
      %p638 = pneg %p198
      %p639 = pneg %p222
      %p640 = pneg %p219
      %p641 = pneg %p243
      %p642 = pneg %p240
      %p643 = pneg %p264
      %p644 = pneg %p261
      %p645 = pneg %p285
      %p646 = pneg %p282
      %p647 = pneg %p306
      %p648 = pneg %p303
      %p649 = pneg %p327
      %p650 = pneg %p324
      %p651 = pneg %p348
      %p652 = pneg %p345
      %p653 = pneg %p369
      %p654 = pneg %p366
      %p655 = pneg %p390
      %p656 = pneg %p387
      %p657 = pneg %p411
      %p658 = pneg %p408
      %p659 = pneg %p432
      %p660 = pneg %p429
      %p661 = pneg %p453
      %p662 = pneg %p450
      %p663 = pneg %p474
      %p664 = pneg %p471
      %p665 = pneg %p495
      %p666 = pneg %p492
      %p667 = pneg %p521
      %p668 = pneg %p518
      %p669 = scmp.lt.s32.totalorder %s33, 1
      %s670 = scalar_select %p669, %s33, 1
      %s671 = smul.addr %s670, 2
      %s672 = smul.addr %s671, 8
      %s673 = scalar_lea.vmem %s22, %s672
      %p674 = scmp.lt.s32.totalorder %s33, 1
      %s675 = scalar_select %p674, %s33, 1
      %s676 = smul.addr %s675, 2
      %s677 = smul.addr %s676, 8
      %s678 = scalar_lea.vmem %s0, %s677
      %p679 = scmp.lt.s32.totalorder %s33, 1
      %s680 = scalar_select %p679, %s33, 1
      %s681 = smul.addr %s680, 2
      %s682 = smul.addr %s681, 8
      %s683 = scalar_lea.vmem %s22, %s682
      %v684 = vld [vmem:[%s678] sm:$0xff]
      %v685 = vld [vmem:[%s678 + $0x8] sm:$0xff]
      %v686 = vld [vmem:[%s1] sm:$0xff]
      %v687 = vld [vmem:[%s1 + $0x8] sm:$0xff]
      %v688 = vld [vmem:[%s1 + $0x10] sm:$0xff]
      %v689 = vld [vmem:[%s1 + $0x18] sm:$0xff]
      %v690 = vld [vmem:[%s1 + $0x20] sm:$0xff]
      %v691 = vld [vmem:[%s1 + $0x28] sm:$0xff]
      %v692 = vld [vmem:[%s2] sm:$0xff]
      %v693 = vld [vmem:[%s2 + $0x8] sm:$0xff]
      %vm694 = vcmask 392192
      %v696 = vsel %vm694, %v684, 0
      %v699 = vsel %vm694, %v685, 0
      %701 = vmatpush.msra.mxu0 0.0
      %702 = vmatpush.msra.mxu0 0.0
      %703 = vmatpush.msra.mxu0 0.0
      %704 = vmatpush.msra.mxu0 0.0
      %705 = vmatpush.msra.mxu0 0.0
      %706 = vmatpush.msra.mxu0 0.0
      %707 = vmatpush.msra.mxu0 0.0
      %708 = vmatpush.msra.mxu0 0.0
      %709 = vmatpush.msra.mxu0 0.0
      %710 = vmatpush.msra.mxu0 0.0
      %711 = vmatpush.msra.mxu0 %v691
      %712 = vmatpush.msra.mxu0 %v690
      %713 = vmatpush.msra.mxu0 %v689
      %714 = vmatpush.msra.mxu0 %v688
      %715 = vmatpush.msra.mxu0 %v687
      %716 = vmatpush.msra.mxu0 %v686
      %717 = vmatmul.f32.gmra.mxu0 %v696
      %v718 = vpop.f32.mrf.mxu0
      %v719 = vadd.f32 %v692, %v718
      %720 = vmatmul.f32.gmra.mxu0 %v699
      %v721 = vpop.f32.mrf.mxu0
      %v722 = vadd.f32 %v693, %v721
      %723 = vdwg.mxu0
      %v724 = vld [vmem:[%s6] sm:$0x1]
      %v725 = vld [vmem:[%s7] sm:$0x1]
      %vm726 = vcmask 261120
      %v727 = vsel %vm726, %v719, 0.0
      %728 = vadd.xlane.f32.xlu0 %v727
      %v729 = vpop.xlane.xlu0 %728
      %v730 = vsel %vm726, %v722, 0.0
      %731 = vadd.xlane.f32.xlu0 %v730
      %v732 = vpop.xlane.xlu0 %731
      %v733 = vrcp.pop 32.0
      %v734 = vmul.f32 32.0, %v733
      %v735 = vsub.f32 1.0, %v734
      %v736 = vmul.f32 %v733, %v735
      %v737 = vadd.f32 %v733, %v736
      %vm738 = vweird.f32 %v733
      %v739 = vsel %vm738, %v733, %v737
      %v740 = vmul.f32 %v729, %v739
      %v741 = vmul.f32 %v732, %v739
      %v742 = vsub.f32 %v719, %v740
      %v743 = vsub.f32 %v722, %v741
      %v744 = vmul.f32 %v742, %v742
      %v745 = vmul.f32 %v743, %v743
      %v746 = vsel %vm726, %v744, 0.0
      %747 = vadd.xlane.f32.xlu0 %v746
      %v748 = vpop.xlane.xlu0 %747
      %v749 = vsel %vm726, %v745, 0.0
      %750 = vadd.xlane.f32.xlu0 %v749
      %v751 = vpop.xlane.xlu0 %750
      %v752 = vmul.f32 %v748, %v739
      %v753 = vmul.f32 %v751, %v739
      %v754 = vadd.f32 %v752, 1e-06
      %v755 = vadd.f32 %v753, 1e-06
      %v756 = vrsqrt.pop %v754
      %v757 = vmul.f32 %v756, %v754
      %v758 = vmul.f32 %v757, %v756
      %v759 = vmul.f32 0.5, %v758
      %v760 = vsub.f32 1.5, %v759
      %v761 = vmul.f32 %v756, %v760
      %vm762 = vweird.f32 %v754
      %vm763 = vweird.f32 %v756
      %vm764 = vmor %vm762, %vm763
      %v765 = vsel %vm764, %v756, %v761
      %v766 = vrsqrt.pop %v755
      %v767 = vmul.f32 %v766, %v755
      %v768 = vmul.f32 %v767, %v766
      %v769 = vmul.f32 0.5, %v768
      %v770 = vsub.f32 1.5, %v769
      %v771 = vmul.f32 %v766, %v770
      %vm772 = vweird.f32 %v755
      %vm773 = vweird.f32 %v766
      %vm774 = vmor %vm772, %vm773
      %v775 = vsel %vm774, %v766, %v771
      %v776 = vmul.f32 %v742, %v765
      %v777 = vmul.f32 %v743, %v775
      %v779 = vperm.slane %v724, 0
      %v781 = vmul.f32 %v776, %v779
      %v782 = vmul.f32 %v777, %v779
      %v784 = vperm.slane %v725, 0
      %v786 = vadd.f32 %v781, %v784
      %v787 = vadd.f32 %v782, %v784
      %v788 = vld [vmem:[%s3] sm:$0xff]
      %v789 = vld [vmem:[%s3 + $0x8] sm:$0xff]
      %v790 = vld [vmem:[%s3 + $0x10] sm:$0xff]
      %v791 = vld [vmem:[%s3 + $0x18] sm:$0xff]
      %vm792 = vcmask 130048
      %v794 = vsel %vm792, %v788, 0
      %v797 = vsel %vm792, %v789, 0
      %v800 = vsel %vm792, %v790, 0
      %v803 = vsel %vm792, %v791, 0
      %805 = vmatpush.msra.mxu0 0.0
      %806 = vmatpush.msra.mxu0 0.0
      %807 = vmatpush.msra.mxu0 0.0
      %808 = vmatpush.msra.mxu0 0.0
      %809 = vmatpush.msra.mxu0 0.0
      %810 = vmatpush.msra.mxu0 0.0
      %811 = vmatpush.msra.mxu0 0.0
      %812 = vmatpush.msra.mxu0 0.0
      %813 = vmatpush.msra.mxu0 0.0
      %814 = vmatpush.msra.mxu0 0.0
      %815 = vmatpush.msra.mxu0 0.0
      %816 = vmatpush.msra.mxu0 0.0
      %817 = vmatpush.msra.mxu0 0.0
      %818 = vmatpush.msra.mxu0 0.0
      %819 = vmatpush.msra.mxu0 %v787
      %820 = vmatpush.msra.mxu0 %v786
      %821 = vmatmul.f32.gmra.mxu0 %v794
      %v822 = vpop.f32.mrf.mxu0
      %v823 = vadd.f32 0.0, %v822
      %824 = vmatmul.f32.gmra.mxu0 %v797
      %v825 = vpop.f32.mrf.mxu0
      %v826 = vadd.f32 0.0, %v825
      %827 = vmatmul.f32.gmra.mxu0 %v800
      %v828 = vpop.f32.mrf.mxu0
      %v829 = vadd.f32 0.0, %v828
      %830 = vmatmul.f32.gmra.mxu0 %v803
      %v831 = vpop.f32.mrf.mxu0
      %v832 = vadd.f32 0.0, %v831
      %833 = vdwg.mxu0
      %836 = vrot.lane.b32.xlu0 %v829, 32
      %v837 = vpop.permute.xlu0 %836
      %838 = vrot.lane.b32.xlu0 %v832, 32
      %v839 = vpop.permute.xlu0 %838
      %v842 = vsel %vm726, %v823, %v837
      %v843 = vsel %vm726, %v826, %v839
      %v844 = vld [vmem:[%s8] sm:$0xff]
      %v845 = vld [vmem:[%s8 + $0x8] sm:$0xff]
      %v846 = vld [vmem:[%s8 + $0x10] sm:$0xff]
      %v847 = vld [vmem:[%s8 + $0x18] sm:$0xff]
      %v848 = vld [vmem:[%s8 + $0x20] sm:$0xff]
      %v849 = vld [vmem:[%s8 + $0x28] sm:$0xff]
      %v850 = vld [vmem:[%s8 + $0x30] sm:$0xff]
      %v851 = vld [vmem:[%s8 + $0x38] sm:$0xff]
      %v852 = vld [vmem:[%s9] sm:$0x1]
      %v854 = vperm.slane %v852, 0
      %vm856 = vcmask 523264
      %v858 = vsel %vm856, %v842, 0
      %v861 = vsel %vm856, %v843, 0
      %863 = vmatpush.msra.mxu0 0.0
      %864 = vmatpush.msra.mxu0 0.0
      %865 = vmatpush.msra.mxu0 0.0
      %866 = vmatpush.msra.mxu0 0.0
      %867 = vmatpush.msra.mxu0 0.0
      %868 = vmatpush.msra.mxu0 0.0
      %869 = vmatpush.msra.mxu0 0.0
      %870 = vmatpush.msra.mxu0 0.0
      %871 = vmatpush.msra.mxu0 %v851
      %872 = vmatpush.msra.mxu0 %v850
      %873 = vmatpush.msra.mxu0 %v849
      %874 = vmatpush.msra.mxu0 %v848
      %875 = vmatpush.msra.mxu0 %v847
      %876 = vmatpush.msra.mxu0 %v846
      %877 = vmatpush.msra.mxu0 %v845
      %878 = vmatpush.msra.mxu0 %v844
      %879 = vmatmul.f32.gmra.mxu0 %v858
      %v880 = vpop.f32.mrf.mxu0
      %v881 = vadd.f32 %v854, %v880
      %882 = vmatmul.f32.gmra.mxu0 %v861
      %v883 = vpop.f32.mrf.mxu0
      %v884 = vadd.f32 %v854, %v883
      %885 = vdwg.mxu0
      %v886 = vmax.f32 %v881, 0.0
      %v887 = vmax.f32 %v884, 0.0
      %v888 = vld [vmem:[%s10] sm:$0xff]
      %v889 = vld [vmem:[%s10 + $0x8] sm:$0xff]
      %v890 = vld [vmem:[%s10 + $0x10] sm:$0xff]
      %v891 = vld [vmem:[%s10 + $0x18] sm:$0xff]
      %v892 = vld [vmem:[%s10 + $0x20] sm:$0xff]
      %v893 = vld [vmem:[%s10 + $0x28] sm:$0xff]
      %v894 = vld [vmem:[%s10 + $0x30] sm:$0xff]
      %v895 = vld [vmem:[%s10 + $0x38] sm:$0xff]
      %v896 = vld [vmem:[%s11] sm:$0x1]
      %v898 = vperm.slane %v896, 0
      %v901 = vsel %vm856, %v886, 0
      %v904 = vsel %vm856, %v887, 0
      %906 = vmatpush.msra.mxu0 0.0
      %907 = vmatpush.msra.mxu0 0.0
      %908 = vmatpush.msra.mxu0 0.0
      %909 = vmatpush.msra.mxu0 0.0
      %910 = vmatpush.msra.mxu0 0.0
      %911 = vmatpush.msra.mxu0 0.0
      %912 = vmatpush.msra.mxu0 0.0
      %913 = vmatpush.msra.mxu0 0.0
      %914 = vmatpush.msra.mxu0 %v895
      %915 = vmatpush.msra.mxu0 %v894
      %916 = vmatpush.msra.mxu0 %v893
      %917 = vmatpush.msra.mxu0 %v892
      %918 = vmatpush.msra.mxu0 %v891
      %919 = vmatpush.msra.mxu0 %v890
      %920 = vmatpush.msra.mxu0 %v889
      %921 = vmatpush.msra.mxu0 %v888
      %922 = vmatmul.f32.gmra.mxu0 %v901
      %v923 = vpop.f32.mrf.mxu0
      %v924 = vadd.f32 %v898, %v923
      %925 = vmatmul.f32.gmra.mxu0 %v904
      %v926 = vpop.f32.mrf.mxu0
      %v927 = vadd.f32 %v898, %v926
      %928 = vdwg.mxu0
      %vm929 = vcmp.gt.f32.partialorder %v924, 0.01
      %vm930 = vcmp.gt.f32.partialorder %v927, 0.01
      %v931 = vsub.f32 %v924, 0.01
      %v932 = vsub.f32 %v927, 0.01
      %vm933 = vcmp.lt.f32.partialorder %v924, -0.01
      %vm934 = vcmp.lt.f32.partialorder %v927, -0.01
      %v935 = vadd.f32 %v924, 0.01
      %v936 = vadd.f32 %v927, 0.01
      %v937 = vsel %vm933, %v935, 0.0
      %v938 = vsel %vm934, %v936, 0.0
      %v939 = vsel %vm929, %v931, %v937
      %v940 = vsel %vm930, %v932, %v938
      %v941 = vld [vmem:[%s4] sm:$0xff]
      %v942 = vld [vmem:[%s4 + $0x8] sm:$0xff]
      %v943 = vld [vmem:[%s5] sm:$0xff]
      %v944 = vld [vmem:[%s5 + $0x8] sm:$0xff]
      %947 = vrot.lane.b32.xlu0 %v939, 96
      %v948 = vpop.permute.xlu0 %947
      %949 = vrot.lane.b32.xlu0 %v940, 96
      %v950 = vpop.permute.xlu0 %949
      %v954 = vsel %vm792, %v943, 0
      %v957 = vsel %vm792, %v944, 0
      %959 = vmatpush.msra.mxu0 0.0
      %960 = vmatpush.msra.mxu0 0.0
      %961 = vmatpush.msra.mxu0 0.0
      %962 = vmatpush.msra.mxu0 0.0
      %963 = vmatpush.msra.mxu0 0.0
      %964 = vmatpush.msra.mxu0 0.0
      %965 = vmatpush.msra.mxu0 0.0
      %966 = vmatpush.msra.mxu0 0.0
      %967 = vmatpush.msra.mxu0 0.0
      %968 = vmatpush.msra.mxu0 0.0
      %969 = vmatpush.msra.mxu0 0.0
      %970 = vmatpush.msra.mxu0 0.0
      %971 = vmatpush.msra.mxu0 0.0
      %972 = vmatpush.msra.mxu0 0.0
      %973 = vmatpush.msra.mxu0 %v950
      %974 = vmatpush.msra.mxu0 %v948
      %975 = vmatmul.f32.gmra.mxu0 %v954
      %v976 = vpop.f32.mrf.mxu0
      %v977 = vadd.f32 0.0, %v976
      %978 = vmatmul.f32.gmra.mxu0 %v957
      %v979 = vpop.f32.mrf.mxu0
      %v980 = vadd.f32 0.0, %v979
      %981 = vdwg.mxu0
      %v983 = vsel %vm792, %v941, 0
      %v986 = vsel %vm792, %v942, 0
      %988 = vmatpush.msra.mxu0 0.0
      %989 = vmatpush.msra.mxu0 0.0
      %990 = vmatpush.msra.mxu0 0.0
      %991 = vmatpush.msra.mxu0 0.0
      %992 = vmatpush.msra.mxu0 0.0
      %993 = vmatpush.msra.mxu0 0.0
      %994 = vmatpush.msra.mxu0 0.0
      %995 = vmatpush.msra.mxu0 0.0
      %996 = vmatpush.msra.mxu0 0.0
      %997 = vmatpush.msra.mxu0 0.0
      %998 = vmatpush.msra.mxu0 0.0
      %999 = vmatpush.msra.mxu0 0.0
      %1000 = vmatpush.msra.mxu0 0.0
      %1001 = vmatpush.msra.mxu0 0.0
      %1002 = vmatpush.msra.mxu0 %v940
      %1003 = vmatpush.msra.mxu0 %v939
      %1004 = vmatmul.f32.gmra.mxu0 %v983
      %v1005 = vpop.f32.mrf.mxu0
      %v1006 = vadd.f32 %v977, %v1005
      %1007 = vmatmul.f32.gmra.mxu0 %v986
      %v1008 = vpop.f32.mrf.mxu0
      %v1009 = vadd.f32 %v980, %v1008
      %1010 = vdwg.mxu0
      %v1011 = vadd.f32 %v1006, %v786
      %v1012 = vadd.f32 %v1009, %v787
      %v1013 = vadd.f32 %v1011, %v719
      %v1014 = vadd.f32 %v1012, %v722
      %v1015 = vld [vmem:[%s12] sm:$0x1]
      %v1016 = vld [vmem:[%s13] sm:$0x1]
      %v1017 = vsel %vm726, %v1013, 0.0
      %1018 = vadd.xlane.f32.xlu0 %v1017
      %v1019 = vpop.xlane.xlu0 %1018
      %v1020 = vsel %vm726, %v1014, 0.0
      %1021 = vadd.xlane.f32.xlu0 %v1020
      %v1022 = vpop.xlane.xlu0 %1021
      %v1023 = vmul.f32 %v1019, %v739
      %v1024 = vmul.f32 %v1022, %v739
      %v1025 = vsub.f32 %v1013, %v1023
      %v1026 = vsub.f32 %v1014, %v1024
      %v1027 = vmul.f32 %v1025, %v1025
      %v1028 = vmul.f32 %v1026, %v1026
      %v1029 = vsel %vm726, %v1027, 0.0
      %1030 = vadd.xlane.f32.xlu0 %v1029
      %v1031 = vpop.xlane.xlu0 %1030
      %v1032 = vsel %vm726, %v1028, 0.0
      %1033 = vadd.xlane.f32.xlu0 %v1032
      %v1034 = vpop.xlane.xlu0 %1033
      %v1035 = vmul.f32 %v1031, %v739
      %v1036 = vmul.f32 %v1034, %v739
      %v1037 = vadd.f32 %v1035, 1e-06
      %v1038 = vadd.f32 %v1036, 1e-06
      %v1039 = vrsqrt.pop %v1037
      %v1040 = vmul.f32 %v1039, %v1037
      %v1041 = vmul.f32 %v1040, %v1039
      %v1042 = vmul.f32 0.5, %v1041
      %v1043 = vsub.f32 1.5, %v1042
      %v1044 = vmul.f32 %v1039, %v1043
      %vm1045 = vweird.f32 %v1037
      %vm1046 = vweird.f32 %v1039
      %vm1047 = vmor %vm1045, %vm1046
      %v1048 = vsel %vm1047, %v1039, %v1044
      %v1049 = vrsqrt.pop %v1038
      %v1050 = vmul.f32 %v1049, %v1038
      %v1051 = vmul.f32 %v1050, %v1049
      %v1052 = vmul.f32 0.5, %v1051
      %v1053 = vsub.f32 1.5, %v1052
      %v1054 = vmul.f32 %v1049, %v1053
      %vm1055 = vweird.f32 %v1038
      %vm1056 = vweird.f32 %v1049
      %vm1057 = vmor %vm1055, %vm1056
      %v1058 = vsel %vm1057, %v1049, %v1054
      %v1059 = vmul.f32 %v1025, %v1048
      %v1060 = vmul.f32 %v1026, %v1058
      %v1062 = vperm.slane %v1015, 0
      %v1064 = vmul.f32 %v1059, %v1062
      %v1065 = vmul.f32 %v1060, %v1062
      %v1067 = vperm.slane %v1016, 0
      %v1069 = vadd.f32 %v1064, %v1067
      %v1070 = vadd.f32 %v1065, %v1067
      %v1071 = vld [vmem:[%s14] sm:$0xff]
      %v1072 = vld [vmem:[%s14 + $0x8] sm:$0xff]
      %v1073 = vld [vmem:[%s14 + $0x10] sm:$0xff]
      %v1074 = vld [vmem:[%s14 + $0x18] sm:$0xff]
      %v1075 = vld [vmem:[%s15] sm:$0x1]
      %v1077 = vperm.slane %v1075, 0
      %v1080 = vsel %vm726, %v1069, 0
      %v1083 = vsel %vm726, %v1070, 0
      %1085 = vmatpush.msra.mxu0 0.0
      %1086 = vmatpush.msra.mxu0 0.0
      %1087 = vmatpush.msra.mxu0 0.0
      %1088 = vmatpush.msra.mxu0 0.0
      %1089 = vmatpush.msra.mxu0 0.0
      %1090 = vmatpush.msra.mxu0 0.0
      %1091 = vmatpush.msra.mxu0 0.0
      %1092 = vmatpush.msra.mxu0 0.0
      %1093 = vmatpush.msra.mxu0 0.0
      %1094 = vmatpush.msra.mxu0 0.0
      %1095 = vmatpush.msra.mxu0 0.0
      %1096 = vmatpush.msra.mxu0 0.0
      %1097 = vmatpush.msra.mxu0 %v1074
      %1098 = vmatpush.msra.mxu0 %v1073
      %1099 = vmatpush.msra.mxu0 %v1072
      %1100 = vmatpush.msra.mxu0 %v1071
      %1101 = vmatmul.f32.gmra.mxu0 %v1080
      %v1102 = vpop.f32.mrf.mxu0
      %v1103 = vadd.f32 %v1077, %v1102
      %1104 = vmatmul.f32.gmra.mxu0 %v1083
      %v1105 = vpop.f32.mrf.mxu0
      %v1106 = vadd.f32 %v1077, %v1105
      %1107 = vdwg.mxu0
      %v1108 = vmul.f32 %v1103, %v1103
      %v1109 = vmul.f32 %v1106, %v1106
      %v1110 = vmul.f32 %v1103, %v1108
      %v1111 = vmul.f32 %v1106, %v1109
      %v1112 = vmul.f32 %v1110, 0.044715
      %v1113 = vmul.f32 %v1111, 0.044715
      %v1114 = vadd.f32 %v1103, %v1112
      %v1115 = vadd.f32 %v1106, %v1113
      %v1116 = vmul.f32 %v1114, 0.7978846
      %v1117 = vmul.f32 %v1115, 0.7978846
      %v1118 = vtanh.pop %v1116
      %v1119 = vtanh.pop %v1117
      %v1120 = vadd.f32 %v1118, 1.0
      %v1121 = vadd.f32 %v1119, 1.0
      %v1122 = vmul.f32 %v1120, 0.5
      %v1123 = vmul.f32 %v1121, 0.5
      %v1124 = vmul.f32 %v1103, %v1122
      %v1125 = vmul.f32 %v1106, %v1123
      %v1126 = vld [vmem:[%s16] sm:$0xff]
      %v1127 = vld [vmem:[%s16 + $0x8] sm:$0xff]
      %v1128 = vld [vmem:[%s16 + $0x10] sm:$0xff]
      %v1129 = vld [vmem:[%s16 + $0x18] sm:$0xff]
      %v1130 = vld [vmem:[%s16 + $0x20] sm:$0xff]
      %v1131 = vld [vmem:[%s16 + $0x28] sm:$0xff]
      %v1132 = vld [vmem:[%s16 + $0x30] sm:$0xff]
      %v1133 = vld [vmem:[%s16 + $0x38] sm:$0xff]
      %v1134 = vld [vmem:[%s16 + $0x40] sm:$0xff]
      %v1135 = vld [vmem:[%s16 + $0x48] sm:$0xff]
      %v1136 = vld [vmem:[%s16 + $0x50] sm:$0xff]
      %v1137 = vld [vmem:[%s16 + $0x58] sm:$0xff]
      %v1138 = vld [vmem:[%s16 + $0x60] sm:$0xff]
      %v1139 = vld [vmem:[%s16 + $0x68] sm:$0xff]
      %v1140 = vld [vmem:[%s16 + $0x70] sm:$0xff]
      %v1141 = vld [vmem:[%s16 + $0x78] sm:$0xff]
      %1142 = vmatpush.msra.mxu0 %v1141
      %1143 = vmatpush.msra.mxu0 %v1140
      %1144 = vmatpush.msra.mxu0 %v1139
      %1145 = vmatpush.msra.mxu0 %v1138
      %1146 = vmatpush.msra.mxu0 %v1137
      %1147 = vmatpush.msra.mxu0 %v1136
      %1148 = vmatpush.msra.mxu0 %v1135
      %1149 = vmatpush.msra.mxu0 %v1134
      %1150 = vmatpush.msra.mxu0 %v1133
      %1151 = vmatpush.msra.mxu0 %v1132
      %1152 = vmatpush.msra.mxu0 %v1131
      %1153 = vmatpush.msra.mxu0 %v1130
      %1154 = vmatpush.msra.mxu0 %v1129
      %1155 = vmatpush.msra.mxu0 %v1128
      %1156 = vmatpush.msra.mxu0 %v1127
      %1157 = vmatpush.msra.mxu0 %v1126
      %1158 = vmatmul.f32.gmra.mxu0 %v1124
      %v1159 = vpop.f32.mrf.mxu0
      %v1160 = vadd.f32 0.0, %v1159
      %1161 = vmatmul.f32.gmra.mxu0 %v1125
      %v1162 = vpop.f32.mrf.mxu0
      %v1163 = vadd.f32 0.0, %v1162
      %1164 = vdwg.mxu0
      %v1165 = vadd.f32 %v1013, %v1160
      %v1166 = vadd.f32 %v1014, %v1163
      %v1167 = vld [vmem:[%s17] sm:$0x1]
      %v1169 = vperm.slane %v1167, 0
      %v1171 = vadd.f32 %v1165, %v1169
      %v1172 = vadd.f32 %v1166, %v1169
      %s1173 = scalar_lea.vmem %s6, 1
      %v1174 = vld [vmem:[%s1173] sm:$0x1]
      %s1175 = scalar_lea.vmem %s7, 1
      %v1176 = vld [vmem:[%s1175] sm:$0x1]
      %v1177 = vsel %vm726, %v1171, 0.0
      %1178 = vadd.xlane.f32.xlu0 %v1177
      %v1179 = vpop.xlane.xlu0 %1178
      %v1180 = vsel %vm726, %v1172, 0.0
      %1181 = vadd.xlane.f32.xlu0 %v1180
      %v1182 = vpop.xlane.xlu0 %1181
      %v1183 = vmul.f32 %v1179, %v739
      %v1184 = vmul.f32 %v1182, %v739
      %v1185 = vsub.f32 %v1171, %v1183
      %v1186 = vsub.f32 %v1172, %v1184
      %v1187 = vmul.f32 %v1185, %v1185
      %v1188 = vmul.f32 %v1186, %v1186
      %v1189 = vsel %vm726, %v1187, 0.0
      %1190 = vadd.xlane.f32.xlu0 %v1189
      %v1191 = vpop.xlane.xlu0 %1190
      %v1192 = vsel %vm726, %v1188, 0.0
      %1193 = vadd.xlane.f32.xlu0 %v1192
      %v1194 = vpop.xlane.xlu0 %1193
      %v1195 = vmul.f32 %v1191, %v739
      %v1196 = vmul.f32 %v1194, %v739
      %v1197 = vadd.f32 %v1195, 1e-06
      %v1198 = vadd.f32 %v1196, 1e-06
      %v1199 = vrsqrt.pop %v1197
      %v1200 = vmul.f32 %v1199, %v1197
      %v1201 = vmul.f32 %v1200, %v1199
      %v1202 = vmul.f32 0.5, %v1201
      %v1203 = vsub.f32 1.5, %v1202
      %v1204 = vmul.f32 %v1199, %v1203
      %vm1205 = vweird.f32 %v1197
      %vm1206 = vweird.f32 %v1199
      %vm1207 = vmor %vm1205, %vm1206
      %v1208 = vsel %vm1207, %v1199, %v1204
      %v1209 = vrsqrt.pop %v1198
      %v1210 = vmul.f32 %v1209, %v1198
      %v1211 = vmul.f32 %v1210, %v1209
      %v1212 = vmul.f32 0.5, %v1211
      %v1213 = vsub.f32 1.5, %v1212
      %v1214 = vmul.f32 %v1209, %v1213
      %vm1215 = vweird.f32 %v1198
      %vm1216 = vweird.f32 %v1209
      %vm1217 = vmor %vm1215, %vm1216
      %v1218 = vsel %vm1217, %v1209, %v1214
      %v1219 = vmul.f32 %v1185, %v1208
      %v1220 = vmul.f32 %v1186, %v1218
      %v1222 = vperm.slane %v1174, 0
      %v1224 = vmul.f32 %v1219, %v1222
      %v1225 = vmul.f32 %v1220, %v1222
      %v1227 = vperm.slane %v1176, 0
      %v1229 = vadd.f32 %v1224, %v1227
      %v1230 = vadd.f32 %v1225, %v1227
      %1231 = vmatpush.msra.mxu0 0.0
      %1232 = vmatpush.msra.mxu0 0.0
      %1233 = vmatpush.msra.mxu0 0.0
      %1234 = vmatpush.msra.mxu0 0.0
      %1235 = vmatpush.msra.mxu0 0.0
      %1236 = vmatpush.msra.mxu0 0.0
      %1237 = vmatpush.msra.mxu0 0.0
      %1238 = vmatpush.msra.mxu0 0.0
      %1239 = vmatpush.msra.mxu0 0.0
      %1240 = vmatpush.msra.mxu0 0.0
      %1241 = vmatpush.msra.mxu0 0.0
      %1242 = vmatpush.msra.mxu0 0.0
      %1243 = vmatpush.msra.mxu0 0.0
      %1244 = vmatpush.msra.mxu0 0.0
      %1245 = vmatpush.msra.mxu0 %v1230
      %1246 = vmatpush.msra.mxu0 %v1229
      %1247 = vmatmul.f32.gmra.mxu0 %v794
      %v1248 = vpop.f32.mrf.mxu0
      %v1249 = vadd.f32 0.0, %v1248
      %1250 = vmatmul.f32.gmra.mxu0 %v797
      %v1251 = vpop.f32.mrf.mxu0
      %v1252 = vadd.f32 0.0, %v1251
      %1253 = vmatmul.f32.gmra.mxu0 %v800
      %v1254 = vpop.f32.mrf.mxu0
      %v1255 = vadd.f32 0.0, %v1254
      %1256 = vmatmul.f32.gmra.mxu0 %v803
      %v1257 = vpop.f32.mrf.mxu0
      %v1258 = vadd.f32 0.0, %v1257
      %1259 = vdwg.mxu0
      %1262 = vrot.lane.b32.xlu0 %v1255, 32
      %v1263 = vpop.permute.xlu0 %1262
      %1264 = vrot.lane.b32.xlu0 %v1258, 32
      %v1265 = vpop.permute.xlu0 %1264
      %v1268 = vsel %vm726, %v1249, %v1263
      %v1269 = vsel %vm726, %v1252, %v1265
      %s1270 = scalar_lea.vmem %s8, 64
      %v1271 = vld [vmem:[%s1270] sm:$0xff]
      %v1272 = vld [vmem:[%s1270 + $0x8] sm:$0xff]
      %v1273 = vld [vmem:[%s1270 + $0x10] sm:$0xff]
      %v1274 = vld [vmem:[%s1270 + $0x18] sm:$0xff]
      %v1275 = vld [vmem:[%s1270 + $0x20] sm:$0xff]
      %v1276 = vld [vmem:[%s1270 + $0x28] sm:$0xff]
      %v1277 = vld [vmem:[%s1270 + $0x30] sm:$0xff]
      %v1278 = vld [vmem:[%s1270 + $0x38] sm:$0xff]
      %s1279 = scalar_lea.vmem %s9, 1
      %v1280 = vld [vmem:[%s1279] sm:$0x1]
      %v1282 = vperm.slane %v1280, 0
      %v1285 = vsel %vm856, %v1268, 0
      %v1288 = vsel %vm856, %v1269, 0
      %1290 = vmatpush.msra.mxu0 0.0
      %1291 = vmatpush.msra.mxu0 0.0
      %1292 = vmatpush.msra.mxu0 0.0
      %1293 = vmatpush.msra.mxu0 0.0
      %1294 = vmatpush.msra.mxu0 0.0
      %1295 = vmatpush.msra.mxu0 0.0
      %1296 = vmatpush.msra.mxu0 0.0
      %1297 = vmatpush.msra.mxu0 0.0
      %1298 = vmatpush.msra.mxu0 %v1278
      %1299 = vmatpush.msra.mxu0 %v1277
      %1300 = vmatpush.msra.mxu0 %v1276
      %1301 = vmatpush.msra.mxu0 %v1275
      %1302 = vmatpush.msra.mxu0 %v1274
      %1303 = vmatpush.msra.mxu0 %v1273
      %1304 = vmatpush.msra.mxu0 %v1272
      %1305 = vmatpush.msra.mxu0 %v1271
      %1306 = vmatmul.f32.gmra.mxu0 %v1285
      %v1307 = vpop.f32.mrf.mxu0
      %v1308 = vadd.f32 %v1282, %v1307
      %1309 = vmatmul.f32.gmra.mxu0 %v1288
      %v1310 = vpop.f32.mrf.mxu0
      %v1311 = vadd.f32 %v1282, %v1310
      %1312 = vdwg.mxu0
      %v1313 = vmax.f32 %v1308, 0.0
      %v1314 = vmax.f32 %v1311, 0.0
      %s1315 = scalar_lea.vmem %s10, 64
      %v1316 = vld [vmem:[%s1315] sm:$0xff]
      %v1317 = vld [vmem:[%s1315 + $0x8] sm:$0xff]
      %v1318 = vld [vmem:[%s1315 + $0x10] sm:$0xff]
      %v1319 = vld [vmem:[%s1315 + $0x18] sm:$0xff]
      %v1320 = vld [vmem:[%s1315 + $0x20] sm:$0xff]
      %v1321 = vld [vmem:[%s1315 + $0x28] sm:$0xff]
      %v1322 = vld [vmem:[%s1315 + $0x30] sm:$0xff]
      %v1323 = vld [vmem:[%s1315 + $0x38] sm:$0xff]
      %s1324 = scalar_lea.vmem %s11, 1
      %v1325 = vld [vmem:[%s1324] sm:$0x1]
      %v1327 = vperm.slane %v1325, 0
      %v1330 = vsel %vm856, %v1313, 0
      %v1333 = vsel %vm856, %v1314, 0
      %1335 = vmatpush.msra.mxu0 0.0
      %1336 = vmatpush.msra.mxu0 0.0
      %1337 = vmatpush.msra.mxu0 0.0
      %1338 = vmatpush.msra.mxu0 0.0
      %1339 = vmatpush.msra.mxu0 0.0
      %1340 = vmatpush.msra.mxu0 0.0
      %1341 = vmatpush.msra.mxu0 0.0
      %1342 = vmatpush.msra.mxu0 0.0
      %1343 = vmatpush.msra.mxu0 %v1323
      %1344 = vmatpush.msra.mxu0 %v1322
      %1345 = vmatpush.msra.mxu0 %v1321
      %1346 = vmatpush.msra.mxu0 %v1320
      %1347 = vmatpush.msra.mxu0 %v1319
      %1348 = vmatpush.msra.mxu0 %v1318
      %1349 = vmatpush.msra.mxu0 %v1317
      %1350 = vmatpush.msra.mxu0 %v1316
      %1351 = vmatmul.f32.gmra.mxu0 %v1330
      %v1352 = vpop.f32.mrf.mxu0
      %v1353 = vadd.f32 %v1327, %v1352
      %1354 = vmatmul.f32.gmra.mxu0 %v1333
      %v1355 = vpop.f32.mrf.mxu0
      %v1356 = vadd.f32 %v1327, %v1355
      %1357 = vdwg.mxu0
      %vm1358 = vcmp.gt.f32.partialorder %v1353, 0.01
      %vm1359 = vcmp.gt.f32.partialorder %v1356, 0.01
      %v1360 = vsub.f32 %v1353, 0.01
      %v1361 = vsub.f32 %v1356, 0.01
      %vm1362 = vcmp.lt.f32.partialorder %v1353, -0.01
      %vm1363 = vcmp.lt.f32.partialorder %v1356, -0.01
      %v1364 = vadd.f32 %v1353, 0.01
      %v1365 = vadd.f32 %v1356, 0.01
      %v1366 = vsel %vm1362, %v1364, 0.0
      %v1367 = vsel %vm1363, %v1365, 0.0
      %v1368 = vsel %vm1358, %v1360, %v1366
      %v1369 = vsel %vm1359, %v1361, %v1367
      %1372 = vrot.lane.b32.xlu0 %v1368, 96
      %v1373 = vpop.permute.xlu0 %1372
      %1374 = vrot.lane.b32.xlu0 %v1369, 96
      %v1375 = vpop.permute.xlu0 %1374
      %1378 = vmatpush.msra.mxu0 0.0
      %1379 = vmatpush.msra.mxu0 0.0
      %1380 = vmatpush.msra.mxu0 0.0
      %1381 = vmatpush.msra.mxu0 0.0
      %1382 = vmatpush.msra.mxu0 0.0
      %1383 = vmatpush.msra.mxu0 0.0
      %1384 = vmatpush.msra.mxu0 0.0
      %1385 = vmatpush.msra.mxu0 0.0
      %1386 = vmatpush.msra.mxu0 0.0
      %1387 = vmatpush.msra.mxu0 0.0
      %1388 = vmatpush.msra.mxu0 0.0
      %1389 = vmatpush.msra.mxu0 0.0
      %1390 = vmatpush.msra.mxu0 0.0
      %1391 = vmatpush.msra.mxu0 0.0
      %1392 = vmatpush.msra.mxu0 %v1375
      %1393 = vmatpush.msra.mxu0 %v1373
      %1394 = vmatmul.f32.gmra.mxu0 %v954
      %v1395 = vpop.f32.mrf.mxu0
      %v1396 = vadd.f32 0.0, %v1395
      %1397 = vmatmul.f32.gmra.mxu0 %v957
      %v1398 = vpop.f32.mrf.mxu0
      %v1399 = vadd.f32 0.0, %v1398
      %1400 = vdwg.mxu0
      %1401 = vmatpush.msra.mxu0 0.0
      %1402 = vmatpush.msra.mxu0 0.0
      %1403 = vmatpush.msra.mxu0 0.0
      %1404 = vmatpush.msra.mxu0 0.0
      %1405 = vmatpush.msra.mxu0 0.0
      %1406 = vmatpush.msra.mxu0 0.0
      %1407 = vmatpush.msra.mxu0 0.0
      %1408 = vmatpush.msra.mxu0 0.0
      %1409 = vmatpush.msra.mxu0 0.0
      %1410 = vmatpush.msra.mxu0 0.0
      %1411 = vmatpush.msra.mxu0 0.0
      %1412 = vmatpush.msra.mxu0 0.0
      %1413 = vmatpush.msra.mxu0 0.0
      %1414 = vmatpush.msra.mxu0 0.0
      %1415 = vmatpush.msra.mxu0 %v1369
      %1416 = vmatpush.msra.mxu0 %v1368
      %1417 = vmatmul.f32.gmra.mxu0 %v983
      %v1418 = vpop.f32.mrf.mxu0
      %v1419 = vadd.f32 %v1396, %v1418
      %1420 = vmatmul.f32.gmra.mxu0 %v986
      %v1421 = vpop.f32.mrf.mxu0
      %v1422 = vadd.f32 %v1399, %v1421
      %1423 = vdwg.mxu0
      %v1424 = vadd.f32 %v1419, %v1229
      %v1425 = vadd.f32 %v1422, %v1230
      %v1426 = vadd.f32 %v1424, %v1171
      %v1427 = vadd.f32 %v1425, %v1172
      %s1428 = scalar_lea.vmem %s12, 1
      %v1429 = vld [vmem:[%s1428] sm:$0x1]
      %s1430 = scalar_lea.vmem %s13, 1
      %v1431 = vld [vmem:[%s1430] sm:$0x1]
      %v1432 = vsel %vm726, %v1426, 0.0
      %1433 = vadd.xlane.f32.xlu0 %v1432
      %v1434 = vpop.xlane.xlu0 %1433
      %v1435 = vsel %vm726, %v1427, 0.0
      %1436 = vadd.xlane.f32.xlu0 %v1435
      %v1437 = vpop.xlane.xlu0 %1436
      %v1438 = vmul.f32 %v1434, %v739
      %v1439 = vmul.f32 %v1437, %v739
      %v1440 = vsub.f32 %v1426, %v1438
      %v1441 = vsub.f32 %v1427, %v1439
      %v1442 = vmul.f32 %v1440, %v1440
      %v1443 = vmul.f32 %v1441, %v1441
      %v1444 = vsel %vm726, %v1442, 0.0
      %1445 = vadd.xlane.f32.xlu0 %v1444
      %v1446 = vpop.xlane.xlu0 %1445
      %v1447 = vsel %vm726, %v1443, 0.0
      %1448 = vadd.xlane.f32.xlu0 %v1447
      %v1449 = vpop.xlane.xlu0 %1448
      %v1450 = vmul.f32 %v1446, %v739
      %v1451 = vmul.f32 %v1449, %v739
      %v1452 = vadd.f32 %v1450, 1e-06
      %v1453 = vadd.f32 %v1451, 1e-06
      %v1454 = vrsqrt.pop %v1452
      %v1455 = vmul.f32 %v1454, %v1452
      %v1456 = vmul.f32 %v1455, %v1454
      %v1457 = vmul.f32 0.5, %v1456
      %v1458 = vsub.f32 1.5, %v1457
      %v1459 = vmul.f32 %v1454, %v1458
      %vm1460 = vweird.f32 %v1452
      %vm1461 = vweird.f32 %v1454
      %vm1462 = vmor %vm1460, %vm1461
      %v1463 = vsel %vm1462, %v1454, %v1459
      %v1464 = vrsqrt.pop %v1453
      %v1465 = vmul.f32 %v1464, %v1453
      %v1466 = vmul.f32 %v1465, %v1464
      %v1467 = vmul.f32 0.5, %v1466
      %v1468 = vsub.f32 1.5, %v1467
      %v1469 = vmul.f32 %v1464, %v1468
      %vm1470 = vweird.f32 %v1453
      %vm1471 = vweird.f32 %v1464
      %vm1472 = vmor %vm1470, %vm1471
      %v1473 = vsel %vm1472, %v1464, %v1469
      %v1474 = vmul.f32 %v1440, %v1463
      %v1475 = vmul.f32 %v1441, %v1473
      %v1477 = vperm.slane %v1429, 0
      %v1479 = vmul.f32 %v1474, %v1477
      %v1480 = vmul.f32 %v1475, %v1477
      %v1482 = vperm.slane %v1431, 0
      %v1484 = vadd.f32 %v1479, %v1482
      %v1485 = vadd.f32 %v1480, %v1482
      %s1486 = scalar_lea.vmem %s14, 32
      %v1487 = vld [vmem:[%s1486] sm:$0xff]
      %v1488 = vld [vmem:[%s1486 + $0x8] sm:$0xff]
      %v1489 = vld [vmem:[%s1486 + $0x10] sm:$0xff]
      %v1490 = vld [vmem:[%s1486 + $0x18] sm:$0xff]
      %s1491 = scalar_lea.vmem %s15, 1
      %v1492 = vld [vmem:[%s1491] sm:$0x1]
      %v1494 = vperm.slane %v1492, 0
      %v1497 = vsel %vm726, %v1484, 0
      %v1500 = vsel %vm726, %v1485, 0
      %1502 = vmatpush.msra.mxu0 0.0
      %1503 = vmatpush.msra.mxu0 0.0
      %1504 = vmatpush.msra.mxu0 0.0
      %1505 = vmatpush.msra.mxu0 0.0
      %1506 = vmatpush.msra.mxu0 0.0
      %1507 = vmatpush.msra.mxu0 0.0
      %1508 = vmatpush.msra.mxu0 0.0
      %1509 = vmatpush.msra.mxu0 0.0
      %1510 = vmatpush.msra.mxu0 0.0
      %1511 = vmatpush.msra.mxu0 0.0
      %1512 = vmatpush.msra.mxu0 0.0
      %1513 = vmatpush.msra.mxu0 0.0
      %1514 = vmatpush.msra.mxu0 %v1490
      %1515 = vmatpush.msra.mxu0 %v1489
      %1516 = vmatpush.msra.mxu0 %v1488
      %1517 = vmatpush.msra.mxu0 %v1487
      %1518 = vmatmul.f32.gmra.mxu0 %v1497
      %v1519 = vpop.f32.mrf.mxu0
      %v1520 = vadd.f32 %v1494, %v1519
      %1521 = vmatmul.f32.gmra.mxu0 %v1500
      %v1522 = vpop.f32.mrf.mxu0
      %v1523 = vadd.f32 %v1494, %v1522
      %1524 = vdwg.mxu0
      %v1525 = vmul.f32 %v1520, %v1520
      %v1526 = vmul.f32 %v1523, %v1523
      %v1527 = vmul.f32 %v1520, %v1525
      %v1528 = vmul.f32 %v1523, %v1526
      %v1529 = vmul.f32 %v1527, 0.044715
      %v1530 = vmul.f32 %v1528, 0.044715
      %v1531 = vadd.f32 %v1520, %v1529
      %v1532 = vadd.f32 %v1523, %v1530
      %v1533 = vmul.f32 %v1531, 0.7978846
      %v1534 = vmul.f32 %v1532, 0.7978846
      %v1535 = vtanh.pop %v1533
      %v1536 = vtanh.pop %v1534
      %v1537 = vadd.f32 %v1535, 1.0
      %v1538 = vadd.f32 %v1536, 1.0
      %v1539 = vmul.f32 %v1537, 0.5
      %v1540 = vmul.f32 %v1538, 0.5
      %v1541 = vmul.f32 %v1520, %v1539
      %v1542 = vmul.f32 %v1523, %v1540
      %s1543 = scalar_lea.vmem %s16, 128
      %v1544 = vld [vmem:[%s1543] sm:$0xff]
      %v1545 = vld [vmem:[%s1543 + $0x8] sm:$0xff]
      %v1546 = vld [vmem:[%s1543 + $0x10] sm:$0xff]
      %v1547 = vld [vmem:[%s1543 + $0x18] sm:$0xff]
      %v1548 = vld [vmem:[%s1543 + $0x20] sm:$0xff]
      %v1549 = vld [vmem:[%s1543 + $0x28] sm:$0xff]
      %v1550 = vld [vmem:[%s1543 + $0x30] sm:$0xff]
      %v1551 = vld [vmem:[%s1543 + $0x38] sm:$0xff]
      %v1552 = vld [vmem:[%s1543 + $0x40] sm:$0xff]
      %v1553 = vld [vmem:[%s1543 + $0x48] sm:$0xff]
      %v1554 = vld [vmem:[%s1543 + $0x50] sm:$0xff]
      %v1555 = vld [vmem:[%s1543 + $0x58] sm:$0xff]
      %v1556 = vld [vmem:[%s1543 + $0x60] sm:$0xff]
      %v1557 = vld [vmem:[%s1543 + $0x68] sm:$0xff]
      %v1558 = vld [vmem:[%s1543 + $0x70] sm:$0xff]
      %v1559 = vld [vmem:[%s1543 + $0x78] sm:$0xff]
      %1560 = vmatpush.msra.mxu0 %v1559
      %1561 = vmatpush.msra.mxu0 %v1558
      %1562 = vmatpush.msra.mxu0 %v1557
      %1563 = vmatpush.msra.mxu0 %v1556
      %1564 = vmatpush.msra.mxu0 %v1555
      %1565 = vmatpush.msra.mxu0 %v1554
      %1566 = vmatpush.msra.mxu0 %v1553
      %1567 = vmatpush.msra.mxu0 %v1552
      %1568 = vmatpush.msra.mxu0 %v1551
      %1569 = vmatpush.msra.mxu0 %v1550
      %1570 = vmatpush.msra.mxu0 %v1549
      %1571 = vmatpush.msra.mxu0 %v1548
      %1572 = vmatpush.msra.mxu0 %v1547
      %1573 = vmatpush.msra.mxu0 %v1546
      %1574 = vmatpush.msra.mxu0 %v1545
      %1575 = vmatpush.msra.mxu0 %v1544
      %1576 = vmatmul.f32.gmra.mxu0 %v1541
      %v1577 = vpop.f32.mrf.mxu0
      %v1578 = vadd.f32 0.0, %v1577
      %1579 = vmatmul.f32.gmra.mxu0 %v1542
      %v1580 = vpop.f32.mrf.mxu0
      %v1581 = vadd.f32 0.0, %v1580
      %1582 = vdwg.mxu0
      %v1583 = vadd.f32 %v1426, %v1578
      %v1584 = vadd.f32 %v1427, %v1581
      %s1585 = scalar_lea.vmem %s17, 1
      %v1586 = vld [vmem:[%s1585] sm:$0x1]
      %v1588 = vperm.slane %v1586, 0
      %v1590 = vadd.f32 %v1583, %v1588
      %v1591 = vadd.f32 %v1584, %v1588
      %v1592 = vld [vmem:[%s18] sm:$0x1]
      %v1593 = vld [vmem:[%s19] sm:$0x1]
      %v1594 = vsel %vm726, %v1590, 0.0
      %1595 = vadd.xlane.f32.xlu0 %v1594
      %v1596 = vpop.xlane.xlu0 %1595
      %v1597 = vsel %vm726, %v1591, 0.0
      %1598 = vadd.xlane.f32.xlu0 %v1597
      %v1599 = vpop.xlane.xlu0 %1598
      %v1600 = vmul.f32 %v1596, %v739
      %v1601 = vmul.f32 %v1599, %v739
      %v1602 = vsub.f32 %v1590, %v1600
      %v1603 = vsub.f32 %v1591, %v1601
      %v1604 = vmul.f32 %v1602, %v1602
      %v1605 = vmul.f32 %v1603, %v1603
      %v1606 = vsel %vm726, %v1604, 0.0
      %1607 = vadd.xlane.f32.xlu0 %v1606
      %v1608 = vpop.xlane.xlu0 %1607
      %v1609 = vsel %vm726, %v1605, 0.0
      %1610 = vadd.xlane.f32.xlu0 %v1609
      %v1611 = vpop.xlane.xlu0 %1610
      %v1612 = vmul.f32 %v1608, %v739
      %v1613 = vmul.f32 %v1611, %v739
      %v1614 = vadd.f32 %v1612, 1e-06
      %v1615 = vadd.f32 %v1613, 1e-06
      %v1616 = vrsqrt.pop %v1614
      %v1617 = vmul.f32 %v1616, %v1614
      %v1618 = vmul.f32 %v1617, %v1616
      %v1619 = vmul.f32 0.5, %v1618
      %v1620 = vsub.f32 1.5, %v1619
      %v1621 = vmul.f32 %v1616, %v1620
      %vm1622 = vweird.f32 %v1614
      %vm1623 = vweird.f32 %v1616
      %vm1624 = vmor %vm1622, %vm1623
      %v1625 = vsel %vm1624, %v1616, %v1621
      %v1626 = vrsqrt.pop %v1615
      %v1627 = vmul.f32 %v1626, %v1615
      %v1628 = vmul.f32 %v1627, %v1626
      %v1629 = vmul.f32 0.5, %v1628
      %v1630 = vsub.f32 1.5, %v1629
      %v1631 = vmul.f32 %v1626, %v1630
      %vm1632 = vweird.f32 %v1615
      %vm1633 = vweird.f32 %v1626
      %vm1634 = vmor %vm1632, %vm1633
      %v1635 = vsel %vm1634, %v1626, %v1631
      %v1636 = vmul.f32 %v1602, %v1625
      %v1637 = vmul.f32 %v1603, %v1635
      %v1639 = vperm.slane %v1592, 0
      %v1641 = vmul.f32 %v1636, %v1639
      %v1642 = vmul.f32 %v1637, %v1639
      %v1644 = vperm.slane %v1593, 0
      %v1646 = vadd.f32 %v1641, %v1644
      %v1647 = vadd.f32 %v1642, %v1644
      %v1648 = vld [vmem:[%s20] sm:$0xff]
      %v1649 = vld [vmem:[%s20 + $0x8] sm:$0xff]
      %v1650 = vld [vmem:[%s20 + $0x10] sm:$0xff]
      %v1651 = vld [vmem:[%s20 + $0x18] sm:$0xff]
      %v1652 = vld [vmem:[%s20 + $0x20] sm:$0xff]
      %v1653 = vld [vmem:[%s20 + $0x28] sm:$0xff]
      %v1654 = vld [vmem:[%s20 + $0x30] sm:$0xff]
      %v1655 = vld [vmem:[%s20 + $0x38] sm:$0xff]
      %v1656 = vld [vmem:[%s20 + $0x40] sm:$0xff]
      %v1657 = vld [vmem:[%s20 + $0x48] sm:$0xff]
      %v1658 = vld [vmem:[%s20 + $0x50] sm:$0xff]
      %v1659 = vld [vmem:[%s20 + $0x58] sm:$0xff]
      %v1660 = vld [vmem:[%s20 + $0x60] sm:$0xff]
      %v1661 = vld [vmem:[%s20 + $0x68] sm:$0xff]
      %v1662 = vld [vmem:[%s20 + $0x70] sm:$0xff]
      %v1663 = vld [vmem:[%s20 + $0x78] sm:$0xff]
      %v1664 = vld [vmem:[%s20 + $0x80] sm:$0xff]
      %v1665 = vld [vmem:[%s20 + $0x88] sm:$0xff]
      %v1666 = vld [vmem:[%s20 + $0x90] sm:$0xff]
      %v1667 = vld [vmem:[%s20 + $0x98] sm:$0xff]
      %v1668 = vld [vmem:[%s20 + $0xa0] sm:$0xff]
      %v1669 = vld [vmem:[%s20 + $0xa8] sm:$0xff]
      %v1670 = vld [vmem:[%s20 + $0xb0] sm:$0xff]
      %v1671 = vld [vmem:[%s20 + $0xb8] sm:$0xff]
      %v1672 = vld [vmem:[%s20 + $0xc0] sm:$0xff]
      %v1673 = vld [vmem:[%s20 + $0xc8] sm:$0xff]
      %v1674 = vld [vmem:[%s20 + $0xd0] sm:$0xff]
      %v1675 = vld [vmem:[%s20 + $0xd8] sm:$0xff]
      %v1676 = vld [vmem:[%s20 + $0xe0] sm:$0xff]
      %v1677 = vld [vmem:[%s20 + $0xe8] sm:$0xff]
      %v1678 = vld [vmem:[%s20 + $0xf0] sm:$0xff]
      %v1679 = vld [vmem:[%s20 + $0xf8] sm:$0xff]
      %v1680 = vld [vmem:[%s20 + $0x100] sm:$0xff]
      %v1681 = vld [vmem:[%s20 + $0x108] sm:$0xff]
      %v1682 = vld [vmem:[%s20 + $0x110] sm:$0xff]
      %v1683 = vld [vmem:[%s20 + $0x118] sm:$0xff]
      %v1684 = vld [vmem:[%s20 + $0x120] sm:$0xff]
      %v1685 = vld [vmem:[%s20 + $0x128] sm:$0xff]
      %v1686 = vld [vmem:[%s20 + $0x130] sm:$0xff]
      %v1687 = vld [vmem:[%s20 + $0x138] sm:$0xff]
      %v1688 = vld [vmem:[%s20 + $0x140] sm:$0xff]
      %v1689 = vld [vmem:[%s20 + $0x148] sm:$0xff]
      %v1690 = vld [vmem:[%s20 + $0x150] sm:$0xff]
      %v1691 = vld [vmem:[%s20 + $0x158] sm:$0xff]
      %v1692 = vld [vmem:[%s20 + $0x160] sm:$0xff]
      %v1693 = vld [vmem:[%s20 + $0x168] sm:$0xff]
      %v1694 = vld [vmem:[%s20 + $0x170] sm:$0xff]
      %v1695 = vld [vmem:[%s20 + $0x178] sm:$0xff]
      %v1696 = vld [vmem:[%s20 + $0x180] sm:$0xff]
      %v1697 = vld [vmem:[%s20 + $0x188] sm:$0xff]
      %v1698 = vld [vmem:[%s20 + $0x190] sm:$0xff]
      %v1699 = vld [vmem:[%s20 + $0x198] sm:$0xff]
      %v1700 = vld [vmem:[%s20 + $0x1a0] sm:$0xff]
      %v1701 = vld [vmem:[%s20 + $0x1a8] sm:$0xff]
      %v1702 = vld [vmem:[%s20 + $0x1b0] sm:$0xff]
      %v1703 = vld [vmem:[%s20 + $0x1b8] sm:$0xff]
      %v1704 = vld [vmem:[%s20 + $0x1c0] sm:$0xff]
      %v1705 = vld [vmem:[%s20 + $0x1c8] sm:$0xff]
      %v1706 = vld [vmem:[%s20 + $0x1d0] sm:$0xff]
      %v1707 = vld [vmem:[%s20 + $0x1d8] sm:$0xff]
      %v1708 = vld [vmem:[%s20 + $0x1e0] sm:$0xff]
      %v1709 = vld [vmem:[%s20 + $0x1e8] sm:$0xff]
      %v1710 = vld [vmem:[%s20 + $0x1f0] sm:$0xff]
      %v1711 = vld [vmem:[%s20 + $0x1f8] sm:$0xff]
      %v1712 = vld [vmem:[%s20 + $0x200] sm:$0xff]
      %v1713 = vld [vmem:[%s20 + $0x208] sm:$0xff]
      %v1714 = vld [vmem:[%s20 + $0x210] sm:$0xff]
      %v1715 = vld [vmem:[%s20 + $0x218] sm:$0xff]
      %v1716 = vld [vmem:[%s20 + $0x220] sm:$0xff]
      %v1717 = vld [vmem:[%s20 + $0x228] sm:$0xff]
      %v1718 = vld [vmem:[%s20 + $0x230] sm:$0xff]
      %v1719 = vld [vmem:[%s20 + $0x238] sm:$0xff]
      %v1720 = vld [vmem:[%s20 + $0x240] sm:$0xff]
      %v1721 = vld [vmem:[%s20 + $0x248] sm:$0xff]
      %v1722 = vld [vmem:[%s20 + $0x250] sm:$0xff]
      %v1723 = vld [vmem:[%s20 + $0x258] sm:$0xff]
      %v1724 = vld [vmem:[%s20 + $0x260] sm:$0xff]
      %v1725 = vld [vmem:[%s20 + $0x268] sm:$0xff]
      %v1726 = vld [vmem:[%s20 + $0x270] sm:$0xff]
      %v1727 = vld [vmem:[%s20 + $0x278] sm:$0xff]
      %v1728 = vld [vmem:[%s20 + $0x280] sm:$0xff]
      %v1729 = vld [vmem:[%s20 + $0x288] sm:$0xff]
      %v1730 = vld [vmem:[%s20 + $0x290] sm:$0xff]
      %v1731 = vld [vmem:[%s20 + $0x298] sm:$0xff]
      %v1732 = vld [vmem:[%s20 + $0x2a0] sm:$0xff]
      %v1733 = vld [vmem:[%s20 + $0x2a8] sm:$0xff]
      %v1734 = vld [vmem:[%s20 + $0x2b0] sm:$0xff]
      %v1735 = vld [vmem:[%s20 + $0x2b8] sm:$0xff]
      %v1736 = vld [vmem:[%s20 + $0x2c0] sm:$0xff]
      %v1737 = vld [vmem:[%s20 + $0x2c8] sm:$0xff]
      %v1738 = vld [vmem:[%s20 + $0x2d0] sm:$0xff]
      %v1739 = vld [vmem:[%s20 + $0x2d8] sm:$0xff]
      %v1740 = vld [vmem:[%s20 + $0x2e0] sm:$0xff]
      %v1741 = vld [vmem:[%s20 + $0x2e8] sm:$0xff]
      %v1742 = vld [vmem:[%s20 + $0x2f0] sm:$0xff]
      %v1743 = vld [vmem:[%s20 + $0x2f8] sm:$0xff]
      %v1744 = vld [vmem:[%s20 + $0x300] sm:$0xff]
      %v1745 = vld [vmem:[%s20 + $0x308] sm:$0xff]
      %v1746 = vld [vmem:[%s20 + $0x310] sm:$0xff]
      %v1747 = vld [vmem:[%s20 + $0x318] sm:$0xff]
      %v1748 = vld [vmem:[%s20 + $0x320] sm:$0xff]
      %v1749 = vld [vmem:[%s20 + $0x328] sm:$0xff]
      %v1750 = vld [vmem:[%s20 + $0x330] sm:$0xff]
      %v1751 = vld [vmem:[%s20 + $0x338] sm:$0xff]
      %v1752 = vld [vmem:[%s20 + $0x340] sm:$0xff]
      %v1753 = vld [vmem:[%s20 + $0x348] sm:$0xff]
      %v1754 = vld [vmem:[%s20 + $0x350] sm:$0xff]
      %v1755 = vld [vmem:[%s20 + $0x358] sm:$0xff]
      %v1756 = vld [vmem:[%s20 + $0x360] sm:$0xff]
      %v1757 = vld [vmem:[%s20 + $0x368] sm:$0xff]
      %v1758 = vld [vmem:[%s20 + $0x370] sm:$0xff]
      %v1759 = vld [vmem:[%s20 + $0x378] sm:$0xff]
      %v1760 = vld [vmem:[%s20 + $0x380] sm:$0xff]
      %v1761 = vld [vmem:[%s20 + $0x388] sm:$0xff]
      %v1762 = vld [vmem:[%s20 + $0x390] sm:$0xff]
      %v1763 = vld [vmem:[%s20 + $0x398] sm:$0xff]
      %v1764 = vld [vmem:[%s20 + $0x3a0] sm:$0xff]
      %v1765 = vld [vmem:[%s20 + $0x3a8] sm:$0xff]
      %v1766 = vld [vmem:[%s20 + $0x3b0] sm:$0xff]
      %v1767 = vld [vmem:[%s20 + $0x3b8] sm:$0xff]
      %v1768 = vld [vmem:[%s20 + $0x3c0] sm:$0xff]
      %v1769 = vld [vmem:[%s20 + $0x3c8] sm:$0xff]
      %v1770 = vld [vmem:[%s20 + $0x3d0] sm:$0xff]
      %v1771 = vld [vmem:[%s20 + $0x3d8] sm:$0xff]
      %v1772 = vld [vmem:[%s20 + $0x3e0] sm:$0xff]
      %v1773 = vld [vmem:[%s20 + $0x3e8] sm:$0xff]
      %v1774 = vld [vmem:[%s20 + $0x3f0] sm:$0xff]
      %v1775 = vld [vmem:[%s20 + $0x3f8] sm:$0xff]
      %v1776 = vld [vmem:[%s20 + $0x400] sm:$0xff]
      %v1777 = vld [vmem:[%s20 + $0x408] sm:$0xff]
      %v1778 = vld [vmem:[%s20 + $0x410] sm:$0xff]
      %v1779 = vld [vmem:[%s20 + $0x418] sm:$0xff]
      %v1780 = vld [vmem:[%s20 + $0x420] sm:$0xff]
      %v1781 = vld [vmem:[%s20 + $0x428] sm:$0xff]
      %v1782 = vld [vmem:[%s20 + $0x430] sm:$0xff]
      %v1783 = vld [vmem:[%s20 + $0x438] sm:$0xff]
      %v1784 = vld [vmem:[%s20 + $0x440] sm:$0xff]
      %v1785 = vld [vmem:[%s20 + $0x448] sm:$0xff]
      %v1786 = vld [vmem:[%s20 + $0x450] sm:$0xff]
      %v1787 = vld [vmem:[%s20 + $0x458] sm:$0xff]
      %v1788 = vld [vmem:[%s20 + $0x460] sm:$0xff]
      %v1789 = vld [vmem:[%s20 + $0x468] sm:$0xff]
      %v1790 = vld [vmem:[%s20 + $0x470] sm:$0xff]
      %v1791 = vld [vmem:[%s20 + $0x478] sm:$0xff]
      %v1792 = vld [vmem:[%s20 + $0x480] sm:$0xff]
      %v1793 = vld [vmem:[%s20 + $0x488] sm:$0xff]
      %v1794 = vld [vmem:[%s20 + $0x490] sm:$0xff]
      %v1795 = vld [vmem:[%s20 + $0x498] sm:$0xff]
      %v1796 = vld [vmem:[%s20 + $0x4a0] sm:$0xff]
      %v1797 = vld [vmem:[%s20 + $0x4a8] sm:$0xff]
      %v1798 = vld [vmem:[%s20 + $0x4b0] sm:$0xff]
      %v1799 = vld [vmem:[%s20 + $0x4b8] sm:$0xff]
      %v1800 = vld [vmem:[%s20 + $0x4c0] sm:$0xff]
      %v1801 = vld [vmem:[%s20 + $0x4c8] sm:$0xff]
      %v1802 = vld [vmem:[%s20 + $0x4d0] sm:$0xff]
      %v1803 = vld [vmem:[%s20 + $0x4d8] sm:$0xff]
      %v1804 = vld [vmem:[%s20 + $0x4e0] sm:$0xff]
      %v1805 = vld [vmem:[%s20 + $0x4e8] sm:$0xff]
      %v1806 = vld [vmem:[%s20 + $0x4f0] sm:$0xff]
      %v1807 = vld [vmem:[%s20 + $0x4f8] sm:$0xff]
      %v1808 = vld [vmem:[%s20 + $0x500] sm:$0xff]
      %v1809 = vld [vmem:[%s20 + $0x508] sm:$0xff]
      %v1810 = vld [vmem:[%s20 + $0x510] sm:$0xff]
      %v1811 = vld [vmem:[%s20 + $0x518] sm:$0xff]
      %v1812 = vld [vmem:[%s20 + $0x520] sm:$0xff]
      %v1813 = vld [vmem:[%s20 + $0x528] sm:$0xff]
      %v1814 = vld [vmem:[%s20 + $0x530] sm:$0xff]
      %v1815 = vld [vmem:[%s20 + $0x538] sm:$0xff]
      %v1816 = vld [vmem:[%s20 + $0x540] sm:$0xff]
      %v1817 = vld [vmem:[%s20 + $0x548] sm:$0xff]
      %v1818 = vld [vmem:[%s20 + $0x550] sm:$0xff]
      %v1819 = vld [vmem:[%s20 + $0x558] sm:$0xff]
      %v1820 = vld [vmem:[%s20 + $0x560] sm:$0xff]
      %v1821 = vld [vmem:[%s20 + $0x568] sm:$0xff]
      %v1822 = vld [vmem:[%s20 + $0x570] sm:$0xff]
      %v1823 = vld [vmem:[%s20 + $0x578] sm:$0xff]
      %v1824 = vld [vmem:[%s20 + $0x580] sm:$0xff]
      %v1825 = vld [vmem:[%s20 + $0x588] sm:$0xff]
      %v1826 = vld [vmem:[%s20 + $0x590] sm:$0xff]
      %v1827 = vld [vmem:[%s20 + $0x598] sm:$0xff]
      %v1828 = vld [vmem:[%s20 + $0x5a0] sm:$0xff]
      %v1829 = vld [vmem:[%s20 + $0x5a8] sm:$0xff]
      %v1830 = vld [vmem:[%s20 + $0x5b0] sm:$0xff]
      %v1831 = vld [vmem:[%s20 + $0x5b8] sm:$0xff]
      %v1832 = vld [vmem:[%s20 + $0x5c0] sm:$0xff]
      %v1833 = vld [vmem:[%s20 + $0x5c8] sm:$0xff]
      %v1834 = vld [vmem:[%s20 + $0x5d0] sm:$0xff]
      %v1835 = vld [vmem:[%s20 + $0x5d8] sm:$0xff]
      %v1836 = vld [vmem:[%s20 + $0x5e0] sm:$0xff]
      %v1837 = vld [vmem:[%s20 + $0x5e8] sm:$0xff]
      %v1838 = vld [vmem:[%s20 + $0x5f0] sm:$0xff]
      %v1839 = vld [vmem:[%s20 + $0x5f8] sm:$0xff]
      %v1840 = vld [vmem:[%s20 + $0x600] sm:$0xff]
      %v1841 = vld [vmem:[%s20 + $0x608] sm:$0xff]
      %v1842 = vld [vmem:[%s20 + $0x610] sm:$0xff]
      %v1843 = vld [vmem:[%s20 + $0x618] sm:$0xff]
      %v1844 = vld [vmem:[%s20 + $0x620] sm:$0xff]
      %v1845 = vld [vmem:[%s20 + $0x628] sm:$0xff]
      %v1846 = vld [vmem:[%s20 + $0x630] sm:$0xff]
      %v1847 = vld [vmem:[%s20 + $0x638] sm:$0xff]
      %v1848 = vld [vmem:[%s20 + $0x640] sm:$0xff]
      %v1849 = vld [vmem:[%s20 + $0x648] sm:$0xff]
      %v1850 = vld [vmem:[%s20 + $0x650] sm:$0xff]
      %v1851 = vld [vmem:[%s20 + $0x658] sm:$0xff]
      %v1852 = vld [vmem:[%s20 + $0x660] sm:$0xff]
      %v1853 = vld [vmem:[%s20 + $0x668] sm:$0xff]
      %v1854 = vld [vmem:[%s20 + $0x670] sm:$0xff]
      %v1855 = vld [vmem:[%s20 + $0x678] sm:$0xff]
      %v1856 = vld [vmem:[%s20 + $0x680] sm:$0xff]
      %v1857 = vld [vmem:[%s20 + $0x688] sm:$0xff]
      %v1858 = vld [vmem:[%s20 + $0x690] sm:$0xff]
      %v1859 = vld [vmem:[%s20 + $0x698] sm:$0xff]
      %v1860 = vld [vmem:[%s20 + $0x6a0] sm:$0xff]
      %v1861 = vld [vmem:[%s20 + $0x6a8] sm:$0xff]
      %v1862 = vld [vmem:[%s20 + $0x6b0] sm:$0xff]
      %v1863 = vld [vmem:[%s20 + $0x6b8] sm:$0xff]
      %v1864 = vld [vmem:[%s20 + $0x6c0] sm:$0xff]
      %v1865 = vld [vmem:[%s20 + $0x6c8] sm:$0xff]
      %v1866 = vld [vmem:[%s20 + $0x6d0] sm:$0xff]
      %v1867 = vld [vmem:[%s20 + $0x6d8] sm:$0xff]
      %v1868 = vld [vmem:[%s20 + $0x6e0] sm:$0xff]
      %v1869 = vld [vmem:[%s20 + $0x6e8] sm:$0xff]
      %v1870 = vld [vmem:[%s20 + $0x6f0] sm:$0xff]
      %v1871 = vld [vmem:[%s20 + $0x6f8] sm:$0xff]
      %v1872 = vld [vmem:[%s20 + $0x700] sm:$0xff]
      %v1873 = vld [vmem:[%s20 + $0x708] sm:$0xff]
      %v1874 = vld [vmem:[%s20 + $0x710] sm:$0xff]
      %v1875 = vld [vmem:[%s20 + $0x718] sm:$0xff]
      %v1876 = vld [vmem:[%s20 + $0x720] sm:$0xff]
      %v1877 = vld [vmem:[%s20 + $0x728] sm:$0xff]
      %v1878 = vld [vmem:[%s20 + $0x730] sm:$0xff]
      %v1879 = vld [vmem:[%s20 + $0x738] sm:$0xff]
      %v1880 = vld [vmem:[%s20 + $0x740] sm:$0xff]
      %v1881 = vld [vmem:[%s20 + $0x748] sm:$0xff]
      %v1882 = vld [vmem:[%s20 + $0x750] sm:$0xff]
      %v1883 = vld [vmem:[%s20 + $0x758] sm:$0xff]
      %v1884 = vld [vmem:[%s20 + $0x760] sm:$0xff]
      %v1885 = vld [vmem:[%s20 + $0x768] sm:$0xff]
      %v1886 = vld [vmem:[%s20 + $0x770] sm:$0xff]
      %v1887 = vld [vmem:[%s20 + $0x778] sm:$0xff]
      %v1888 = vld [vmem:[%s20 + $0x780] sm:$0xff]
      %v1889 = vld [vmem:[%s20 + $0x788] sm:$0xff]
      %v1890 = vld [vmem:[%s20 + $0x790] sm:$0xff]
      %v1891 = vld [vmem:[%s20 + $0x798] sm:$0xff]
      %v1892 = vld [vmem:[%s20 + $0x7a0] sm:$0xff]
      %v1893 = vld [vmem:[%s20 + $0x7a8] sm:$0xff]
      %v1894 = vld [vmem:[%s20 + $0x7b0] sm:$0xff]
      %v1895 = vld [vmem:[%s20 + $0x7b8] sm:$0xff]
      %v1896 = vld [vmem:[%s20 + $0x7c0] sm:$0xff]
      %v1897 = vld [vmem:[%s20 + $0x7c8] sm:$0xff]
      %v1898 = vld [vmem:[%s20 + $0x7d0] sm:$0xff]
      %v1899 = vld [vmem:[%s20 + $0x7d8] sm:$0xff]
      %v1900 = vld [vmem:[%s20 + $0x7e0] sm:$0xff]
      %v1901 = vld [vmem:[%s20 + $0x7e8] sm:$0xff]
      %v1902 = vld [vmem:[%s20 + $0x7f0] sm:$0xff]
      %v1903 = vld [vmem:[%s20 + $0x7f8] sm:$0xff]
      %v1905 = vsel %vm726, %v1646, 0
      %v1908 = vsel %vm726, %v1647, 0
      %1910 = vmatpush.msra.mxu0 0.0
      %1911 = vmatpush.msra.mxu0 0.0
      %1912 = vmatpush.msra.mxu0 0.0
      %1913 = vmatpush.msra.mxu0 0.0
      %1914 = vmatpush.msra.mxu0 0.0
      %1915 = vmatpush.msra.mxu0 0.0
      %1916 = vmatpush.msra.mxu0 0.0
      %1917 = vmatpush.msra.mxu0 0.0
      %1918 = vmatpush.msra.mxu0 0.0
      %1919 = vmatpush.msra.mxu0 0.0
      %1920 = vmatpush.msra.mxu0 0.0
      %1921 = vmatpush.msra.mxu0 0.0
      %1922 = vmatpush.msra.mxu0 %v1840
      %1923 = vmatpush.msra.mxu0 %v1776
      %1924 = vmatpush.msra.mxu0 %v1712
      %1925 = vmatpush.msra.mxu0 %v1648
      %1926 = vmatmul.f32.gmra.mxu0 %v1905
      %v1927 = vpop.f32.mrf.mxu0
      %v1928 = vadd.f32 0.0, %v1927
      %1929 = vmatmul.f32.gmra.mxu0 %v1908
      %v1930 = vpop.f32.mrf.mxu0
      %v1931 = vadd.f32 0.0, %v1930
      %1932 = vdwg.mxu0
      %1933 = vmatpush.msra.mxu0 0.0
      %1934 = vmatpush.msra.mxu0 0.0
      %1935 = vmatpush.msra.mxu0 0.0
      %1936 = vmatpush.msra.mxu0 0.0
      %1937 = vmatpush.msra.mxu0 0.0
      %1938 = vmatpush.msra.mxu0 0.0
      %1939 = vmatpush.msra.mxu0 0.0
      %1940 = vmatpush.msra.mxu0 0.0
      %1941 = vmatpush.msra.mxu0 0.0
      %1942 = vmatpush.msra.mxu0 0.0
      %1943 = vmatpush.msra.mxu0 0.0
      %1944 = vmatpush.msra.mxu0 0.0
      %1945 = vmatpush.msra.mxu0 %v1841
      %1946 = vmatpush.msra.mxu0 %v1777
      %1947 = vmatpush.msra.mxu0 %v1713
      %1948 = vmatpush.msra.mxu0 %v1649
      %1949 = vmatmul.f32.gmra.mxu0 %v1905
      %v1950 = vpop.f32.mrf.mxu0
      %v1951 = vadd.f32 0.0, %v1950
      %1952 = vmatmul.f32.gmra.mxu0 %v1908
      %v1953 = vpop.f32.mrf.mxu0
      %v1954 = vadd.f32 0.0, %v1953
      %1955 = vdwg.mxu0
      %1956 = vmatpush.msra.mxu0 0.0
      %1957 = vmatpush.msra.mxu0 0.0
      %1958 = vmatpush.msra.mxu0 0.0
      %1959 = vmatpush.msra.mxu0 0.0
      %1960 = vmatpush.msra.mxu0 0.0
      %1961 = vmatpush.msra.mxu0 0.0
      %1962 = vmatpush.msra.mxu0 0.0
      %1963 = vmatpush.msra.mxu0 0.0
      %1964 = vmatpush.msra.mxu0 0.0
      %1965 = vmatpush.msra.mxu0 0.0
      %1966 = vmatpush.msra.mxu0 0.0
      %1967 = vmatpush.msra.mxu0 0.0
      %1968 = vmatpush.msra.mxu0 %v1842
      %1969 = vmatpush.msra.mxu0 %v1778
      %1970 = vmatpush.msra.mxu0 %v1714
      %1971 = vmatpush.msra.mxu0 %v1650
      %1972 = vmatmul.f32.gmra.mxu0 %v1905
      %v1973 = vpop.f32.mrf.mxu0
      %v1974 = vadd.f32 0.0, %v1973
      %1975 = vmatmul.f32.gmra.mxu0 %v1908
      %v1976 = vpop.f32.mrf.mxu0
      %v1977 = vadd.f32 0.0, %v1976
      %1978 = vdwg.mxu0
      %1979 = vmatpush.msra.mxu0 0.0
      %1980 = vmatpush.msra.mxu0 0.0
      %1981 = vmatpush.msra.mxu0 0.0
      %1982 = vmatpush.msra.mxu0 0.0
      %1983 = vmatpush.msra.mxu0 0.0
      %1984 = vmatpush.msra.mxu0 0.0
      %1985 = vmatpush.msra.mxu0 0.0
      %1986 = vmatpush.msra.mxu0 0.0
      %1987 = vmatpush.msra.mxu0 0.0
      %1988 = vmatpush.msra.mxu0 0.0
      %1989 = vmatpush.msra.mxu0 0.0
      %1990 = vmatpush.msra.mxu0 0.0
      %1991 = vmatpush.msra.mxu0 %v1843
      %1992 = vmatpush.msra.mxu0 %v1779
      %1993 = vmatpush.msra.mxu0 %v1715
      %1994 = vmatpush.msra.mxu0 %v1651
      %1995 = vmatmul.f32.gmra.mxu0 %v1905
      %v1996 = vpop.f32.mrf.mxu0
      %v1997 = vadd.f32 0.0, %v1996
      %1998 = vmatmul.f32.gmra.mxu0 %v1908
      %v1999 = vpop.f32.mrf.mxu0
      %v2000 = vadd.f32 0.0, %v1999
      %2001 = vdwg.mxu0
      %2002 = vmatpush.msra.mxu0 0.0
      %2003 = vmatpush.msra.mxu0 0.0
      %2004 = vmatpush.msra.mxu0 0.0
      %2005 = vmatpush.msra.mxu0 0.0
      %2006 = vmatpush.msra.mxu0 0.0
      %2007 = vmatpush.msra.mxu0 0.0
      %2008 = vmatpush.msra.mxu0 0.0
      %2009 = vmatpush.msra.mxu0 0.0
      %2010 = vmatpush.msra.mxu0 0.0
      %2011 = vmatpush.msra.mxu0 0.0
      %2012 = vmatpush.msra.mxu0 0.0
      %2013 = vmatpush.msra.mxu0 0.0
      %2014 = vmatpush.msra.mxu0 %v1844
      %2015 = vmatpush.msra.mxu0 %v1780
      %2016 = vmatpush.msra.mxu0 %v1716
      %2017 = vmatpush.msra.mxu0 %v1652
      %2018 = vmatmul.f32.gmra.mxu0 %v1905
      %v2019 = vpop.f32.mrf.mxu0
      %v2020 = vadd.f32 0.0, %v2019
      %2021 = vmatmul.f32.gmra.mxu0 %v1908
      %v2022 = vpop.f32.mrf.mxu0
      %v2023 = vadd.f32 0.0, %v2022
      %2024 = vdwg.mxu0
      %2025 = vmatpush.msra.mxu0 0.0
      %2026 = vmatpush.msra.mxu0 0.0
      %2027 = vmatpush.msra.mxu0 0.0
      %2028 = vmatpush.msra.mxu0 0.0
      %2029 = vmatpush.msra.mxu0 0.0
      %2030 = vmatpush.msra.mxu0 0.0
      %2031 = vmatpush.msra.mxu0 0.0
      %2032 = vmatpush.msra.mxu0 0.0
      %2033 = vmatpush.msra.mxu0 0.0
      %2034 = vmatpush.msra.mxu0 0.0
      %2035 = vmatpush.msra.mxu0 0.0
      %2036 = vmatpush.msra.mxu0 0.0
      %2037 = vmatpush.msra.mxu0 %v1845
      %2038 = vmatpush.msra.mxu0 %v1781
      %2039 = vmatpush.msra.mxu0 %v1717
      %2040 = vmatpush.msra.mxu0 %v1653
      %2041 = vmatmul.f32.gmra.mxu0 %v1905
      %v2042 = vpop.f32.mrf.mxu0
      %v2043 = vadd.f32 0.0, %v2042
      %2044 = vmatmul.f32.gmra.mxu0 %v1908
      %v2045 = vpop.f32.mrf.mxu0
      %v2046 = vadd.f32 0.0, %v2045
      %2047 = vdwg.mxu0
      %2048 = vmatpush.msra.mxu0 0.0
      %2049 = vmatpush.msra.mxu0 0.0
      %2050 = vmatpush.msra.mxu0 0.0
      %2051 = vmatpush.msra.mxu0 0.0
      %2052 = vmatpush.msra.mxu0 0.0
      %2053 = vmatpush.msra.mxu0 0.0
      %2054 = vmatpush.msra.mxu0 0.0
      %2055 = vmatpush.msra.mxu0 0.0
      %2056 = vmatpush.msra.mxu0 0.0
      %2057 = vmatpush.msra.mxu0 0.0
      %2058 = vmatpush.msra.mxu0 0.0
      %2059 = vmatpush.msra.mxu0 0.0
      %2060 = vmatpush.msra.mxu0 %v1846
      %2061 = vmatpush.msra.mxu0 %v1782
      %2062 = vmatpush.msra.mxu0 %v1718
      %2063 = vmatpush.msra.mxu0 %v1654
      %2064 = vmatmul.f32.gmra.mxu0 %v1905
      %v2065 = vpop.f32.mrf.mxu0
      %v2066 = vadd.f32 0.0, %v2065
      %2067 = vmatmul.f32.gmra.mxu0 %v1908
      %v2068 = vpop.f32.mrf.mxu0
      %v2069 = vadd.f32 0.0, %v2068
      %2070 = vdwg.mxu0
      %2071 = vmatpush.msra.mxu0 0.0
      %2072 = vmatpush.msra.mxu0 0.0
      %2073 = vmatpush.msra.mxu0 0.0
      %2074 = vmatpush.msra.mxu0 0.0
      %2075 = vmatpush.msra.mxu0 0.0
      %2076 = vmatpush.msra.mxu0 0.0
      %2077 = vmatpush.msra.mxu0 0.0
      %2078 = vmatpush.msra.mxu0 0.0
      %2079 = vmatpush.msra.mxu0 0.0
      %2080 = vmatpush.msra.mxu0 0.0
      %2081 = vmatpush.msra.mxu0 0.0
      %2082 = vmatpush.msra.mxu0 0.0
      %2083 = vmatpush.msra.mxu0 %v1847
      %2084 = vmatpush.msra.mxu0 %v1783
      %2085 = vmatpush.msra.mxu0 %v1719
      %2086 = vmatpush.msra.mxu0 %v1655
      %2087 = vmatmul.f32.gmra.mxu0 %v1905
      %v2088 = vpop.f32.mrf.mxu0
      %v2089 = vadd.f32 0.0, %v2088
      %2090 = vmatmul.f32.gmra.mxu0 %v1908
      %v2091 = vpop.f32.mrf.mxu0
      %v2092 = vadd.f32 0.0, %v2091
      %2093 = vdwg.mxu0
      %2094 = vmatpush.msra.mxu0 0.0
      %2095 = vmatpush.msra.mxu0 0.0
      %2096 = vmatpush.msra.mxu0 0.0
      %2097 = vmatpush.msra.mxu0 0.0
      %2098 = vmatpush.msra.mxu0 0.0
      %2099 = vmatpush.msra.mxu0 0.0
      %2100 = vmatpush.msra.mxu0 0.0
      %2101 = vmatpush.msra.mxu0 0.0
      %2102 = vmatpush.msra.mxu0 0.0
      %2103 = vmatpush.msra.mxu0 0.0
      %2104 = vmatpush.msra.mxu0 0.0
      %2105 = vmatpush.msra.mxu0 0.0
      %2106 = vmatpush.msra.mxu0 %v1848
      %2107 = vmatpush.msra.mxu0 %v1784
      %2108 = vmatpush.msra.mxu0 %v1720
      %2109 = vmatpush.msra.mxu0 %v1656
      %2110 = vmatmul.f32.gmra.mxu0 %v1905
      %v2111 = vpop.f32.mrf.mxu0
      %v2112 = vadd.f32 0.0, %v2111
      %2113 = vmatmul.f32.gmra.mxu0 %v1908
      %v2114 = vpop.f32.mrf.mxu0
      %v2115 = vadd.f32 0.0, %v2114
      %2116 = vdwg.mxu0
      %2117 = vmatpush.msra.mxu0 0.0
      %2118 = vmatpush.msra.mxu0 0.0
      %2119 = vmatpush.msra.mxu0 0.0
      %2120 = vmatpush.msra.mxu0 0.0
      %2121 = vmatpush.msra.mxu0 0.0
      %2122 = vmatpush.msra.mxu0 0.0
      %2123 = vmatpush.msra.mxu0 0.0
      %2124 = vmatpush.msra.mxu0 0.0
      %2125 = vmatpush.msra.mxu0 0.0
      %2126 = vmatpush.msra.mxu0 0.0
      %2127 = vmatpush.msra.mxu0 0.0
      %2128 = vmatpush.msra.mxu0 0.0
      %2129 = vmatpush.msra.mxu0 %v1849
      %2130 = vmatpush.msra.mxu0 %v1785
      %2131 = vmatpush.msra.mxu0 %v1721
      %2132 = vmatpush.msra.mxu0 %v1657
      %2133 = vmatmul.f32.gmra.mxu0 %v1905
      %v2134 = vpop.f32.mrf.mxu0
      %v2135 = vadd.f32 0.0, %v2134
      %2136 = vmatmul.f32.gmra.mxu0 %v1908
      %v2137 = vpop.f32.mrf.mxu0
      %v2138 = vadd.f32 0.0, %v2137
      %2139 = vdwg.mxu0
      %2140 = vmatpush.msra.mxu0 0.0
      %2141 = vmatpush.msra.mxu0 0.0
      %2142 = vmatpush.msra.mxu0 0.0
      %2143 = vmatpush.msra.mxu0 0.0
      %2144 = vmatpush.msra.mxu0 0.0
      %2145 = vmatpush.msra.mxu0 0.0
      %2146 = vmatpush.msra.mxu0 0.0
      %2147 = vmatpush.msra.mxu0 0.0
      %2148 = vmatpush.msra.mxu0 0.0
      %2149 = vmatpush.msra.mxu0 0.0
      %2150 = vmatpush.msra.mxu0 0.0
      %2151 = vmatpush.msra.mxu0 0.0
      %2152 = vmatpush.msra.mxu0 %v1850
      %2153 = vmatpush.msra.mxu0 %v1786
      %2154 = vmatpush.msra.mxu0 %v1722
      %2155 = vmatpush.msra.mxu0 %v1658
      %2156 = vmatmul.f32.gmra.mxu0 %v1905
      %v2157 = vpop.f32.mrf.mxu0
      %v2158 = vadd.f32 0.0, %v2157
      %2159 = vmatmul.f32.gmra.mxu0 %v1908
      %v2160 = vpop.f32.mrf.mxu0
      %v2161 = vadd.f32 0.0, %v2160
      %2162 = vdwg.mxu0
      %2163 = vmatpush.msra.mxu0 0.0
      %2164 = vmatpush.msra.mxu0 0.0
      %2165 = vmatpush.msra.mxu0 0.0
      %2166 = vmatpush.msra.mxu0 0.0
      %2167 = vmatpush.msra.mxu0 0.0
      %2168 = vmatpush.msra.mxu0 0.0
      %2169 = vmatpush.msra.mxu0 0.0
      %2170 = vmatpush.msra.mxu0 0.0
      %2171 = vmatpush.msra.mxu0 0.0
      %2172 = vmatpush.msra.mxu0 0.0
      %2173 = vmatpush.msra.mxu0 0.0
      %2174 = vmatpush.msra.mxu0 0.0
      %2175 = vmatpush.msra.mxu0 %v1851
      %2176 = vmatpush.msra.mxu0 %v1787
      %2177 = vmatpush.msra.mxu0 %v1723
      %2178 = vmatpush.msra.mxu0 %v1659
      %2179 = vmatmul.f32.gmra.mxu0 %v1905
      %v2180 = vpop.f32.mrf.mxu0
      %v2181 = vadd.f32 0.0, %v2180
      %2182 = vmatmul.f32.gmra.mxu0 %v1908
      %v2183 = vpop.f32.mrf.mxu0
      %v2184 = vadd.f32 0.0, %v2183
      %2185 = vdwg.mxu0
      %2186 = vmatpush.msra.mxu0 0.0
      %2187 = vmatpush.msra.mxu0 0.0
      %2188 = vmatpush.msra.mxu0 0.0
      %2189 = vmatpush.msra.mxu0 0.0
      %2190 = vmatpush.msra.mxu0 0.0
      %2191 = vmatpush.msra.mxu0 0.0
      %2192 = vmatpush.msra.mxu0 0.0
      %2193 = vmatpush.msra.mxu0 0.0
      %2194 = vmatpush.msra.mxu0 0.0
      %2195 = vmatpush.msra.mxu0 0.0
      %2196 = vmatpush.msra.mxu0 0.0
      %2197 = vmatpush.msra.mxu0 0.0
      %2198 = vmatpush.msra.mxu0 %v1852
      %2199 = vmatpush.msra.mxu0 %v1788
      %2200 = vmatpush.msra.mxu0 %v1724
      %2201 = vmatpush.msra.mxu0 %v1660
      %2202 = vmatmul.f32.gmra.mxu0 %v1905
      %v2203 = vpop.f32.mrf.mxu0
      %v2204 = vadd.f32 0.0, %v2203
      %2205 = vmatmul.f32.gmra.mxu0 %v1908
      %v2206 = vpop.f32.mrf.mxu0
      %v2207 = vadd.f32 0.0, %v2206
      %2208 = vdwg.mxu0
      %2209 = vmatpush.msra.mxu0 0.0
      %2210 = vmatpush.msra.mxu0 0.0
      %2211 = vmatpush.msra.mxu0 0.0
      %2212 = vmatpush.msra.mxu0 0.0
      %2213 = vmatpush.msra.mxu0 0.0
      %2214 = vmatpush.msra.mxu0 0.0
      %2215 = vmatpush.msra.mxu0 0.0
      %2216 = vmatpush.msra.mxu0 0.0
      %2217 = vmatpush.msra.mxu0 0.0
      %2218 = vmatpush.msra.mxu0 0.0
      %2219 = vmatpush.msra.mxu0 0.0
      %2220 = vmatpush.msra.mxu0 0.0
      %2221 = vmatpush.msra.mxu0 %v1853
      %2222 = vmatpush.msra.mxu0 %v1789
      %2223 = vmatpush.msra.mxu0 %v1725
      %2224 = vmatpush.msra.mxu0 %v1661
      %2225 = vmatmul.f32.gmra.mxu0 %v1905
      %v2226 = vpop.f32.mrf.mxu0
      %v2227 = vadd.f32 0.0, %v2226
      %2228 = vmatmul.f32.gmra.mxu0 %v1908
      %v2229 = vpop.f32.mrf.mxu0
      %v2230 = vadd.f32 0.0, %v2229
      %2231 = vdwg.mxu0
      %2232 = vmatpush.msra.mxu0 0.0
      %2233 = vmatpush.msra.mxu0 0.0
      %2234 = vmatpush.msra.mxu0 0.0
      %2235 = vmatpush.msra.mxu0 0.0
      %2236 = vmatpush.msra.mxu0 0.0
      %2237 = vmatpush.msra.mxu0 0.0
      %2238 = vmatpush.msra.mxu0 0.0
      %2239 = vmatpush.msra.mxu0 0.0
      %2240 = vmatpush.msra.mxu0 0.0
      %2241 = vmatpush.msra.mxu0 0.0
      %2242 = vmatpush.msra.mxu0 0.0
      %2243 = vmatpush.msra.mxu0 0.0
      %2244 = vmatpush.msra.mxu0 %v1854
      %2245 = vmatpush.msra.mxu0 %v1790
      %2246 = vmatpush.msra.mxu0 %v1726
      %2247 = vmatpush.msra.mxu0 %v1662
      %2248 = vmatmul.f32.gmra.mxu0 %v1905
      %v2249 = vpop.f32.mrf.mxu0
      %v2250 = vadd.f32 0.0, %v2249
      %2251 = vmatmul.f32.gmra.mxu0 %v1908
      %v2252 = vpop.f32.mrf.mxu0
      %v2253 = vadd.f32 0.0, %v2252
      %2254 = vdwg.mxu0
      %2255 = vmatpush.msra.mxu0 0.0
      %2256 = vmatpush.msra.mxu0 0.0
      %2257 = vmatpush.msra.mxu0 0.0
      %2258 = vmatpush.msra.mxu0 0.0
      %2259 = vmatpush.msra.mxu0 0.0
      %2260 = vmatpush.msra.mxu0 0.0
      %2261 = vmatpush.msra.mxu0 0.0
      %2262 = vmatpush.msra.mxu0 0.0
      %2263 = vmatpush.msra.mxu0 0.0
      %2264 = vmatpush.msra.mxu0 0.0
      %2265 = vmatpush.msra.mxu0 0.0
      %2266 = vmatpush.msra.mxu0 0.0
      %2267 = vmatpush.msra.mxu0 %v1855
      %2268 = vmatpush.msra.mxu0 %v1791
      %2269 = vmatpush.msra.mxu0 %v1727
      %2270 = vmatpush.msra.mxu0 %v1663
      %2271 = vmatmul.f32.gmra.mxu0 %v1905
      %v2272 = vpop.f32.mrf.mxu0
      %v2273 = vadd.f32 0.0, %v2272
      %2274 = vmatmul.f32.gmra.mxu0 %v1908
      %v2275 = vpop.f32.mrf.mxu0
      %v2276 = vadd.f32 0.0, %v2275
      %2277 = vdwg.mxu0
      %2278 = vmatpush.msra.mxu0 0.0
      %2279 = vmatpush.msra.mxu0 0.0
      %2280 = vmatpush.msra.mxu0 0.0
      %2281 = vmatpush.msra.mxu0 0.0
      %2282 = vmatpush.msra.mxu0 0.0
      %2283 = vmatpush.msra.mxu0 0.0
      %2284 = vmatpush.msra.mxu0 0.0
      %2285 = vmatpush.msra.mxu0 0.0
      %2286 = vmatpush.msra.mxu0 0.0
      %2287 = vmatpush.msra.mxu0 0.0
      %2288 = vmatpush.msra.mxu0 0.0
      %2289 = vmatpush.msra.mxu0 0.0
      %2290 = vmatpush.msra.mxu0 %v1856
      %2291 = vmatpush.msra.mxu0 %v1792
      %2292 = vmatpush.msra.mxu0 %v1728
      %2293 = vmatpush.msra.mxu0 %v1664
      %2294 = vmatmul.f32.gmra.mxu0 %v1905
      %v2295 = vpop.f32.mrf.mxu0
      %v2296 = vadd.f32 0.0, %v2295
      %2297 = vmatmul.f32.gmra.mxu0 %v1908
      %v2298 = vpop.f32.mrf.mxu0
      %v2299 = vadd.f32 0.0, %v2298
      %2300 = vdwg.mxu0
      %2301 = vmatpush.msra.mxu0 0.0
      %2302 = vmatpush.msra.mxu0 0.0
      %2303 = vmatpush.msra.mxu0 0.0
      %2304 = vmatpush.msra.mxu0 0.0
      %2305 = vmatpush.msra.mxu0 0.0
      %2306 = vmatpush.msra.mxu0 0.0
      %2307 = vmatpush.msra.mxu0 0.0
      %2308 = vmatpush.msra.mxu0 0.0
      %2309 = vmatpush.msra.mxu0 0.0
      %2310 = vmatpush.msra.mxu0 0.0
      %2311 = vmatpush.msra.mxu0 0.0
      %2312 = vmatpush.msra.mxu0 0.0
      %2313 = vmatpush.msra.mxu0 %v1857
      %2314 = vmatpush.msra.mxu0 %v1793
      %2315 = vmatpush.msra.mxu0 %v1729
      %2316 = vmatpush.msra.mxu0 %v1665
      %2317 = vmatmul.f32.gmra.mxu0 %v1905
      %v2318 = vpop.f32.mrf.mxu0
      %v2319 = vadd.f32 0.0, %v2318
      %2320 = vmatmul.f32.gmra.mxu0 %v1908
      %v2321 = vpop.f32.mrf.mxu0
      %v2322 = vadd.f32 0.0, %v2321
      %2323 = vdwg.mxu0
      %2324 = vmatpush.msra.mxu0 0.0
      %2325 = vmatpush.msra.mxu0 0.0
      %2326 = vmatpush.msra.mxu0 0.0
      %2327 = vmatpush.msra.mxu0 0.0
      %2328 = vmatpush.msra.mxu0 0.0
      %2329 = vmatpush.msra.mxu0 0.0
      %2330 = vmatpush.msra.mxu0 0.0
      %2331 = vmatpush.msra.mxu0 0.0
      %2332 = vmatpush.msra.mxu0 0.0
      %2333 = vmatpush.msra.mxu0 0.0
      %2334 = vmatpush.msra.mxu0 0.0
      %2335 = vmatpush.msra.mxu0 0.0
      %2336 = vmatpush.msra.mxu0 %v1858
      %2337 = vmatpush.msra.mxu0 %v1794
      %2338 = vmatpush.msra.mxu0 %v1730
      %2339 = vmatpush.msra.mxu0 %v1666
      %2340 = vmatmul.f32.gmra.mxu0 %v1905
      %v2341 = vpop.f32.mrf.mxu0
      %v2342 = vadd.f32 0.0, %v2341
      %2343 = vmatmul.f32.gmra.mxu0 %v1908
      %v2344 = vpop.f32.mrf.mxu0
      %v2345 = vadd.f32 0.0, %v2344
      %2346 = vdwg.mxu0
      %2347 = vmatpush.msra.mxu0 0.0
      %2348 = vmatpush.msra.mxu0 0.0
      %2349 = vmatpush.msra.mxu0 0.0
      %2350 = vmatpush.msra.mxu0 0.0
      %2351 = vmatpush.msra.mxu0 0.0
      %2352 = vmatpush.msra.mxu0 0.0
      %2353 = vmatpush.msra.mxu0 0.0
      %2354 = vmatpush.msra.mxu0 0.0
      %2355 = vmatpush.msra.mxu0 0.0
      %2356 = vmatpush.msra.mxu0 0.0
      %2357 = vmatpush.msra.mxu0 0.0
      %2358 = vmatpush.msra.mxu0 0.0
      %2359 = vmatpush.msra.mxu0 %v1859
      %2360 = vmatpush.msra.mxu0 %v1795
      %2361 = vmatpush.msra.mxu0 %v1731
      %2362 = vmatpush.msra.mxu0 %v1667
      %2363 = vmatmul.f32.gmra.mxu0 %v1905
      %v2364 = vpop.f32.mrf.mxu0
      %v2365 = vadd.f32 0.0, %v2364
      %2366 = vmatmul.f32.gmra.mxu0 %v1908
      %v2367 = vpop.f32.mrf.mxu0
      %v2368 = vadd.f32 0.0, %v2367
      %2369 = vdwg.mxu0
      %2370 = vmatpush.msra.mxu0 0.0
      %2371 = vmatpush.msra.mxu0 0.0
      %2372 = vmatpush.msra.mxu0 0.0
      %2373 = vmatpush.msra.mxu0 0.0
      %2374 = vmatpush.msra.mxu0 0.0
      %2375 = vmatpush.msra.mxu0 0.0
      %2376 = vmatpush.msra.mxu0 0.0
      %2377 = vmatpush.msra.mxu0 0.0
      %2378 = vmatpush.msra.mxu0 0.0
      %2379 = vmatpush.msra.mxu0 0.0
      %2380 = vmatpush.msra.mxu0 0.0
      %2381 = vmatpush.msra.mxu0 0.0
      %2382 = vmatpush.msra.mxu0 %v1860
      %2383 = vmatpush.msra.mxu0 %v1796
      %2384 = vmatpush.msra.mxu0 %v1732
      %2385 = vmatpush.msra.mxu0 %v1668
      %2386 = vmatmul.f32.gmra.mxu0 %v1905
      %v2387 = vpop.f32.mrf.mxu0
      %v2388 = vadd.f32 0.0, %v2387
      %2389 = vmatmul.f32.gmra.mxu0 %v1908
      %v2390 = vpop.f32.mrf.mxu0
      %v2391 = vadd.f32 0.0, %v2390
      %2392 = vdwg.mxu0
      %2393 = vmatpush.msra.mxu0 0.0
      %2394 = vmatpush.msra.mxu0 0.0
      %2395 = vmatpush.msra.mxu0 0.0
      %2396 = vmatpush.msra.mxu0 0.0
      %2397 = vmatpush.msra.mxu0 0.0
      %2398 = vmatpush.msra.mxu0 0.0
      %2399 = vmatpush.msra.mxu0 0.0
      %2400 = vmatpush.msra.mxu0 0.0
      %2401 = vmatpush.msra.mxu0 0.0
      %2402 = vmatpush.msra.mxu0 0.0
      %2403 = vmatpush.msra.mxu0 0.0
      %2404 = vmatpush.msra.mxu0 0.0
      %2405 = vmatpush.msra.mxu0 %v1861
      %2406 = vmatpush.msra.mxu0 %v1797
      %2407 = vmatpush.msra.mxu0 %v1733
      %2408 = vmatpush.msra.mxu0 %v1669
      %2409 = vmatmul.f32.gmra.mxu0 %v1905
      %v2410 = vpop.f32.mrf.mxu0
      %v2411 = vadd.f32 0.0, %v2410
      %2412 = vmatmul.f32.gmra.mxu0 %v1908
      %v2413 = vpop.f32.mrf.mxu0
      %v2414 = vadd.f32 0.0, %v2413
      %2415 = vdwg.mxu0
      %2416 = vmatpush.msra.mxu0 0.0
      %2417 = vmatpush.msra.mxu0 0.0
      %2418 = vmatpush.msra.mxu0 0.0
      %2419 = vmatpush.msra.mxu0 0.0
      %2420 = vmatpush.msra.mxu0 0.0
      %2421 = vmatpush.msra.mxu0 0.0
      %2422 = vmatpush.msra.mxu0 0.0
      %2423 = vmatpush.msra.mxu0 0.0
      %2424 = vmatpush.msra.mxu0 0.0
      %2425 = vmatpush.msra.mxu0 0.0
      %2426 = vmatpush.msra.mxu0 0.0
      %2427 = vmatpush.msra.mxu0 0.0
      %2428 = vmatpush.msra.mxu0 %v1862
      %2429 = vmatpush.msra.mxu0 %v1798
      %2430 = vmatpush.msra.mxu0 %v1734
      %2431 = vmatpush.msra.mxu0 %v1670
      %2432 = vmatmul.f32.gmra.mxu0 %v1905
      %v2433 = vpop.f32.mrf.mxu0
      %v2434 = vadd.f32 0.0, %v2433
      %2435 = vmatmul.f32.gmra.mxu0 %v1908
      %v2436 = vpop.f32.mrf.mxu0
      %v2437 = vadd.f32 0.0, %v2436
      %2438 = vdwg.mxu0
      %2439 = vmatpush.msra.mxu0 0.0
      %2440 = vmatpush.msra.mxu0 0.0
      %2441 = vmatpush.msra.mxu0 0.0
      %2442 = vmatpush.msra.mxu0 0.0
      %2443 = vmatpush.msra.mxu0 0.0
      %2444 = vmatpush.msra.mxu0 0.0
      %2445 = vmatpush.msra.mxu0 0.0
      %2446 = vmatpush.msra.mxu0 0.0
      %2447 = vmatpush.msra.mxu0 0.0
      %2448 = vmatpush.msra.mxu0 0.0
      %2449 = vmatpush.msra.mxu0 0.0
      %2450 = vmatpush.msra.mxu0 0.0
      %2451 = vmatpush.msra.mxu0 %v1863
      %2452 = vmatpush.msra.mxu0 %v1799
      %2453 = vmatpush.msra.mxu0 %v1735
      %2454 = vmatpush.msra.mxu0 %v1671
      %2455 = vmatmul.f32.gmra.mxu0 %v1905
      %v2456 = vpop.f32.mrf.mxu0
      %v2457 = vadd.f32 0.0, %v2456
      %2458 = vmatmul.f32.gmra.mxu0 %v1908
      %v2459 = vpop.f32.mrf.mxu0
      %v2460 = vadd.f32 0.0, %v2459
      %2461 = vdwg.mxu0
      %2462 = vmatpush.msra.mxu0 0.0
      %2463 = vmatpush.msra.mxu0 0.0
      %2464 = vmatpush.msra.mxu0 0.0
      %2465 = vmatpush.msra.mxu0 0.0
      %2466 = vmatpush.msra.mxu0 0.0
      %2467 = vmatpush.msra.mxu0 0.0
      %2468 = vmatpush.msra.mxu0 0.0
      %2469 = vmatpush.msra.mxu0 0.0
      %2470 = vmatpush.msra.mxu0 0.0
      %2471 = vmatpush.msra.mxu0 0.0
      %2472 = vmatpush.msra.mxu0 0.0
      %2473 = vmatpush.msra.mxu0 0.0
      %2474 = vmatpush.msra.mxu0 %v1864
      %2475 = vmatpush.msra.mxu0 %v1800
      %2476 = vmatpush.msra.mxu0 %v1736
      %2477 = vmatpush.msra.mxu0 %v1672
      %2478 = vmatmul.f32.gmra.mxu0 %v1905
      %v2479 = vpop.f32.mrf.mxu0
      %v2480 = vadd.f32 0.0, %v2479
      %2481 = vmatmul.f32.gmra.mxu0 %v1908
      %v2482 = vpop.f32.mrf.mxu0
      %v2483 = vadd.f32 0.0, %v2482
      %2484 = vdwg.mxu0
      %2485 = vmatpush.msra.mxu0 0.0
      %2486 = vmatpush.msra.mxu0 0.0
      %2487 = vmatpush.msra.mxu0 0.0
      %2488 = vmatpush.msra.mxu0 0.0
      %2489 = vmatpush.msra.mxu0 0.0
      %2490 = vmatpush.msra.mxu0 0.0
      %2491 = vmatpush.msra.mxu0 0.0
      %2492 = vmatpush.msra.mxu0 0.0
      %2493 = vmatpush.msra.mxu0 0.0
      %2494 = vmatpush.msra.mxu0 0.0
      %2495 = vmatpush.msra.mxu0 0.0
      %2496 = vmatpush.msra.mxu0 0.0
      %2497 = vmatpush.msra.mxu0 %v1865
      %2498 = vmatpush.msra.mxu0 %v1801
      %2499 = vmatpush.msra.mxu0 %v1737
      %2500 = vmatpush.msra.mxu0 %v1673
      %2501 = vmatmul.f32.gmra.mxu0 %v1905
      %v2502 = vpop.f32.mrf.mxu0
      %v2503 = vadd.f32 0.0, %v2502
      %2504 = vmatmul.f32.gmra.mxu0 %v1908
      %v2505 = vpop.f32.mrf.mxu0
      %v2506 = vadd.f32 0.0, %v2505
      %2507 = vdwg.mxu0
      %2508 = vmatpush.msra.mxu0 0.0
      %2509 = vmatpush.msra.mxu0 0.0
      %2510 = vmatpush.msra.mxu0 0.0
      %2511 = vmatpush.msra.mxu0 0.0
      %2512 = vmatpush.msra.mxu0 0.0
      %2513 = vmatpush.msra.mxu0 0.0
      %2514 = vmatpush.msra.mxu0 0.0
      %2515 = vmatpush.msra.mxu0 0.0
      %2516 = vmatpush.msra.mxu0 0.0
      %2517 = vmatpush.msra.mxu0 0.0
      %2518 = vmatpush.msra.mxu0 0.0
      %2519 = vmatpush.msra.mxu0 0.0
      %2520 = vmatpush.msra.mxu0 %v1866
      %2521 = vmatpush.msra.mxu0 %v1802
      %2522 = vmatpush.msra.mxu0 %v1738
      %2523 = vmatpush.msra.mxu0 %v1674
      %2524 = vmatmul.f32.gmra.mxu0 %v1905
      %v2525 = vpop.f32.mrf.mxu0
      %v2526 = vadd.f32 0.0, %v2525
      %2527 = vmatmul.f32.gmra.mxu0 %v1908
      %v2528 = vpop.f32.mrf.mxu0
      %v2529 = vadd.f32 0.0, %v2528
      %2530 = vdwg.mxu0
      %2531 = vmatpush.msra.mxu0 0.0
      %2532 = vmatpush.msra.mxu0 0.0
      %2533 = vmatpush.msra.mxu0 0.0
      %2534 = vmatpush.msra.mxu0 0.0
      %2535 = vmatpush.msra.mxu0 0.0
      %2536 = vmatpush.msra.mxu0 0.0
      %2537 = vmatpush.msra.mxu0 0.0
      %2538 = vmatpush.msra.mxu0 0.0
      %2539 = vmatpush.msra.mxu0 0.0
      %2540 = vmatpush.msra.mxu0 0.0
      %2541 = vmatpush.msra.mxu0 0.0
      %2542 = vmatpush.msra.mxu0 0.0
      %2543 = vmatpush.msra.mxu0 %v1867
      %2544 = vmatpush.msra.mxu0 %v1803
      %2545 = vmatpush.msra.mxu0 %v1739
      %2546 = vmatpush.msra.mxu0 %v1675
      %2547 = vmatmul.f32.gmra.mxu0 %v1905
      %v2548 = vpop.f32.mrf.mxu0
      %v2549 = vadd.f32 0.0, %v2548
      %2550 = vmatmul.f32.gmra.mxu0 %v1908
      %v2551 = vpop.f32.mrf.mxu0
      %v2552 = vadd.f32 0.0, %v2551
      %2553 = vdwg.mxu0
      %2554 = vmatpush.msra.mxu0 0.0
      %2555 = vmatpush.msra.mxu0 0.0
      %2556 = vmatpush.msra.mxu0 0.0
      %2557 = vmatpush.msra.mxu0 0.0
      %2558 = vmatpush.msra.mxu0 0.0
      %2559 = vmatpush.msra.mxu0 0.0
      %2560 = vmatpush.msra.mxu0 0.0
      %2561 = vmatpush.msra.mxu0 0.0
      %2562 = vmatpush.msra.mxu0 0.0
      %2563 = vmatpush.msra.mxu0 0.0
      %2564 = vmatpush.msra.mxu0 0.0
      %2565 = vmatpush.msra.mxu0 0.0
      %2566 = vmatpush.msra.mxu0 %v1868
      %2567 = vmatpush.msra.mxu0 %v1804
      %2568 = vmatpush.msra.mxu0 %v1740
      %2569 = vmatpush.msra.mxu0 %v1676
      %2570 = vmatmul.f32.gmra.mxu0 %v1905
      %v2571 = vpop.f32.mrf.mxu0
      %v2572 = vadd.f32 0.0, %v2571
      %2573 = vmatmul.f32.gmra.mxu0 %v1908
      %v2574 = vpop.f32.mrf.mxu0
      %v2575 = vadd.f32 0.0, %v2574
      %2576 = vdwg.mxu0
      %2577 = vmatpush.msra.mxu0 0.0
      %2578 = vmatpush.msra.mxu0 0.0
      %2579 = vmatpush.msra.mxu0 0.0
      %2580 = vmatpush.msra.mxu0 0.0
      %2581 = vmatpush.msra.mxu0 0.0
      %2582 = vmatpush.msra.mxu0 0.0
      %2583 = vmatpush.msra.mxu0 0.0
      %2584 = vmatpush.msra.mxu0 0.0
      %2585 = vmatpush.msra.mxu0 0.0
      %2586 = vmatpush.msra.mxu0 0.0
      %2587 = vmatpush.msra.mxu0 0.0
      %2588 = vmatpush.msra.mxu0 0.0
      %2589 = vmatpush.msra.mxu0 %v1869
      %2590 = vmatpush.msra.mxu0 %v1805
      %2591 = vmatpush.msra.mxu0 %v1741
      %2592 = vmatpush.msra.mxu0 %v1677
      %2593 = vmatmul.f32.gmra.mxu0 %v1905
      %v2594 = vpop.f32.mrf.mxu0
      %v2595 = vadd.f32 0.0, %v2594
      %2596 = vmatmul.f32.gmra.mxu0 %v1908
      %v2597 = vpop.f32.mrf.mxu0
      %v2598 = vadd.f32 0.0, %v2597
      %2599 = vdwg.mxu0
      %2600 = vmatpush.msra.mxu0 0.0
      %2601 = vmatpush.msra.mxu0 0.0
      %2602 = vmatpush.msra.mxu0 0.0
      %2603 = vmatpush.msra.mxu0 0.0
      %2604 = vmatpush.msra.mxu0 0.0
      %2605 = vmatpush.msra.mxu0 0.0
      %2606 = vmatpush.msra.mxu0 0.0
      %2607 = vmatpush.msra.mxu0 0.0
      %2608 = vmatpush.msra.mxu0 0.0
      %2609 = vmatpush.msra.mxu0 0.0
      %2610 = vmatpush.msra.mxu0 0.0
      %2611 = vmatpush.msra.mxu0 0.0
      %2612 = vmatpush.msra.mxu0 %v1870
      %2613 = vmatpush.msra.mxu0 %v1806
      %2614 = vmatpush.msra.mxu0 %v1742
      %2615 = vmatpush.msra.mxu0 %v1678
      %2616 = vmatmul.f32.gmra.mxu0 %v1905
      %v2617 = vpop.f32.mrf.mxu0
      %v2618 = vadd.f32 0.0, %v2617
      %2619 = vmatmul.f32.gmra.mxu0 %v1908
      %v2620 = vpop.f32.mrf.mxu0
      %v2621 = vadd.f32 0.0, %v2620
      %2622 = vdwg.mxu0
      %2623 = vmatpush.msra.mxu0 0.0
      %2624 = vmatpush.msra.mxu0 0.0
      %2625 = vmatpush.msra.mxu0 0.0
      %2626 = vmatpush.msra.mxu0 0.0
      %2627 = vmatpush.msra.mxu0 0.0
      %2628 = vmatpush.msra.mxu0 0.0
      %2629 = vmatpush.msra.mxu0 0.0
      %2630 = vmatpush.msra.mxu0 0.0
      %2631 = vmatpush.msra.mxu0 0.0
      %2632 = vmatpush.msra.mxu0 0.0
      %2633 = vmatpush.msra.mxu0 0.0
      %2634 = vmatpush.msra.mxu0 0.0
      %2635 = vmatpush.msra.mxu0 %v1871
      %2636 = vmatpush.msra.mxu0 %v1807
      %2637 = vmatpush.msra.mxu0 %v1743
      %2638 = vmatpush.msra.mxu0 %v1679
      %2639 = vmatmul.f32.gmra.mxu0 %v1905
      %v2640 = vpop.f32.mrf.mxu0
      %v2641 = vadd.f32 0.0, %v2640
      %2642 = vmatmul.f32.gmra.mxu0 %v1908
      %v2643 = vpop.f32.mrf.mxu0
      %v2644 = vadd.f32 0.0, %v2643
      %2645 = vdwg.mxu0
      %2646 = vmatpush.msra.mxu0 0.0
      %2647 = vmatpush.msra.mxu0 0.0
      %2648 = vmatpush.msra.mxu0 0.0
      %2649 = vmatpush.msra.mxu0 0.0
      %2650 = vmatpush.msra.mxu0 0.0
      %2651 = vmatpush.msra.mxu0 0.0
      %2652 = vmatpush.msra.mxu0 0.0
      %2653 = vmatpush.msra.mxu0 0.0
      %2654 = vmatpush.msra.mxu0 0.0
      %2655 = vmatpush.msra.mxu0 0.0
      %2656 = vmatpush.msra.mxu0 0.0
      %2657 = vmatpush.msra.mxu0 0.0
      %2658 = vmatpush.msra.mxu0 %v1872
      %2659 = vmatpush.msra.mxu0 %v1808
      %2660 = vmatpush.msra.mxu0 %v1744
      %2661 = vmatpush.msra.mxu0 %v1680
      %2662 = vmatmul.f32.gmra.mxu0 %v1905
      %v2663 = vpop.f32.mrf.mxu0
      %v2664 = vadd.f32 0.0, %v2663
      %2665 = vmatmul.f32.gmra.mxu0 %v1908
      %v2666 = vpop.f32.mrf.mxu0
      %v2667 = vadd.f32 0.0, %v2666
      %2668 = vdwg.mxu0
      %2669 = vmatpush.msra.mxu0 0.0
      %2670 = vmatpush.msra.mxu0 0.0
      %2671 = vmatpush.msra.mxu0 0.0
      %2672 = vmatpush.msra.mxu0 0.0
      %2673 = vmatpush.msra.mxu0 0.0
      %2674 = vmatpush.msra.mxu0 0.0
      %2675 = vmatpush.msra.mxu0 0.0
      %2676 = vmatpush.msra.mxu0 0.0
      %2677 = vmatpush.msra.mxu0 0.0
      %2678 = vmatpush.msra.mxu0 0.0
      %2679 = vmatpush.msra.mxu0 0.0
      %2680 = vmatpush.msra.mxu0 0.0
      %2681 = vmatpush.msra.mxu0 %v1873
      %2682 = vmatpush.msra.mxu0 %v1809
      %2683 = vmatpush.msra.mxu0 %v1745
      %2684 = vmatpush.msra.mxu0 %v1681
      %2685 = vmatmul.f32.gmra.mxu0 %v1905
      %v2686 = vpop.f32.mrf.mxu0
      %v2687 = vadd.f32 0.0, %v2686
      %2688 = vmatmul.f32.gmra.mxu0 %v1908
      %v2689 = vpop.f32.mrf.mxu0
      %v2690 = vadd.f32 0.0, %v2689
      %2691 = vdwg.mxu0
      %2692 = vmatpush.msra.mxu0 0.0
      %2693 = vmatpush.msra.mxu0 0.0
      %2694 = vmatpush.msra.mxu0 0.0
      %2695 = vmatpush.msra.mxu0 0.0
      %2696 = vmatpush.msra.mxu0 0.0
      %2697 = vmatpush.msra.mxu0 0.0
      %2698 = vmatpush.msra.mxu0 0.0
      %2699 = vmatpush.msra.mxu0 0.0
      %2700 = vmatpush.msra.mxu0 0.0
      %2701 = vmatpush.msra.mxu0 0.0
      %2702 = vmatpush.msra.mxu0 0.0
      %2703 = vmatpush.msra.mxu0 0.0
      %2704 = vmatpush.msra.mxu0 %v1874
      %2705 = vmatpush.msra.mxu0 %v1810
      %2706 = vmatpush.msra.mxu0 %v1746
      %2707 = vmatpush.msra.mxu0 %v1682
      %2708 = vmatmul.f32.gmra.mxu0 %v1905
      %v2709 = vpop.f32.mrf.mxu0
      %v2710 = vadd.f32 0.0, %v2709
      %2711 = vmatmul.f32.gmra.mxu0 %v1908
      %v2712 = vpop.f32.mrf.mxu0
      %v2713 = vadd.f32 0.0, %v2712
      %2714 = vdwg.mxu0
      %2715 = vmatpush.msra.mxu0 0.0
      %2716 = vmatpush.msra.mxu0 0.0
      %2717 = vmatpush.msra.mxu0 0.0
      %2718 = vmatpush.msra.mxu0 0.0
      %2719 = vmatpush.msra.mxu0 0.0
      %2720 = vmatpush.msra.mxu0 0.0
      %2721 = vmatpush.msra.mxu0 0.0
      %2722 = vmatpush.msra.mxu0 0.0
      %2723 = vmatpush.msra.mxu0 0.0
      %2724 = vmatpush.msra.mxu0 0.0
      %2725 = vmatpush.msra.mxu0 0.0
      %2726 = vmatpush.msra.mxu0 0.0
      %2727 = vmatpush.msra.mxu0 %v1875
      %2728 = vmatpush.msra.mxu0 %v1811
      %2729 = vmatpush.msra.mxu0 %v1747
      %2730 = vmatpush.msra.mxu0 %v1683
      %2731 = vmatmul.f32.gmra.mxu0 %v1905
      %v2732 = vpop.f32.mrf.mxu0
      %v2733 = vadd.f32 0.0, %v2732
      %2734 = vmatmul.f32.gmra.mxu0 %v1908
      %v2735 = vpop.f32.mrf.mxu0
      %v2736 = vadd.f32 0.0, %v2735
      %2737 = vdwg.mxu0
      %2738 = vmatpush.msra.mxu0 0.0
      %2739 = vmatpush.msra.mxu0 0.0
      %2740 = vmatpush.msra.mxu0 0.0
      %2741 = vmatpush.msra.mxu0 0.0
      %2742 = vmatpush.msra.mxu0 0.0
      %2743 = vmatpush.msra.mxu0 0.0
      %2744 = vmatpush.msra.mxu0 0.0
      %2745 = vmatpush.msra.mxu0 0.0
      %2746 = vmatpush.msra.mxu0 0.0
      %2747 = vmatpush.msra.mxu0 0.0
      %2748 = vmatpush.msra.mxu0 0.0
      %2749 = vmatpush.msra.mxu0 0.0
      %2750 = vmatpush.msra.mxu0 %v1876
      %2751 = vmatpush.msra.mxu0 %v1812
      %2752 = vmatpush.msra.mxu0 %v1748
      %2753 = vmatpush.msra.mxu0 %v1684
      %2754 = vmatmul.f32.gmra.mxu0 %v1905
      %v2755 = vpop.f32.mrf.mxu0
      %v2756 = vadd.f32 0.0, %v2755
      %2757 = vmatmul.f32.gmra.mxu0 %v1908
      %v2758 = vpop.f32.mrf.mxu0
      %v2759 = vadd.f32 0.0, %v2758
      %2760 = vdwg.mxu0
      %2761 = vmatpush.msra.mxu0 0.0
      %2762 = vmatpush.msra.mxu0 0.0
      %2763 = vmatpush.msra.mxu0 0.0
      %2764 = vmatpush.msra.mxu0 0.0
      %2765 = vmatpush.msra.mxu0 0.0
      %2766 = vmatpush.msra.mxu0 0.0
      %2767 = vmatpush.msra.mxu0 0.0
      %2768 = vmatpush.msra.mxu0 0.0
      %2769 = vmatpush.msra.mxu0 0.0
      %2770 = vmatpush.msra.mxu0 0.0
      %2771 = vmatpush.msra.mxu0 0.0
      %2772 = vmatpush.msra.mxu0 0.0
      %2773 = vmatpush.msra.mxu0 %v1877
      %2774 = vmatpush.msra.mxu0 %v1813
      %2775 = vmatpush.msra.mxu0 %v1749
      %2776 = vmatpush.msra.mxu0 %v1685
      %2777 = vmatmul.f32.gmra.mxu0 %v1905
      %v2778 = vpop.f32.mrf.mxu0
      %v2779 = vadd.f32 0.0, %v2778
      %2780 = vmatmul.f32.gmra.mxu0 %v1908
      %v2781 = vpop.f32.mrf.mxu0
      %v2782 = vadd.f32 0.0, %v2781
      %2783 = vdwg.mxu0
      %2784 = vmatpush.msra.mxu0 0.0
      %2785 = vmatpush.msra.mxu0 0.0
      %2786 = vmatpush.msra.mxu0 0.0
      %2787 = vmatpush.msra.mxu0 0.0
      %2788 = vmatpush.msra.mxu0 0.0
      %2789 = vmatpush.msra.mxu0 0.0
      %2790 = vmatpush.msra.mxu0 0.0
      %2791 = vmatpush.msra.mxu0 0.0
      %2792 = vmatpush.msra.mxu0 0.0
      %2793 = vmatpush.msra.mxu0 0.0
      %2794 = vmatpush.msra.mxu0 0.0
      %2795 = vmatpush.msra.mxu0 0.0
      %2796 = vmatpush.msra.mxu0 %v1878
      %2797 = vmatpush.msra.mxu0 %v1814
      %2798 = vmatpush.msra.mxu0 %v1750
      %2799 = vmatpush.msra.mxu0 %v1686
      %2800 = vmatmul.f32.gmra.mxu0 %v1905
      %v2801 = vpop.f32.mrf.mxu0
      %v2802 = vadd.f32 0.0, %v2801
      %2803 = vmatmul.f32.gmra.mxu0 %v1908
      %v2804 = vpop.f32.mrf.mxu0
      %v2805 = vadd.f32 0.0, %v2804
      %2806 = vdwg.mxu0
      %2807 = vmatpush.msra.mxu0 0.0
      %2808 = vmatpush.msra.mxu0 0.0
      %2809 = vmatpush.msra.mxu0 0.0
      %2810 = vmatpush.msra.mxu0 0.0
      %2811 = vmatpush.msra.mxu0 0.0
      %2812 = vmatpush.msra.mxu0 0.0
      %2813 = vmatpush.msra.mxu0 0.0
      %2814 = vmatpush.msra.mxu0 0.0
      %2815 = vmatpush.msra.mxu0 0.0
      %2816 = vmatpush.msra.mxu0 0.0
      %2817 = vmatpush.msra.mxu0 0.0
      %2818 = vmatpush.msra.mxu0 0.0
      %2819 = vmatpush.msra.mxu0 %v1879
      %2820 = vmatpush.msra.mxu0 %v1815
      %2821 = vmatpush.msra.mxu0 %v1751
      %2822 = vmatpush.msra.mxu0 %v1687
      %2823 = vmatmul.f32.gmra.mxu0 %v1905
      %v2824 = vpop.f32.mrf.mxu0
      %v2825 = vadd.f32 0.0, %v2824
      %2826 = vmatmul.f32.gmra.mxu0 %v1908
      %v2827 = vpop.f32.mrf.mxu0
      %v2828 = vadd.f32 0.0, %v2827
      %2829 = vdwg.mxu0
      %2830 = vmatpush.msra.mxu0 0.0
      %2831 = vmatpush.msra.mxu0 0.0
      %2832 = vmatpush.msra.mxu0 0.0
      %2833 = vmatpush.msra.mxu0 0.0
      %2834 = vmatpush.msra.mxu0 0.0
      %2835 = vmatpush.msra.mxu0 0.0
      %2836 = vmatpush.msra.mxu0 0.0
      %2837 = vmatpush.msra.mxu0 0.0
      %2838 = vmatpush.msra.mxu0 0.0
      %2839 = vmatpush.msra.mxu0 0.0
      %2840 = vmatpush.msra.mxu0 0.0
      %2841 = vmatpush.msra.mxu0 0.0
      %2842 = vmatpush.msra.mxu0 %v1880
      %2843 = vmatpush.msra.mxu0 %v1816
      %2844 = vmatpush.msra.mxu0 %v1752
      %2845 = vmatpush.msra.mxu0 %v1688
      %2846 = vmatmul.f32.gmra.mxu0 %v1905
      %v2847 = vpop.f32.mrf.mxu0
      %v2848 = vadd.f32 0.0, %v2847
      %2849 = vmatmul.f32.gmra.mxu0 %v1908
      %v2850 = vpop.f32.mrf.mxu0
      %v2851 = vadd.f32 0.0, %v2850
      %2852 = vdwg.mxu0
      %2853 = vmatpush.msra.mxu0 0.0
      %2854 = vmatpush.msra.mxu0 0.0
      %2855 = vmatpush.msra.mxu0 0.0
      %2856 = vmatpush.msra.mxu0 0.0
      %2857 = vmatpush.msra.mxu0 0.0
      %2858 = vmatpush.msra.mxu0 0.0
      %2859 = vmatpush.msra.mxu0 0.0
      %2860 = vmatpush.msra.mxu0 0.0
      %2861 = vmatpush.msra.mxu0 0.0
      %2862 = vmatpush.msra.mxu0 0.0
      %2863 = vmatpush.msra.mxu0 0.0
      %2864 = vmatpush.msra.mxu0 0.0
      %2865 = vmatpush.msra.mxu0 %v1881
      %2866 = vmatpush.msra.mxu0 %v1817
      %2867 = vmatpush.msra.mxu0 %v1753
      %2868 = vmatpush.msra.mxu0 %v1689
      %2869 = vmatmul.f32.gmra.mxu0 %v1905
      %v2870 = vpop.f32.mrf.mxu0
      %v2871 = vadd.f32 0.0, %v2870
      %2872 = vmatmul.f32.gmra.mxu0 %v1908
      %v2873 = vpop.f32.mrf.mxu0
      %v2874 = vadd.f32 0.0, %v2873
      %2875 = vdwg.mxu0
      %2876 = vmatpush.msra.mxu0 0.0
      %2877 = vmatpush.msra.mxu0 0.0
      %2878 = vmatpush.msra.mxu0 0.0
      %2879 = vmatpush.msra.mxu0 0.0
      %2880 = vmatpush.msra.mxu0 0.0
      %2881 = vmatpush.msra.mxu0 0.0
      %2882 = vmatpush.msra.mxu0 0.0
      %2883 = vmatpush.msra.mxu0 0.0
      %2884 = vmatpush.msra.mxu0 0.0
      %2885 = vmatpush.msra.mxu0 0.0
      %2886 = vmatpush.msra.mxu0 0.0
      %2887 = vmatpush.msra.mxu0 0.0
      %2888 = vmatpush.msra.mxu0 %v1882
      %2889 = vmatpush.msra.mxu0 %v1818
      %2890 = vmatpush.msra.mxu0 %v1754
      %2891 = vmatpush.msra.mxu0 %v1690
      %2892 = vmatmul.f32.gmra.mxu0 %v1905
      %v2893 = vpop.f32.mrf.mxu0
      %v2894 = vadd.f32 0.0, %v2893
      %2895 = vmatmul.f32.gmra.mxu0 %v1908
      %v2896 = vpop.f32.mrf.mxu0
      %v2897 = vadd.f32 0.0, %v2896
      %2898 = vdwg.mxu0
      %2899 = vmatpush.msra.mxu0 0.0
      %2900 = vmatpush.msra.mxu0 0.0
      %2901 = vmatpush.msra.mxu0 0.0
      %2902 = vmatpush.msra.mxu0 0.0
      %2903 = vmatpush.msra.mxu0 0.0
      %2904 = vmatpush.msra.mxu0 0.0
      %2905 = vmatpush.msra.mxu0 0.0
      %2906 = vmatpush.msra.mxu0 0.0
      %2907 = vmatpush.msra.mxu0 0.0
      %2908 = vmatpush.msra.mxu0 0.0
      %2909 = vmatpush.msra.mxu0 0.0
      %2910 = vmatpush.msra.mxu0 0.0
      %2911 = vmatpush.msra.mxu0 %v1883
      %2912 = vmatpush.msra.mxu0 %v1819
      %2913 = vmatpush.msra.mxu0 %v1755
      %2914 = vmatpush.msra.mxu0 %v1691
      %2915 = vmatmul.f32.gmra.mxu0 %v1905
      %v2916 = vpop.f32.mrf.mxu0
      %v2917 = vadd.f32 0.0, %v2916
      %2918 = vmatmul.f32.gmra.mxu0 %v1908
      %v2919 = vpop.f32.mrf.mxu0
      %v2920 = vadd.f32 0.0, %v2919
      %2921 = vdwg.mxu0
      %2922 = vmatpush.msra.mxu0 0.0
      %2923 = vmatpush.msra.mxu0 0.0
      %2924 = vmatpush.msra.mxu0 0.0
      %2925 = vmatpush.msra.mxu0 0.0
      %2926 = vmatpush.msra.mxu0 0.0
      %2927 = vmatpush.msra.mxu0 0.0
      %2928 = vmatpush.msra.mxu0 0.0
      %2929 = vmatpush.msra.mxu0 0.0
      %2930 = vmatpush.msra.mxu0 0.0
      %2931 = vmatpush.msra.mxu0 0.0
      %2932 = vmatpush.msra.mxu0 0.0
      %2933 = vmatpush.msra.mxu0 0.0
      %2934 = vmatpush.msra.mxu0 %v1884
      %2935 = vmatpush.msra.mxu0 %v1820
      %2936 = vmatpush.msra.mxu0 %v1756
      %2937 = vmatpush.msra.mxu0 %v1692
      %2938 = vmatmul.f32.gmra.mxu0 %v1905
      %v2939 = vpop.f32.mrf.mxu0
      %v2940 = vadd.f32 0.0, %v2939
      %2941 = vmatmul.f32.gmra.mxu0 %v1908
      %v2942 = vpop.f32.mrf.mxu0
      %v2943 = vadd.f32 0.0, %v2942
      %2944 = vdwg.mxu0
      %2945 = vmatpush.msra.mxu0 0.0
      %2946 = vmatpush.msra.mxu0 0.0
      %2947 = vmatpush.msra.mxu0 0.0
      %2948 = vmatpush.msra.mxu0 0.0
      %2949 = vmatpush.msra.mxu0 0.0
      %2950 = vmatpush.msra.mxu0 0.0
      %2951 = vmatpush.msra.mxu0 0.0
      %2952 = vmatpush.msra.mxu0 0.0
      %2953 = vmatpush.msra.mxu0 0.0
      %2954 = vmatpush.msra.mxu0 0.0
      %2955 = vmatpush.msra.mxu0 0.0
      %2956 = vmatpush.msra.mxu0 0.0
      %2957 = vmatpush.msra.mxu0 %v1885
      %2958 = vmatpush.msra.mxu0 %v1821
      %2959 = vmatpush.msra.mxu0 %v1757
      %2960 = vmatpush.msra.mxu0 %v1693
      %2961 = vmatmul.f32.gmra.mxu0 %v1905
      %v2962 = vpop.f32.mrf.mxu0
      %v2963 = vadd.f32 0.0, %v2962
      %2964 = vmatmul.f32.gmra.mxu0 %v1908
      %v2965 = vpop.f32.mrf.mxu0
      %v2966 = vadd.f32 0.0, %v2965
      %2967 = vdwg.mxu0
      %2968 = vmatpush.msra.mxu0 0.0
      %2969 = vmatpush.msra.mxu0 0.0
      %2970 = vmatpush.msra.mxu0 0.0
      %2971 = vmatpush.msra.mxu0 0.0
      %2972 = vmatpush.msra.mxu0 0.0
      %2973 = vmatpush.msra.mxu0 0.0
      %2974 = vmatpush.msra.mxu0 0.0
      %2975 = vmatpush.msra.mxu0 0.0
      %2976 = vmatpush.msra.mxu0 0.0
      %2977 = vmatpush.msra.mxu0 0.0
      %2978 = vmatpush.msra.mxu0 0.0
      %2979 = vmatpush.msra.mxu0 0.0
      %2980 = vmatpush.msra.mxu0 %v1886
      %2981 = vmatpush.msra.mxu0 %v1822
      %2982 = vmatpush.msra.mxu0 %v1758
      %2983 = vmatpush.msra.mxu0 %v1694
      %2984 = vmatmul.f32.gmra.mxu0 %v1905
      %v2985 = vpop.f32.mrf.mxu0
      %v2986 = vadd.f32 0.0, %v2985
      %2987 = vmatmul.f32.gmra.mxu0 %v1908
      %v2988 = vpop.f32.mrf.mxu0
      %v2989 = vadd.f32 0.0, %v2988
      %2990 = vdwg.mxu0
      %2991 = vmatpush.msra.mxu0 0.0
      %2992 = vmatpush.msra.mxu0 0.0
      %2993 = vmatpush.msra.mxu0 0.0
      %2994 = vmatpush.msra.mxu0 0.0
      %2995 = vmatpush.msra.mxu0 0.0
      %2996 = vmatpush.msra.mxu0 0.0
      %2997 = vmatpush.msra.mxu0 0.0
      %2998 = vmatpush.msra.mxu0 0.0
      %2999 = vmatpush.msra.mxu0 0.0
      %3000 = vmatpush.msra.mxu0 0.0
      %3001 = vmatpush.msra.mxu0 0.0
      %3002 = vmatpush.msra.mxu0 0.0
      %3003 = vmatpush.msra.mxu0 %v1887
      %3004 = vmatpush.msra.mxu0 %v1823
      %3005 = vmatpush.msra.mxu0 %v1759
      %3006 = vmatpush.msra.mxu0 %v1695
      %3007 = vmatmul.f32.gmra.mxu0 %v1905
      %v3008 = vpop.f32.mrf.mxu0
      %v3009 = vadd.f32 0.0, %v3008
      %3010 = vmatmul.f32.gmra.mxu0 %v1908
      %v3011 = vpop.f32.mrf.mxu0
      %v3012 = vadd.f32 0.0, %v3011
      %3013 = vdwg.mxu0
      %3014 = vmatpush.msra.mxu0 0.0
      %3015 = vmatpush.msra.mxu0 0.0
      %3016 = vmatpush.msra.mxu0 0.0
      %3017 = vmatpush.msra.mxu0 0.0
      %3018 = vmatpush.msra.mxu0 0.0
      %3019 = vmatpush.msra.mxu0 0.0
      %3020 = vmatpush.msra.mxu0 0.0
      %3021 = vmatpush.msra.mxu0 0.0
      %3022 = vmatpush.msra.mxu0 0.0
      %3023 = vmatpush.msra.mxu0 0.0
      %3024 = vmatpush.msra.mxu0 0.0
      %3025 = vmatpush.msra.mxu0 0.0
      %3026 = vmatpush.msra.mxu0 %v1888
      %3027 = vmatpush.msra.mxu0 %v1824
      %3028 = vmatpush.msra.mxu0 %v1760
      %3029 = vmatpush.msra.mxu0 %v1696
      %3030 = vmatmul.f32.gmra.mxu0 %v1905
      %v3031 = vpop.f32.mrf.mxu0
      %v3032 = vadd.f32 0.0, %v3031
      %3033 = vmatmul.f32.gmra.mxu0 %v1908
      %v3034 = vpop.f32.mrf.mxu0
      %v3035 = vadd.f32 0.0, %v3034
      %3036 = vdwg.mxu0
      %3037 = vmatpush.msra.mxu0 0.0
      %3038 = vmatpush.msra.mxu0 0.0
      %3039 = vmatpush.msra.mxu0 0.0
      %3040 = vmatpush.msra.mxu0 0.0
      %3041 = vmatpush.msra.mxu0 0.0
      %3042 = vmatpush.msra.mxu0 0.0
      %3043 = vmatpush.msra.mxu0 0.0
      %3044 = vmatpush.msra.mxu0 0.0
      %3045 = vmatpush.msra.mxu0 0.0
      %3046 = vmatpush.msra.mxu0 0.0
      %3047 = vmatpush.msra.mxu0 0.0
      %3048 = vmatpush.msra.mxu0 0.0
      %3049 = vmatpush.msra.mxu0 %v1889
      %3050 = vmatpush.msra.mxu0 %v1825
      %3051 = vmatpush.msra.mxu0 %v1761
      %3052 = vmatpush.msra.mxu0 %v1697
      %3053 = vmatmul.f32.gmra.mxu0 %v1905
      %v3054 = vpop.f32.mrf.mxu0
      %v3055 = vadd.f32 0.0, %v3054
      %3056 = vmatmul.f32.gmra.mxu0 %v1908
      %v3057 = vpop.f32.mrf.mxu0
      %v3058 = vadd.f32 0.0, %v3057
      %3059 = vdwg.mxu0
      %3060 = vmatpush.msra.mxu0 0.0
      %3061 = vmatpush.msra.mxu0 0.0
      %3062 = vmatpush.msra.mxu0 0.0
      %3063 = vmatpush.msra.mxu0 0.0
      %3064 = vmatpush.msra.mxu0 0.0
      %3065 = vmatpush.msra.mxu0 0.0
      %3066 = vmatpush.msra.mxu0 0.0
      %3067 = vmatpush.msra.mxu0 0.0
      %3068 = vmatpush.msra.mxu0 0.0
      %3069 = vmatpush.msra.mxu0 0.0
      %3070 = vmatpush.msra.mxu0 0.0
      %3071 = vmatpush.msra.mxu0 0.0
      %3072 = vmatpush.msra.mxu0 %v1890
      %3073 = vmatpush.msra.mxu0 %v1826
      %3074 = vmatpush.msra.mxu0 %v1762
      %3075 = vmatpush.msra.mxu0 %v1698
      %3076 = vmatmul.f32.gmra.mxu0 %v1905
      %v3077 = vpop.f32.mrf.mxu0
      %v3078 = vadd.f32 0.0, %v3077
      %3079 = vmatmul.f32.gmra.mxu0 %v1908
      %v3080 = vpop.f32.mrf.mxu0
      %v3081 = vadd.f32 0.0, %v3080
      %3082 = vdwg.mxu0
      %3083 = vmatpush.msra.mxu0 0.0
      %3084 = vmatpush.msra.mxu0 0.0
      %3085 = vmatpush.msra.mxu0 0.0
      %3086 = vmatpush.msra.mxu0 0.0
      %3087 = vmatpush.msra.mxu0 0.0
      %3088 = vmatpush.msra.mxu0 0.0
      %3089 = vmatpush.msra.mxu0 0.0
      %3090 = vmatpush.msra.mxu0 0.0
      %3091 = vmatpush.msra.mxu0 0.0
      %3092 = vmatpush.msra.mxu0 0.0
      %3093 = vmatpush.msra.mxu0 0.0
      %3094 = vmatpush.msra.mxu0 0.0
      %3095 = vmatpush.msra.mxu0 %v1891
      %3096 = vmatpush.msra.mxu0 %v1827
      %3097 = vmatpush.msra.mxu0 %v1763
      %3098 = vmatpush.msra.mxu0 %v1699
      %3099 = vmatmul.f32.gmra.mxu0 %v1905
      %v3100 = vpop.f32.mrf.mxu0
      %v3101 = vadd.f32 0.0, %v3100
      %3102 = vmatmul.f32.gmra.mxu0 %v1908
      %v3103 = vpop.f32.mrf.mxu0
      %v3104 = vadd.f32 0.0, %v3103
      %3105 = vdwg.mxu0
      %3106 = vmatpush.msra.mxu0 0.0
      %3107 = vmatpush.msra.mxu0 0.0
      %3108 = vmatpush.msra.mxu0 0.0
      %3109 = vmatpush.msra.mxu0 0.0
      %3110 = vmatpush.msra.mxu0 0.0
      %3111 = vmatpush.msra.mxu0 0.0
      %3112 = vmatpush.msra.mxu0 0.0
      %3113 = vmatpush.msra.mxu0 0.0
      %3114 = vmatpush.msra.mxu0 0.0
      %3115 = vmatpush.msra.mxu0 0.0
      %3116 = vmatpush.msra.mxu0 0.0
      %3117 = vmatpush.msra.mxu0 0.0
      %3118 = vmatpush.msra.mxu0 %v1892
      %3119 = vmatpush.msra.mxu0 %v1828
      %3120 = vmatpush.msra.mxu0 %v1764
      %3121 = vmatpush.msra.mxu0 %v1700
      %3122 = vmatmul.f32.gmra.mxu0 %v1905
      %v3123 = vpop.f32.mrf.mxu0
      %v3124 = vadd.f32 0.0, %v3123
      %3125 = vmatmul.f32.gmra.mxu0 %v1908
      %v3126 = vpop.f32.mrf.mxu0
      %v3127 = vadd.f32 0.0, %v3126
      %3128 = vdwg.mxu0
      %3129 = vmatpush.msra.mxu0 0.0
      %3130 = vmatpush.msra.mxu0 0.0
      %3131 = vmatpush.msra.mxu0 0.0
      %3132 = vmatpush.msra.mxu0 0.0
      %3133 = vmatpush.msra.mxu0 0.0
      %3134 = vmatpush.msra.mxu0 0.0
      %3135 = vmatpush.msra.mxu0 0.0
      %3136 = vmatpush.msra.mxu0 0.0
      %3137 = vmatpush.msra.mxu0 0.0
      %3138 = vmatpush.msra.mxu0 0.0
      %3139 = vmatpush.msra.mxu0 0.0
      %3140 = vmatpush.msra.mxu0 0.0
      %3141 = vmatpush.msra.mxu0 %v1893
      %3142 = vmatpush.msra.mxu0 %v1829
      %3143 = vmatpush.msra.mxu0 %v1765
      %3144 = vmatpush.msra.mxu0 %v1701
      %3145 = vmatmul.f32.gmra.mxu0 %v1905
      %v3146 = vpop.f32.mrf.mxu0
      %v3147 = vadd.f32 0.0, %v3146
      %3148 = vmatmul.f32.gmra.mxu0 %v1908
      %v3149 = vpop.f32.mrf.mxu0
      %v3150 = vadd.f32 0.0, %v3149
      %3151 = vdwg.mxu0
      %3152 = vmatpush.msra.mxu0 0.0
      %3153 = vmatpush.msra.mxu0 0.0
      %3154 = vmatpush.msra.mxu0 0.0
      %3155 = vmatpush.msra.mxu0 0.0
      %3156 = vmatpush.msra.mxu0 0.0
      %3157 = vmatpush.msra.mxu0 0.0
      %3158 = vmatpush.msra.mxu0 0.0
      %3159 = vmatpush.msra.mxu0 0.0
      %3160 = vmatpush.msra.mxu0 0.0
      %3161 = vmatpush.msra.mxu0 0.0
      %3162 = vmatpush.msra.mxu0 0.0
      %3163 = vmatpush.msra.mxu0 0.0
      %3164 = vmatpush.msra.mxu0 %v1894
      %3165 = vmatpush.msra.mxu0 %v1830
      %3166 = vmatpush.msra.mxu0 %v1766
      %3167 = vmatpush.msra.mxu0 %v1702
      %3168 = vmatmul.f32.gmra.mxu0 %v1905
      %v3169 = vpop.f32.mrf.mxu0
      %v3170 = vadd.f32 0.0, %v3169
      %3171 = vmatmul.f32.gmra.mxu0 %v1908
      %v3172 = vpop.f32.mrf.mxu0
      %v3173 = vadd.f32 0.0, %v3172
      %3174 = vdwg.mxu0
      %3175 = vmatpush.msra.mxu0 0.0
      %3176 = vmatpush.msra.mxu0 0.0
      %3177 = vmatpush.msra.mxu0 0.0
      %3178 = vmatpush.msra.mxu0 0.0
      %3179 = vmatpush.msra.mxu0 0.0
      %3180 = vmatpush.msra.mxu0 0.0
      %3181 = vmatpush.msra.mxu0 0.0
      %3182 = vmatpush.msra.mxu0 0.0
      %3183 = vmatpush.msra.mxu0 0.0
      %3184 = vmatpush.msra.mxu0 0.0
      %3185 = vmatpush.msra.mxu0 0.0
      %3186 = vmatpush.msra.mxu0 0.0
      %3187 = vmatpush.msra.mxu0 %v1895
      %3188 = vmatpush.msra.mxu0 %v1831
      %3189 = vmatpush.msra.mxu0 %v1767
      %3190 = vmatpush.msra.mxu0 %v1703
      %3191 = vmatmul.f32.gmra.mxu0 %v1905
      %v3192 = vpop.f32.mrf.mxu0
      %v3193 = vadd.f32 0.0, %v3192
      %3194 = vmatmul.f32.gmra.mxu0 %v1908
      %v3195 = vpop.f32.mrf.mxu0
      %v3196 = vadd.f32 0.0, %v3195
      %3197 = vdwg.mxu0
      %3198 = vmatpush.msra.mxu0 0.0
      %3199 = vmatpush.msra.mxu0 0.0
      %3200 = vmatpush.msra.mxu0 0.0
      %3201 = vmatpush.msra.mxu0 0.0
      %3202 = vmatpush.msra.mxu0 0.0
      %3203 = vmatpush.msra.mxu0 0.0
      %3204 = vmatpush.msra.mxu0 0.0
      %3205 = vmatpush.msra.mxu0 0.0
      %3206 = vmatpush.msra.mxu0 0.0
      %3207 = vmatpush.msra.mxu0 0.0
      %3208 = vmatpush.msra.mxu0 0.0
      %3209 = vmatpush.msra.mxu0 0.0
      %3210 = vmatpush.msra.mxu0 %v1896
      %3211 = vmatpush.msra.mxu0 %v1832
      %3212 = vmatpush.msra.mxu0 %v1768
      %3213 = vmatpush.msra.mxu0 %v1704
      %3214 = vmatmul.f32.gmra.mxu0 %v1905
      %v3215 = vpop.f32.mrf.mxu0
      %v3216 = vadd.f32 0.0, %v3215
      %3217 = vmatmul.f32.gmra.mxu0 %v1908
      %v3218 = vpop.f32.mrf.mxu0
      %v3219 = vadd.f32 0.0, %v3218
      %3220 = vdwg.mxu0
      %3221 = vmatpush.msra.mxu0 0.0
      %3222 = vmatpush.msra.mxu0 0.0
      %3223 = vmatpush.msra.mxu0 0.0
      %3224 = vmatpush.msra.mxu0 0.0
      %3225 = vmatpush.msra.mxu0 0.0
      %3226 = vmatpush.msra.mxu0 0.0
      %3227 = vmatpush.msra.mxu0 0.0
      %3228 = vmatpush.msra.mxu0 0.0
      %3229 = vmatpush.msra.mxu0 0.0
      %3230 = vmatpush.msra.mxu0 0.0
      %3231 = vmatpush.msra.mxu0 0.0
      %3232 = vmatpush.msra.mxu0 0.0
      %3233 = vmatpush.msra.mxu0 %v1897
      %3234 = vmatpush.msra.mxu0 %v1833
      %3235 = vmatpush.msra.mxu0 %v1769
      %3236 = vmatpush.msra.mxu0 %v1705
      %3237 = vmatmul.f32.gmra.mxu0 %v1905
      %v3238 = vpop.f32.mrf.mxu0
      %v3239 = vadd.f32 0.0, %v3238
      %3240 = vmatmul.f32.gmra.mxu0 %v1908
      %v3241 = vpop.f32.mrf.mxu0
      %v3242 = vadd.f32 0.0, %v3241
      %3243 = vdwg.mxu0
      %3244 = vmatpush.msra.mxu0 0.0
      %3245 = vmatpush.msra.mxu0 0.0
      %3246 = vmatpush.msra.mxu0 0.0
      %3247 = vmatpush.msra.mxu0 0.0
      %3248 = vmatpush.msra.mxu0 0.0
      %3249 = vmatpush.msra.mxu0 0.0
      %3250 = vmatpush.msra.mxu0 0.0
      %3251 = vmatpush.msra.mxu0 0.0
      %3252 = vmatpush.msra.mxu0 0.0
      %3253 = vmatpush.msra.mxu0 0.0
      %3254 = vmatpush.msra.mxu0 0.0
      %3255 = vmatpush.msra.mxu0 0.0
      %3256 = vmatpush.msra.mxu0 %v1898
      %3257 = vmatpush.msra.mxu0 %v1834
      %3258 = vmatpush.msra.mxu0 %v1770
      %3259 = vmatpush.msra.mxu0 %v1706
      %3260 = vmatmul.f32.gmra.mxu0 %v1905
      %v3261 = vpop.f32.mrf.mxu0
      %v3262 = vadd.f32 0.0, %v3261
      %3263 = vmatmul.f32.gmra.mxu0 %v1908
      %v3264 = vpop.f32.mrf.mxu0
      %v3265 = vadd.f32 0.0, %v3264
      %3266 = vdwg.mxu0
      %3267 = vmatpush.msra.mxu0 0.0
      %3268 = vmatpush.msra.mxu0 0.0
      %3269 = vmatpush.msra.mxu0 0.0
      %3270 = vmatpush.msra.mxu0 0.0
      %3271 = vmatpush.msra.mxu0 0.0
      %3272 = vmatpush.msra.mxu0 0.0
      %3273 = vmatpush.msra.mxu0 0.0
      %3274 = vmatpush.msra.mxu0 0.0
      %3275 = vmatpush.msra.mxu0 0.0
      %3276 = vmatpush.msra.mxu0 0.0
      %3277 = vmatpush.msra.mxu0 0.0
      %3278 = vmatpush.msra.mxu0 0.0
      %3279 = vmatpush.msra.mxu0 %v1899
      %3280 = vmatpush.msra.mxu0 %v1835
      %3281 = vmatpush.msra.mxu0 %v1771
      %3282 = vmatpush.msra.mxu0 %v1707
      %3283 = vmatmul.f32.gmra.mxu0 %v1905
      %v3284 = vpop.f32.mrf.mxu0
      %v3285 = vadd.f32 0.0, %v3284
      %3286 = vmatmul.f32.gmra.mxu0 %v1908
      %v3287 = vpop.f32.mrf.mxu0
      %v3288 = vadd.f32 0.0, %v3287
      %3289 = vdwg.mxu0
      %3290 = vmatpush.msra.mxu0 0.0
      %3291 = vmatpush.msra.mxu0 0.0
      %3292 = vmatpush.msra.mxu0 0.0
      %3293 = vmatpush.msra.mxu0 0.0
      %3294 = vmatpush.msra.mxu0 0.0
      %3295 = vmatpush.msra.mxu0 0.0
      %3296 = vmatpush.msra.mxu0 0.0
      %3297 = vmatpush.msra.mxu0 0.0
      %3298 = vmatpush.msra.mxu0 0.0
      %3299 = vmatpush.msra.mxu0 0.0
      %3300 = vmatpush.msra.mxu0 0.0
      %3301 = vmatpush.msra.mxu0 0.0
      %3302 = vmatpush.msra.mxu0 %v1900
      %3303 = vmatpush.msra.mxu0 %v1836
      %3304 = vmatpush.msra.mxu0 %v1772
      %3305 = vmatpush.msra.mxu0 %v1708
      %3306 = vmatmul.f32.gmra.mxu0 %v1905
      %v3307 = vpop.f32.mrf.mxu0
      %v3308 = vadd.f32 0.0, %v3307
      %3309 = vmatmul.f32.gmra.mxu0 %v1908
      %v3310 = vpop.f32.mrf.mxu0
      %v3311 = vadd.f32 0.0, %v3310
      %3312 = vdwg.mxu0
      %3313 = vmatpush.msra.mxu0 0.0
      %3314 = vmatpush.msra.mxu0 0.0
      %3315 = vmatpush.msra.mxu0 0.0
      %3316 = vmatpush.msra.mxu0 0.0
      %3317 = vmatpush.msra.mxu0 0.0
      %3318 = vmatpush.msra.mxu0 0.0
      %3319 = vmatpush.msra.mxu0 0.0
      %3320 = vmatpush.msra.mxu0 0.0
      %3321 = vmatpush.msra.mxu0 0.0
      %3322 = vmatpush.msra.mxu0 0.0
      %3323 = vmatpush.msra.mxu0 0.0
      %3324 = vmatpush.msra.mxu0 0.0
      %3325 = vmatpush.msra.mxu0 %v1901
      %3326 = vmatpush.msra.mxu0 %v1837
      %3327 = vmatpush.msra.mxu0 %v1773
      %3328 = vmatpush.msra.mxu0 %v1709
      %3329 = vmatmul.f32.gmra.mxu0 %v1905
      %v3330 = vpop.f32.mrf.mxu0
      %v3331 = vadd.f32 0.0, %v3330
      %3332 = vmatmul.f32.gmra.mxu0 %v1908
      %v3333 = vpop.f32.mrf.mxu0
      %v3334 = vadd.f32 0.0, %v3333
      %3335 = vdwg.mxu0
      %3336 = vmatpush.msra.mxu0 0.0
      %3337 = vmatpush.msra.mxu0 0.0
      %3338 = vmatpush.msra.mxu0 0.0
      %3339 = vmatpush.msra.mxu0 0.0
      %3340 = vmatpush.msra.mxu0 0.0
      %3341 = vmatpush.msra.mxu0 0.0
      %3342 = vmatpush.msra.mxu0 0.0
      %3343 = vmatpush.msra.mxu0 0.0
      %3344 = vmatpush.msra.mxu0 0.0
      %3345 = vmatpush.msra.mxu0 0.0
      %3346 = vmatpush.msra.mxu0 0.0
      %3347 = vmatpush.msra.mxu0 0.0
      %3348 = vmatpush.msra.mxu0 %v1902
      %3349 = vmatpush.msra.mxu0 %v1838
      %3350 = vmatpush.msra.mxu0 %v1774
      %3351 = vmatpush.msra.mxu0 %v1710
      %3352 = vmatmul.f32.gmra.mxu0 %v1905
      %v3353 = vpop.f32.mrf.mxu0
      %v3354 = vadd.f32 0.0, %v3353
      %3355 = vmatmul.f32.gmra.mxu0 %v1908
      %v3356 = vpop.f32.mrf.mxu0
      %v3357 = vadd.f32 0.0, %v3356
      %3358 = vdwg.mxu0
      %3359 = vmatpush.msra.mxu0 0.0
      %3360 = vmatpush.msra.mxu0 0.0
      %3361 = vmatpush.msra.mxu0 0.0
      %3362 = vmatpush.msra.mxu0 0.0
      %3363 = vmatpush.msra.mxu0 0.0
      %3364 = vmatpush.msra.mxu0 0.0
      %3365 = vmatpush.msra.mxu0 0.0
      %3366 = vmatpush.msra.mxu0 0.0
      %3367 = vmatpush.msra.mxu0 0.0
      %3368 = vmatpush.msra.mxu0 0.0
      %3369 = vmatpush.msra.mxu0 0.0
      %3370 = vmatpush.msra.mxu0 0.0
      %3371 = vmatpush.msra.mxu0 %v1903
      %3372 = vmatpush.msra.mxu0 %v1839
      %3373 = vmatpush.msra.mxu0 %v1775
      %3374 = vmatpush.msra.mxu0 %v1711
      %3375 = vmatmul.f32.gmra.mxu0 %v1905
      %v3376 = vpop.f32.mrf.mxu0
      %v3377 = vadd.f32 0.0, %v3376
      %3378 = vmatmul.f32.gmra.mxu0 %v1908
      %v3379 = vpop.f32.mrf.mxu0
      %v3380 = vadd.f32 0.0, %v3379
      %3381 = vdwg.mxu0
      %v3382 = vmul.f32 %v1928, %v1928
      %v3383 = vmul.f32 %v1951, %v1951
      %v3384 = vmul.f32 %v1974, %v1974
      %v3385 = vmul.f32 %v1997, %v1997
      %v3386 = vmul.f32 %v2020, %v2020
      %v3387 = vmul.f32 %v2043, %v2043
      %v3388 = vmul.f32 %v2066, %v2066
      %v3389 = vmul.f32 %v2089, %v2089
      %v3390 = vmul.f32 %v2112, %v2112
      %v3391 = vmul.f32 %v2135, %v2135
      %v3392 = vmul.f32 %v2158, %v2158
      %v3393 = vmul.f32 %v2181, %v2181
      %v3394 = vmul.f32 %v2204, %v2204
      %v3395 = vmul.f32 %v2227, %v2227
      %v3396 = vmul.f32 %v2250, %v2250
      %v3397 = vmul.f32 %v2273, %v2273
      %v3398 = vmul.f32 %v2296, %v2296
      %v3399 = vmul.f32 %v2319, %v2319
      %v3400 = vmul.f32 %v2342, %v2342
      %v3401 = vmul.f32 %v2365, %v2365
      %v3402 = vmul.f32 %v2388, %v2388
      %v3403 = vmul.f32 %v2411, %v2411
      %v3404 = vmul.f32 %v2434, %v2434
      %v3405 = vmul.f32 %v2457, %v2457
      %v3406 = vmul.f32 %v2480, %v2480
      %v3407 = vmul.f32 %v2503, %v2503
      %v3408 = vmul.f32 %v2526, %v2526
      %v3409 = vmul.f32 %v2549, %v2549
      %v3410 = vmul.f32 %v2572, %v2572
      %v3411 = vmul.f32 %v2595, %v2595
      %v3412 = vmul.f32 %v2618, %v2618
      %v3413 = vmul.f32 %v2641, %v2641
      %v3414 = vmul.f32 %v2664, %v2664
      %v3415 = vmul.f32 %v2687, %v2687
      %v3416 = vmul.f32 %v2710, %v2710
      %v3417 = vmul.f32 %v2733, %v2733
      %v3418 = vmul.f32 %v2756, %v2756
      %v3419 = vmul.f32 %v2779, %v2779
      %v3420 = vmul.f32 %v2802, %v2802
      %v3421 = vmul.f32 %v2825, %v2825
      %v3422 = vmul.f32 %v2848, %v2848
      %v3423 = vmul.f32 %v2871, %v2871
      %v3424 = vmul.f32 %v2894, %v2894
      %v3425 = vmul.f32 %v2917, %v2917
      %v3426 = vmul.f32 %v2940, %v2940
      %v3427 = vmul.f32 %v2963, %v2963
      %v3428 = vmul.f32 %v2986, %v2986
      %v3429 = vmul.f32 %v3009, %v3009
      %v3430 = vmul.f32 %v3032, %v3032
      %v3431 = vmul.f32 %v3055, %v3055
      %v3432 = vmul.f32 %v3078, %v3078
      %v3433 = vmul.f32 %v3101, %v3101
      %v3434 = vmul.f32 %v3124, %v3124
      %v3435 = vmul.f32 %v3147, %v3147
      %v3436 = vmul.f32 %v3170, %v3170
      %v3437 = vmul.f32 %v3193, %v3193
      %v3438 = vmul.f32 %v3216, %v3216
      %v3439 = vmul.f32 %v3239, %v3239
      %v3440 = vmul.f32 %v3262, %v3262
      %v3441 = vmul.f32 %v3285, %v3285
      %v3442 = vmul.f32 %v3308, %v3308
      %v3443 = vmul.f32 %v3331, %v3331
      %v3444 = vmul.f32 %v3354, %v3354
      %v3445 = vmul.f32 %v3377, %v3377
      %v3446 = vmul.f32 %v1931, %v1931
      %v3447 = vmul.f32 %v1954, %v1954
      %v3448 = vmul.f32 %v1977, %v1977
      %v3449 = vmul.f32 %v2000, %v2000
      %v3450 = vmul.f32 %v2023, %v2023
      %v3451 = vmul.f32 %v2046, %v2046
      %v3452 = vmul.f32 %v2069, %v2069
      %v3453 = vmul.f32 %v2092, %v2092
      %v3454 = vmul.f32 %v2115, %v2115
      %v3455 = vmul.f32 %v2138, %v2138
      %v3456 = vmul.f32 %v2161, %v2161
      %v3457 = vmul.f32 %v2184, %v2184
      %v3458 = vmul.f32 %v2207, %v2207
      %v3459 = vmul.f32 %v2230, %v2230
      %v3460 = vmul.f32 %v2253, %v2253
      %v3461 = vmul.f32 %v2276, %v2276
      %v3462 = vmul.f32 %v2299, %v2299
      %v3463 = vmul.f32 %v2322, %v2322
      %v3464 = vmul.f32 %v2345, %v2345
      %v3465 = vmul.f32 %v2368, %v2368
      %v3466 = vmul.f32 %v2391, %v2391
      %v3467 = vmul.f32 %v2414, %v2414
      %v3468 = vmul.f32 %v2437, %v2437
      %v3469 = vmul.f32 %v2460, %v2460
      %v3470 = vmul.f32 %v2483, %v2483
      %v3471 = vmul.f32 %v2506, %v2506
      %v3472 = vmul.f32 %v2529, %v2529
      %v3473 = vmul.f32 %v2552, %v2552
      %v3474 = vmul.f32 %v2575, %v2575
      %v3475 = vmul.f32 %v2598, %v2598
      %v3476 = vmul.f32 %v2621, %v2621
      %v3477 = vmul.f32 %v2644, %v2644
      %v3478 = vmul.f32 %v2667, %v2667
      %v3479 = vmul.f32 %v2690, %v2690
      %v3480 = vmul.f32 %v2713, %v2713
      %v3481 = vmul.f32 %v2736, %v2736
      %v3482 = vmul.f32 %v2759, %v2759
      %v3483 = vmul.f32 %v2782, %v2782
      %v3484 = vmul.f32 %v2805, %v2805
      %v3485 = vmul.f32 %v2828, %v2828
      %v3486 = vmul.f32 %v2851, %v2851
      %v3487 = vmul.f32 %v2874, %v2874
      %v3488 = vmul.f32 %v2897, %v2897
      %v3489 = vmul.f32 %v2920, %v2920
      %v3490 = vmul.f32 %v2943, %v2943
      %v3491 = vmul.f32 %v2966, %v2966
      %v3492 = vmul.f32 %v2989, %v2989
      %v3493 = vmul.f32 %v3012, %v3012
      %v3494 = vmul.f32 %v3035, %v3035
      %v3495 = vmul.f32 %v3058, %v3058
      %v3496 = vmul.f32 %v3081, %v3081
      %v3497 = vmul.f32 %v3104, %v3104
      %v3498 = vmul.f32 %v3127, %v3127
      %v3499 = vmul.f32 %v3150, %v3150
      %v3500 = vmul.f32 %v3173, %v3173
      %v3501 = vmul.f32 %v3196, %v3196
      %v3502 = vmul.f32 %v3219, %v3219
      %v3503 = vmul.f32 %v3242, %v3242
      %v3504 = vmul.f32 %v3265, %v3265
      %v3505 = vmul.f32 %v3288, %v3288
      %v3506 = vmul.f32 %v3311, %v3311
      %v3507 = vmul.f32 %v3334, %v3334
      %v3508 = vmul.f32 %v3357, %v3357
      %v3509 = vmul.f32 %v3380, %v3380
      %v3510 = vmul.f32 %v1928, %v3382
      %v3511 = vmul.f32 %v1951, %v3383
      %v3512 = vmul.f32 %v1974, %v3384
      %v3513 = vmul.f32 %v1997, %v3385
      %v3514 = vmul.f32 %v2020, %v3386
      %v3515 = vmul.f32 %v2043, %v3387
      %v3516 = vmul.f32 %v2066, %v3388
      %v3517 = vmul.f32 %v2089, %v3389
      %v3518 = vmul.f32 %v2112, %v3390
      %v3519 = vmul.f32 %v2135, %v3391
      %v3520 = vmul.f32 %v2158, %v3392
      %v3521 = vmul.f32 %v2181, %v3393
      %v3522 = vmul.f32 %v2204, %v3394
      %v3523 = vmul.f32 %v2227, %v3395
      %v3524 = vmul.f32 %v2250, %v3396
      %v3525 = vmul.f32 %v2273, %v3397
      %v3526 = vmul.f32 %v2296, %v3398
      %v3527 = vmul.f32 %v2319, %v3399
      %v3528 = vmul.f32 %v2342, %v3400
      %v3529 = vmul.f32 %v2365, %v3401
      %v3530 = vmul.f32 %v2388, %v3402
      %v3531 = vmul.f32 %v2411, %v3403
      %v3532 = vmul.f32 %v2434, %v3404
      %v3533 = vmul.f32 %v2457, %v3405
      %v3534 = vmul.f32 %v2480, %v3406
      %v3535 = vmul.f32 %v2503, %v3407
      %v3536 = vmul.f32 %v2526, %v3408
      %v3537 = vmul.f32 %v2549, %v3409
      %v3538 = vmul.f32 %v2572, %v3410
      %v3539 = vmul.f32 %v2595, %v3411
      %v3540 = vmul.f32 %v2618, %v3412
      %v3541 = vmul.f32 %v2641, %v3413
      %v3542 = vmul.f32 %v2664, %v3414
      %v3543 = vmul.f32 %v2687, %v3415
      %v3544 = vmul.f32 %v2710, %v3416
      %v3545 = vmul.f32 %v2733, %v3417
      %v3546 = vmul.f32 %v2756, %v3418
      %v3547 = vmul.f32 %v2779, %v3419
      %v3548 = vmul.f32 %v2802, %v3420
      %v3549 = vmul.f32 %v2825, %v3421
      %v3550 = vmul.f32 %v2848, %v3422
      %v3551 = vmul.f32 %v2871, %v3423
      %v3552 = vmul.f32 %v2894, %v3424
      %v3553 = vmul.f32 %v2917, %v3425
      %v3554 = vmul.f32 %v2940, %v3426
      %v3555 = vmul.f32 %v2963, %v3427
      %v3556 = vmul.f32 %v2986, %v3428
      %v3557 = vmul.f32 %v3009, %v3429
      %v3558 = vmul.f32 %v3032, %v3430
      %v3559 = vmul.f32 %v3055, %v3431
      %v3560 = vmul.f32 %v3078, %v3432
      %v3561 = vmul.f32 %v3101, %v3433
      %v3562 = vmul.f32 %v3124, %v3434
      %v3563 = vmul.f32 %v3147, %v3435
      %v3564 = vmul.f32 %v3170, %v3436
      %v3565 = vmul.f32 %v3193, %v3437
      %v3566 = vmul.f32 %v3216, %v3438
      %v3567 = vmul.f32 %v3239, %v3439
      %v3568 = vmul.f32 %v3262, %v3440
      %v3569 = vmul.f32 %v3285, %v3441
      %v3570 = vmul.f32 %v3308, %v3442
      %v3571 = vmul.f32 %v3331, %v3443
      %v3572 = vmul.f32 %v3354, %v3444
      %v3573 = vmul.f32 %v3377, %v3445
      %v3574 = vmul.f32 %v1931, %v3446
      %v3575 = vmul.f32 %v1954, %v3447
      %v3576 = vmul.f32 %v1977, %v3448
      %v3577 = vmul.f32 %v2000, %v3449
      %v3578 = vmul.f32 %v2023, %v3450
      %v3579 = vmul.f32 %v2046, %v3451
      %v3580 = vmul.f32 %v2069, %v3452
      %v3581 = vmul.f32 %v2092, %v3453
      %v3582 = vmul.f32 %v2115, %v3454
      %v3583 = vmul.f32 %v2138, %v3455
      %v3584 = vmul.f32 %v2161, %v3456
      %v3585 = vmul.f32 %v2184, %v3457
      %v3586 = vmul.f32 %v2207, %v3458
      %v3587 = vmul.f32 %v2230, %v3459
      %v3588 = vmul.f32 %v2253, %v3460
      %v3589 = vmul.f32 %v2276, %v3461
      %v3590 = vmul.f32 %v2299, %v3462
      %v3591 = vmul.f32 %v2322, %v3463
      %v3592 = vmul.f32 %v2345, %v3464
      %v3593 = vmul.f32 %v2368, %v3465
      %v3594 = vmul.f32 %v2391, %v3466
      %v3595 = vmul.f32 %v2414, %v3467
      %v3596 = vmul.f32 %v2437, %v3468
      %v3597 = vmul.f32 %v2460, %v3469
      %v3598 = vmul.f32 %v2483, %v3470
      %v3599 = vmul.f32 %v2506, %v3471
      %v3600 = vmul.f32 %v2529, %v3472
      %v3601 = vmul.f32 %v2552, %v3473
      %v3602 = vmul.f32 %v2575, %v3474
      %v3603 = vmul.f32 %v2598, %v3475
      %v3604 = vmul.f32 %v2621, %v3476
      %v3605 = vmul.f32 %v2644, %v3477
      %v3606 = vmul.f32 %v2667, %v3478
      %v3607 = vmul.f32 %v2690, %v3479
      %v3608 = vmul.f32 %v2713, %v3480
      %v3609 = vmul.f32 %v2736, %v3481
      %v3610 = vmul.f32 %v2759, %v3482
      %v3611 = vmul.f32 %v2782, %v3483
      %v3612 = vmul.f32 %v2805, %v3484
      %v3613 = vmul.f32 %v2828, %v3485
      %v3614 = vmul.f32 %v2851, %v3486
      %v3615 = vmul.f32 %v2874, %v3487
      %v3616 = vmul.f32 %v2897, %v3488
      %v3617 = vmul.f32 %v2920, %v3489
      %v3618 = vmul.f32 %v2943, %v3490
      %v3619 = vmul.f32 %v2966, %v3491
      %v3620 = vmul.f32 %v2989, %v3492
      %v3621 = vmul.f32 %v3012, %v3493
      %v3622 = vmul.f32 %v3035, %v3494
      %v3623 = vmul.f32 %v3058, %v3495
      %v3624 = vmul.f32 %v3081, %v3496
      %v3625 = vmul.f32 %v3104, %v3497
      %v3626 = vmul.f32 %v3127, %v3498
      %v3627 = vmul.f32 %v3150, %v3499
      %v3628 = vmul.f32 %v3173, %v3500
      %v3629 = vmul.f32 %v3196, %v3501
      %v3630 = vmul.f32 %v3219, %v3502
      %v3631 = vmul.f32 %v3242, %v3503
      %v3632 = vmul.f32 %v3265, %v3504
      %v3633 = vmul.f32 %v3288, %v3505
      %v3634 = vmul.f32 %v3311, %v3506
      %v3635 = vmul.f32 %v3334, %v3507
      %v3636 = vmul.f32 %v3357, %v3508
      %v3637 = vmul.f32 %v3380, %v3509
      %v3638 = vmul.f32 %v3510, 0.044715
      %v3639 = vmul.f32 %v3511, 0.044715
      %v3640 = vmul.f32 %v3512, 0.044715
      %v3641 = vmul.f32 %v3513, 0.044715
      %v3642 = vmul.f32 %v3514, 0.044715
      %v3643 = vmul.f32 %v3515, 0.044715
      %v3644 = vmul.f32 %v3516, 0.044715
      %v3645 = vmul.f32 %v3517, 0.044715
      %v3646 = vmul.f32 %v3518, 0.044715
      %v3647 = vmul.f32 %v3519, 0.044715
      %v3648 = vmul.f32 %v3520, 0.044715
      %v3649 = vmul.f32 %v3521, 0.044715
      %v3650 = vmul.f32 %v3522, 0.044715
      %v3651 = vmul.f32 %v3523, 0.044715
      %v3652 = vmul.f32 %v3524, 0.044715
      %v3653 = vmul.f32 %v3525, 0.044715
      %v3654 = vmul.f32 %v3526, 0.044715
      %v3655 = vmul.f32 %v3527, 0.044715
      %v3656 = vmul.f32 %v3528, 0.044715
      %v3657 = vmul.f32 %v3529, 0.044715
      %v3658 = vmul.f32 %v3530, 0.044715
      %v3659 = vmul.f32 %v3531, 0.044715
      %v3660 = vmul.f32 %v3532, 0.044715
      %v3661 = vmul.f32 %v3533, 0.044715
      %v3662 = vmul.f32 %v3534, 0.044715
      %v3663 = vmul.f32 %v3535, 0.044715
      %v3664 = vmul.f32 %v3536, 0.044715
      %v3665 = vmul.f32 %v3537, 0.044715
      %v3666 = vmul.f32 %v3538, 0.044715
      %v3667 = vmul.f32 %v3539, 0.044715
      %v3668 = vmul.f32 %v3540, 0.044715
      %v3669 = vmul.f32 %v3541, 0.044715
      %v3670 = vmul.f32 %v3542, 0.044715
      %v3671 = vmul.f32 %v3543, 0.044715
      %v3672 = vmul.f32 %v3544, 0.044715
      %v3673 = vmul.f32 %v3545, 0.044715
      %v3674 = vmul.f32 %v3546, 0.044715
      %v3675 = vmul.f32 %v3547, 0.044715
      %v3676 = vmul.f32 %v3548, 0.044715
      %v3677 = vmul.f32 %v3549, 0.044715
      %v3678 = vmul.f32 %v3550, 0.044715
      %v3679 = vmul.f32 %v3551, 0.044715
      %v3680 = vmul.f32 %v3552, 0.044715
      %v3681 = vmul.f32 %v3553, 0.044715
      %v3682 = vmul.f32 %v3554, 0.044715
      %v3683 = vmul.f32 %v3555, 0.044715
      %v3684 = vmul.f32 %v3556, 0.044715
      %v3685 = vmul.f32 %v3557, 0.044715
      %v3686 = vmul.f32 %v3558, 0.044715
      %v3687 = vmul.f32 %v3559, 0.044715
      %v3688 = vmul.f32 %v3560, 0.044715
      %v3689 = vmul.f32 %v3561, 0.044715
      %v3690 = vmul.f32 %v3562, 0.044715
      %v3691 = vmul.f32 %v3563, 0.044715
      %v3692 = vmul.f32 %v3564, 0.044715
      %v3693 = vmul.f32 %v3565, 0.044715
      %v3694 = vmul.f32 %v3566, 0.044715
      %v3695 = vmul.f32 %v3567, 0.044715
      %v3696 = vmul.f32 %v3568, 0.044715
      %v3697 = vmul.f32 %v3569, 0.044715
      %v3698 = vmul.f32 %v3570, 0.044715
      %v3699 = vmul.f32 %v3571, 0.044715
      %v3700 = vmul.f32 %v3572, 0.044715
      %v3701 = vmul.f32 %v3573, 0.044715
      %v3702 = vmul.f32 %v3574, 0.044715
      %v3703 = vmul.f32 %v3575, 0.044715
      %v3704 = vmul.f32 %v3576, 0.044715
      %v3705 = vmul.f32 %v3577, 0.044715
      %v3706 = vmul.f32 %v3578, 0.044715
      %v3707 = vmul.f32 %v3579, 0.044715
      %v3708 = vmul.f32 %v3580, 0.044715
      %v3709 = vmul.f32 %v3581, 0.044715
      %v3710 = vmul.f32 %v3582, 0.044715
      %v3711 = vmul.f32 %v3583, 0.044715
      %v3712 = vmul.f32 %v3584, 0.044715
      %v3713 = vmul.f32 %v3585, 0.044715
      %v3714 = vmul.f32 %v3586, 0.044715
      %v3715 = vmul.f32 %v3587, 0.044715
      %v3716 = vmul.f32 %v3588, 0.044715
      %v3717 = vmul.f32 %v3589, 0.044715
      %v3718 = vmul.f32 %v3590, 0.044715
      %v3719 = vmul.f32 %v3591, 0.044715
      %v3720 = vmul.f32 %v3592, 0.044715
      %v3721 = vmul.f32 %v3593, 0.044715
      %v3722 = vmul.f32 %v3594, 0.044715
      %v3723 = vmul.f32 %v3595, 0.044715
      %v3724 = vmul.f32 %v3596, 0.044715
      %v3725 = vmul.f32 %v3597, 0.044715
      %v3726 = vmul.f32 %v3598, 0.044715
      %v3727 = vmul.f32 %v3599, 0.044715
      %v3728 = vmul.f32 %v3600, 0.044715
      %v3729 = vmul.f32 %v3601, 0.044715
      %v3730 = vmul.f32 %v3602, 0.044715
      %v3731 = vmul.f32 %v3603, 0.044715
      %v3732 = vmul.f32 %v3604, 0.044715
      %v3733 = vmul.f32 %v3605, 0.044715
      %v3734 = vmul.f32 %v3606, 0.044715
      %v3735 = vmul.f32 %v3607, 0.044715
      %v3736 = vmul.f32 %v3608, 0.044715
      %v3737 = vmul.f32 %v3609, 0.044715
      %v3738 = vmul.f32 %v3610, 0.044715
      %v3739 = vmul.f32 %v3611, 0.044715
      %v3740 = vmul.f32 %v3612, 0.044715
      %v3741 = vmul.f32 %v3613, 0.044715
      %v3742 = vmul.f32 %v3614, 0.044715
      %v3743 = vmul.f32 %v3615, 0.044715
      %v3744 = vmul.f32 %v3616, 0.044715
      %v3745 = vmul.f32 %v3617, 0.044715
      %v3746 = vmul.f32 %v3618, 0.044715
      %v3747 = vmul.f32 %v3619, 0.044715
      %v3748 = vmul.f32 %v3620, 0.044715
      %v3749 = vmul.f32 %v3621, 0.044715
      %v3750 = vmul.f32 %v3622, 0.044715
      %v3751 = vmul.f32 %v3623, 0.044715
      %v3752 = vmul.f32 %v3624, 0.044715
      %v3753 = vmul.f32 %v3625, 0.044715
      %v3754 = vmul.f32 %v3626, 0.044715
      %v3755 = vmul.f32 %v3627, 0.044715
      %v3756 = vmul.f32 %v3628, 0.044715
      %v3757 = vmul.f32 %v3629, 0.044715
      %v3758 = vmul.f32 %v3630, 0.044715
      %v3759 = vmul.f32 %v3631, 0.044715
      %v3760 = vmul.f32 %v3632, 0.044715
      %v3761 = vmul.f32 %v3633, 0.044715
      %v3762 = vmul.f32 %v3634, 0.044715
      %v3763 = vmul.f32 %v3635, 0.044715
      %v3764 = vmul.f32 %v3636, 0.044715
      %v3765 = vmul.f32 %v3637, 0.044715
      %v3766 = vadd.f32 %v1928, %v3638
      %v3767 = vadd.f32 %v1951, %v3639
      %v3768 = vadd.f32 %v1974, %v3640
      %v3769 = vadd.f32 %v1997, %v3641
      %v3770 = vadd.f32 %v2020, %v3642
      %v3771 = vadd.f32 %v2043, %v3643
      %v3772 = vadd.f32 %v2066, %v3644
      %v3773 = vadd.f32 %v2089, %v3645
      %v3774 = vadd.f32 %v2112, %v3646
      %v3775 = vadd.f32 %v2135, %v3647
      %v3776 = vadd.f32 %v2158, %v3648
      %v3777 = vadd.f32 %v2181, %v3649
      %v3778 = vadd.f32 %v2204, %v3650
      %v3779 = vadd.f32 %v2227, %v3651
      %v3780 = vadd.f32 %v2250, %v3652
      %v3781 = vadd.f32 %v2273, %v3653
      %v3782 = vadd.f32 %v2296, %v3654
      %v3783 = vadd.f32 %v2319, %v3655
      %v3784 = vadd.f32 %v2342, %v3656
      %v3785 = vadd.f32 %v2365, %v3657
      %v3786 = vadd.f32 %v2388, %v3658
      %v3787 = vadd.f32 %v2411, %v3659
      %v3788 = vadd.f32 %v2434, %v3660
      %v3789 = vadd.f32 %v2457, %v3661
      %v3790 = vadd.f32 %v2480, %v3662
      %v3791 = vadd.f32 %v2503, %v3663
      %v3792 = vadd.f32 %v2526, %v3664
      %v3793 = vadd.f32 %v2549, %v3665
      %v3794 = vadd.f32 %v2572, %v3666
      %v3795 = vadd.f32 %v2595, %v3667
      %v3796 = vadd.f32 %v2618, %v3668
      %v3797 = vadd.f32 %v2641, %v3669
      %v3798 = vadd.f32 %v2664, %v3670
      %v3799 = vadd.f32 %v2687, %v3671
      %v3800 = vadd.f32 %v2710, %v3672
      %v3801 = vadd.f32 %v2733, %v3673
      %v3802 = vadd.f32 %v2756, %v3674
      %v3803 = vadd.f32 %v2779, %v3675
      %v3804 = vadd.f32 %v2802, %v3676
      %v3805 = vadd.f32 %v2825, %v3677
      %v3806 = vadd.f32 %v2848, %v3678
      %v3807 = vadd.f32 %v2871, %v3679
      %v3808 = vadd.f32 %v2894, %v3680
      %v3809 = vadd.f32 %v2917, %v3681
      %v3810 = vadd.f32 %v2940, %v3682
      %v3811 = vadd.f32 %v2963, %v3683
      %v3812 = vadd.f32 %v2986, %v3684
      %v3813 = vadd.f32 %v3009, %v3685
      %v3814 = vadd.f32 %v3032, %v3686
      %v3815 = vadd.f32 %v3055, %v3687
      %v3816 = vadd.f32 %v3078, %v3688
      %v3817 = vadd.f32 %v3101, %v3689
      %v3818 = vadd.f32 %v3124, %v3690
      %v3819 = vadd.f32 %v3147, %v3691
      %v3820 = vadd.f32 %v3170, %v3692
      %v3821 = vadd.f32 %v3193, %v3693
      %v3822 = vadd.f32 %v3216, %v3694
      %v3823 = vadd.f32 %v3239, %v3695
      %v3824 = vadd.f32 %v3262, %v3696
      %v3825 = vadd.f32 %v3285, %v3697
      %v3826 = vadd.f32 %v3308, %v3698
      %v3827 = vadd.f32 %v3331, %v3699
      %v3828 = vadd.f32 %v3354, %v3700
      %v3829 = vadd.f32 %v3377, %v3701
      %v3830 = vadd.f32 %v1931, %v3702
      %v3831 = vadd.f32 %v1954, %v3703
      %v3832 = vadd.f32 %v1977, %v3704
      %v3833 = vadd.f32 %v2000, %v3705
      %v3834 = vadd.f32 %v2023, %v3706
      %v3835 = vadd.f32 %v2046, %v3707
      %v3836 = vadd.f32 %v2069, %v3708
      %v3837 = vadd.f32 %v2092, %v3709
      %v3838 = vadd.f32 %v2115, %v3710
      %v3839 = vadd.f32 %v2138, %v3711
      %v3840 = vadd.f32 %v2161, %v3712
      %v3841 = vadd.f32 %v2184, %v3713
      %v3842 = vadd.f32 %v2207, %v3714
      %v3843 = vadd.f32 %v2230, %v3715
      %v3844 = vadd.f32 %v2253, %v3716
      %v3845 = vadd.f32 %v2276, %v3717
      %v3846 = vadd.f32 %v2299, %v3718
      %v3847 = vadd.f32 %v2322, %v3719
      %v3848 = vadd.f32 %v2345, %v3720
      %v3849 = vadd.f32 %v2368, %v3721
      %v3850 = vadd.f32 %v2391, %v3722
      %v3851 = vadd.f32 %v2414, %v3723
      %v3852 = vadd.f32 %v2437, %v3724
      %v3853 = vadd.f32 %v2460, %v3725
      %v3854 = vadd.f32 %v2483, %v3726
      %v3855 = vadd.f32 %v2506, %v3727
      %v3856 = vadd.f32 %v2529, %v3728
      %v3857 = vadd.f32 %v2552, %v3729
      %v3858 = vadd.f32 %v2575, %v3730
      %v3859 = vadd.f32 %v2598, %v3731
      %v3860 = vadd.f32 %v2621, %v3732
      %v3861 = vadd.f32 %v2644, %v3733
      %v3862 = vadd.f32 %v2667, %v3734
      %v3863 = vadd.f32 %v2690, %v3735
      %v3864 = vadd.f32 %v2713, %v3736
      %v3865 = vadd.f32 %v2736, %v3737
      %v3866 = vadd.f32 %v2759, %v3738
      %v3867 = vadd.f32 %v2782, %v3739
      %v3868 = vadd.f32 %v2805, %v3740
      %v3869 = vadd.f32 %v2828, %v3741
      %v3870 = vadd.f32 %v2851, %v3742
      %v3871 = vadd.f32 %v2874, %v3743
      %v3872 = vadd.f32 %v2897, %v3744
      %v3873 = vadd.f32 %v2920, %v3745
      %v3874 = vadd.f32 %v2943, %v3746
      %v3875 = vadd.f32 %v2966, %v3747
      %v3876 = vadd.f32 %v2989, %v3748
      %v3877 = vadd.f32 %v3012, %v3749
      %v3878 = vadd.f32 %v3035, %v3750
      %v3879 = vadd.f32 %v3058, %v3751
      %v3880 = vadd.f32 %v3081, %v3752
      %v3881 = vadd.f32 %v3104, %v3753
      %v3882 = vadd.f32 %v3127, %v3754
      %v3883 = vadd.f32 %v3150, %v3755
      %v3884 = vadd.f32 %v3173, %v3756
      %v3885 = vadd.f32 %v3196, %v3757
      %v3886 = vadd.f32 %v3219, %v3758
      %v3887 = vadd.f32 %v3242, %v3759
      %v3888 = vadd.f32 %v3265, %v3760
      %v3889 = vadd.f32 %v3288, %v3761
      %v3890 = vadd.f32 %v3311, %v3762
      %v3891 = vadd.f32 %v3334, %v3763
      %v3892 = vadd.f32 %v3357, %v3764
      %v3893 = vadd.f32 %v3380, %v3765
      %v3894 = vmul.f32 %v3766, 0.7978846
      %v3895 = vmul.f32 %v3767, 0.7978846
      %v3896 = vmul.f32 %v3768, 0.7978846
      %v3897 = vmul.f32 %v3769, 0.7978846
      %v3898 = vmul.f32 %v3770, 0.7978846
      %v3899 = vmul.f32 %v3771, 0.7978846
      %v3900 = vmul.f32 %v3772, 0.7978846
      %v3901 = vmul.f32 %v3773, 0.7978846
      %v3902 = vmul.f32 %v3774, 0.7978846
      %v3903 = vmul.f32 %v3775, 0.7978846
      %v3904 = vmul.f32 %v3776, 0.7978846
      %v3905 = vmul.f32 %v3777, 0.7978846
      %v3906 = vmul.f32 %v3778, 0.7978846
      %v3907 = vmul.f32 %v3779, 0.7978846
      %v3908 = vmul.f32 %v3780, 0.7978846
      %v3909 = vmul.f32 %v3781, 0.7978846
      %v3910 = vmul.f32 %v3782, 0.7978846
      %v3911 = vmul.f32 %v3783, 0.7978846
      %v3912 = vmul.f32 %v3784, 0.7978846
      %v3913 = vmul.f32 %v3785, 0.7978846
      %v3914 = vmul.f32 %v3786, 0.7978846
      %v3915 = vmul.f32 %v3787, 0.7978846
      %v3916 = vmul.f32 %v3788, 0.7978846
      %v3917 = vmul.f32 %v3789, 0.7978846
      %v3918 = vmul.f32 %v3790, 0.7978846
      %v3919 = vmul.f32 %v3791, 0.7978846
      %v3920 = vmul.f32 %v3792, 0.7978846
      %v3921 = vmul.f32 %v3793, 0.7978846
      %v3922 = vmul.f32 %v3794, 0.7978846
      %v3923 = vmul.f32 %v3795, 0.7978846
      %v3924 = vmul.f32 %v3796, 0.7978846
      %v3925 = vmul.f32 %v3797, 0.7978846
      %v3926 = vmul.f32 %v3798, 0.7978846
      %v3927 = vmul.f32 %v3799, 0.7978846
      %v3928 = vmul.f32 %v3800, 0.7978846
      %v3929 = vmul.f32 %v3801, 0.7978846
      %v3930 = vmul.f32 %v3802, 0.7978846
      %v3931 = vmul.f32 %v3803, 0.7978846
      %v3932 = vmul.f32 %v3804, 0.7978846
      %v3933 = vmul.f32 %v3805, 0.7978846
      %v3934 = vmul.f32 %v3806, 0.7978846
      %v3935 = vmul.f32 %v3807, 0.7978846
      %v3936 = vmul.f32 %v3808, 0.7978846
      %v3937 = vmul.f32 %v3809, 0.7978846
      %v3938 = vmul.f32 %v3810, 0.7978846
      %v3939 = vmul.f32 %v3811, 0.7978846
      %v3940 = vmul.f32 %v3812, 0.7978846
      %v3941 = vmul.f32 %v3813, 0.7978846
      %v3942 = vmul.f32 %v3814, 0.7978846
      %v3943 = vmul.f32 %v3815, 0.7978846
      %v3944 = vmul.f32 %v3816, 0.7978846
      %v3945 = vmul.f32 %v3817, 0.7978846
      %v3946 = vmul.f32 %v3818, 0.7978846
      %v3947 = vmul.f32 %v3819, 0.7978846
      %v3948 = vmul.f32 %v3820, 0.7978846
      %v3949 = vmul.f32 %v3821, 0.7978846
      %v3950 = vmul.f32 %v3822, 0.7978846
      %v3951 = vmul.f32 %v3823, 0.7978846
      %v3952 = vmul.f32 %v3824, 0.7978846
      %v3953 = vmul.f32 %v3825, 0.7978846
      %v3954 = vmul.f32 %v3826, 0.7978846
      %v3955 = vmul.f32 %v3827, 0.7978846
      %v3956 = vmul.f32 %v3828, 0.7978846
      %v3957 = vmul.f32 %v3829, 0.7978846
      %v3958 = vmul.f32 %v3830, 0.7978846
      %v3959 = vmul.f32 %v3831, 0.7978846
      %v3960 = vmul.f32 %v3832, 0.7978846
      %v3961 = vmul.f32 %v3833, 0.7978846
      %v3962 = vmul.f32 %v3834, 0.7978846
      %v3963 = vmul.f32 %v3835, 0.7978846
      %v3964 = vmul.f32 %v3836, 0.7978846
      %v3965 = vmul.f32 %v3837, 0.7978846
      %v3966 = vmul.f32 %v3838, 0.7978846
      %v3967 = vmul.f32 %v3839, 0.7978846
      %v3968 = vmul.f32 %v3840, 0.7978846
      %v3969 = vmul.f32 %v3841, 0.7978846
      %v3970 = vmul.f32 %v3842, 0.7978846
      %v3971 = vmul.f32 %v3843, 0.7978846
      %v3972 = vmul.f32 %v3844, 0.7978846
      %v3973 = vmul.f32 %v3845, 0.7978846
      %v3974 = vmul.f32 %v3846, 0.7978846
      %v3975 = vmul.f32 %v3847, 0.7978846
      %v3976 = vmul.f32 %v3848, 0.7978846
      %v3977 = vmul.f32 %v3849, 0.7978846
      %v3978 = vmul.f32 %v3850, 0.7978846
      %v3979 = vmul.f32 %v3851, 0.7978846
      %v3980 = vmul.f32 %v3852, 0.7978846
      %v3981 = vmul.f32 %v3853, 0.7978846
      %v3982 = vmul.f32 %v3854, 0.7978846
      %v3983 = vmul.f32 %v3855, 0.7978846
      %v3984 = vmul.f32 %v3856, 0.7978846
      %v3985 = vmul.f32 %v3857, 0.7978846
      %v3986 = vmul.f32 %v3858, 0.7978846
      %v3987 = vmul.f32 %v3859, 0.7978846
      %v3988 = vmul.f32 %v3860, 0.7978846
      %v3989 = vmul.f32 %v3861, 0.7978846
      %v3990 = vmul.f32 %v3862, 0.7978846
      %v3991 = vmul.f32 %v3863, 0.7978846
      %v3992 = vmul.f32 %v3864, 0.7978846
      %v3993 = vmul.f32 %v3865, 0.7978846
      %v3994 = vmul.f32 %v3866, 0.7978846
      %v3995 = vmul.f32 %v3867, 0.7978846
      %v3996 = vmul.f32 %v3868, 0.7978846
      %v3997 = vmul.f32 %v3869, 0.7978846
      %v3998 = vmul.f32 %v3870, 0.7978846
      %v3999 = vmul.f32 %v3871, 0.7978846
      %v4000 = vmul.f32 %v3872, 0.7978846
      %v4001 = vmul.f32 %v3873, 0.7978846
      %v4002 = vmul.f32 %v3874, 0.7978846
      %v4003 = vmul.f32 %v3875, 0.7978846
      %v4004 = vmul.f32 %v3876, 0.7978846
      %v4005 = vmul.f32 %v3877, 0.7978846
      %v4006 = vmul.f32 %v3878, 0.7978846
      %v4007 = vmul.f32 %v3879, 0.7978846
      %v4008 = vmul.f32 %v3880, 0.7978846
      %v4009 = vmul.f32 %v3881, 0.7978846
      %v4010 = vmul.f32 %v3882, 0.7978846
      %v4011 = vmul.f32 %v3883, 0.7978846
      %v4012 = vmul.f32 %v3884, 0.7978846
      %v4013 = vmul.f32 %v3885, 0.7978846
      %v4014 = vmul.f32 %v3886, 0.7978846
      %v4015 = vmul.f32 %v3887, 0.7978846
      %v4016 = vmul.f32 %v3888, 0.7978846
      %v4017 = vmul.f32 %v3889, 0.7978846
      %v4018 = vmul.f32 %v3890, 0.7978846
      %v4019 = vmul.f32 %v3891, 0.7978846
      %v4020 = vmul.f32 %v3892, 0.7978846
      %v4021 = vmul.f32 %v3893, 0.7978846
      %v4022 = vtanh.pop %v3894
      %v4023 = vtanh.pop %v3895
      %v4024 = vtanh.pop %v3896
      %v4025 = vtanh.pop %v3897
      %v4026 = vtanh.pop %v3898
      %v4027 = vtanh.pop %v3899
      %v4028 = vtanh.pop %v3900
      %v4029 = vtanh.pop %v3901
      %v4030 = vtanh.pop %v3902
      %v4031 = vtanh.pop %v3903
      %v4032 = vtanh.pop %v3904
      %v4033 = vtanh.pop %v3905
      %v4034 = vtanh.pop %v3906
      %v4035 = vtanh.pop %v3907
      %v4036 = vtanh.pop %v3908
      %v4037 = vtanh.pop %v3909
      %v4038 = vtanh.pop %v3910
      %v4039 = vtanh.pop %v3911
      %v4040 = vtanh.pop %v3912
      %v4041 = vtanh.pop %v3913
      %v4042 = vtanh.pop %v3914
      %v4043 = vtanh.pop %v3915
      %v4044 = vtanh.pop %v3916
      %v4045 = vtanh.pop %v3917
      %v4046 = vtanh.pop %v3918
      %v4047 = vtanh.pop %v3919
      %v4048 = vtanh.pop %v3920
      %v4049 = vtanh.pop %v3921
      %v4050 = vtanh.pop %v3922
      %v4051 = vtanh.pop %v3923
      %v4052 = vtanh.pop %v3924
      %v4053 = vtanh.pop %v3925
      %v4054 = vtanh.pop %v3926
      %v4055 = vtanh.pop %v3927
      %v4056 = vtanh.pop %v3928
      %v4057 = vtanh.pop %v3929
      %v4058 = vtanh.pop %v3930
      %v4059 = vtanh.pop %v3931
      %v4060 = vtanh.pop %v3932
      %v4061 = vtanh.pop %v3933
      %v4062 = vtanh.pop %v3934
      %v4063 = vtanh.pop %v3935
      %v4064 = vtanh.pop %v3936
      %v4065 = vtanh.pop %v3937
      %v4066 = vtanh.pop %v3938
      %v4067 = vtanh.pop %v3939
      %v4068 = vtanh.pop %v3940
      %v4069 = vtanh.pop %v3941
      %v4070 = vtanh.pop %v3942
      %v4071 = vtanh.pop %v3943
      %v4072 = vtanh.pop %v3944
      %v4073 = vtanh.pop %v3945
      %v4074 = vtanh.pop %v3946
      %v4075 = vtanh.pop %v3947
      %v4076 = vtanh.pop %v3948
      %v4077 = vtanh.pop %v3949
      %v4078 = vtanh.pop %v3950
      %v4079 = vtanh.pop %v3951
      %v4080 = vtanh.pop %v3952
      %v4081 = vtanh.pop %v3953
      %v4082 = vtanh.pop %v3954
      %v4083 = vtanh.pop %v3955
      %v4084 = vtanh.pop %v3956
      %v4085 = vtanh.pop %v3957
      %v4086 = vtanh.pop %v3958
      %v4087 = vtanh.pop %v3959
      %v4088 = vtanh.pop %v3960
      %v4089 = vtanh.pop %v3961
      %v4090 = vtanh.pop %v3962
      %v4091 = vtanh.pop %v3963
      %v4092 = vtanh.pop %v3964
      %v4093 = vtanh.pop %v3965
      %v4094 = vtanh.pop %v3966
      %v4095 = vtanh.pop %v3967
      %v4096 = vtanh.pop %v3968
      %v4097 = vtanh.pop %v3969
      %v4098 = vtanh.pop %v3970
      %v4099 = vtanh.pop %v3971
      %v4100 = vtanh.pop %v3972
      %v4101 = vtanh.pop %v3973
      %v4102 = vtanh.pop %v3974
      %v4103 = vtanh.pop %v3975
      %v4104 = vtanh.pop %v3976
      %v4105 = vtanh.pop %v3977
      %v4106 = vtanh.pop %v3978
      %v4107 = vtanh.pop %v3979
      %v4108 = vtanh.pop %v3980
      %v4109 = vtanh.pop %v3981
      %v4110 = vtanh.pop %v3982
      %v4111 = vtanh.pop %v3983
      %v4112 = vtanh.pop %v3984
      %v4113 = vtanh.pop %v3985
      %v4114 = vtanh.pop %v3986
      %v4115 = vtanh.pop %v3987
      %v4116 = vtanh.pop %v3988
      %v4117 = vtanh.pop %v3989
      %v4118 = vtanh.pop %v3990
      %v4119 = vtanh.pop %v3991
      %v4120 = vtanh.pop %v3992
      %v4121 = vtanh.pop %v3993
      %v4122 = vtanh.pop %v3994
      %v4123 = vtanh.pop %v3995
      %v4124 = vtanh.pop %v3996
      %v4125 = vtanh.pop %v3997
      %v4126 = vtanh.pop %v3998
      %v4127 = vtanh.pop %v3999
      %v4128 = vtanh.pop %v4000
      %v4129 = vtanh.pop %v4001
      %v4130 = vtanh.pop %v4002
      %v4131 = vtanh.pop %v4003
      %v4132 = vtanh.pop %v4004
      %v4133 = vtanh.pop %v4005
      %v4134 = vtanh.pop %v4006
      %v4135 = vtanh.pop %v4007
      %v4136 = vtanh.pop %v4008
      %v4137 = vtanh.pop %v4009
      %v4138 = vtanh.pop %v4010
      %v4139 = vtanh.pop %v4011
      %v4140 = vtanh.pop %v4012
      %v4141 = vtanh.pop %v4013
      %v4142 = vtanh.pop %v4014
      %v4143 = vtanh.pop %v4015
      %v4144 = vtanh.pop %v4016
      %v4145 = vtanh.pop %v4017
      %v4146 = vtanh.pop %v4018
      %v4147 = vtanh.pop %v4019
      %v4148 = vtanh.pop %v4020
      %v4149 = vtanh.pop %v4021
      %v4150 = vadd.f32 %v4022, 1.0
      %v4151 = vadd.f32 %v4023, 1.0
      %v4152 = vadd.f32 %v4024, 1.0
      %v4153 = vadd.f32 %v4025, 1.0
      %v4154 = vadd.f32 %v4026, 1.0
      %v4155 = vadd.f32 %v4027, 1.0
      %v4156 = vadd.f32 %v4028, 1.0
      %v4157 = vadd.f32 %v4029, 1.0
      %v4158 = vadd.f32 %v4030, 1.0
      %v4159 = vadd.f32 %v4031, 1.0
      %v4160 = vadd.f32 %v4032, 1.0
      %v4161 = vadd.f32 %v4033, 1.0
      %v4162 = vadd.f32 %v4034, 1.0
      %v4163 = vadd.f32 %v4035, 1.0
      %v4164 = vadd.f32 %v4036, 1.0
      %v4165 = vadd.f32 %v4037, 1.0
      %v4166 = vadd.f32 %v4038, 1.0
      %v4167 = vadd.f32 %v4039, 1.0
      %v4168 = vadd.f32 %v4040, 1.0
      %v4169 = vadd.f32 %v4041, 1.0
      %v4170 = vadd.f32 %v4042, 1.0
      %v4171 = vadd.f32 %v4043, 1.0
      %v4172 = vadd.f32 %v4044, 1.0
      %v4173 = vadd.f32 %v4045, 1.0
      %v4174 = vadd.f32 %v4046, 1.0
      %v4175 = vadd.f32 %v4047, 1.0
      %v4176 = vadd.f32 %v4048, 1.0
      %v4177 = vadd.f32 %v4049, 1.0
      %v4178 = vadd.f32 %v4050, 1.0
      %v4179 = vadd.f32 %v4051, 1.0
      %v4180 = vadd.f32 %v4052, 1.0
      %v4181 = vadd.f32 %v4053, 1.0
      %v4182 = vadd.f32 %v4054, 1.0
      %v4183 = vadd.f32 %v4055, 1.0
      %v4184 = vadd.f32 %v4056, 1.0
      %v4185 = vadd.f32 %v4057, 1.0
      %v4186 = vadd.f32 %v4058, 1.0
      %v4187 = vadd.f32 %v4059, 1.0
      %v4188 = vadd.f32 %v4060, 1.0
      %v4189 = vadd.f32 %v4061, 1.0
      %v4190 = vadd.f32 %v4062, 1.0
      %v4191 = vadd.f32 %v4063, 1.0
      %v4192 = vadd.f32 %v4064, 1.0
      %v4193 = vadd.f32 %v4065, 1.0
      %v4194 = vadd.f32 %v4066, 1.0
      %v4195 = vadd.f32 %v4067, 1.0
      %v4196 = vadd.f32 %v4068, 1.0
      %v4197 = vadd.f32 %v4069, 1.0
      %v4198 = vadd.f32 %v4070, 1.0
      %v4199 = vadd.f32 %v4071, 1.0
      %v4200 = vadd.f32 %v4072, 1.0
      %v4201 = vadd.f32 %v4073, 1.0
      %v4202 = vadd.f32 %v4074, 1.0
      %v4203 = vadd.f32 %v4075, 1.0
      %v4204 = vadd.f32 %v4076, 1.0
      %v4205 = vadd.f32 %v4077, 1.0
      %v4206 = vadd.f32 %v4078, 1.0
      %v4207 = vadd.f32 %v4079, 1.0
      %v4208 = vadd.f32 %v4080, 1.0
      %v4209 = vadd.f32 %v4081, 1.0
      %v4210 = vadd.f32 %v4082, 1.0
      %v4211 = vadd.f32 %v4083, 1.0
      %v4212 = vadd.f32 %v4084, 1.0
      %v4213 = vadd.f32 %v4085, 1.0
      %v4214 = vadd.f32 %v4086, 1.0
      %v4215 = vadd.f32 %v4087, 1.0
      %v4216 = vadd.f32 %v4088, 1.0
      %v4217 = vadd.f32 %v4089, 1.0
      %v4218 = vadd.f32 %v4090, 1.0
      %v4219 = vadd.f32 %v4091, 1.0
      %v4220 = vadd.f32 %v4092, 1.0
      %v4221 = vadd.f32 %v4093, 1.0
      %v4222 = vadd.f32 %v4094, 1.0
      %v4223 = vadd.f32 %v4095, 1.0
      %v4224 = vadd.f32 %v4096, 1.0
      %v4225 = vadd.f32 %v4097, 1.0
      %v4226 = vadd.f32 %v4098, 1.0
      %v4227 = vadd.f32 %v4099, 1.0
      %v4228 = vadd.f32 %v4100, 1.0
      %v4229 = vadd.f32 %v4101, 1.0
      %v4230 = vadd.f32 %v4102, 1.0
      %v4231 = vadd.f32 %v4103, 1.0
      %v4232 = vadd.f32 %v4104, 1.0
      %v4233 = vadd.f32 %v4105, 1.0
      %v4234 = vadd.f32 %v4106, 1.0
      %v4235 = vadd.f32 %v4107, 1.0
      %v4236 = vadd.f32 %v4108, 1.0
      %v4237 = vadd.f32 %v4109, 1.0
      %v4238 = vadd.f32 %v4110, 1.0
      %v4239 = vadd.f32 %v4111, 1.0
      %v4240 = vadd.f32 %v4112, 1.0
      %v4241 = vadd.f32 %v4113, 1.0
      %v4242 = vadd.f32 %v4114, 1.0
      %v4243 = vadd.f32 %v4115, 1.0
      %v4244 = vadd.f32 %v4116, 1.0
      %v4245 = vadd.f32 %v4117, 1.0
      %v4246 = vadd.f32 %v4118, 1.0
      %v4247 = vadd.f32 %v4119, 1.0
      %v4248 = vadd.f32 %v4120, 1.0
      %v4249 = vadd.f32 %v4121, 1.0
      %v4250 = vadd.f32 %v4122, 1.0
      %v4251 = vadd.f32 %v4123, 1.0
      %v4252 = vadd.f32 %v4124, 1.0
      %v4253 = vadd.f32 %v4125, 1.0
      %v4254 = vadd.f32 %v4126, 1.0
      %v4255 = vadd.f32 %v4127, 1.0
      %v4256 = vadd.f32 %v4128, 1.0
      %v4257 = vadd.f32 %v4129, 1.0
      %v4258 = vadd.f32 %v4130, 1.0
      %v4259 = vadd.f32 %v4131, 1.0
      %v4260 = vadd.f32 %v4132, 1.0
      %v4261 = vadd.f32 %v4133, 1.0
      %v4262 = vadd.f32 %v4134, 1.0
      %v4263 = vadd.f32 %v4135, 1.0
      %v4264 = vadd.f32 %v4136, 1.0
      %v4265 = vadd.f32 %v4137, 1.0
      %v4266 = vadd.f32 %v4138, 1.0
      %v4267 = vadd.f32 %v4139, 1.0
      %v4268 = vadd.f32 %v4140, 1.0
      %v4269 = vadd.f32 %v4141, 1.0
      %v4270 = vadd.f32 %v4142, 1.0
      %v4271 = vadd.f32 %v4143, 1.0
      %v4272 = vadd.f32 %v4144, 1.0
      %v4273 = vadd.f32 %v4145, 1.0
      %v4274 = vadd.f32 %v4146, 1.0
      %v4275 = vadd.f32 %v4147, 1.0
      %v4276 = vadd.f32 %v4148, 1.0
      %v4277 = vadd.f32 %v4149, 1.0
      %v4278 = vmul.f32 %v4150, 0.5
      %v4279 = vmul.f32 %v4151, 0.5
      %v4280 = vmul.f32 %v4152, 0.5
      %v4281 = vmul.f32 %v4153, 0.5
      %v4282 = vmul.f32 %v4154, 0.5
      %v4283 = vmul.f32 %v4155, 0.5
      %v4284 = vmul.f32 %v4156, 0.5
      %v4285 = vmul.f32 %v4157, 0.5
      %v4286 = vmul.f32 %v4158, 0.5
      %v4287 = vmul.f32 %v4159, 0.5
      %v4288 = vmul.f32 %v4160, 0.5
      %v4289 = vmul.f32 %v4161, 0.5
      %v4290 = vmul.f32 %v4162, 0.5
      %v4291 = vmul.f32 %v4163, 0.5
      %v4292 = vmul.f32 %v4164, 0.5
      %v4293 = vmul.f32 %v4165, 0.5
      %v4294 = vmul.f32 %v4166, 0.5
      %v4295 = vmul.f32 %v4167, 0.5
      %v4296 = vmul.f32 %v4168, 0.5
      %v4297 = vmul.f32 %v4169, 0.5
      %v4298 = vmul.f32 %v4170, 0.5
      %v4299 = vmul.f32 %v4171, 0.5
      %v4300 = vmul.f32 %v4172, 0.5
      %v4301 = vmul.f32 %v4173, 0.5
      %v4302 = vmul.f32 %v4174, 0.5
      %v4303 = vmul.f32 %v4175, 0.5
      %v4304 = vmul.f32 %v4176, 0.5
      %v4305 = vmul.f32 %v4177, 0.5
      %v4306 = vmul.f32 %v4178, 0.5
      %v4307 = vmul.f32 %v4179, 0.5
      %v4308 = vmul.f32 %v4180, 0.5
      %v4309 = vmul.f32 %v4181, 0.5
      %v4310 = vmul.f32 %v4182, 0.5
      %v4311 = vmul.f32 %v4183, 0.5
      %v4312 = vmul.f32 %v4184, 0.5
      %v4313 = vmul.f32 %v4185, 0.5
      %v4314 = vmul.f32 %v4186, 0.5
      %v4315 = vmul.f32 %v4187, 0.5
      %v4316 = vmul.f32 %v4188, 0.5
      %v4317 = vmul.f32 %v4189, 0.5
      %v4318 = vmul.f32 %v4190, 0.5
      %v4319 = vmul.f32 %v4191, 0.5
      %v4320 = vmul.f32 %v4192, 0.5
      %v4321 = vmul.f32 %v4193, 0.5
      %v4322 = vmul.f32 %v4194, 0.5
      %v4323 = vmul.f32 %v4195, 0.5
      %v4324 = vmul.f32 %v4196, 0.5
      %v4325 = vmul.f32 %v4197, 0.5
      %v4326 = vmul.f32 %v4198, 0.5
      %v4327 = vmul.f32 %v4199, 0.5
      %v4328 = vmul.f32 %v4200, 0.5
      %v4329 = vmul.f32 %v4201, 0.5
      %v4330 = vmul.f32 %v4202, 0.5
      %v4331 = vmul.f32 %v4203, 0.5
      %v4332 = vmul.f32 %v4204, 0.5
      %v4333 = vmul.f32 %v4205, 0.5
      %v4334 = vmul.f32 %v4206, 0.5
      %v4335 = vmul.f32 %v4207, 0.5
      %v4336 = vmul.f32 %v4208, 0.5
      %v4337 = vmul.f32 %v4209, 0.5
      %v4338 = vmul.f32 %v4210, 0.5
      %v4339 = vmul.f32 %v4211, 0.5
      %v4340 = vmul.f32 %v4212, 0.5
      %v4341 = vmul.f32 %v4213, 0.5
      %v4342 = vmul.f32 %v4214, 0.5
      %v4343 = vmul.f32 %v4215, 0.5
      %v4344 = vmul.f32 %v4216, 0.5
      %v4345 = vmul.f32 %v4217, 0.5
      %v4346 = vmul.f32 %v4218, 0.5
      %v4347 = vmul.f32 %v4219, 0.5
      %v4348 = vmul.f32 %v4220, 0.5
      %v4349 = vmul.f32 %v4221, 0.5
      %v4350 = vmul.f32 %v4222, 0.5
      %v4351 = vmul.f32 %v4223, 0.5
      %v4352 = vmul.f32 %v4224, 0.5
      %v4353 = vmul.f32 %v4225, 0.5
      %v4354 = vmul.f32 %v4226, 0.5
      %v4355 = vmul.f32 %v4227, 0.5
      %v4356 = vmul.f32 %v4228, 0.5
      %v4357 = vmul.f32 %v4229, 0.5
      %v4358 = vmul.f32 %v4230, 0.5
      %v4359 = vmul.f32 %v4231, 0.5
      %v4360 = vmul.f32 %v4232, 0.5
      %v4361 = vmul.f32 %v4233, 0.5
      %v4362 = vmul.f32 %v4234, 0.5
      %v4363 = vmul.f32 %v4235, 0.5
      %v4364 = vmul.f32 %v4236, 0.5
      %v4365 = vmul.f32 %v4237, 0.5
      %v4366 = vmul.f32 %v4238, 0.5
      %v4367 = vmul.f32 %v4239, 0.5
      %v4368 = vmul.f32 %v4240, 0.5
      %v4369 = vmul.f32 %v4241, 0.5
      %v4370 = vmul.f32 %v4242, 0.5
      %v4371 = vmul.f32 %v4243, 0.5
      %v4372 = vmul.f32 %v4244, 0.5
      %v4373 = vmul.f32 %v4245, 0.5
      %v4374 = vmul.f32 %v4246, 0.5
      %v4375 = vmul.f32 %v4247, 0.5
      %v4376 = vmul.f32 %v4248, 0.5
      %v4377 = vmul.f32 %v4249, 0.5
      %v4378 = vmul.f32 %v4250, 0.5
      %v4379 = vmul.f32 %v4251, 0.5
      %v4380 = vmul.f32 %v4252, 0.5
      %v4381 = vmul.f32 %v4253, 0.5
      %v4382 = vmul.f32 %v4254, 0.5
      %v4383 = vmul.f32 %v4255, 0.5
      %v4384 = vmul.f32 %v4256, 0.5
      %v4385 = vmul.f32 %v4257, 0.5
      %v4386 = vmul.f32 %v4258, 0.5
      %v4387 = vmul.f32 %v4259, 0.5
      %v4388 = vmul.f32 %v4260, 0.5
      %v4389 = vmul.f32 %v4261, 0.5
      %v4390 = vmul.f32 %v4262, 0.5
      %v4391 = vmul.f32 %v4263, 0.5
      %v4392 = vmul.f32 %v4264, 0.5
      %v4393 = vmul.f32 %v4265, 0.5
      %v4394 = vmul.f32 %v4266, 0.5
      %v4395 = vmul.f32 %v4267, 0.5
      %v4396 = vmul.f32 %v4268, 0.5
      %v4397 = vmul.f32 %v4269, 0.5
      %v4398 = vmul.f32 %v4270, 0.5
      %v4399 = vmul.f32 %v4271, 0.5
      %v4400 = vmul.f32 %v4272, 0.5
      %v4401 = vmul.f32 %v4273, 0.5
      %v4402 = vmul.f32 %v4274, 0.5
      %v4403 = vmul.f32 %v4275, 0.5
      %v4404 = vmul.f32 %v4276, 0.5
      %v4405 = vmul.f32 %v4277, 0.5
      %v4406 = vmul.f32 %v1928, %v4278
      %v4407 = vmul.f32 %v1951, %v4279
      %v4408 = vmul.f32 %v1974, %v4280
      %v4409 = vmul.f32 %v1997, %v4281
      %v4410 = vmul.f32 %v2020, %v4282
      %v4411 = vmul.f32 %v2043, %v4283
      %v4412 = vmul.f32 %v2066, %v4284
      %v4413 = vmul.f32 %v2089, %v4285
      %v4414 = vmul.f32 %v2112, %v4286
      %v4415 = vmul.f32 %v2135, %v4287
      %v4416 = vmul.f32 %v2158, %v4288
      %v4417 = vmul.f32 %v2181, %v4289
      %v4418 = vmul.f32 %v2204, %v4290
      %v4419 = vmul.f32 %v2227, %v4291
      %v4420 = vmul.f32 %v2250, %v4292
      %v4421 = vmul.f32 %v2273, %v4293
      %v4422 = vmul.f32 %v2296, %v4294
      %v4423 = vmul.f32 %v2319, %v4295
      %v4424 = vmul.f32 %v2342, %v4296
      %v4425 = vmul.f32 %v2365, %v4297
      %v4426 = vmul.f32 %v2388, %v4298
      %v4427 = vmul.f32 %v2411, %v4299
      %v4428 = vmul.f32 %v2434, %v4300
      %v4429 = vmul.f32 %v2457, %v4301
      %v4430 = vmul.f32 %v2480, %v4302
      %v4431 = vmul.f32 %v2503, %v4303
      %v4432 = vmul.f32 %v2526, %v4304
      %v4433 = vmul.f32 %v2549, %v4305
      %v4434 = vmul.f32 %v2572, %v4306
      %v4435 = vmul.f32 %v2595, %v4307
      %v4436 = vmul.f32 %v2618, %v4308
      %v4437 = vmul.f32 %v2641, %v4309
      %v4438 = vmul.f32 %v2664, %v4310
      %v4439 = vmul.f32 %v2687, %v4311
      %v4440 = vmul.f32 %v2710, %v4312
      %v4441 = vmul.f32 %v2733, %v4313
      %v4442 = vmul.f32 %v2756, %v4314
      %v4443 = vmul.f32 %v2779, %v4315
      %v4444 = vmul.f32 %v2802, %v4316
      %v4445 = vmul.f32 %v2825, %v4317
      %v4446 = vmul.f32 %v2848, %v4318
      %v4447 = vmul.f32 %v2871, %v4319
      %v4448 = vmul.f32 %v2894, %v4320
      %v4449 = vmul.f32 %v2917, %v4321
      %v4450 = vmul.f32 %v2940, %v4322
      %v4451 = vmul.f32 %v2963, %v4323
      %v4452 = vmul.f32 %v2986, %v4324
      %v4453 = vmul.f32 %v3009, %v4325
      %v4454 = vmul.f32 %v3032, %v4326
      %v4455 = vmul.f32 %v3055, %v4327
      %v4456 = vmul.f32 %v3078, %v4328
      %v4457 = vmul.f32 %v3101, %v4329
      %v4458 = vmul.f32 %v3124, %v4330
      %v4459 = vmul.f32 %v3147, %v4331
      %v4460 = vmul.f32 %v3170, %v4332
      %v4461 = vmul.f32 %v3193, %v4333
      %v4462 = vmul.f32 %v3216, %v4334
      %v4463 = vmul.f32 %v3239, %v4335
      %v4464 = vmul.f32 %v3262, %v4336
      %v4465 = vmul.f32 %v3285, %v4337
      %v4466 = vmul.f32 %v3308, %v4338
      %v4467 = vmul.f32 %v3331, %v4339
      %v4468 = vmul.f32 %v3354, %v4340
      %v4469 = vmul.f32 %v3377, %v4341
      %v4470 = vmul.f32 %v1931, %v4342
      %v4471 = vmul.f32 %v1954, %v4343
      %v4472 = vmul.f32 %v1977, %v4344
      %v4473 = vmul.f32 %v2000, %v4345
      %v4474 = vmul.f32 %v2023, %v4346
      %v4475 = vmul.f32 %v2046, %v4347
      %v4476 = vmul.f32 %v2069, %v4348
      %v4477 = vmul.f32 %v2092, %v4349
      %v4478 = vmul.f32 %v2115, %v4350
      %v4479 = vmul.f32 %v2138, %v4351
      %v4480 = vmul.f32 %v2161, %v4352
      %v4481 = vmul.f32 %v2184, %v4353
      %v4482 = vmul.f32 %v2207, %v4354
      %v4483 = vmul.f32 %v2230, %v4355
      %v4484 = vmul.f32 %v2253, %v4356
      %v4485 = vmul.f32 %v2276, %v4357
      %v4486 = vmul.f32 %v2299, %v4358
      %v4487 = vmul.f32 %v2322, %v4359
      %v4488 = vmul.f32 %v2345, %v4360
      %v4489 = vmul.f32 %v2368, %v4361
      %v4490 = vmul.f32 %v2391, %v4362
      %v4491 = vmul.f32 %v2414, %v4363
      %v4492 = vmul.f32 %v2437, %v4364
      %v4493 = vmul.f32 %v2460, %v4365
      %v4494 = vmul.f32 %v2483, %v4366
      %v4495 = vmul.f32 %v2506, %v4367
      %v4496 = vmul.f32 %v2529, %v4368
      %v4497 = vmul.f32 %v2552, %v4369
      %v4498 = vmul.f32 %v2575, %v4370
      %v4499 = vmul.f32 %v2598, %v4371
      %v4500 = vmul.f32 %v2621, %v4372
      %v4501 = vmul.f32 %v2644, %v4373
      %v4502 = vmul.f32 %v2667, %v4374
      %v4503 = vmul.f32 %v2690, %v4375
      %v4504 = vmul.f32 %v2713, %v4376
      %v4505 = vmul.f32 %v2736, %v4377
      %v4506 = vmul.f32 %v2759, %v4378
      %v4507 = vmul.f32 %v2782, %v4379
      %v4508 = vmul.f32 %v2805, %v4380
      %v4509 = vmul.f32 %v2828, %v4381
      %v4510 = vmul.f32 %v2851, %v4382
      %v4511 = vmul.f32 %v2874, %v4383
      %v4512 = vmul.f32 %v2897, %v4384
      %v4513 = vmul.f32 %v2920, %v4385
      %v4514 = vmul.f32 %v2943, %v4386
      %v4515 = vmul.f32 %v2966, %v4387
      %v4516 = vmul.f32 %v2989, %v4388
      %v4517 = vmul.f32 %v3012, %v4389
      %v4518 = vmul.f32 %v3035, %v4390
      %v4519 = vmul.f32 %v3058, %v4391
      %v4520 = vmul.f32 %v3081, %v4392
      %v4521 = vmul.f32 %v3104, %v4393
      %v4522 = vmul.f32 %v3127, %v4394
      %v4523 = vmul.f32 %v3150, %v4395
      %v4524 = vmul.f32 %v3173, %v4396
      %v4525 = vmul.f32 %v3196, %v4397
      %v4526 = vmul.f32 %v3219, %v4398
      %v4527 = vmul.f32 %v3242, %v4399
      %v4528 = vmul.f32 %v3265, %v4400
      %v4529 = vmul.f32 %v3288, %v4401
      %v4530 = vmul.f32 %v3311, %v4402
      %v4531 = vmul.f32 %v3334, %v4403
      %v4532 = vmul.f32 %v3357, %v4404
      %v4533 = vmul.f32 %v3380, %v4405
      %v4534 = vld [vmem:[%s21] sm:$0xff]
      %v4535 = vld [vmem:[%s21 + $0x8] sm:$0xff]
      %v4536 = vld [vmem:[%s21 + $0x10] sm:$0xff]
      %v4537 = vld [vmem:[%s21 + $0x18] sm:$0xff]
      %v4538 = vld [vmem:[%s21 + $0x20] sm:$0xff]
      %v4539 = vld [vmem:[%s21 + $0x28] sm:$0xff]
      %v4540 = vld [vmem:[%s21 + $0x30] sm:$0xff]
      %v4541 = vld [vmem:[%s21 + $0x38] sm:$0xff]
      %v4542 = vld [vmem:[%s21 + $0x40] sm:$0xff]
      %v4543 = vld [vmem:[%s21 + $0x48] sm:$0xff]
      %v4544 = vld [vmem:[%s21 + $0x50] sm:$0xff]
      %v4545 = vld [vmem:[%s21 + $0x58] sm:$0xff]
      %v4546 = vld [vmem:[%s21 + $0x60] sm:$0xff]
      %v4547 = vld [vmem:[%s21 + $0x68] sm:$0xff]
      %v4548 = vld [vmem:[%s21 + $0x70] sm:$0xff]
      %v4549 = vld [vmem:[%s21 + $0x78] sm:$0xff]
      %v4550 = vld [vmem:[%s21 + $0x80] sm:$0xff]
      %v4551 = vld [vmem:[%s21 + $0x88] sm:$0xff]
      %v4552 = vld [vmem:[%s21 + $0x90] sm:$0xff]
      %v4553 = vld [vmem:[%s21 + $0x98] sm:$0xff]
      %v4554 = vld [vmem:[%s21 + $0xa0] sm:$0xff]
      %v4555 = vld [vmem:[%s21 + $0xa8] sm:$0xff]
      %v4556 = vld [vmem:[%s21 + $0xb0] sm:$0xff]
      %v4557 = vld [vmem:[%s21 + $0xb8] sm:$0xff]
      %v4558 = vld [vmem:[%s21 + $0xc0] sm:$0xff]
      %v4559 = vld [vmem:[%s21 + $0xc8] sm:$0xff]
      %v4560 = vld [vmem:[%s21 + $0xd0] sm:$0xff]
      %v4561 = vld [vmem:[%s21 + $0xd8] sm:$0xff]
      %v4562 = vld [vmem:[%s21 + $0xe0] sm:$0xff]
      %v4563 = vld [vmem:[%s21 + $0xe8] sm:$0xff]
      %v4564 = vld [vmem:[%s21 + $0xf0] sm:$0xff]
      %v4565 = vld [vmem:[%s21 + $0xf8] sm:$0xff]
      %v4566 = vld [vmem:[%s21 + $0x100] sm:$0xff]
      %v4567 = vld [vmem:[%s21 + $0x108] sm:$0xff]
      %v4568 = vld [vmem:[%s21 + $0x110] sm:$0xff]
      %v4569 = vld [vmem:[%s21 + $0x118] sm:$0xff]
      %v4570 = vld [vmem:[%s21 + $0x120] sm:$0xff]
      %v4571 = vld [vmem:[%s21 + $0x128] sm:$0xff]
      %v4572 = vld [vmem:[%s21 + $0x130] sm:$0xff]
      %v4573 = vld [vmem:[%s21 + $0x138] sm:$0xff]
      %v4574 = vld [vmem:[%s21 + $0x140] sm:$0xff]
      %v4575 = vld [vmem:[%s21 + $0x148] sm:$0xff]
      %v4576 = vld [vmem:[%s21 + $0x150] sm:$0xff]
      %v4577 = vld [vmem:[%s21 + $0x158] sm:$0xff]
      %v4578 = vld [vmem:[%s21 + $0x160] sm:$0xff]
      %v4579 = vld [vmem:[%s21 + $0x168] sm:$0xff]
      %v4580 = vld [vmem:[%s21 + $0x170] sm:$0xff]
      %v4581 = vld [vmem:[%s21 + $0x178] sm:$0xff]
      %v4582 = vld [vmem:[%s21 + $0x180] sm:$0xff]
      %v4583 = vld [vmem:[%s21 + $0x188] sm:$0xff]
      %v4584 = vld [vmem:[%s21 + $0x190] sm:$0xff]
      %v4585 = vld [vmem:[%s21 + $0x198] sm:$0xff]
      %v4586 = vld [vmem:[%s21 + $0x1a0] sm:$0xff]
      %v4587 = vld [vmem:[%s21 + $0x1a8] sm:$0xff]
      %v4588 = vld [vmem:[%s21 + $0x1b0] sm:$0xff]
      %v4589 = vld [vmem:[%s21 + $0x1b8] sm:$0xff]
      %v4590 = vld [vmem:[%s21 + $0x1c0] sm:$0xff]
      %v4591 = vld [vmem:[%s21 + $0x1c8] sm:$0xff]
      %v4592 = vld [vmem:[%s21 + $0x1d0] sm:$0xff]
      %v4593 = vld [vmem:[%s21 + $0x1d8] sm:$0xff]
      %v4594 = vld [vmem:[%s21 + $0x1e0] sm:$0xff]
      %v4595 = vld [vmem:[%s21 + $0x1e8] sm:$0xff]
      %v4596 = vld [vmem:[%s21 + $0x1f0] sm:$0xff]
      %v4597 = vld [vmem:[%s21 + $0x1f8] sm:$0xff]
      %v4598 = vld [vmem:[%s21 + $0x200] sm:$0xff]
      %v4599 = vld [vmem:[%s21 + $0x208] sm:$0xff]
      %v4600 = vld [vmem:[%s21 + $0x210] sm:$0xff]
      %v4601 = vld [vmem:[%s21 + $0x218] sm:$0xff]
      %v4602 = vld [vmem:[%s21 + $0x220] sm:$0xff]
      %v4603 = vld [vmem:[%s21 + $0x228] sm:$0xff]
      %v4604 = vld [vmem:[%s21 + $0x230] sm:$0xff]
      %v4605 = vld [vmem:[%s21 + $0x238] sm:$0xff]
      %v4606 = vld [vmem:[%s21 + $0x240] sm:$0xff]
      %v4607 = vld [vmem:[%s21 + $0x248] sm:$0xff]
      %v4608 = vld [vmem:[%s21 + $0x250] sm:$0xff]
      %v4609 = vld [vmem:[%s21 + $0x258] sm:$0xff]
      %v4610 = vld [vmem:[%s21 + $0x260] sm:$0xff]
      %v4611 = vld [vmem:[%s21 + $0x268] sm:$0xff]
      %v4612 = vld [vmem:[%s21 + $0x270] sm:$0xff]
      %v4613 = vld [vmem:[%s21 + $0x278] sm:$0xff]
      %v4614 = vld [vmem:[%s21 + $0x280] sm:$0xff]
      %v4615 = vld [vmem:[%s21 + $0x288] sm:$0xff]
      %v4616 = vld [vmem:[%s21 + $0x290] sm:$0xff]
      %v4617 = vld [vmem:[%s21 + $0x298] sm:$0xff]
      %v4618 = vld [vmem:[%s21 + $0x2a0] sm:$0xff]
      %v4619 = vld [vmem:[%s21 + $0x2a8] sm:$0xff]
      %v4620 = vld [vmem:[%s21 + $0x2b0] sm:$0xff]
      %v4621 = vld [vmem:[%s21 + $0x2b8] sm:$0xff]
      %v4622 = vld [vmem:[%s21 + $0x2c0] sm:$0xff]
      %v4623 = vld [vmem:[%s21 + $0x2c8] sm:$0xff]
      %v4624 = vld [vmem:[%s21 + $0x2d0] sm:$0xff]
      %v4625 = vld [vmem:[%s21 + $0x2d8] sm:$0xff]
      %v4626 = vld [vmem:[%s21 + $0x2e0] sm:$0xff]
      %v4627 = vld [vmem:[%s21 + $0x2e8] sm:$0xff]
      %v4628 = vld [vmem:[%s21 + $0x2f0] sm:$0xff]
      %v4629 = vld [vmem:[%s21 + $0x2f8] sm:$0xff]
      %v4630 = vld [vmem:[%s21 + $0x300] sm:$0xff]
      %v4631 = vld [vmem:[%s21 + $0x308] sm:$0xff]
      %v4632 = vld [vmem:[%s21 + $0x310] sm:$0xff]
      %v4633 = vld [vmem:[%s21 + $0x318] sm:$0xff]
      %v4634 = vld [vmem:[%s21 + $0x320] sm:$0xff]
      %v4635 = vld [vmem:[%s21 + $0x328] sm:$0xff]
      %v4636 = vld [vmem:[%s21 + $0x330] sm:$0xff]
      %v4637 = vld [vmem:[%s21 + $0x338] sm:$0xff]
      %v4638 = vld [vmem:[%s21 + $0x340] sm:$0xff]
      %v4639 = vld [vmem:[%s21 + $0x348] sm:$0xff]
      %v4640 = vld [vmem:[%s21 + $0x350] sm:$0xff]
      %v4641 = vld [vmem:[%s21 + $0x358] sm:$0xff]
      %v4642 = vld [vmem:[%s21 + $0x360] sm:$0xff]
      %v4643 = vld [vmem:[%s21 + $0x368] sm:$0xff]
      %v4644 = vld [vmem:[%s21 + $0x370] sm:$0xff]
      %v4645 = vld [vmem:[%s21 + $0x378] sm:$0xff]
      %v4646 = vld [vmem:[%s21 + $0x380] sm:$0xff]
      %v4647 = vld [vmem:[%s21 + $0x388] sm:$0xff]
      %v4648 = vld [vmem:[%s21 + $0x390] sm:$0xff]
      %v4649 = vld [vmem:[%s21 + $0x398] sm:$0xff]
      %v4650 = vld [vmem:[%s21 + $0x3a0] sm:$0xff]
      %v4651 = vld [vmem:[%s21 + $0x3a8] sm:$0xff]
      %v4652 = vld [vmem:[%s21 + $0x3b0] sm:$0xff]
      %v4653 = vld [vmem:[%s21 + $0x3b8] sm:$0xff]
      %v4654 = vld [vmem:[%s21 + $0x3c0] sm:$0xff]
      %v4655 = vld [vmem:[%s21 + $0x3c8] sm:$0xff]
      %v4656 = vld [vmem:[%s21 + $0x3d0] sm:$0xff]
      %v4657 = vld [vmem:[%s21 + $0x3d8] sm:$0xff]
      %v4658 = vld [vmem:[%s21 + $0x3e0] sm:$0xff]
      %v4659 = vld [vmem:[%s21 + $0x3e8] sm:$0xff]
      %v4660 = vld [vmem:[%s21 + $0x3f0] sm:$0xff]
      %v4661 = vld [vmem:[%s21 + $0x3f8] sm:$0xff]
      %v4662 = vld [vmem:[%s21 + $0x400] sm:$0xff]
      %v4663 = vld [vmem:[%s21 + $0x408] sm:$0xff]
      %v4664 = vld [vmem:[%s21 + $0x410] sm:$0xff]
      %v4665 = vld [vmem:[%s21 + $0x418] sm:$0xff]
      %v4666 = vld [vmem:[%s21 + $0x420] sm:$0xff]
      %v4667 = vld [vmem:[%s21 + $0x428] sm:$0xff]
      %v4668 = vld [vmem:[%s21 + $0x430] sm:$0xff]
      %v4669 = vld [vmem:[%s21 + $0x438] sm:$0xff]
      %v4670 = vld [vmem:[%s21 + $0x440] sm:$0xff]
      %v4671 = vld [vmem:[%s21 + $0x448] sm:$0xff]
      %v4672 = vld [vmem:[%s21 + $0x450] sm:$0xff]
      %v4673 = vld [vmem:[%s21 + $0x458] sm:$0xff]
      %v4674 = vld [vmem:[%s21 + $0x460] sm:$0xff]
      %v4675 = vld [vmem:[%s21 + $0x468] sm:$0xff]
      %v4676 = vld [vmem:[%s21 + $0x470] sm:$0xff]
      %v4677 = vld [vmem:[%s21 + $0x478] sm:$0xff]
      %v4678 = vld [vmem:[%s21 + $0x480] sm:$0xff]
      %v4679 = vld [vmem:[%s21 + $0x488] sm:$0xff]
      %v4680 = vld [vmem:[%s21 + $0x490] sm:$0xff]
      %v4681 = vld [vmem:[%s21 + $0x498] sm:$0xff]
      %v4682 = vld [vmem:[%s21 + $0x4a0] sm:$0xff]
      %v4683 = vld [vmem:[%s21 + $0x4a8] sm:$0xff]
      %v4684 = vld [vmem:[%s21 + $0x4b0] sm:$0xff]
      %v4685 = vld [vmem:[%s21 + $0x4b8] sm:$0xff]
      %v4686 = vld [vmem:[%s21 + $0x4c0] sm:$0xff]
      %v4687 = vld [vmem:[%s21 + $0x4c8] sm:$0xff]
      %v4688 = vld [vmem:[%s21 + $0x4d0] sm:$0xff]
      %v4689 = vld [vmem:[%s21 + $0x4d8] sm:$0xff]
      %v4690 = vld [vmem:[%s21 + $0x4e0] sm:$0xff]
      %v4691 = vld [vmem:[%s21 + $0x4e8] sm:$0xff]
      %v4692 = vld [vmem:[%s21 + $0x4f0] sm:$0xff]
      %v4693 = vld [vmem:[%s21 + $0x4f8] sm:$0xff]
      %v4694 = vld [vmem:[%s21 + $0x500] sm:$0xff]
      %v4695 = vld [vmem:[%s21 + $0x508] sm:$0xff]
      %v4696 = vld [vmem:[%s21 + $0x510] sm:$0xff]
      %v4697 = vld [vmem:[%s21 + $0x518] sm:$0xff]
      %v4698 = vld [vmem:[%s21 + $0x520] sm:$0xff]
      %v4699 = vld [vmem:[%s21 + $0x528] sm:$0xff]
      %v4700 = vld [vmem:[%s21 + $0x530] sm:$0xff]
      %v4701 = vld [vmem:[%s21 + $0x538] sm:$0xff]
      %v4702 = vld [vmem:[%s21 + $0x540] sm:$0xff]
      %v4703 = vld [vmem:[%s21 + $0x548] sm:$0xff]
      %v4704 = vld [vmem:[%s21 + $0x550] sm:$0xff]
      %v4705 = vld [vmem:[%s21 + $0x558] sm:$0xff]
      %v4706 = vld [vmem:[%s21 + $0x560] sm:$0xff]
      %v4707 = vld [vmem:[%s21 + $0x568] sm:$0xff]
      %v4708 = vld [vmem:[%s21 + $0x570] sm:$0xff]
      %v4709 = vld [vmem:[%s21 + $0x578] sm:$0xff]
      %v4710 = vld [vmem:[%s21 + $0x580] sm:$0xff]
      %v4711 = vld [vmem:[%s21 + $0x588] sm:$0xff]
      %v4712 = vld [vmem:[%s21 + $0x590] sm:$0xff]
      %v4713 = vld [vmem:[%s21 + $0x598] sm:$0xff]
      %v4714 = vld [vmem:[%s21 + $0x5a0] sm:$0xff]
      %v4715 = vld [vmem:[%s21 + $0x5a8] sm:$0xff]
      %v4716 = vld [vmem:[%s21 + $0x5b0] sm:$0xff]
      %v4717 = vld [vmem:[%s21 + $0x5b8] sm:$0xff]
      %v4718 = vld [vmem:[%s21 + $0x5c0] sm:$0xff]
      %v4719 = vld [vmem:[%s21 + $0x5c8] sm:$0xff]
      %v4720 = vld [vmem:[%s21 + $0x5d0] sm:$0xff]
      %v4721 = vld [vmem:[%s21 + $0x5d8] sm:$0xff]
      %v4722 = vld [vmem:[%s21 + $0x5e0] sm:$0xff]
      %v4723 = vld [vmem:[%s21 + $0x5e8] sm:$0xff]
      %v4724 = vld [vmem:[%s21 + $0x5f0] sm:$0xff]
      %v4725 = vld [vmem:[%s21 + $0x5f8] sm:$0xff]
      %v4726 = vld [vmem:[%s21 + $0x600] sm:$0xff]
      %v4727 = vld [vmem:[%s21 + $0x608] sm:$0xff]
      %v4728 = vld [vmem:[%s21 + $0x610] sm:$0xff]
      %v4729 = vld [vmem:[%s21 + $0x618] sm:$0xff]
      %v4730 = vld [vmem:[%s21 + $0x620] sm:$0xff]
      %v4731 = vld [vmem:[%s21 + $0x628] sm:$0xff]
      %v4732 = vld [vmem:[%s21 + $0x630] sm:$0xff]
      %v4733 = vld [vmem:[%s21 + $0x638] sm:$0xff]
      %v4734 = vld [vmem:[%s21 + $0x640] sm:$0xff]
      %v4735 = vld [vmem:[%s21 + $0x648] sm:$0xff]
      %v4736 = vld [vmem:[%s21 + $0x650] sm:$0xff]
      %v4737 = vld [vmem:[%s21 + $0x658] sm:$0xff]
      %v4738 = vld [vmem:[%s21 + $0x660] sm:$0xff]
      %v4739 = vld [vmem:[%s21 + $0x668] sm:$0xff]
      %v4740 = vld [vmem:[%s21 + $0x670] sm:$0xff]
      %v4741 = vld [vmem:[%s21 + $0x678] sm:$0xff]
      %v4742 = vld [vmem:[%s21 + $0x680] sm:$0xff]
      %v4743 = vld [vmem:[%s21 + $0x688] sm:$0xff]
      %v4744 = vld [vmem:[%s21 + $0x690] sm:$0xff]
      %v4745 = vld [vmem:[%s21 + $0x698] sm:$0xff]
      %v4746 = vld [vmem:[%s21 + $0x6a0] sm:$0xff]
      %v4747 = vld [vmem:[%s21 + $0x6a8] sm:$0xff]
      %v4748 = vld [vmem:[%s21 + $0x6b0] sm:$0xff]
      %v4749 = vld [vmem:[%s21 + $0x6b8] sm:$0xff]
      %v4750 = vld [vmem:[%s21 + $0x6c0] sm:$0xff]
      %v4751 = vld [vmem:[%s21 + $0x6c8] sm:$0xff]
      %v4752 = vld [vmem:[%s21 + $0x6d0] sm:$0xff]
      %v4753 = vld [vmem:[%s21 + $0x6d8] sm:$0xff]
      %v4754 = vld [vmem:[%s21 + $0x6e0] sm:$0xff]
      %v4755 = vld [vmem:[%s21 + $0x6e8] sm:$0xff]
      %v4756 = vld [vmem:[%s21 + $0x6f0] sm:$0xff]
      %v4757 = vld [vmem:[%s21 + $0x6f8] sm:$0xff]
      %v4758 = vld [vmem:[%s21 + $0x700] sm:$0xff]
      %v4759 = vld [vmem:[%s21 + $0x708] sm:$0xff]
      %v4760 = vld [vmem:[%s21 + $0x710] sm:$0xff]
      %v4761 = vld [vmem:[%s21 + $0x718] sm:$0xff]
      %v4762 = vld [vmem:[%s21 + $0x720] sm:$0xff]
      %v4763 = vld [vmem:[%s21 + $0x728] sm:$0xff]
      %v4764 = vld [vmem:[%s21 + $0x730] sm:$0xff]
      %v4765 = vld [vmem:[%s21 + $0x738] sm:$0xff]
      %v4766 = vld [vmem:[%s21 + $0x740] sm:$0xff]
      %v4767 = vld [vmem:[%s21 + $0x748] sm:$0xff]
      %v4768 = vld [vmem:[%s21 + $0x750] sm:$0xff]
      %v4769 = vld [vmem:[%s21 + $0x758] sm:$0xff]
      %v4770 = vld [vmem:[%s21 + $0x760] sm:$0xff]
      %v4771 = vld [vmem:[%s21 + $0x768] sm:$0xff]
      %v4772 = vld [vmem:[%s21 + $0x770] sm:$0xff]
      %v4773 = vld [vmem:[%s21 + $0x778] sm:$0xff]
      %v4774 = vld [vmem:[%s21 + $0x780] sm:$0xff]
      %v4775 = vld [vmem:[%s21 + $0x788] sm:$0xff]
      %v4776 = vld [vmem:[%s21 + $0x790] sm:$0xff]
      %v4777 = vld [vmem:[%s21 + $0x798] sm:$0xff]
      %v4778 = vld [vmem:[%s21 + $0x7a0] sm:$0xff]
      %v4779 = vld [vmem:[%s21 + $0x7a8] sm:$0xff]
      %v4780 = vld [vmem:[%s21 + $0x7b0] sm:$0xff]
      %v4781 = vld [vmem:[%s21 + $0x7b8] sm:$0xff]
      %v4782 = vld [vmem:[%s21 + $0x7c0] sm:$0xff]
      %v4783 = vld [vmem:[%s21 + $0x7c8] sm:$0xff]
      %v4784 = vld [vmem:[%s21 + $0x7d0] sm:$0xff]
      %v4785 = vld [vmem:[%s21 + $0x7d8] sm:$0xff]
      %v4786 = vld [vmem:[%s21 + $0x7e0] sm:$0xff]
      %v4787 = vld [vmem:[%s21 + $0x7e8] sm:$0xff]
      %v4788 = vld [vmem:[%s21 + $0x7f0] sm:$0xff]
      %v4789 = vld [vmem:[%s21 + $0x7f8] sm:$0xff]
      %v4790 = vld [vmem:[%s21 + $0x800] sm:$0xff]
      %v4791 = vld [vmem:[%s21 + $0x808] sm:$0xff]
      %v4792 = vld [vmem:[%s21 + $0x810] sm:$0xff]
      %v4793 = vld [vmem:[%s21 + $0x818] sm:$0xff]
      %v4794 = vld [vmem:[%s21 + $0x820] sm:$0xff]
      %v4795 = vld [vmem:[%s21 + $0x828] sm:$0xff]
      %v4796 = vld [vmem:[%s21 + $0x830] sm:$0xff]
      %v4797 = vld [vmem:[%s21 + $0x838] sm:$0xff]
      %v4798 = vld [vmem:[%s21 + $0x840] sm:$0xff]
      %v4799 = vld [vmem:[%s21 + $0x848] sm:$0xff]
      %v4800 = vld [vmem:[%s21 + $0x850] sm:$0xff]
      %v4801 = vld [vmem:[%s21 + $0x858] sm:$0xff]
      %v4802 = vld [vmem:[%s21 + $0x860] sm:$0xff]
      %v4803 = vld [vmem:[%s21 + $0x868] sm:$0xff]
      %v4804 = vld [vmem:[%s21 + $0x870] sm:$0xff]
      %v4805 = vld [vmem:[%s21 + $0x878] sm:$0xff]
      %v4806 = vld [vmem:[%s21 + $0x880] sm:$0xff]
      %v4807 = vld [vmem:[%s21 + $0x888] sm:$0xff]
      %v4808 = vld [vmem:[%s21 + $0x890] sm:$0xff]
      %v4809 = vld [vmem:[%s21 + $0x898] sm:$0xff]
      %v4810 = vld [vmem:[%s21 + $0x8a0] sm:$0xff]
      %v4811 = vld [vmem:[%s21 + $0x8a8] sm:$0xff]
      %v4812 = vld [vmem:[%s21 + $0x8b0] sm:$0xff]
      %v4813 = vld [vmem:[%s21 + $0x8b8] sm:$0xff]
      %v4814 = vld [vmem:[%s21 + $0x8c0] sm:$0xff]
      %v4815 = vld [vmem:[%s21 + $0x8c8] sm:$0xff]
      %v4816 = vld [vmem:[%s21 + $0x8d0] sm:$0xff]
      %v4817 = vld [vmem:[%s21 + $0x8d8] sm:$0xff]
      %v4818 = vld [vmem:[%s21 + $0x8e0] sm:$0xff]
      %v4819 = vld [vmem:[%s21 + $0x8e8] sm:$0xff]
      %v4820 = vld [vmem:[%s21 + $0x8f0] sm:$0xff]
      %v4821 = vld [vmem:[%s21 + $0x8f8] sm:$0xff]
      %v4822 = vld [vmem:[%s21 + $0x900] sm:$0xff]
      %v4823 = vld [vmem:[%s21 + $0x908] sm:$0xff]
      %v4824 = vld [vmem:[%s21 + $0x910] sm:$0xff]
      %v4825 = vld [vmem:[%s21 + $0x918] sm:$0xff]
      %v4826 = vld [vmem:[%s21 + $0x920] sm:$0xff]
      %v4827 = vld [vmem:[%s21 + $0x928] sm:$0xff]
      %v4828 = vld [vmem:[%s21 + $0x930] sm:$0xff]
      %v4829 = vld [vmem:[%s21 + $0x938] sm:$0xff]
      %v4830 = vld [vmem:[%s21 + $0x940] sm:$0xff]
      %v4831 = vld [vmem:[%s21 + $0x948] sm:$0xff]
      %v4832 = vld [vmem:[%s21 + $0x950] sm:$0xff]
      %v4833 = vld [vmem:[%s21 + $0x958] sm:$0xff]
      %v4834 = vld [vmem:[%s21 + $0x960] sm:$0xff]
      %v4835 = vld [vmem:[%s21 + $0x968] sm:$0xff]
      %v4836 = vld [vmem:[%s21 + $0x970] sm:$0xff]
      %v4837 = vld [vmem:[%s21 + $0x978] sm:$0xff]
      %v4838 = vld [vmem:[%s21 + $0x980] sm:$0xff]
      %v4839 = vld [vmem:[%s21 + $0x988] sm:$0xff]
      %v4840 = vld [vmem:[%s21 + $0x990] sm:$0xff]
      %v4841 = vld [vmem:[%s21 + $0x998] sm:$0xff]
      %v4842 = vld [vmem:[%s21 + $0x9a0] sm:$0xff]
      %v4843 = vld [vmem:[%s21 + $0x9a8] sm:$0xff]
      %v4844 = vld [vmem:[%s21 + $0x9b0] sm:$0xff]
      %v4845 = vld [vmem:[%s21 + $0x9b8] sm:$0xff]
      %v4846 = vld [vmem:[%s21 + $0x9c0] sm:$0xff]
      %v4847 = vld [vmem:[%s21 + $0x9c8] sm:$0xff]
      %v4848 = vld [vmem:[%s21 + $0x9d0] sm:$0xff]
      %v4849 = vld [vmem:[%s21 + $0x9d8] sm:$0xff]
      %v4850 = vld [vmem:[%s21 + $0x9e0] sm:$0xff]
      %v4851 = vld [vmem:[%s21 + $0x9e8] sm:$0xff]
      %v4852 = vld [vmem:[%s21 + $0x9f0] sm:$0xff]
      %v4853 = vld [vmem:[%s21 + $0x9f8] sm:$0xff]
      %v4854 = vld [vmem:[%s21 + $0xa00] sm:$0xff]
      %v4855 = vld [vmem:[%s21 + $0xa08] sm:$0xff]
      %v4856 = vld [vmem:[%s21 + $0xa10] sm:$0xff]
      %v4857 = vld [vmem:[%s21 + $0xa18] sm:$0xff]
      %v4858 = vld [vmem:[%s21 + $0xa20] sm:$0xff]
      %v4859 = vld [vmem:[%s21 + $0xa28] sm:$0xff]
      %v4860 = vld [vmem:[%s21 + $0xa30] sm:$0xff]
      %v4861 = vld [vmem:[%s21 + $0xa38] sm:$0xff]
      %v4862 = vld [vmem:[%s21 + $0xa40] sm:$0xff]
      %v4863 = vld [vmem:[%s21 + $0xa48] sm:$0xff]
      %v4864 = vld [vmem:[%s21 + $0xa50] sm:$0xff]
      %v4865 = vld [vmem:[%s21 + $0xa58] sm:$0xff]
      %v4866 = vld [vmem:[%s21 + $0xa60] sm:$0xff]
      %v4867 = vld [vmem:[%s21 + $0xa68] sm:$0xff]
      %v4868 = vld [vmem:[%s21 + $0xa70] sm:$0xff]
      %v4869 = vld [vmem:[%s21 + $0xa78] sm:$0xff]
      %v4870 = vld [vmem:[%s21 + $0xa80] sm:$0xff]
      %v4871 = vld [vmem:[%s21 + $0xa88] sm:$0xff]
      %v4872 = vld [vmem:[%s21 + $0xa90] sm:$0xff]
      %v4873 = vld [vmem:[%s21 + $0xa98] sm:$0xff]
      %v4874 = vld [vmem:[%s21 + $0xaa0] sm:$0xff]
      %v4875 = vld [vmem:[%s21 + $0xaa8] sm:$0xff]
      %v4876 = vld [vmem:[%s21 + $0xab0] sm:$0xff]
      %v4877 = vld [vmem:[%s21 + $0xab8] sm:$0xff]
      %v4878 = vld [vmem:[%s21 + $0xac0] sm:$0xff]
      %v4879 = vld [vmem:[%s21 + $0xac8] sm:$0xff]
      %v4880 = vld [vmem:[%s21 + $0xad0] sm:$0xff]
      %v4881 = vld [vmem:[%s21 + $0xad8] sm:$0xff]
      %v4882 = vld [vmem:[%s21 + $0xae0] sm:$0xff]
      %v4883 = vld [vmem:[%s21 + $0xae8] sm:$0xff]
      %v4884 = vld [vmem:[%s21 + $0xaf0] sm:$0xff]
      %v4885 = vld [vmem:[%s21 + $0xaf8] sm:$0xff]
      %v4886 = vld [vmem:[%s21 + $0xb00] sm:$0xff]
      %v4887 = vld [vmem:[%s21 + $0xb08] sm:$0xff]
      %v4888 = vld [vmem:[%s21 + $0xb10] sm:$0xff]
      %v4889 = vld [vmem:[%s21 + $0xb18] sm:$0xff]
      %v4890 = vld [vmem:[%s21 + $0xb20] sm:$0xff]
      %v4891 = vld [vmem:[%s21 + $0xb28] sm:$0xff]
      %v4892 = vld [vmem:[%s21 + $0xb30] sm:$0xff]
      %v4893 = vld [vmem:[%s21 + $0xb38] sm:$0xff]
      %v4894 = vld [vmem:[%s21 + $0xb40] sm:$0xff]
      %v4895 = vld [vmem:[%s21 + $0xb48] sm:$0xff]
      %v4896 = vld [vmem:[%s21 + $0xb50] sm:$0xff]
      %v4897 = vld [vmem:[%s21 + $0xb58] sm:$0xff]
      %v4898 = vld [vmem:[%s21 + $0xb60] sm:$0xff]
      %v4899 = vld [vmem:[%s21 + $0xb68] sm:$0xff]
      %v4900 = vld [vmem:[%s21 + $0xb70] sm:$0xff]
      %v4901 = vld [vmem:[%s21 + $0xb78] sm:$0xff]
      %v4902 = vld [vmem:[%s21 + $0xb80] sm:$0xff]
      %v4903 = vld [vmem:[%s21 + $0xb88] sm:$0xff]
      %v4904 = vld [vmem:[%s21 + $0xb90] sm:$0xff]
      %v4905 = vld [vmem:[%s21 + $0xb98] sm:$0xff]
      %v4906 = vld [vmem:[%s21 + $0xba0] sm:$0xff]
      %v4907 = vld [vmem:[%s21 + $0xba8] sm:$0xff]
      %v4908 = vld [vmem:[%s21 + $0xbb0] sm:$0xff]
      %v4909 = vld [vmem:[%s21 + $0xbb8] sm:$0xff]
      %v4910 = vld [vmem:[%s21 + $0xbc0] sm:$0xff]
      %v4911 = vld [vmem:[%s21 + $0xbc8] sm:$0xff]
      %v4912 = vld [vmem:[%s21 + $0xbd0] sm:$0xff]
      %v4913 = vld [vmem:[%s21 + $0xbd8] sm:$0xff]
      %v4914 = vld [vmem:[%s21 + $0xbe0] sm:$0xff]
      %v4915 = vld [vmem:[%s21 + $0xbe8] sm:$0xff]
      %v4916 = vld [vmem:[%s21 + $0xbf0] sm:$0xff]
      %v4917 = vld [vmem:[%s21 + $0xbf8] sm:$0xff]
      %v4918 = vld [vmem:[%s21 + $0xc00] sm:$0xff]
      %v4919 = vld [vmem:[%s21 + $0xc08] sm:$0xff]
      %v4920 = vld [vmem:[%s21 + $0xc10] sm:$0xff]
      %v4921 = vld [vmem:[%s21 + $0xc18] sm:$0xff]
      %v4922 = vld [vmem:[%s21 + $0xc20] sm:$0xff]
      %v4923 = vld [vmem:[%s21 + $0xc28] sm:$0xff]
      %v4924 = vld [vmem:[%s21 + $0xc30] sm:$0xff]
      %v4925 = vld [vmem:[%s21 + $0xc38] sm:$0xff]
      %v4926 = vld [vmem:[%s21 + $0xc40] sm:$0xff]
      %v4927 = vld [vmem:[%s21 + $0xc48] sm:$0xff]
      %v4928 = vld [vmem:[%s21 + $0xc50] sm:$0xff]
      %v4929 = vld [vmem:[%s21 + $0xc58] sm:$0xff]
      %v4930 = vld [vmem:[%s21 + $0xc60] sm:$0xff]
      %v4931 = vld [vmem:[%s21 + $0xc68] sm:$0xff]
      %v4932 = vld [vmem:[%s21 + $0xc70] sm:$0xff]
      %v4933 = vld [vmem:[%s21 + $0xc78] sm:$0xff]
      %v4934 = vld [vmem:[%s21 + $0xc80] sm:$0xff]
      %v4935 = vld [vmem:[%s21 + $0xc88] sm:$0xff]
      %v4936 = vld [vmem:[%s21 + $0xc90] sm:$0xff]
      %v4937 = vld [vmem:[%s21 + $0xc98] sm:$0xff]
      %v4938 = vld [vmem:[%s21 + $0xca0] sm:$0xff]
      %v4939 = vld [vmem:[%s21 + $0xca8] sm:$0xff]
      %v4940 = vld [vmem:[%s21 + $0xcb0] sm:$0xff]
      %v4941 = vld [vmem:[%s21 + $0xcb8] sm:$0xff]
      %v4942 = vld [vmem:[%s21 + $0xcc0] sm:$0xff]
      %v4943 = vld [vmem:[%s21 + $0xcc8] sm:$0xff]
      %v4944 = vld [vmem:[%s21 + $0xcd0] sm:$0xff]
      %v4945 = vld [vmem:[%s21 + $0xcd8] sm:$0xff]
      %v4946 = vld [vmem:[%s21 + $0xce0] sm:$0xff]
      %v4947 = vld [vmem:[%s21 + $0xce8] sm:$0xff]
      %v4948 = vld [vmem:[%s21 + $0xcf0] sm:$0xff]
      %v4949 = vld [vmem:[%s21 + $0xcf8] sm:$0xff]
      %v4950 = vld [vmem:[%s21 + $0xd00] sm:$0xff]
      %v4951 = vld [vmem:[%s21 + $0xd08] sm:$0xff]
      %v4952 = vld [vmem:[%s21 + $0xd10] sm:$0xff]
      %v4953 = vld [vmem:[%s21 + $0xd18] sm:$0xff]
      %v4954 = vld [vmem:[%s21 + $0xd20] sm:$0xff]
      %v4955 = vld [vmem:[%s21 + $0xd28] sm:$0xff]
      %v4956 = vld [vmem:[%s21 + $0xd30] sm:$0xff]
      %v4957 = vld [vmem:[%s21 + $0xd38] sm:$0xff]
      %v4958 = vld [vmem:[%s21 + $0xd40] sm:$0xff]
      %v4959 = vld [vmem:[%s21 + $0xd48] sm:$0xff]
      %v4960 = vld [vmem:[%s21 + $0xd50] sm:$0xff]
      %v4961 = vld [vmem:[%s21 + $0xd58] sm:$0xff]
      %v4962 = vld [vmem:[%s21 + $0xd60] sm:$0xff]
      %v4963 = vld [vmem:[%s21 + $0xd68] sm:$0xff]
      %v4964 = vld [vmem:[%s21 + $0xd70] sm:$0xff]
      %v4965 = vld [vmem:[%s21 + $0xd78] sm:$0xff]
      %v4966 = vld [vmem:[%s21 + $0xd80] sm:$0xff]
      %v4967 = vld [vmem:[%s21 + $0xd88] sm:$0xff]
      %v4968 = vld [vmem:[%s21 + $0xd90] sm:$0xff]
      %v4969 = vld [vmem:[%s21 + $0xd98] sm:$0xff]
      %v4970 = vld [vmem:[%s21 + $0xda0] sm:$0xff]
      %v4971 = vld [vmem:[%s21 + $0xda8] sm:$0xff]
      %v4972 = vld [vmem:[%s21 + $0xdb0] sm:$0xff]
      %v4973 = vld [vmem:[%s21 + $0xdb8] sm:$0xff]
      %v4974 = vld [vmem:[%s21 + $0xdc0] sm:$0xff]
      %v4975 = vld [vmem:[%s21 + $0xdc8] sm:$0xff]
      %v4976 = vld [vmem:[%s21 + $0xdd0] sm:$0xff]
      %v4977 = vld [vmem:[%s21 + $0xdd8] sm:$0xff]
      %v4978 = vld [vmem:[%s21 + $0xde0] sm:$0xff]
      %v4979 = vld [vmem:[%s21 + $0xde8] sm:$0xff]
      %v4980 = vld [vmem:[%s21 + $0xdf0] sm:$0xff]
      %v4981 = vld [vmem:[%s21 + $0xdf8] sm:$0xff]
      %v4982 = vld [vmem:[%s21 + $0xe00] sm:$0xff]
      %v4983 = vld [vmem:[%s21 + $0xe08] sm:$0xff]
      %v4984 = vld [vmem:[%s21 + $0xe10] sm:$0xff]
      %v4985 = vld [vmem:[%s21 + $0xe18] sm:$0xff]
      %v4986 = vld [vmem:[%s21 + $0xe20] sm:$0xff]
      %v4987 = vld [vmem:[%s21 + $0xe28] sm:$0xff]
      %v4988 = vld [vmem:[%s21 + $0xe30] sm:$0xff]
      %v4989 = vld [vmem:[%s21 + $0xe38] sm:$0xff]
      %v4990 = vld [vmem:[%s21 + $0xe40] sm:$0xff]
      %v4991 = vld [vmem:[%s21 + $0xe48] sm:$0xff]
      %v4992 = vld [vmem:[%s21 + $0xe50] sm:$0xff]
      %v4993 = vld [vmem:[%s21 + $0xe58] sm:$0xff]
      %v4994 = vld [vmem:[%s21 + $0xe60] sm:$0xff]
      %v4995 = vld [vmem:[%s21 + $0xe68] sm:$0xff]
      %v4996 = vld [vmem:[%s21 + $0xe70] sm:$0xff]
      %v4997 = vld [vmem:[%s21 + $0xe78] sm:$0xff]
      %v4998 = vld [vmem:[%s21 + $0xe80] sm:$0xff]
      %v4999 = vld [vmem:[%s21 + $0xe88] sm:$0xff]
      %v5000 = vld [vmem:[%s21 + $0xe90] sm:$0xff]
      %v5001 = vld [vmem:[%s21 + $0xe98] sm:$0xff]
      %v5002 = vld [vmem:[%s21 + $0xea0] sm:$0xff]
      %v5003 = vld [vmem:[%s21 + $0xea8] sm:$0xff]
      %v5004 = vld [vmem:[%s21 + $0xeb0] sm:$0xff]
      %v5005 = vld [vmem:[%s21 + $0xeb8] sm:$0xff]
      %v5006 = vld [vmem:[%s21 + $0xec0] sm:$0xff]
      %v5007 = vld [vmem:[%s21 + $0xec8] sm:$0xff]
      %v5008 = vld [vmem:[%s21 + $0xed0] sm:$0xff]
      %v5009 = vld [vmem:[%s21 + $0xed8] sm:$0xff]
      %v5010 = vld [vmem:[%s21 + $0xee0] sm:$0xff]
      %v5011 = vld [vmem:[%s21 + $0xee8] sm:$0xff]
      %v5012 = vld [vmem:[%s21 + $0xef0] sm:$0xff]
      %v5013 = vld [vmem:[%s21 + $0xef8] sm:$0xff]
      %v5014 = vld [vmem:[%s21 + $0xf00] sm:$0xff]
      %v5015 = vld [vmem:[%s21 + $0xf08] sm:$0xff]
      %v5016 = vld [vmem:[%s21 + $0xf10] sm:$0xff]
      %v5017 = vld [vmem:[%s21 + $0xf18] sm:$0xff]
      %v5018 = vld [vmem:[%s21 + $0xf20] sm:$0xff]
      %v5019 = vld [vmem:[%s21 + $0xf28] sm:$0xff]
      %v5020 = vld [vmem:[%s21 + $0xf30] sm:$0xff]
      %v5021 = vld [vmem:[%s21 + $0xf38] sm:$0xff]
      %v5022 = vld [vmem:[%s21 + $0xf40] sm:$0xff]
      %v5023 = vld [vmem:[%s21 + $0xf48] sm:$0xff]
      %v5024 = vld [vmem:[%s21 + $0xf50] sm:$0xff]
      %v5025 = vld [vmem:[%s21 + $0xf58] sm:$0xff]
      %v5026 = vld [vmem:[%s21 + $0xf60] sm:$0xff]
      %v5027 = vld [vmem:[%s21 + $0xf68] sm:$0xff]
      %v5028 = vld [vmem:[%s21 + $0xf70] sm:$0xff]
      %v5029 = vld [vmem:[%s21 + $0xf78] sm:$0xff]
      %v5030 = vld [vmem:[%s21 + $0xf80] sm:$0xff]
      %v5031 = vld [vmem:[%s21 + $0xf88] sm:$0xff]
      %v5032 = vld [vmem:[%s21 + $0xf90] sm:$0xff]
      %v5033 = vld [vmem:[%s21 + $0xf98] sm:$0xff]
      %v5034 = vld [vmem:[%s21 + $0xfa0] sm:$0xff]
      %v5035 = vld [vmem:[%s21 + $0xfa8] sm:$0xff]
      %v5036 = vld [vmem:[%s21 + $0xfb0] sm:$0xff]
      %v5037 = vld [vmem:[%s21 + $0xfb8] sm:$0xff]
      %v5038 = vld [vmem:[%s21 + $0xfc0] sm:$0xff]
      %v5039 = vld [vmem:[%s21 + $0xfc8] sm:$0xff]
      %v5040 = vld [vmem:[%s21 + $0xfd0] sm:$0xff]
      %v5041 = vld [vmem:[%s21 + $0xfd8] sm:$0xff]
      %v5042 = vld [vmem:[%s21 + $0xfe0] sm:$0xff]
      %v5043 = vld [vmem:[%s21 + $0xfe8] sm:$0xff]
      %v5044 = vld [vmem:[%s21 + $0xff0] sm:$0xff]
      %v5045 = vld [vmem:[%s21 + $0xff8] sm:$0xff]
      %v5046 = vld [vmem:[%s21 + $0x1000] sm:$0xff]
      %v5047 = vld [vmem:[%s21 + $0x1008] sm:$0xff]
      %v5048 = vld [vmem:[%s21 + $0x1010] sm:$0xff]
      %v5049 = vld [vmem:[%s21 + $0x1018] sm:$0xff]
      %v5050 = vld [vmem:[%s21 + $0x1020] sm:$0xff]
      %v5051 = vld [vmem:[%s21 + $0x1028] sm:$0xff]
      %v5052 = vld [vmem:[%s21 + $0x1030] sm:$0xff]
      %v5053 = vld [vmem:[%s21 + $0x1038] sm:$0xff]
      %v5054 = vld [vmem:[%s21 + $0x1040] sm:$0xff]
      %v5055 = vld [vmem:[%s21 + $0x1048] sm:$0xff]
      %v5056 = vld [vmem:[%s21 + $0x1050] sm:$0xff]
      %v5057 = vld [vmem:[%s21 + $0x1058] sm:$0xff]
      %v5058 = vld [vmem:[%s21 + $0x1060] sm:$0xff]
      %v5059 = vld [vmem:[%s21 + $0x1068] sm:$0xff]
      %v5060 = vld [vmem:[%s21 + $0x1070] sm:$0xff]
      %v5061 = vld [vmem:[%s21 + $0x1078] sm:$0xff]
      %v5062 = vld [vmem:[%s21 + $0x1080] sm:$0xff]
      %v5063 = vld [vmem:[%s21 + $0x1088] sm:$0xff]
      %v5064 = vld [vmem:[%s21 + $0x1090] sm:$0xff]
      %v5065 = vld [vmem:[%s21 + $0x1098] sm:$0xff]
      %v5066 = vld [vmem:[%s21 + $0x10a0] sm:$0xff]
      %v5067 = vld [vmem:[%s21 + $0x10a8] sm:$0xff]
      %v5068 = vld [vmem:[%s21 + $0x10b0] sm:$0xff]
      %v5069 = vld [vmem:[%s21 + $0x10b8] sm:$0xff]
      %v5070 = vld [vmem:[%s21 + $0x10c0] sm:$0xff]
      %v5071 = vld [vmem:[%s21 + $0x10c8] sm:$0xff]
      %v5072 = vld [vmem:[%s21 + $0x10d0] sm:$0xff]
      %v5073 = vld [vmem:[%s21 + $0x10d8] sm:$0xff]
      %v5074 = vld [vmem:[%s21 + $0x10e0] sm:$0xff]
      %v5075 = vld [vmem:[%s21 + $0x10e8] sm:$0xff]
      %v5076 = vld [vmem:[%s21 + $0x10f0] sm:$0xff]
      %v5077 = vld [vmem:[%s21 + $0x10f8] sm:$0xff]
      %v5078 = vld [vmem:[%s21 + $0x1100] sm:$0xff]
      %v5079 = vld [vmem:[%s21 + $0x1108] sm:$0xff]
      %v5080 = vld [vmem:[%s21 + $0x1110] sm:$0xff]
      %v5081 = vld [vmem:[%s21 + $0x1118] sm:$0xff]
      %v5082 = vld [vmem:[%s21 + $0x1120] sm:$0xff]
      %v5083 = vld [vmem:[%s21 + $0x1128] sm:$0xff]
      %v5084 = vld [vmem:[%s21 + $0x1130] sm:$0xff]
      %v5085 = vld [vmem:[%s21 + $0x1138] sm:$0xff]
      %v5086 = vld [vmem:[%s21 + $0x1140] sm:$0xff]
      %v5087 = vld [vmem:[%s21 + $0x1148] sm:$0xff]
      %v5088 = vld [vmem:[%s21 + $0x1150] sm:$0xff]
      %v5089 = vld [vmem:[%s21 + $0x1158] sm:$0xff]
      %v5090 = vld [vmem:[%s21 + $0x1160] sm:$0xff]
      %v5091 = vld [vmem:[%s21 + $0x1168] sm:$0xff]
      %v5092 = vld [vmem:[%s21 + $0x1170] sm:$0xff]
      %v5093 = vld [vmem:[%s21 + $0x1178] sm:$0xff]
      %v5094 = vld [vmem:[%s21 + $0x1180] sm:$0xff]
      %v5095 = vld [vmem:[%s21 + $0x1188] sm:$0xff]
      %v5096 = vld [vmem:[%s21 + $0x1190] sm:$0xff]
      %v5097 = vld [vmem:[%s21 + $0x1198] sm:$0xff]
      %v5098 = vld [vmem:[%s21 + $0x11a0] sm:$0xff]
      %v5099 = vld [vmem:[%s21 + $0x11a8] sm:$0xff]
      %v5100 = vld [vmem:[%s21 + $0x11b0] sm:$0xff]
      %v5101 = vld [vmem:[%s21 + $0x11b8] sm:$0xff]
      %v5102 = vld [vmem:[%s21 + $0x11c0] sm:$0xff]
      %v5103 = vld [vmem:[%s21 + $0x11c8] sm:$0xff]
      %v5104 = vld [vmem:[%s21 + $0x11d0] sm:$0xff]
      %v5105 = vld [vmem:[%s21 + $0x11d8] sm:$0xff]
      %v5106 = vld [vmem:[%s21 + $0x11e0] sm:$0xff]
      %v5107 = vld [vmem:[%s21 + $0x11e8] sm:$0xff]
      %v5108 = vld [vmem:[%s21 + $0x11f0] sm:$0xff]
      %v5109 = vld [vmem:[%s21 + $0x11f8] sm:$0xff]
      %v5110 = vld [vmem:[%s21 + $0x1200] sm:$0xff]
      %v5111 = vld [vmem:[%s21 + $0x1208] sm:$0xff]
      %v5112 = vld [vmem:[%s21 + $0x1210] sm:$0xff]
      %v5113 = vld [vmem:[%s21 + $0x1218] sm:$0xff]
      %v5114 = vld [vmem:[%s21 + $0x1220] sm:$0xff]
      %v5115 = vld [vmem:[%s21 + $0x1228] sm:$0xff]
      %v5116 = vld [vmem:[%s21 + $0x1230] sm:$0xff]
      %v5117 = vld [vmem:[%s21 + $0x1238] sm:$0xff]
      %v5118 = vld [vmem:[%s21 + $0x1240] sm:$0xff]
      %v5119 = vld [vmem:[%s21 + $0x1248] sm:$0xff]
      %v5120 = vld [vmem:[%s21 + $0x1250] sm:$0xff]
      %v5121 = vld [vmem:[%s21 + $0x1258] sm:$0xff]
      %v5122 = vld [vmem:[%s21 + $0x1260] sm:$0xff]
      %v5123 = vld [vmem:[%s21 + $0x1268] sm:$0xff]
      %v5124 = vld [vmem:[%s21 + $0x1270] sm:$0xff]
      %v5125 = vld [vmem:[%s21 + $0x1278] sm:$0xff]
      %v5126 = vld [vmem:[%s21 + $0x1280] sm:$0xff]
      %v5127 = vld [vmem:[%s21 + $0x1288] sm:$0xff]
      %v5128 = vld [vmem:[%s21 + $0x1290] sm:$0xff]
      %v5129 = vld [vmem:[%s21 + $0x1298] sm:$0xff]
      %v5130 = vld [vmem:[%s21 + $0x12a0] sm:$0xff]
      %v5131 = vld [vmem:[%s21 + $0x12a8] sm:$0xff]
      %v5132 = vld [vmem:[%s21 + $0x12b0] sm:$0xff]
      %v5133 = vld [vmem:[%s21 + $0x12b8] sm:$0xff]
      %v5134 = vld [vmem:[%s21 + $0x12c0] sm:$0xff]
      %v5135 = vld [vmem:[%s21 + $0x12c8] sm:$0xff]
      %v5136 = vld [vmem:[%s21 + $0x12d0] sm:$0xff]
      %v5137 = vld [vmem:[%s21 + $0x12d8] sm:$0xff]
      %v5138 = vld [vmem:[%s21 + $0x12e0] sm:$0xff]
      %v5139 = vld [vmem:[%s21 + $0x12e8] sm:$0xff]
      %v5140 = vld [vmem:[%s21 + $0x12f0] sm:$0xff]
      %v5141 = vld [vmem:[%s21 + $0x12f8] sm:$0xff]
      %v5142 = vld [vmem:[%s21 + $0x1300] sm:$0xff]
      %v5143 = vld [vmem:[%s21 + $0x1308] sm:$0xff]
      %v5144 = vld [vmem:[%s21 + $0x1310] sm:$0xff]
      %v5145 = vld [vmem:[%s21 + $0x1318] sm:$0xff]
      %v5146 = vld [vmem:[%s21 + $0x1320] sm:$0xff]
      %v5147 = vld [vmem:[%s21 + $0x1328] sm:$0xff]
      %v5148 = vld [vmem:[%s21 + $0x1330] sm:$0xff]
      %v5149 = vld [vmem:[%s21 + $0x1338] sm:$0xff]
      %v5150 = vld [vmem:[%s21 + $0x1340] sm:$0xff]
      %v5151 = vld [vmem:[%s21 + $0x1348] sm:$0xff]
      %v5152 = vld [vmem:[%s21 + $0x1350] sm:$0xff]
      %v5153 = vld [vmem:[%s21 + $0x1358] sm:$0xff]
      %v5154 = vld [vmem:[%s21 + $0x1360] sm:$0xff]
      %v5155 = vld [vmem:[%s21 + $0x1368] sm:$0xff]
      %v5156 = vld [vmem:[%s21 + $0x1370] sm:$0xff]
      %v5157 = vld [vmem:[%s21 + $0x1378] sm:$0xff]
      %v5158 = vld [vmem:[%s21 + $0x1380] sm:$0xff]
      %v5159 = vld [vmem:[%s21 + $0x1388] sm:$0xff]
      %v5160 = vld [vmem:[%s21 + $0x1390] sm:$0xff]
      %v5161 = vld [vmem:[%s21 + $0x1398] sm:$0xff]
      %v5162 = vld [vmem:[%s21 + $0x13a0] sm:$0xff]
      %v5163 = vld [vmem:[%s21 + $0x13a8] sm:$0xff]
      %v5164 = vld [vmem:[%s21 + $0x13b0] sm:$0xff]
      %v5165 = vld [vmem:[%s21 + $0x13b8] sm:$0xff]
      %v5166 = vld [vmem:[%s21 + $0x13c0] sm:$0xff]
      %v5167 = vld [vmem:[%s21 + $0x13c8] sm:$0xff]
      %v5168 = vld [vmem:[%s21 + $0x13d0] sm:$0xff]
      %v5169 = vld [vmem:[%s21 + $0x13d8] sm:$0xff]
      %v5170 = vld [vmem:[%s21 + $0x13e0] sm:$0xff]
      %v5171 = vld [vmem:[%s21 + $0x13e8] sm:$0xff]
      %v5172 = vld [vmem:[%s21 + $0x13f0] sm:$0xff]
      %v5173 = vld [vmem:[%s21 + $0x13f8] sm:$0xff]
      %v5174 = vld [vmem:[%s21 + $0x1400] sm:$0xff]
      %v5175 = vld [vmem:[%s21 + $0x1408] sm:$0xff]
      %v5176 = vld [vmem:[%s21 + $0x1410] sm:$0xff]
      %v5177 = vld [vmem:[%s21 + $0x1418] sm:$0xff]
      %v5178 = vld [vmem:[%s21 + $0x1420] sm:$0xff]
      %v5179 = vld [vmem:[%s21 + $0x1428] sm:$0xff]
      %v5180 = vld [vmem:[%s21 + $0x1430] sm:$0xff]
      %v5181 = vld [vmem:[%s21 + $0x1438] sm:$0xff]
      %v5182 = vld [vmem:[%s21 + $0x1440] sm:$0xff]
      %v5183 = vld [vmem:[%s21 + $0x1448] sm:$0xff]
      %v5184 = vld [vmem:[%s21 + $0x1450] sm:$0xff]
      %v5185 = vld [vmem:[%s21 + $0x1458] sm:$0xff]
      %v5186 = vld [vmem:[%s21 + $0x1460] sm:$0xff]
      %v5187 = vld [vmem:[%s21 + $0x1468] sm:$0xff]
      %v5188 = vld [vmem:[%s21 + $0x1470] sm:$0xff]
      %v5189 = vld [vmem:[%s21 + $0x1478] sm:$0xff]
      %v5190 = vld [vmem:[%s21 + $0x1480] sm:$0xff]
      %v5191 = vld [vmem:[%s21 + $0x1488] sm:$0xff]
      %v5192 = vld [vmem:[%s21 + $0x1490] sm:$0xff]
      %v5193 = vld [vmem:[%s21 + $0x1498] sm:$0xff]
      %v5194 = vld [vmem:[%s21 + $0x14a0] sm:$0xff]
      %v5195 = vld [vmem:[%s21 + $0x14a8] sm:$0xff]
      %v5196 = vld [vmem:[%s21 + $0x14b0] sm:$0xff]
      %v5197 = vld [vmem:[%s21 + $0x14b8] sm:$0xff]
      %v5198 = vld [vmem:[%s21 + $0x14c0] sm:$0xff]
      %v5199 = vld [vmem:[%s21 + $0x14c8] sm:$0xff]
      %v5200 = vld [vmem:[%s21 + $0x14d0] sm:$0xff]
      %v5201 = vld [vmem:[%s21 + $0x14d8] sm:$0xff]
      %v5202 = vld [vmem:[%s21 + $0x14e0] sm:$0xff]
      %v5203 = vld [vmem:[%s21 + $0x14e8] sm:$0xff]
      %v5204 = vld [vmem:[%s21 + $0x14f0] sm:$0xff]
      %v5205 = vld [vmem:[%s21 + $0x14f8] sm:$0xff]
      %v5206 = vld [vmem:[%s21 + $0x1500] sm:$0xff]
      %v5207 = vld [vmem:[%s21 + $0x1508] sm:$0xff]
      %v5208 = vld [vmem:[%s21 + $0x1510] sm:$0xff]
      %v5209 = vld [vmem:[%s21 + $0x1518] sm:$0xff]
      %v5210 = vld [vmem:[%s21 + $0x1520] sm:$0xff]
      %v5211 = vld [vmem:[%s21 + $0x1528] sm:$0xff]
      %v5212 = vld [vmem:[%s21 + $0x1530] sm:$0xff]
      %v5213 = vld [vmem:[%s21 + $0x1538] sm:$0xff]
      %v5214 = vld [vmem:[%s21 + $0x1540] sm:$0xff]
      %v5215 = vld [vmem:[%s21 + $0x1548] sm:$0xff]
      %v5216 = vld [vmem:[%s21 + $0x1550] sm:$0xff]
      %v5217 = vld [vmem:[%s21 + $0x1558] sm:$0xff]
      %v5218 = vld [vmem:[%s21 + $0x1560] sm:$0xff]
      %v5219 = vld [vmem:[%s21 + $0x1568] sm:$0xff]
      %v5220 = vld [vmem:[%s21 + $0x1570] sm:$0xff]
      %v5221 = vld [vmem:[%s21 + $0x1578] sm:$0xff]
      %v5222 = vld [vmem:[%s21 + $0x1580] sm:$0xff]
      %v5223 = vld [vmem:[%s21 + $0x1588] sm:$0xff]
      %v5224 = vld [vmem:[%s21 + $0x1590] sm:$0xff]
      %v5225 = vld [vmem:[%s21 + $0x1598] sm:$0xff]
      %v5226 = vld [vmem:[%s21 + $0x15a0] sm:$0xff]
      %v5227 = vld [vmem:[%s21 + $0x15a8] sm:$0xff]
      %v5228 = vld [vmem:[%s21 + $0x15b0] sm:$0xff]
      %v5229 = vld [vmem:[%s21 + $0x15b8] sm:$0xff]
      %v5230 = vld [vmem:[%s21 + $0x15c0] sm:$0xff]
      %v5231 = vld [vmem:[%s21 + $0x15c8] sm:$0xff]
      %v5232 = vld [vmem:[%s21 + $0x15d0] sm:$0xff]
      %v5233 = vld [vmem:[%s21 + $0x15d8] sm:$0xff]
      %v5234 = vld [vmem:[%s21 + $0x15e0] sm:$0xff]
      %v5235 = vld [vmem:[%s21 + $0x15e8] sm:$0xff]
      %v5236 = vld [vmem:[%s21 + $0x15f0] sm:$0xff]
      %v5237 = vld [vmem:[%s21 + $0x15f8] sm:$0xff]
      %v5238 = vld [vmem:[%s21 + $0x1600] sm:$0xff]
      %v5239 = vld [vmem:[%s21 + $0x1608] sm:$0xff]
      %v5240 = vld [vmem:[%s21 + $0x1610] sm:$0xff]
      %v5241 = vld [vmem:[%s21 + $0x1618] sm:$0xff]
      %v5242 = vld [vmem:[%s21 + $0x1620] sm:$0xff]
      %v5243 = vld [vmem:[%s21 + $0x1628] sm:$0xff]
      %v5244 = vld [vmem:[%s21 + $0x1630] sm:$0xff]
      %v5245 = vld [vmem:[%s21 + $0x1638] sm:$0xff]
      %v5246 = vld [vmem:[%s21 + $0x1640] sm:$0xff]
      %v5247 = vld [vmem:[%s21 + $0x1648] sm:$0xff]
      %v5248 = vld [vmem:[%s21 + $0x1650] sm:$0xff]
      %v5249 = vld [vmem:[%s21 + $0x1658] sm:$0xff]
      %v5250 = vld [vmem:[%s21 + $0x1660] sm:$0xff]
      %v5251 = vld [vmem:[%s21 + $0x1668] sm:$0xff]
      %v5252 = vld [vmem:[%s21 + $0x1670] sm:$0xff]
      %v5253 = vld [vmem:[%s21 + $0x1678] sm:$0xff]
      %v5254 = vld [vmem:[%s21 + $0x1680] sm:$0xff]
      %v5255 = vld [vmem:[%s21 + $0x1688] sm:$0xff]
      %v5256 = vld [vmem:[%s21 + $0x1690] sm:$0xff]
      %v5257 = vld [vmem:[%s21 + $0x1698] sm:$0xff]
      %v5258 = vld [vmem:[%s21 + $0x16a0] sm:$0xff]
      %v5259 = vld [vmem:[%s21 + $0x16a8] sm:$0xff]
      %v5260 = vld [vmem:[%s21 + $0x16b0] sm:$0xff]
      %v5261 = vld [vmem:[%s21 + $0x16b8] sm:$0xff]
      %v5262 = vld [vmem:[%s21 + $0x16c0] sm:$0xff]
      %v5263 = vld [vmem:[%s21 + $0x16c8] sm:$0xff]
      %v5264 = vld [vmem:[%s21 + $0x16d0] sm:$0xff]
      %v5265 = vld [vmem:[%s21 + $0x16d8] sm:$0xff]
      %v5266 = vld [vmem:[%s21 + $0x16e0] sm:$0xff]
      %v5267 = vld [vmem:[%s21 + $0x16e8] sm:$0xff]
      %v5268 = vld [vmem:[%s21 + $0x16f0] sm:$0xff]
      %v5269 = vld [vmem:[%s21 + $0x16f8] sm:$0xff]
      %v5270 = vld [vmem:[%s21 + $0x1700] sm:$0xff]
      %v5271 = vld [vmem:[%s21 + $0x1708] sm:$0xff]
      %v5272 = vld [vmem:[%s21 + $0x1710] sm:$0xff]
      %v5273 = vld [vmem:[%s21 + $0x1718] sm:$0xff]
      %v5274 = vld [vmem:[%s21 + $0x1720] sm:$0xff]
      %v5275 = vld [vmem:[%s21 + $0x1728] sm:$0xff]
      %v5276 = vld [vmem:[%s21 + $0x1730] sm:$0xff]
      %v5277 = vld [vmem:[%s21 + $0x1738] sm:$0xff]
      %v5278 = vld [vmem:[%s21 + $0x1740] sm:$0xff]
      %v5279 = vld [vmem:[%s21 + $0x1748] sm:$0xff]
      %v5280 = vld [vmem:[%s21 + $0x1750] sm:$0xff]
      %v5281 = vld [vmem:[%s21 + $0x1758] sm:$0xff]
      %v5282 = vld [vmem:[%s21 + $0x1760] sm:$0xff]
      %v5283 = vld [vmem:[%s21 + $0x1768] sm:$0xff]
      %v5284 = vld [vmem:[%s21 + $0x1770] sm:$0xff]
      %v5285 = vld [vmem:[%s21 + $0x1778] sm:$0xff]
      %v5286 = vld [vmem:[%s21 + $0x1780] sm:$0xff]
      %v5287 = vld [vmem:[%s21 + $0x1788] sm:$0xff]
      %v5288 = vld [vmem:[%s21 + $0x1790] sm:$0xff]
      %v5289 = vld [vmem:[%s21 + $0x1798] sm:$0xff]
      %v5290 = vld [vmem:[%s21 + $0x17a0] sm:$0xff]
      %v5291 = vld [vmem:[%s21 + $0x17a8] sm:$0xff]
      %v5292 = vld [vmem:[%s21 + $0x17b0] sm:$0xff]
      %v5293 = vld [vmem:[%s21 + $0x17b8] sm:$0xff]
      %v5294 = vld [vmem:[%s21 + $0x17c0] sm:$0xff]
      %v5295 = vld [vmem:[%s21 + $0x17c8] sm:$0xff]
      %v5296 = vld [vmem:[%s21 + $0x17d0] sm:$0xff]
      %v5297 = vld [vmem:[%s21 + $0x17d8] sm:$0xff]
      %v5298 = vld [vmem:[%s21 + $0x17e0] sm:$0xff]
      %v5299 = vld [vmem:[%s21 + $0x17e8] sm:$0xff]
      %v5300 = vld [vmem:[%s21 + $0x17f0] sm:$0xff]
      %v5301 = vld [vmem:[%s21 + $0x17f8] sm:$0xff]
      %v5302 = vld [vmem:[%s21 + $0x1800] sm:$0xff]
      %v5303 = vld [vmem:[%s21 + $0x1808] sm:$0xff]
      %v5304 = vld [vmem:[%s21 + $0x1810] sm:$0xff]
      %v5305 = vld [vmem:[%s21 + $0x1818] sm:$0xff]
      %v5306 = vld [vmem:[%s21 + $0x1820] sm:$0xff]
      %v5307 = vld [vmem:[%s21 + $0x1828] sm:$0xff]
      %v5308 = vld [vmem:[%s21 + $0x1830] sm:$0xff]
      %v5309 = vld [vmem:[%s21 + $0x1838] sm:$0xff]
      %v5310 = vld [vmem:[%s21 + $0x1840] sm:$0xff]
      %v5311 = vld [vmem:[%s21 + $0x1848] sm:$0xff]
      %v5312 = vld [vmem:[%s21 + $0x1850] sm:$0xff]
      %v5313 = vld [vmem:[%s21 + $0x1858] sm:$0xff]
      %v5314 = vld [vmem:[%s21 + $0x1860] sm:$0xff]
      %v5315 = vld [vmem:[%s21 + $0x1868] sm:$0xff]
      %v5316 = vld [vmem:[%s21 + $0x1870] sm:$0xff]
      %v5317 = vld [vmem:[%s21 + $0x1878] sm:$0xff]
      %v5318 = vld [vmem:[%s21 + $0x1880] sm:$0xff]
      %v5319 = vld [vmem:[%s21 + $0x1888] sm:$0xff]
      %v5320 = vld [vmem:[%s21 + $0x1890] sm:$0xff]
      %v5321 = vld [vmem:[%s21 + $0x1898] sm:$0xff]
      %v5322 = vld [vmem:[%s21 + $0x18a0] sm:$0xff]
      %v5323 = vld [vmem:[%s21 + $0x18a8] sm:$0xff]
      %v5324 = vld [vmem:[%s21 + $0x18b0] sm:$0xff]
      %v5325 = vld [vmem:[%s21 + $0x18b8] sm:$0xff]
      %v5326 = vld [vmem:[%s21 + $0x18c0] sm:$0xff]
      %v5327 = vld [vmem:[%s21 + $0x18c8] sm:$0xff]
      %v5328 = vld [vmem:[%s21 + $0x18d0] sm:$0xff]
      %v5329 = vld [vmem:[%s21 + $0x18d8] sm:$0xff]
      %v5330 = vld [vmem:[%s21 + $0x18e0] sm:$0xff]
      %v5331 = vld [vmem:[%s21 + $0x18e8] sm:$0xff]
      %v5332 = vld [vmem:[%s21 + $0x18f0] sm:$0xff]
      %v5333 = vld [vmem:[%s21 + $0x18f8] sm:$0xff]
      %v5334 = vld [vmem:[%s21 + $0x1900] sm:$0xff]
      %v5335 = vld [vmem:[%s21 + $0x1908] sm:$0xff]
      %v5336 = vld [vmem:[%s21 + $0x1910] sm:$0xff]
      %v5337 = vld [vmem:[%s21 + $0x1918] sm:$0xff]
      %v5338 = vld [vmem:[%s21 + $0x1920] sm:$0xff]
      %v5339 = vld [vmem:[%s21 + $0x1928] sm:$0xff]
      %v5340 = vld [vmem:[%s21 + $0x1930] sm:$0xff]
      %v5341 = vld [vmem:[%s21 + $0x1938] sm:$0xff]
      %v5342 = vld [vmem:[%s21 + $0x1940] sm:$0xff]
      %v5343 = vld [vmem:[%s21 + $0x1948] sm:$0xff]
      %v5344 = vld [vmem:[%s21 + $0x1950] sm:$0xff]
      %v5345 = vld [vmem:[%s21 + $0x1958] sm:$0xff]
      %v5346 = vld [vmem:[%s21 + $0x1960] sm:$0xff]
      %v5347 = vld [vmem:[%s21 + $0x1968] sm:$0xff]
      %v5348 = vld [vmem:[%s21 + $0x1970] sm:$0xff]
      %v5349 = vld [vmem:[%s21 + $0x1978] sm:$0xff]
      %v5350 = vld [vmem:[%s21 + $0x1980] sm:$0xff]
      %v5351 = vld [vmem:[%s21 + $0x1988] sm:$0xff]
      %v5352 = vld [vmem:[%s21 + $0x1990] sm:$0xff]
      %v5353 = vld [vmem:[%s21 + $0x1998] sm:$0xff]
      %v5354 = vld [vmem:[%s21 + $0x19a0] sm:$0xff]
      %v5355 = vld [vmem:[%s21 + $0x19a8] sm:$0xff]
      %v5356 = vld [vmem:[%s21 + $0x19b0] sm:$0xff]
      %v5357 = vld [vmem:[%s21 + $0x19b8] sm:$0xff]
      %v5358 = vld [vmem:[%s21 + $0x19c0] sm:$0xff]
      %v5359 = vld [vmem:[%s21 + $0x19c8] sm:$0xff]
      %v5360 = vld [vmem:[%s21 + $0x19d0] sm:$0xff]
      %v5361 = vld [vmem:[%s21 + $0x19d8] sm:$0xff]
      %v5362 = vld [vmem:[%s21 + $0x19e0] sm:$0xff]
      %v5363 = vld [vmem:[%s21 + $0x19e8] sm:$0xff]
      %v5364 = vld [vmem:[%s21 + $0x19f0] sm:$0xff]
      %v5365 = vld [vmem:[%s21 + $0x19f8] sm:$0xff]
      %v5366 = vld [vmem:[%s21 + $0x1a00] sm:$0xff]
      %v5367 = vld [vmem:[%s21 + $0x1a08] sm:$0xff]
      %v5368 = vld [vmem:[%s21 + $0x1a10] sm:$0xff]
      %v5369 = vld [vmem:[%s21 + $0x1a18] sm:$0xff]
      %v5370 = vld [vmem:[%s21 + $0x1a20] sm:$0xff]
      %v5371 = vld [vmem:[%s21 + $0x1a28] sm:$0xff]
      %v5372 = vld [vmem:[%s21 + $0x1a30] sm:$0xff]
      %v5373 = vld [vmem:[%s21 + $0x1a38] sm:$0xff]
      %v5374 = vld [vmem:[%s21 + $0x1a40] sm:$0xff]
      %v5375 = vld [vmem:[%s21 + $0x1a48] sm:$0xff]
      %v5376 = vld [vmem:[%s21 + $0x1a50] sm:$0xff]
      %v5377 = vld [vmem:[%s21 + $0x1a58] sm:$0xff]
      %v5378 = vld [vmem:[%s21 + $0x1a60] sm:$0xff]
      %v5379 = vld [vmem:[%s21 + $0x1a68] sm:$0xff]
      %v5380 = vld [vmem:[%s21 + $0x1a70] sm:$0xff]
      %v5381 = vld [vmem:[%s21 + $0x1a78] sm:$0xff]
      %v5382 = vld [vmem:[%s21 + $0x1a80] sm:$0xff]
      %v5383 = vld [vmem:[%s21 + $0x1a88] sm:$0xff]
      %v5384 = vld [vmem:[%s21 + $0x1a90] sm:$0xff]
      %v5385 = vld [vmem:[%s21 + $0x1a98] sm:$0xff]
      %v5386 = vld [vmem:[%s21 + $0x1aa0] sm:$0xff]
      %v5387 = vld [vmem:[%s21 + $0x1aa8] sm:$0xff]
      %v5388 = vld [vmem:[%s21 + $0x1ab0] sm:$0xff]
      %v5389 = vld [vmem:[%s21 + $0x1ab8] sm:$0xff]
      %v5390 = vld [vmem:[%s21 + $0x1ac0] sm:$0xff]
      %v5391 = vld [vmem:[%s21 + $0x1ac8] sm:$0xff]
      %v5392 = vld [vmem:[%s21 + $0x1ad0] sm:$0xff]
      %v5393 = vld [vmem:[%s21 + $0x1ad8] sm:$0xff]
      %v5394 = vld [vmem:[%s21 + $0x1ae0] sm:$0xff]
      %v5395 = vld [vmem:[%s21 + $0x1ae8] sm:$0xff]
      %v5396 = vld [vmem:[%s21 + $0x1af0] sm:$0xff]
      %v5397 = vld [vmem:[%s21 + $0x1af8] sm:$0xff]
      %v5398 = vld [vmem:[%s21 + $0x1b00] sm:$0xff]
      %v5399 = vld [vmem:[%s21 + $0x1b08] sm:$0xff]
      %v5400 = vld [vmem:[%s21 + $0x1b10] sm:$0xff]
      %v5401 = vld [vmem:[%s21 + $0x1b18] sm:$0xff]
      %v5402 = vld [vmem:[%s21 + $0x1b20] sm:$0xff]
      %v5403 = vld [vmem:[%s21 + $0x1b28] sm:$0xff]
      %v5404 = vld [vmem:[%s21 + $0x1b30] sm:$0xff]
      %v5405 = vld [vmem:[%s21 + $0x1b38] sm:$0xff]
      %v5406 = vld [vmem:[%s21 + $0x1b40] sm:$0xff]
      %v5407 = vld [vmem:[%s21 + $0x1b48] sm:$0xff]
      %v5408 = vld [vmem:[%s21 + $0x1b50] sm:$0xff]
      %v5409 = vld [vmem:[%s21 + $0x1b58] sm:$0xff]
      %v5410 = vld [vmem:[%s21 + $0x1b60] sm:$0xff]
      %v5411 = vld [vmem:[%s21 + $0x1b68] sm:$0xff]
      %v5412 = vld [vmem:[%s21 + $0x1b70] sm:$0xff]
      %v5413 = vld [vmem:[%s21 + $0x1b78] sm:$0xff]
      %v5414 = vld [vmem:[%s21 + $0x1b80] sm:$0xff]
      %v5415 = vld [vmem:[%s21 + $0x1b88] sm:$0xff]
      %v5416 = vld [vmem:[%s21 + $0x1b90] sm:$0xff]
      %v5417 = vld [vmem:[%s21 + $0x1b98] sm:$0xff]
      %v5418 = vld [vmem:[%s21 + $0x1ba0] sm:$0xff]
      %v5419 = vld [vmem:[%s21 + $0x1ba8] sm:$0xff]
      %v5420 = vld [vmem:[%s21 + $0x1bb0] sm:$0xff]
      %v5421 = vld [vmem:[%s21 + $0x1bb8] sm:$0xff]
      %v5422 = vld [vmem:[%s21 + $0x1bc0] sm:$0xff]
      %v5423 = vld [vmem:[%s21 + $0x1bc8] sm:$0xff]
      %v5424 = vld [vmem:[%s21 + $0x1bd0] sm:$0xff]
      %v5425 = vld [vmem:[%s21 + $0x1bd8] sm:$0xff]
      %v5426 = vld [vmem:[%s21 + $0x1be0] sm:$0xff]
      %v5427 = vld [vmem:[%s21 + $0x1be8] sm:$0xff]
      %v5428 = vld [vmem:[%s21 + $0x1bf0] sm:$0xff]
      %v5429 = vld [vmem:[%s21 + $0x1bf8] sm:$0xff]
      %v5430 = vld [vmem:[%s21 + $0x1c00] sm:$0xff]
      %v5431 = vld [vmem:[%s21 + $0x1c08] sm:$0xff]
      %v5432 = vld [vmem:[%s21 + $0x1c10] sm:$0xff]
      %v5433 = vld [vmem:[%s21 + $0x1c18] sm:$0xff]
      %v5434 = vld [vmem:[%s21 + $0x1c20] sm:$0xff]
      %v5435 = vld [vmem:[%s21 + $0x1c28] sm:$0xff]
      %v5436 = vld [vmem:[%s21 + $0x1c30] sm:$0xff]
      %v5437 = vld [vmem:[%s21 + $0x1c38] sm:$0xff]
      %v5438 = vld [vmem:[%s21 + $0x1c40] sm:$0xff]
      %v5439 = vld [vmem:[%s21 + $0x1c48] sm:$0xff]
      %v5440 = vld [vmem:[%s21 + $0x1c50] sm:$0xff]
      %v5441 = vld [vmem:[%s21 + $0x1c58] sm:$0xff]
      %v5442 = vld [vmem:[%s21 + $0x1c60] sm:$0xff]
      %v5443 = vld [vmem:[%s21 + $0x1c68] sm:$0xff]
      %v5444 = vld [vmem:[%s21 + $0x1c70] sm:$0xff]
      %v5445 = vld [vmem:[%s21 + $0x1c78] sm:$0xff]
      %v5446 = vld [vmem:[%s21 + $0x1c80] sm:$0xff]
      %v5447 = vld [vmem:[%s21 + $0x1c88] sm:$0xff]
      %v5448 = vld [vmem:[%s21 + $0x1c90] sm:$0xff]
      %v5449 = vld [vmem:[%s21 + $0x1c98] sm:$0xff]
      %v5450 = vld [vmem:[%s21 + $0x1ca0] sm:$0xff]
      %v5451 = vld [vmem:[%s21 + $0x1ca8] sm:$0xff]
      %v5452 = vld [vmem:[%s21 + $0x1cb0] sm:$0xff]
      %v5453 = vld [vmem:[%s21 + $0x1cb8] sm:$0xff]
      %v5454 = vld [vmem:[%s21 + $0x1cc0] sm:$0xff]
      %v5455 = vld [vmem:[%s21 + $0x1cc8] sm:$0xff]
      %v5456 = vld [vmem:[%s21 + $0x1cd0] sm:$0xff]
      %v5457 = vld [vmem:[%s21 + $0x1cd8] sm:$0xff]
      %v5458 = vld [vmem:[%s21 + $0x1ce0] sm:$0xff]
      %v5459 = vld [vmem:[%s21 + $0x1ce8] sm:$0xff]
      %v5460 = vld [vmem:[%s21 + $0x1cf0] sm:$0xff]
      %v5461 = vld [vmem:[%s21 + $0x1cf8] sm:$0xff]
      %v5462 = vld [vmem:[%s21 + $0x1d00] sm:$0xff]
      %v5463 = vld [vmem:[%s21 + $0x1d08] sm:$0xff]
      %v5464 = vld [vmem:[%s21 + $0x1d10] sm:$0xff]
      %v5465 = vld [vmem:[%s21 + $0x1d18] sm:$0xff]
      %v5466 = vld [vmem:[%s21 + $0x1d20] sm:$0xff]
      %v5467 = vld [vmem:[%s21 + $0x1d28] sm:$0xff]
      %v5468 = vld [vmem:[%s21 + $0x1d30] sm:$0xff]
      %v5469 = vld [vmem:[%s21 + $0x1d38] sm:$0xff]
      %v5470 = vld [vmem:[%s21 + $0x1d40] sm:$0xff]
      %v5471 = vld [vmem:[%s21 + $0x1d48] sm:$0xff]
      %v5472 = vld [vmem:[%s21 + $0x1d50] sm:$0xff]
      %v5473 = vld [vmem:[%s21 + $0x1d58] sm:$0xff]
      %v5474 = vld [vmem:[%s21 + $0x1d60] sm:$0xff]
      %v5475 = vld [vmem:[%s21 + $0x1d68] sm:$0xff]
      %v5476 = vld [vmem:[%s21 + $0x1d70] sm:$0xff]
      %v5477 = vld [vmem:[%s21 + $0x1d78] sm:$0xff]
      %v5478 = vld [vmem:[%s21 + $0x1d80] sm:$0xff]
      %v5479 = vld [vmem:[%s21 + $0x1d88] sm:$0xff]
      %v5480 = vld [vmem:[%s21 + $0x1d90] sm:$0xff]
      %v5481 = vld [vmem:[%s21 + $0x1d98] sm:$0xff]
      %v5482 = vld [vmem:[%s21 + $0x1da0] sm:$0xff]
      %v5483 = vld [vmem:[%s21 + $0x1da8] sm:$0xff]
      %v5484 = vld [vmem:[%s21 + $0x1db0] sm:$0xff]
      %v5485 = vld [vmem:[%s21 + $0x1db8] sm:$0xff]
      %v5486 = vld [vmem:[%s21 + $0x1dc0] sm:$0xff]
      %v5487 = vld [vmem:[%s21 + $0x1dc8] sm:$0xff]
      %v5488 = vld [vmem:[%s21 + $0x1dd0] sm:$0xff]
      %v5489 = vld [vmem:[%s21 + $0x1dd8] sm:$0xff]
      %v5490 = vld [vmem:[%s21 + $0x1de0] sm:$0xff]
      %v5491 = vld [vmem:[%s21 + $0x1de8] sm:$0xff]
      %v5492 = vld [vmem:[%s21 + $0x1df0] sm:$0xff]
      %v5493 = vld [vmem:[%s21 + $0x1df8] sm:$0xff]
      %v5494 = vld [vmem:[%s21 + $0x1e00] sm:$0xff]
      %v5495 = vld [vmem:[%s21 + $0x1e08] sm:$0xff]
      %v5496 = vld [vmem:[%s21 + $0x1e10] sm:$0xff]
      %v5497 = vld [vmem:[%s21 + $0x1e18] sm:$0xff]
      %v5498 = vld [vmem:[%s21 + $0x1e20] sm:$0xff]
      %v5499 = vld [vmem:[%s21 + $0x1e28] sm:$0xff]
      %v5500 = vld [vmem:[%s21 + $0x1e30] sm:$0xff]
      %v5501 = vld [vmem:[%s21 + $0x1e38] sm:$0xff]
      %v5502 = vld [vmem:[%s21 + $0x1e40] sm:$0xff]
      %v5503 = vld [vmem:[%s21 + $0x1e48] sm:$0xff]
      %v5504 = vld [vmem:[%s21 + $0x1e50] sm:$0xff]
      %v5505 = vld [vmem:[%s21 + $0x1e58] sm:$0xff]
      %v5506 = vld [vmem:[%s21 + $0x1e60] sm:$0xff]
      %v5507 = vld [vmem:[%s21 + $0x1e68] sm:$0xff]
      %v5508 = vld [vmem:[%s21 + $0x1e70] sm:$0xff]
      %v5509 = vld [vmem:[%s21 + $0x1e78] sm:$0xff]
      %v5510 = vld [vmem:[%s21 + $0x1e80] sm:$0xff]
      %v5511 = vld [vmem:[%s21 + $0x1e88] sm:$0xff]
      %v5512 = vld [vmem:[%s21 + $0x1e90] sm:$0xff]
      %v5513 = vld [vmem:[%s21 + $0x1e98] sm:$0xff]
      %v5514 = vld [vmem:[%s21 + $0x1ea0] sm:$0xff]
      %v5515 = vld [vmem:[%s21 + $0x1ea8] sm:$0xff]
      %v5516 = vld [vmem:[%s21 + $0x1eb0] sm:$0xff]
      %v5517 = vld [vmem:[%s21 + $0x1eb8] sm:$0xff]
      %v5518 = vld [vmem:[%s21 + $0x1ec0] sm:$0xff]
      %v5519 = vld [vmem:[%s21 + $0x1ec8] sm:$0xff]
      %v5520 = vld [vmem:[%s21 + $0x1ed0] sm:$0xff]
      %v5521 = vld [vmem:[%s21 + $0x1ed8] sm:$0xff]
      %v5522 = vld [vmem:[%s21 + $0x1ee0] sm:$0xff]
      %v5523 = vld [vmem:[%s21 + $0x1ee8] sm:$0xff]
      %v5524 = vld [vmem:[%s21 + $0x1ef0] sm:$0xff]
      %v5525 = vld [vmem:[%s21 + $0x1ef8] sm:$0xff]
      %v5526 = vld [vmem:[%s21 + $0x1f00] sm:$0xff]
      %v5527 = vld [vmem:[%s21 + $0x1f08] sm:$0xff]
      %v5528 = vld [vmem:[%s21 + $0x1f10] sm:$0xff]
      %v5529 = vld [vmem:[%s21 + $0x1f18] sm:$0xff]
      %v5530 = vld [vmem:[%s21 + $0x1f20] sm:$0xff]
      %v5531 = vld [vmem:[%s21 + $0x1f28] sm:$0xff]
      %v5532 = vld [vmem:[%s21 + $0x1f30] sm:$0xff]
      %v5533 = vld [vmem:[%s21 + $0x1f38] sm:$0xff]
      %v5534 = vld [vmem:[%s21 + $0x1f40] sm:$0xff]
      %v5535 = vld [vmem:[%s21 + $0x1f48] sm:$0xff]
      %v5536 = vld [vmem:[%s21 + $0x1f50] sm:$0xff]
      %v5537 = vld [vmem:[%s21 + $0x1f58] sm:$0xff]
      %v5538 = vld [vmem:[%s21 + $0x1f60] sm:$0xff]
      %v5539 = vld [vmem:[%s21 + $0x1f68] sm:$0xff]
      %v5540 = vld [vmem:[%s21 + $0x1f70] sm:$0xff]
      %v5541 = vld [vmem:[%s21 + $0x1f78] sm:$0xff]
      %v5542 = vld [vmem:[%s21 + $0x1f80] sm:$0xff]
      %v5543 = vld [vmem:[%s21 + $0x1f88] sm:$0xff]
      %v5544 = vld [vmem:[%s21 + $0x1f90] sm:$0xff]
      %v5545 = vld [vmem:[%s21 + $0x1f98] sm:$0xff]
      %v5546 = vld [vmem:[%s21 + $0x1fa0] sm:$0xff]
      %v5547 = vld [vmem:[%s21 + $0x1fa8] sm:$0xff]
      %v5548 = vld [vmem:[%s21 + $0x1fb0] sm:$0xff]
      %v5549 = vld [vmem:[%s21 + $0x1fb8] sm:$0xff]
      %v5550 = vld [vmem:[%s21 + $0x1fc0] sm:$0xff]
      %v5551 = vld [vmem:[%s21 + $0x1fc8] sm:$0xff]
      %v5552 = vld [vmem:[%s21 + $0x1fd0] sm:$0xff]
      %v5553 = vld [vmem:[%s21 + $0x1fd8] sm:$0xff]
      %v5554 = vld [vmem:[%s21 + $0x1fe0] sm:$0xff]
      %v5555 = vld [vmem:[%s21 + $0x1fe8] sm:$0xff]
      %v5556 = vld [vmem:[%s21 + $0x1ff0] sm:$0xff]
      %v5557 = vld [vmem:[%s21 + $0x1ff8] sm:$0xff]
      %5558 = vmatpush.msra.mxu0 %v4549
      %5559 = vmatpush.msra.mxu0 %v4548
      %5560 = vmatpush.msra.mxu0 %v4547
      %5561 = vmatpush.msra.mxu0 %v4546
      %5562 = vmatpush.msra.mxu0 %v4545
      %5563 = vmatpush.msra.mxu0 %v4544
      %5564 = vmatpush.msra.mxu0 %v4543
      %5565 = vmatpush.msra.mxu0 %v4542
      %5566 = vmatpush.msra.mxu0 %v4541
      %5567 = vmatpush.msra.mxu0 %v4540
      %5568 = vmatpush.msra.mxu0 %v4539
      %5569 = vmatpush.msra.mxu0 %v4538
      %5570 = vmatpush.msra.mxu0 %v4537
      %5571 = vmatpush.msra.mxu0 %v4536
      %5572 = vmatpush.msra.mxu0 %v4535
      %5573 = vmatpush.msra.mxu0 %v4534
      %5574 = vmatmul.f32.gmra.mxu0 %v4406
      %v5575 = vpop.f32.mrf.mxu0
      %v5576 = vadd.f32 0.0, %v5575
      %5577 = vmatmul.f32.gmra.mxu0 %v4470
      %v5578 = vpop.f32.mrf.mxu0
      %v5579 = vadd.f32 0.0, %v5578
      %5580 = vdwg.mxu0
      %5581 = vmatpush.msra.mxu0 %v4565
      %5582 = vmatpush.msra.mxu0 %v4564
      %5583 = vmatpush.msra.mxu0 %v4563
      %5584 = vmatpush.msra.mxu0 %v4562
      %5585 = vmatpush.msra.mxu0 %v4561
      %5586 = vmatpush.msra.mxu0 %v4560
      %5587 = vmatpush.msra.mxu0 %v4559
      %5588 = vmatpush.msra.mxu0 %v4558
      %5589 = vmatpush.msra.mxu0 %v4557
      %5590 = vmatpush.msra.mxu0 %v4556
      %5591 = vmatpush.msra.mxu0 %v4555
      %5592 = vmatpush.msra.mxu0 %v4554
      %5593 = vmatpush.msra.mxu0 %v4553
      %5594 = vmatpush.msra.mxu0 %v4552
      %5595 = vmatpush.msra.mxu0 %v4551
      %5596 = vmatpush.msra.mxu0 %v4550
      %5597 = vmatmul.f32.gmra.mxu0 %v4407
      %v5598 = vpop.f32.mrf.mxu0
      %v5599 = vadd.f32 %v5576, %v5598
      %5600 = vmatmul.f32.gmra.mxu0 %v4471
      %v5601 = vpop.f32.mrf.mxu0
      %v5602 = vadd.f32 %v5579, %v5601
      %5603 = vdwg.mxu0
      %5604 = vmatpush.msra.mxu0 %v4581
      %5605 = vmatpush.msra.mxu0 %v4580
      %5606 = vmatpush.msra.mxu0 %v4579
      %5607 = vmatpush.msra.mxu0 %v4578
      %5608 = vmatpush.msra.mxu0 %v4577
      %5609 = vmatpush.msra.mxu0 %v4576
      %5610 = vmatpush.msra.mxu0 %v4575
      %5611 = vmatpush.msra.mxu0 %v4574
      %5612 = vmatpush.msra.mxu0 %v4573
      %5613 = vmatpush.msra.mxu0 %v4572
      %5614 = vmatpush.msra.mxu0 %v4571
      %5615 = vmatpush.msra.mxu0 %v4570
      %5616 = vmatpush.msra.mxu0 %v4569
      %5617 = vmatpush.msra.mxu0 %v4568
      %5618 = vmatpush.msra.mxu0 %v4567
      %5619 = vmatpush.msra.mxu0 %v4566
      %5620 = vmatmul.f32.gmra.mxu0 %v4408
      %v5621 = vpop.f32.mrf.mxu0
      %v5622 = vadd.f32 %v5599, %v5621
      %5623 = vmatmul.f32.gmra.mxu0 %v4472
      %v5624 = vpop.f32.mrf.mxu0
      %v5625 = vadd.f32 %v5602, %v5624
      %5626 = vdwg.mxu0
      %5627 = vmatpush.msra.mxu0 %v4597
      %5628 = vmatpush.msra.mxu0 %v4596
      %5629 = vmatpush.msra.mxu0 %v4595
      %5630 = vmatpush.msra.mxu0 %v4594
      %5631 = vmatpush.msra.mxu0 %v4593
      %5632 = vmatpush.msra.mxu0 %v4592
      %5633 = vmatpush.msra.mxu0 %v4591
      %5634 = vmatpush.msra.mxu0 %v4590
      %5635 = vmatpush.msra.mxu0 %v4589
      %5636 = vmatpush.msra.mxu0 %v4588
      %5637 = vmatpush.msra.mxu0 %v4587
      %5638 = vmatpush.msra.mxu0 %v4586
      %5639 = vmatpush.msra.mxu0 %v4585
      %5640 = vmatpush.msra.mxu0 %v4584
      %5641 = vmatpush.msra.mxu0 %v4583
      %5642 = vmatpush.msra.mxu0 %v4582
      %5643 = vmatmul.f32.gmra.mxu0 %v4409
      %v5644 = vpop.f32.mrf.mxu0
      %v5645 = vadd.f32 %v5622, %v5644
      %5646 = vmatmul.f32.gmra.mxu0 %v4473
      %v5647 = vpop.f32.mrf.mxu0
      %v5648 = vadd.f32 %v5625, %v5647
      %5649 = vdwg.mxu0
      %5650 = vmatpush.msra.mxu0 %v4613
      %5651 = vmatpush.msra.mxu0 %v4612
      %5652 = vmatpush.msra.mxu0 %v4611
      %5653 = vmatpush.msra.mxu0 %v4610
      %5654 = vmatpush.msra.mxu0 %v4609
      %5655 = vmatpush.msra.mxu0 %v4608
      %5656 = vmatpush.msra.mxu0 %v4607
      %5657 = vmatpush.msra.mxu0 %v4606
      %5658 = vmatpush.msra.mxu0 %v4605
      %5659 = vmatpush.msra.mxu0 %v4604
      %5660 = vmatpush.msra.mxu0 %v4603
      %5661 = vmatpush.msra.mxu0 %v4602
      %5662 = vmatpush.msra.mxu0 %v4601
      %5663 = vmatpush.msra.mxu0 %v4600
      %5664 = vmatpush.msra.mxu0 %v4599
      %5665 = vmatpush.msra.mxu0 %v4598
      %5666 = vmatmul.f32.gmra.mxu0 %v4410
      %v5667 = vpop.f32.mrf.mxu0
      %v5668 = vadd.f32 %v5645, %v5667
      %5669 = vmatmul.f32.gmra.mxu0 %v4474
      %v5670 = vpop.f32.mrf.mxu0
      %v5671 = vadd.f32 %v5648, %v5670
      %5672 = vdwg.mxu0
      %5673 = vmatpush.msra.mxu0 %v4629
      %5674 = vmatpush.msra.mxu0 %v4628
      %5675 = vmatpush.msra.mxu0 %v4627
      %5676 = vmatpush.msra.mxu0 %v4626
      %5677 = vmatpush.msra.mxu0 %v4625
      %5678 = vmatpush.msra.mxu0 %v4624
      %5679 = vmatpush.msra.mxu0 %v4623
      %5680 = vmatpush.msra.mxu0 %v4622
      %5681 = vmatpush.msra.mxu0 %v4621
      %5682 = vmatpush.msra.mxu0 %v4620
      %5683 = vmatpush.msra.mxu0 %v4619
      %5684 = vmatpush.msra.mxu0 %v4618
      %5685 = vmatpush.msra.mxu0 %v4617
      %5686 = vmatpush.msra.mxu0 %v4616
      %5687 = vmatpush.msra.mxu0 %v4615
      %5688 = vmatpush.msra.mxu0 %v4614
      %5689 = vmatmul.f32.gmra.mxu0 %v4411
      %v5690 = vpop.f32.mrf.mxu0
      %v5691 = vadd.f32 %v5668, %v5690
      %5692 = vmatmul.f32.gmra.mxu0 %v4475
      %v5693 = vpop.f32.mrf.mxu0
      %v5694 = vadd.f32 %v5671, %v5693
      %5695 = vdwg.mxu0
      %5696 = vmatpush.msra.mxu0 %v4645
      %5697 = vmatpush.msra.mxu0 %v4644
      %5698 = vmatpush.msra.mxu0 %v4643
      %5699 = vmatpush.msra.mxu0 %v4642
      %5700 = vmatpush.msra.mxu0 %v4641
      %5701 = vmatpush.msra.mxu0 %v4640
      %5702 = vmatpush.msra.mxu0 %v4639
      %5703 = vmatpush.msra.mxu0 %v4638
      %5704 = vmatpush.msra.mxu0 %v4637
      %5705 = vmatpush.msra.mxu0 %v4636
      %5706 = vmatpush.msra.mxu0 %v4635
      %5707 = vmatpush.msra.mxu0 %v4634
      %5708 = vmatpush.msra.mxu0 %v4633
      %5709 = vmatpush.msra.mxu0 %v4632
      %5710 = vmatpush.msra.mxu0 %v4631
      %5711 = vmatpush.msra.mxu0 %v4630
      %5712 = vmatmul.f32.gmra.mxu0 %v4412
      %v5713 = vpop.f32.mrf.mxu0
      %v5714 = vadd.f32 %v5691, %v5713
      %5715 = vmatmul.f32.gmra.mxu0 %v4476
      %v5716 = vpop.f32.mrf.mxu0
      %v5717 = vadd.f32 %v5694, %v5716
      %5718 = vdwg.mxu0
      %5719 = vmatpush.msra.mxu0 %v4661
      %5720 = vmatpush.msra.mxu0 %v4660
      %5721 = vmatpush.msra.mxu0 %v4659
      %5722 = vmatpush.msra.mxu0 %v4658
      %5723 = vmatpush.msra.mxu0 %v4657
      %5724 = vmatpush.msra.mxu0 %v4656
      %5725 = vmatpush.msra.mxu0 %v4655
      %5726 = vmatpush.msra.mxu0 %v4654
      %5727 = vmatpush.msra.mxu0 %v4653
      %5728 = vmatpush.msra.mxu0 %v4652
      %5729 = vmatpush.msra.mxu0 %v4651
      %5730 = vmatpush.msra.mxu0 %v4650
      %5731 = vmatpush.msra.mxu0 %v4649
      %5732 = vmatpush.msra.mxu0 %v4648
      %5733 = vmatpush.msra.mxu0 %v4647
      %5734 = vmatpush.msra.mxu0 %v4646
      %5735 = vmatmul.f32.gmra.mxu0 %v4413
      %v5736 = vpop.f32.mrf.mxu0
      %v5737 = vadd.f32 %v5714, %v5736
      %5738 = vmatmul.f32.gmra.mxu0 %v4477
      %v5739 = vpop.f32.mrf.mxu0
      %v5740 = vadd.f32 %v5717, %v5739
      %5741 = vdwg.mxu0
      %5742 = vmatpush.msra.mxu0 %v4677
      %5743 = vmatpush.msra.mxu0 %v4676
      %5744 = vmatpush.msra.mxu0 %v4675
      %5745 = vmatpush.msra.mxu0 %v4674
      %5746 = vmatpush.msra.mxu0 %v4673
      %5747 = vmatpush.msra.mxu0 %v4672
      %5748 = vmatpush.msra.mxu0 %v4671
      %5749 = vmatpush.msra.mxu0 %v4670
      %5750 = vmatpush.msra.mxu0 %v4669
      %5751 = vmatpush.msra.mxu0 %v4668
      %5752 = vmatpush.msra.mxu0 %v4667
      %5753 = vmatpush.msra.mxu0 %v4666
      %5754 = vmatpush.msra.mxu0 %v4665
      %5755 = vmatpush.msra.mxu0 %v4664
      %5756 = vmatpush.msra.mxu0 %v4663
      %5757 = vmatpush.msra.mxu0 %v4662
      %5758 = vmatmul.f32.gmra.mxu0 %v4414
      %v5759 = vpop.f32.mrf.mxu0
      %v5760 = vadd.f32 %v5737, %v5759
      %5761 = vmatmul.f32.gmra.mxu0 %v4478
      %v5762 = vpop.f32.mrf.mxu0
      %v5763 = vadd.f32 %v5740, %v5762
      %5764 = vdwg.mxu0
      %5765 = vmatpush.msra.mxu0 %v4693
      %5766 = vmatpush.msra.mxu0 %v4692
      %5767 = vmatpush.msra.mxu0 %v4691
      %5768 = vmatpush.msra.mxu0 %v4690
      %5769 = vmatpush.msra.mxu0 %v4689
      %5770 = vmatpush.msra.mxu0 %v4688
      %5771 = vmatpush.msra.mxu0 %v4687
      %5772 = vmatpush.msra.mxu0 %v4686
      %5773 = vmatpush.msra.mxu0 %v4685
      %5774 = vmatpush.msra.mxu0 %v4684
      %5775 = vmatpush.msra.mxu0 %v4683
      %5776 = vmatpush.msra.mxu0 %v4682
      %5777 = vmatpush.msra.mxu0 %v4681
      %5778 = vmatpush.msra.mxu0 %v4680
      %5779 = vmatpush.msra.mxu0 %v4679
      %5780 = vmatpush.msra.mxu0 %v4678
      %5781 = vmatmul.f32.gmra.mxu0 %v4415
      %v5782 = vpop.f32.mrf.mxu0
      %v5783 = vadd.f32 %v5760, %v5782
      %5784 = vmatmul.f32.gmra.mxu0 %v4479
      %v5785 = vpop.f32.mrf.mxu0
      %v5786 = vadd.f32 %v5763, %v5785
      %5787 = vdwg.mxu0
      %5788 = vmatpush.msra.mxu0 %v4709
      %5789 = vmatpush.msra.mxu0 %v4708
      %5790 = vmatpush.msra.mxu0 %v4707
      %5791 = vmatpush.msra.mxu0 %v4706
      %5792 = vmatpush.msra.mxu0 %v4705
      %5793 = vmatpush.msra.mxu0 %v4704
      %5794 = vmatpush.msra.mxu0 %v4703
      %5795 = vmatpush.msra.mxu0 %v4702
      %5796 = vmatpush.msra.mxu0 %v4701
      %5797 = vmatpush.msra.mxu0 %v4700
      %5798 = vmatpush.msra.mxu0 %v4699
      %5799 = vmatpush.msra.mxu0 %v4698
      %5800 = vmatpush.msra.mxu0 %v4697
      %5801 = vmatpush.msra.mxu0 %v4696
      %5802 = vmatpush.msra.mxu0 %v4695
      %5803 = vmatpush.msra.mxu0 %v4694
      %5804 = vmatmul.f32.gmra.mxu0 %v4416
      %v5805 = vpop.f32.mrf.mxu0
      %v5806 = vadd.f32 %v5783, %v5805
      %5807 = vmatmul.f32.gmra.mxu0 %v4480
      %v5808 = vpop.f32.mrf.mxu0
      %v5809 = vadd.f32 %v5786, %v5808
      %5810 = vdwg.mxu0
      %5811 = vmatpush.msra.mxu0 %v4725
      %5812 = vmatpush.msra.mxu0 %v4724
      %5813 = vmatpush.msra.mxu0 %v4723
      %5814 = vmatpush.msra.mxu0 %v4722
      %5815 = vmatpush.msra.mxu0 %v4721
      %5816 = vmatpush.msra.mxu0 %v4720
      %5817 = vmatpush.msra.mxu0 %v4719
      %5818 = vmatpush.msra.mxu0 %v4718
      %5819 = vmatpush.msra.mxu0 %v4717
      %5820 = vmatpush.msra.mxu0 %v4716
      %5821 = vmatpush.msra.mxu0 %v4715
      %5822 = vmatpush.msra.mxu0 %v4714
      %5823 = vmatpush.msra.mxu0 %v4713
      %5824 = vmatpush.msra.mxu0 %v4712
      %5825 = vmatpush.msra.mxu0 %v4711
      %5826 = vmatpush.msra.mxu0 %v4710
      %5827 = vmatmul.f32.gmra.mxu0 %v4417
      %v5828 = vpop.f32.mrf.mxu0
      %v5829 = vadd.f32 %v5806, %v5828
      %5830 = vmatmul.f32.gmra.mxu0 %v4481
      %v5831 = vpop.f32.mrf.mxu0
      %v5832 = vadd.f32 %v5809, %v5831
      %5833 = vdwg.mxu0
      %5834 = vmatpush.msra.mxu0 %v4741
      %5835 = vmatpush.msra.mxu0 %v4740
      %5836 = vmatpush.msra.mxu0 %v4739
      %5837 = vmatpush.msra.mxu0 %v4738
      %5838 = vmatpush.msra.mxu0 %v4737
      %5839 = vmatpush.msra.mxu0 %v4736
      %5840 = vmatpush.msra.mxu0 %v4735
      %5841 = vmatpush.msra.mxu0 %v4734
      %5842 = vmatpush.msra.mxu0 %v4733
      %5843 = vmatpush.msra.mxu0 %v4732
      %5844 = vmatpush.msra.mxu0 %v4731
      %5845 = vmatpush.msra.mxu0 %v4730
      %5846 = vmatpush.msra.mxu0 %v4729
      %5847 = vmatpush.msra.mxu0 %v4728
      %5848 = vmatpush.msra.mxu0 %v4727
      %5849 = vmatpush.msra.mxu0 %v4726
      %5850 = vmatmul.f32.gmra.mxu0 %v4418
      %v5851 = vpop.f32.mrf.mxu0
      %v5852 = vadd.f32 %v5829, %v5851
      %5853 = vmatmul.f32.gmra.mxu0 %v4482
      %v5854 = vpop.f32.mrf.mxu0
      %v5855 = vadd.f32 %v5832, %v5854
      %5856 = vdwg.mxu0
      %5857 = vmatpush.msra.mxu0 %v4757
      %5858 = vmatpush.msra.mxu0 %v4756
      %5859 = vmatpush.msra.mxu0 %v4755
      %5860 = vmatpush.msra.mxu0 %v4754
      %5861 = vmatpush.msra.mxu0 %v4753
      %5862 = vmatpush.msra.mxu0 %v4752
      %5863 = vmatpush.msra.mxu0 %v4751
      %5864 = vmatpush.msra.mxu0 %v4750
      %5865 = vmatpush.msra.mxu0 %v4749
      %5866 = vmatpush.msra.mxu0 %v4748
      %5867 = vmatpush.msra.mxu0 %v4747
      %5868 = vmatpush.msra.mxu0 %v4746
      %5869 = vmatpush.msra.mxu0 %v4745
      %5870 = vmatpush.msra.mxu0 %v4744
      %5871 = vmatpush.msra.mxu0 %v4743
      %5872 = vmatpush.msra.mxu0 %v4742
      %5873 = vmatmul.f32.gmra.mxu0 %v4419
      %v5874 = vpop.f32.mrf.mxu0
      %v5875 = vadd.f32 %v5852, %v5874
      %5876 = vmatmul.f32.gmra.mxu0 %v4483
      %v5877 = vpop.f32.mrf.mxu0
      %v5878 = vadd.f32 %v5855, %v5877
      %5879 = vdwg.mxu0
      %5880 = vmatpush.msra.mxu0 %v4773
      %5881 = vmatpush.msra.mxu0 %v4772
      %5882 = vmatpush.msra.mxu0 %v4771
      %5883 = vmatpush.msra.mxu0 %v4770
      %5884 = vmatpush.msra.mxu0 %v4769
      %5885 = vmatpush.msra.mxu0 %v4768
      %5886 = vmatpush.msra.mxu0 %v4767
      %5887 = vmatpush.msra.mxu0 %v4766
      %5888 = vmatpush.msra.mxu0 %v4765
      %5889 = vmatpush.msra.mxu0 %v4764
      %5890 = vmatpush.msra.mxu0 %v4763
      %5891 = vmatpush.msra.mxu0 %v4762
      %5892 = vmatpush.msra.mxu0 %v4761
      %5893 = vmatpush.msra.mxu0 %v4760
      %5894 = vmatpush.msra.mxu0 %v4759
      %5895 = vmatpush.msra.mxu0 %v4758
      %5896 = vmatmul.f32.gmra.mxu0 %v4420
      %v5897 = vpop.f32.mrf.mxu0
      %v5898 = vadd.f32 %v5875, %v5897
      %5899 = vmatmul.f32.gmra.mxu0 %v4484
      %v5900 = vpop.f32.mrf.mxu0
      %v5901 = vadd.f32 %v5878, %v5900
      %5902 = vdwg.mxu0
      %5903 = vmatpush.msra.mxu0 %v4789
      %5904 = vmatpush.msra.mxu0 %v4788
      %5905 = vmatpush.msra.mxu0 %v4787
      %5906 = vmatpush.msra.mxu0 %v4786
      %5907 = vmatpush.msra.mxu0 %v4785
      %5908 = vmatpush.msra.mxu0 %v4784
      %5909 = vmatpush.msra.mxu0 %v4783
      %5910 = vmatpush.msra.mxu0 %v4782
      %5911 = vmatpush.msra.mxu0 %v4781
      %5912 = vmatpush.msra.mxu0 %v4780
      %5913 = vmatpush.msra.mxu0 %v4779
      %5914 = vmatpush.msra.mxu0 %v4778
      %5915 = vmatpush.msra.mxu0 %v4777
      %5916 = vmatpush.msra.mxu0 %v4776
      %5917 = vmatpush.msra.mxu0 %v4775
      %5918 = vmatpush.msra.mxu0 %v4774
      %5919 = vmatmul.f32.gmra.mxu0 %v4421
      %v5920 = vpop.f32.mrf.mxu0
      %v5921 = vadd.f32 %v5898, %v5920
      %5922 = vmatmul.f32.gmra.mxu0 %v4485
      %v5923 = vpop.f32.mrf.mxu0
      %v5924 = vadd.f32 %v5901, %v5923
      %5925 = vdwg.mxu0
      %5926 = vmatpush.msra.mxu0 %v4805
      %5927 = vmatpush.msra.mxu0 %v4804
      %5928 = vmatpush.msra.mxu0 %v4803
      %5929 = vmatpush.msra.mxu0 %v4802
      %5930 = vmatpush.msra.mxu0 %v4801
      %5931 = vmatpush.msra.mxu0 %v4800
      %5932 = vmatpush.msra.mxu0 %v4799
      %5933 = vmatpush.msra.mxu0 %v4798
      %5934 = vmatpush.msra.mxu0 %v4797
      %5935 = vmatpush.msra.mxu0 %v4796
      %5936 = vmatpush.msra.mxu0 %v4795
      %5937 = vmatpush.msra.mxu0 %v4794
      %5938 = vmatpush.msra.mxu0 %v4793
      %5939 = vmatpush.msra.mxu0 %v4792
      %5940 = vmatpush.msra.mxu0 %v4791
      %5941 = vmatpush.msra.mxu0 %v4790
      %5942 = vmatmul.f32.gmra.mxu0 %v4422
      %v5943 = vpop.f32.mrf.mxu0
      %v5944 = vadd.f32 %v5921, %v5943
      %5945 = vmatmul.f32.gmra.mxu0 %v4486
      %v5946 = vpop.f32.mrf.mxu0
      %v5947 = vadd.f32 %v5924, %v5946
      %5948 = vdwg.mxu0
      %5949 = vmatpush.msra.mxu0 %v4821
      %5950 = vmatpush.msra.mxu0 %v4820
      %5951 = vmatpush.msra.mxu0 %v4819
      %5952 = vmatpush.msra.mxu0 %v4818
      %5953 = vmatpush.msra.mxu0 %v4817
      %5954 = vmatpush.msra.mxu0 %v4816
      %5955 = vmatpush.msra.mxu0 %v4815
      %5956 = vmatpush.msra.mxu0 %v4814
      %5957 = vmatpush.msra.mxu0 %v4813
      %5958 = vmatpush.msra.mxu0 %v4812
      %5959 = vmatpush.msra.mxu0 %v4811
      %5960 = vmatpush.msra.mxu0 %v4810
      %5961 = vmatpush.msra.mxu0 %v4809
      %5962 = vmatpush.msra.mxu0 %v4808
      %5963 = vmatpush.msra.mxu0 %v4807
      %5964 = vmatpush.msra.mxu0 %v4806
      %5965 = vmatmul.f32.gmra.mxu0 %v4423
      %v5966 = vpop.f32.mrf.mxu0
      %v5967 = vadd.f32 %v5944, %v5966
      %5968 = vmatmul.f32.gmra.mxu0 %v4487
      %v5969 = vpop.f32.mrf.mxu0
      %v5970 = vadd.f32 %v5947, %v5969
      %5971 = vdwg.mxu0
      %5972 = vmatpush.msra.mxu0 %v4837
      %5973 = vmatpush.msra.mxu0 %v4836
      %5974 = vmatpush.msra.mxu0 %v4835
      %5975 = vmatpush.msra.mxu0 %v4834
      %5976 = vmatpush.msra.mxu0 %v4833
      %5977 = vmatpush.msra.mxu0 %v4832
      %5978 = vmatpush.msra.mxu0 %v4831
      %5979 = vmatpush.msra.mxu0 %v4830
      %5980 = vmatpush.msra.mxu0 %v4829
      %5981 = vmatpush.msra.mxu0 %v4828
      %5982 = vmatpush.msra.mxu0 %v4827
      %5983 = vmatpush.msra.mxu0 %v4826
      %5984 = vmatpush.msra.mxu0 %v4825
      %5985 = vmatpush.msra.mxu0 %v4824
      %5986 = vmatpush.msra.mxu0 %v4823
      %5987 = vmatpush.msra.mxu0 %v4822
      %5988 = vmatmul.f32.gmra.mxu0 %v4424
      %v5989 = vpop.f32.mrf.mxu0
      %v5990 = vadd.f32 %v5967, %v5989
      %5991 = vmatmul.f32.gmra.mxu0 %v4488
      %v5992 = vpop.f32.mrf.mxu0
      %v5993 = vadd.f32 %v5970, %v5992
      %5994 = vdwg.mxu0
      %5995 = vmatpush.msra.mxu0 %v4853
      %5996 = vmatpush.msra.mxu0 %v4852
      %5997 = vmatpush.msra.mxu0 %v4851
      %5998 = vmatpush.msra.mxu0 %v4850
      %5999 = vmatpush.msra.mxu0 %v4849
      %6000 = vmatpush.msra.mxu0 %v4848
      %6001 = vmatpush.msra.mxu0 %v4847
      %6002 = vmatpush.msra.mxu0 %v4846
      %6003 = vmatpush.msra.mxu0 %v4845
      %6004 = vmatpush.msra.mxu0 %v4844
      %6005 = vmatpush.msra.mxu0 %v4843
      %6006 = vmatpush.msra.mxu0 %v4842
      %6007 = vmatpush.msra.mxu0 %v4841
      %6008 = vmatpush.msra.mxu0 %v4840
      %6009 = vmatpush.msra.mxu0 %v4839
      %6010 = vmatpush.msra.mxu0 %v4838
      %6011 = vmatmul.f32.gmra.mxu0 %v4425
      %v6012 = vpop.f32.mrf.mxu0
      %v6013 = vadd.f32 %v5990, %v6012
      %6014 = vmatmul.f32.gmra.mxu0 %v4489
      %v6015 = vpop.f32.mrf.mxu0
      %v6016 = vadd.f32 %v5993, %v6015
      %6017 = vdwg.mxu0
      %6018 = vmatpush.msra.mxu0 %v4869
      %6019 = vmatpush.msra.mxu0 %v4868
      %6020 = vmatpush.msra.mxu0 %v4867
      %6021 = vmatpush.msra.mxu0 %v4866
      %6022 = vmatpush.msra.mxu0 %v4865
      %6023 = vmatpush.msra.mxu0 %v4864
      %6024 = vmatpush.msra.mxu0 %v4863
      %6025 = vmatpush.msra.mxu0 %v4862
      %6026 = vmatpush.msra.mxu0 %v4861
      %6027 = vmatpush.msra.mxu0 %v4860
      %6028 = vmatpush.msra.mxu0 %v4859
      %6029 = vmatpush.msra.mxu0 %v4858
      %6030 = vmatpush.msra.mxu0 %v4857
      %6031 = vmatpush.msra.mxu0 %v4856
      %6032 = vmatpush.msra.mxu0 %v4855
      %6033 = vmatpush.msra.mxu0 %v4854
      %6034 = vmatmul.f32.gmra.mxu0 %v4426
      %v6035 = vpop.f32.mrf.mxu0
      %v6036 = vadd.f32 %v6013, %v6035
      %6037 = vmatmul.f32.gmra.mxu0 %v4490
      %v6038 = vpop.f32.mrf.mxu0
      %v6039 = vadd.f32 %v6016, %v6038
      %6040 = vdwg.mxu0
      %6041 = vmatpush.msra.mxu0 %v4885
      %6042 = vmatpush.msra.mxu0 %v4884
      %6043 = vmatpush.msra.mxu0 %v4883
      %6044 = vmatpush.msra.mxu0 %v4882
      %6045 = vmatpush.msra.mxu0 %v4881
      %6046 = vmatpush.msra.mxu0 %v4880
      %6047 = vmatpush.msra.mxu0 %v4879
      %6048 = vmatpush.msra.mxu0 %v4878
      %6049 = vmatpush.msra.mxu0 %v4877
      %6050 = vmatpush.msra.mxu0 %v4876
      %6051 = vmatpush.msra.mxu0 %v4875
      %6052 = vmatpush.msra.mxu0 %v4874
      %6053 = vmatpush.msra.mxu0 %v4873
      %6054 = vmatpush.msra.mxu0 %v4872
      %6055 = vmatpush.msra.mxu0 %v4871
      %6056 = vmatpush.msra.mxu0 %v4870
      %6057 = vmatmul.f32.gmra.mxu0 %v4427
      %v6058 = vpop.f32.mrf.mxu0
      %v6059 = vadd.f32 %v6036, %v6058
      %6060 = vmatmul.f32.gmra.mxu0 %v4491
      %v6061 = vpop.f32.mrf.mxu0
      %v6062 = vadd.f32 %v6039, %v6061
      %6063 = vdwg.mxu0
      %6064 = vmatpush.msra.mxu0 %v4901
      %6065 = vmatpush.msra.mxu0 %v4900
      %6066 = vmatpush.msra.mxu0 %v4899
      %6067 = vmatpush.msra.mxu0 %v4898
      %6068 = vmatpush.msra.mxu0 %v4897
      %6069 = vmatpush.msra.mxu0 %v4896
      %6070 = vmatpush.msra.mxu0 %v4895
      %6071 = vmatpush.msra.mxu0 %v4894
      %6072 = vmatpush.msra.mxu0 %v4893
      %6073 = vmatpush.msra.mxu0 %v4892
      %6074 = vmatpush.msra.mxu0 %v4891
      %6075 = vmatpush.msra.mxu0 %v4890
      %6076 = vmatpush.msra.mxu0 %v4889
      %6077 = vmatpush.msra.mxu0 %v4888
      %6078 = vmatpush.msra.mxu0 %v4887
      %6079 = vmatpush.msra.mxu0 %v4886
      %6080 = vmatmul.f32.gmra.mxu0 %v4428
      %v6081 = vpop.f32.mrf.mxu0
      %v6082 = vadd.f32 %v6059, %v6081
      %6083 = vmatmul.f32.gmra.mxu0 %v4492
      %v6084 = vpop.f32.mrf.mxu0
      %v6085 = vadd.f32 %v6062, %v6084
      %6086 = vdwg.mxu0
      %6087 = vmatpush.msra.mxu0 %v4917
      %6088 = vmatpush.msra.mxu0 %v4916
      %6089 = vmatpush.msra.mxu0 %v4915
      %6090 = vmatpush.msra.mxu0 %v4914
      %6091 = vmatpush.msra.mxu0 %v4913
      %6092 = vmatpush.msra.mxu0 %v4912
      %6093 = vmatpush.msra.mxu0 %v4911
      %6094 = vmatpush.msra.mxu0 %v4910
      %6095 = vmatpush.msra.mxu0 %v4909
      %6096 = vmatpush.msra.mxu0 %v4908
      %6097 = vmatpush.msra.mxu0 %v4907
      %6098 = vmatpush.msra.mxu0 %v4906
      %6099 = vmatpush.msra.mxu0 %v4905
      %6100 = vmatpush.msra.mxu0 %v4904
      %6101 = vmatpush.msra.mxu0 %v4903
      %6102 = vmatpush.msra.mxu0 %v4902
      %6103 = vmatmul.f32.gmra.mxu0 %v4429
      %v6104 = vpop.f32.mrf.mxu0
      %v6105 = vadd.f32 %v6082, %v6104
      %6106 = vmatmul.f32.gmra.mxu0 %v4493
      %v6107 = vpop.f32.mrf.mxu0
      %v6108 = vadd.f32 %v6085, %v6107
      %6109 = vdwg.mxu0
      %6110 = vmatpush.msra.mxu0 %v4933
      %6111 = vmatpush.msra.mxu0 %v4932
      %6112 = vmatpush.msra.mxu0 %v4931
      %6113 = vmatpush.msra.mxu0 %v4930
      %6114 = vmatpush.msra.mxu0 %v4929
      %6115 = vmatpush.msra.mxu0 %v4928
      %6116 = vmatpush.msra.mxu0 %v4927
      %6117 = vmatpush.msra.mxu0 %v4926
      %6118 = vmatpush.msra.mxu0 %v4925
      %6119 = vmatpush.msra.mxu0 %v4924
      %6120 = vmatpush.msra.mxu0 %v4923
      %6121 = vmatpush.msra.mxu0 %v4922
      %6122 = vmatpush.msra.mxu0 %v4921
      %6123 = vmatpush.msra.mxu0 %v4920
      %6124 = vmatpush.msra.mxu0 %v4919
      %6125 = vmatpush.msra.mxu0 %v4918
      %6126 = vmatmul.f32.gmra.mxu0 %v4430
      %v6127 = vpop.f32.mrf.mxu0
      %v6128 = vadd.f32 %v6105, %v6127
      %6129 = vmatmul.f32.gmra.mxu0 %v4494
      %v6130 = vpop.f32.mrf.mxu0
      %v6131 = vadd.f32 %v6108, %v6130
      %6132 = vdwg.mxu0
      %6133 = vmatpush.msra.mxu0 %v4949
      %6134 = vmatpush.msra.mxu0 %v4948
      %6135 = vmatpush.msra.mxu0 %v4947
      %6136 = vmatpush.msra.mxu0 %v4946
      %6137 = vmatpush.msra.mxu0 %v4945
      %6138 = vmatpush.msra.mxu0 %v4944
      %6139 = vmatpush.msra.mxu0 %v4943
      %6140 = vmatpush.msra.mxu0 %v4942
      %6141 = vmatpush.msra.mxu0 %v4941
      %6142 = vmatpush.msra.mxu0 %v4940
      %6143 = vmatpush.msra.mxu0 %v4939
      %6144 = vmatpush.msra.mxu0 %v4938
      %6145 = vmatpush.msra.mxu0 %v4937
      %6146 = vmatpush.msra.mxu0 %v4936
      %6147 = vmatpush.msra.mxu0 %v4935
      %6148 = vmatpush.msra.mxu0 %v4934
      %6149 = vmatmul.f32.gmra.mxu0 %v4431
      %v6150 = vpop.f32.mrf.mxu0
      %v6151 = vadd.f32 %v6128, %v6150
      %6152 = vmatmul.f32.gmra.mxu0 %v4495
      %v6153 = vpop.f32.mrf.mxu0
      %v6154 = vadd.f32 %v6131, %v6153
      %6155 = vdwg.mxu0
      %6156 = vmatpush.msra.mxu0 %v4965
      %6157 = vmatpush.msra.mxu0 %v4964
      %6158 = vmatpush.msra.mxu0 %v4963
      %6159 = vmatpush.msra.mxu0 %v4962
      %6160 = vmatpush.msra.mxu0 %v4961
      %6161 = vmatpush.msra.mxu0 %v4960
      %6162 = vmatpush.msra.mxu0 %v4959
      %6163 = vmatpush.msra.mxu0 %v4958
      %6164 = vmatpush.msra.mxu0 %v4957
      %6165 = vmatpush.msra.mxu0 %v4956
      %6166 = vmatpush.msra.mxu0 %v4955
      %6167 = vmatpush.msra.mxu0 %v4954
      %6168 = vmatpush.msra.mxu0 %v4953
      %6169 = vmatpush.msra.mxu0 %v4952
      %6170 = vmatpush.msra.mxu0 %v4951
      %6171 = vmatpush.msra.mxu0 %v4950
      %6172 = vmatmul.f32.gmra.mxu0 %v4432
      %v6173 = vpop.f32.mrf.mxu0
      %v6174 = vadd.f32 %v6151, %v6173
      %6175 = vmatmul.f32.gmra.mxu0 %v4496
      %v6176 = vpop.f32.mrf.mxu0
      %v6177 = vadd.f32 %v6154, %v6176
      %6178 = vdwg.mxu0
      %6179 = vmatpush.msra.mxu0 %v4981
      %6180 = vmatpush.msra.mxu0 %v4980
      %6181 = vmatpush.msra.mxu0 %v4979
      %6182 = vmatpush.msra.mxu0 %v4978
      %6183 = vmatpush.msra.mxu0 %v4977
      %6184 = vmatpush.msra.mxu0 %v4976
      %6185 = vmatpush.msra.mxu0 %v4975
      %6186 = vmatpush.msra.mxu0 %v4974
      %6187 = vmatpush.msra.mxu0 %v4973
      %6188 = vmatpush.msra.mxu0 %v4972
      %6189 = vmatpush.msra.mxu0 %v4971
      %6190 = vmatpush.msra.mxu0 %v4970
      %6191 = vmatpush.msra.mxu0 %v4969
      %6192 = vmatpush.msra.mxu0 %v4968
      %6193 = vmatpush.msra.mxu0 %v4967
      %6194 = vmatpush.msra.mxu0 %v4966
      %6195 = vmatmul.f32.gmra.mxu0 %v4433
      %v6196 = vpop.f32.mrf.mxu0
      %v6197 = vadd.f32 %v6174, %v6196
      %6198 = vmatmul.f32.gmra.mxu0 %v4497
      %v6199 = vpop.f32.mrf.mxu0
      %v6200 = vadd.f32 %v6177, %v6199
      %6201 = vdwg.mxu0
      %6202 = vmatpush.msra.mxu0 %v4997
      %6203 = vmatpush.msra.mxu0 %v4996
      %6204 = vmatpush.msra.mxu0 %v4995
      %6205 = vmatpush.msra.mxu0 %v4994
      %6206 = vmatpush.msra.mxu0 %v4993
      %6207 = vmatpush.msra.mxu0 %v4992
      %6208 = vmatpush.msra.mxu0 %v4991
      %6209 = vmatpush.msra.mxu0 %v4990
      %6210 = vmatpush.msra.mxu0 %v4989
      %6211 = vmatpush.msra.mxu0 %v4988
      %6212 = vmatpush.msra.mxu0 %v4987
      %6213 = vmatpush.msra.mxu0 %v4986
      %6214 = vmatpush.msra.mxu0 %v4985
      %6215 = vmatpush.msra.mxu0 %v4984
      %6216 = vmatpush.msra.mxu0 %v4983
      %6217 = vmatpush.msra.mxu0 %v4982
      %6218 = vmatmul.f32.gmra.mxu0 %v4434
      %v6219 = vpop.f32.mrf.mxu0
      %v6220 = vadd.f32 %v6197, %v6219
      %6221 = vmatmul.f32.gmra.mxu0 %v4498
      %v6222 = vpop.f32.mrf.mxu0
      %v6223 = vadd.f32 %v6200, %v6222
      %6224 = vdwg.mxu0
      %6225 = vmatpush.msra.mxu0 %v5013
      %6226 = vmatpush.msra.mxu0 %v5012
      %6227 = vmatpush.msra.mxu0 %v5011
      %6228 = vmatpush.msra.mxu0 %v5010
      %6229 = vmatpush.msra.mxu0 %v5009
      %6230 = vmatpush.msra.mxu0 %v5008
      %6231 = vmatpush.msra.mxu0 %v5007
      %6232 = vmatpush.msra.mxu0 %v5006
      %6233 = vmatpush.msra.mxu0 %v5005
      %6234 = vmatpush.msra.mxu0 %v5004
      %6235 = vmatpush.msra.mxu0 %v5003
      %6236 = vmatpush.msra.mxu0 %v5002
      %6237 = vmatpush.msra.mxu0 %v5001
      %6238 = vmatpush.msra.mxu0 %v5000
      %6239 = vmatpush.msra.mxu0 %v4999
      %6240 = vmatpush.msra.mxu0 %v4998
      %6241 = vmatmul.f32.gmra.mxu0 %v4435
      %v6242 = vpop.f32.mrf.mxu0
      %v6243 = vadd.f32 %v6220, %v6242
      %6244 = vmatmul.f32.gmra.mxu0 %v4499
      %v6245 = vpop.f32.mrf.mxu0
      %v6246 = vadd.f32 %v6223, %v6245
      %6247 = vdwg.mxu0
      %6248 = vmatpush.msra.mxu0 %v5029
      %6249 = vmatpush.msra.mxu0 %v5028
      %6250 = vmatpush.msra.mxu0 %v5027
      %6251 = vmatpush.msra.mxu0 %v5026
      %6252 = vmatpush.msra.mxu0 %v5025
      %6253 = vmatpush.msra.mxu0 %v5024
      %6254 = vmatpush.msra.mxu0 %v5023
      %6255 = vmatpush.msra.mxu0 %v5022
      %6256 = vmatpush.msra.mxu0 %v5021
      %6257 = vmatpush.msra.mxu0 %v5020
      %6258 = vmatpush.msra.mxu0 %v5019
      %6259 = vmatpush.msra.mxu0 %v5018
      %6260 = vmatpush.msra.mxu0 %v5017
      %6261 = vmatpush.msra.mxu0 %v5016
      %6262 = vmatpush.msra.mxu0 %v5015
      %6263 = vmatpush.msra.mxu0 %v5014
      %6264 = vmatmul.f32.gmra.mxu0 %v4436
      %v6265 = vpop.f32.mrf.mxu0
      %v6266 = vadd.f32 %v6243, %v6265
      %6267 = vmatmul.f32.gmra.mxu0 %v4500
      %v6268 = vpop.f32.mrf.mxu0
      %v6269 = vadd.f32 %v6246, %v6268
      %6270 = vdwg.mxu0
      %6271 = vmatpush.msra.mxu0 %v5045
      %6272 = vmatpush.msra.mxu0 %v5044
      %6273 = vmatpush.msra.mxu0 %v5043
      %6274 = vmatpush.msra.mxu0 %v5042
      %6275 = vmatpush.msra.mxu0 %v5041
      %6276 = vmatpush.msra.mxu0 %v5040
      %6277 = vmatpush.msra.mxu0 %v5039
      %6278 = vmatpush.msra.mxu0 %v5038
      %6279 = vmatpush.msra.mxu0 %v5037
      %6280 = vmatpush.msra.mxu0 %v5036
      %6281 = vmatpush.msra.mxu0 %v5035
      %6282 = vmatpush.msra.mxu0 %v5034
      %6283 = vmatpush.msra.mxu0 %v5033
      %6284 = vmatpush.msra.mxu0 %v5032
      %6285 = vmatpush.msra.mxu0 %v5031
      %6286 = vmatpush.msra.mxu0 %v5030
      %6287 = vmatmul.f32.gmra.mxu0 %v4437
      %v6288 = vpop.f32.mrf.mxu0
      %v6289 = vadd.f32 %v6266, %v6288
      %6290 = vmatmul.f32.gmra.mxu0 %v4501
      %v6291 = vpop.f32.mrf.mxu0
      %v6292 = vadd.f32 %v6269, %v6291
      %6293 = vdwg.mxu0
      %6294 = vmatpush.msra.mxu0 %v5061
      %6295 = vmatpush.msra.mxu0 %v5060
      %6296 = vmatpush.msra.mxu0 %v5059
      %6297 = vmatpush.msra.mxu0 %v5058
      %6298 = vmatpush.msra.mxu0 %v5057
      %6299 = vmatpush.msra.mxu0 %v5056
      %6300 = vmatpush.msra.mxu0 %v5055
      %6301 = vmatpush.msra.mxu0 %v5054
      %6302 = vmatpush.msra.mxu0 %v5053
      %6303 = vmatpush.msra.mxu0 %v5052
      %6304 = vmatpush.msra.mxu0 %v5051
      %6305 = vmatpush.msra.mxu0 %v5050
      %6306 = vmatpush.msra.mxu0 %v5049
      %6307 = vmatpush.msra.mxu0 %v5048
      %6308 = vmatpush.msra.mxu0 %v5047
      %6309 = vmatpush.msra.mxu0 %v5046
      %6310 = vmatmul.f32.gmra.mxu0 %v4438
      %v6311 = vpop.f32.mrf.mxu0
      %v6312 = vadd.f32 %v6289, %v6311
      %6313 = vmatmul.f32.gmra.mxu0 %v4502
      %v6314 = vpop.f32.mrf.mxu0
      %v6315 = vadd.f32 %v6292, %v6314
      %6316 = vdwg.mxu0
      %6317 = vmatpush.msra.mxu0 %v5077
      %6318 = vmatpush.msra.mxu0 %v5076
      %6319 = vmatpush.msra.mxu0 %v5075
      %6320 = vmatpush.msra.mxu0 %v5074
      %6321 = vmatpush.msra.mxu0 %v5073
      %6322 = vmatpush.msra.mxu0 %v5072
      %6323 = vmatpush.msra.mxu0 %v5071
      %6324 = vmatpush.msra.mxu0 %v5070
      %6325 = vmatpush.msra.mxu0 %v5069
      %6326 = vmatpush.msra.mxu0 %v5068
      %6327 = vmatpush.msra.mxu0 %v5067
      %6328 = vmatpush.msra.mxu0 %v5066
      %6329 = vmatpush.msra.mxu0 %v5065
      %6330 = vmatpush.msra.mxu0 %v5064
      %6331 = vmatpush.msra.mxu0 %v5063
      %6332 = vmatpush.msra.mxu0 %v5062
      %6333 = vmatmul.f32.gmra.mxu0 %v4439
      %v6334 = vpop.f32.mrf.mxu0
      %v6335 = vadd.f32 %v6312, %v6334
      %6336 = vmatmul.f32.gmra.mxu0 %v4503
      %v6337 = vpop.f32.mrf.mxu0
      %v6338 = vadd.f32 %v6315, %v6337
      %6339 = vdwg.mxu0
      %6340 = vmatpush.msra.mxu0 %v5093
      %6341 = vmatpush.msra.mxu0 %v5092
      %6342 = vmatpush.msra.mxu0 %v5091
      %6343 = vmatpush.msra.mxu0 %v5090
      %6344 = vmatpush.msra.mxu0 %v5089
      %6345 = vmatpush.msra.mxu0 %v5088
      %6346 = vmatpush.msra.mxu0 %v5087
      %6347 = vmatpush.msra.mxu0 %v5086
      %6348 = vmatpush.msra.mxu0 %v5085
      %6349 = vmatpush.msra.mxu0 %v5084
      %6350 = vmatpush.msra.mxu0 %v5083
      %6351 = vmatpush.msra.mxu0 %v5082
      %6352 = vmatpush.msra.mxu0 %v5081
      %6353 = vmatpush.msra.mxu0 %v5080
      %6354 = vmatpush.msra.mxu0 %v5079
      %6355 = vmatpush.msra.mxu0 %v5078
      %6356 = vmatmul.f32.gmra.mxu0 %v4440
      %v6357 = vpop.f32.mrf.mxu0
      %v6358 = vadd.f32 %v6335, %v6357
      %6359 = vmatmul.f32.gmra.mxu0 %v4504
      %v6360 = vpop.f32.mrf.mxu0
      %v6361 = vadd.f32 %v6338, %v6360
      %6362 = vdwg.mxu0
      %6363 = vmatpush.msra.mxu0 %v5109
      %6364 = vmatpush.msra.mxu0 %v5108
      %6365 = vmatpush.msra.mxu0 %v5107
      %6366 = vmatpush.msra.mxu0 %v5106
      %6367 = vmatpush.msra.mxu0 %v5105
      %6368 = vmatpush.msra.mxu0 %v5104
      %6369 = vmatpush.msra.mxu0 %v5103
      %6370 = vmatpush.msra.mxu0 %v5102
      %6371 = vmatpush.msra.mxu0 %v5101
      %6372 = vmatpush.msra.mxu0 %v5100
      %6373 = vmatpush.msra.mxu0 %v5099
      %6374 = vmatpush.msra.mxu0 %v5098
      %6375 = vmatpush.msra.mxu0 %v5097
      %6376 = vmatpush.msra.mxu0 %v5096
      %6377 = vmatpush.msra.mxu0 %v5095
      %6378 = vmatpush.msra.mxu0 %v5094
      %6379 = vmatmul.f32.gmra.mxu0 %v4441
      %v6380 = vpop.f32.mrf.mxu0
      %v6381 = vadd.f32 %v6358, %v6380
      %6382 = vmatmul.f32.gmra.mxu0 %v4505
      %v6383 = vpop.f32.mrf.mxu0
      %v6384 = vadd.f32 %v6361, %v6383
      %6385 = vdwg.mxu0
      %6386 = vmatpush.msra.mxu0 %v5125
      %6387 = vmatpush.msra.mxu0 %v5124
      %6388 = vmatpush.msra.mxu0 %v5123
      %6389 = vmatpush.msra.mxu0 %v5122
      %6390 = vmatpush.msra.mxu0 %v5121
      %6391 = vmatpush.msra.mxu0 %v5120
      %6392 = vmatpush.msra.mxu0 %v5119
      %6393 = vmatpush.msra.mxu0 %v5118
      %6394 = vmatpush.msra.mxu0 %v5117
      %6395 = vmatpush.msra.mxu0 %v5116
      %6396 = vmatpush.msra.mxu0 %v5115
      %6397 = vmatpush.msra.mxu0 %v5114
      %6398 = vmatpush.msra.mxu0 %v5113
      %6399 = vmatpush.msra.mxu0 %v5112
      %6400 = vmatpush.msra.mxu0 %v5111
      %6401 = vmatpush.msra.mxu0 %v5110
      %6402 = vmatmul.f32.gmra.mxu0 %v4442
      %v6403 = vpop.f32.mrf.mxu0
      %v6404 = vadd.f32 %v6381, %v6403
      %6405 = vmatmul.f32.gmra.mxu0 %v4506
      %v6406 = vpop.f32.mrf.mxu0
      %v6407 = vadd.f32 %v6384, %v6406
      %6408 = vdwg.mxu0
      %6409 = vmatpush.msra.mxu0 %v5141
      %6410 = vmatpush.msra.mxu0 %v5140
      %6411 = vmatpush.msra.mxu0 %v5139
      %6412 = vmatpush.msra.mxu0 %v5138
      %6413 = vmatpush.msra.mxu0 %v5137
      %6414 = vmatpush.msra.mxu0 %v5136
      %6415 = vmatpush.msra.mxu0 %v5135
      %6416 = vmatpush.msra.mxu0 %v5134
      %6417 = vmatpush.msra.mxu0 %v5133
      %6418 = vmatpush.msra.mxu0 %v5132
      %6419 = vmatpush.msra.mxu0 %v5131
      %6420 = vmatpush.msra.mxu0 %v5130
      %6421 = vmatpush.msra.mxu0 %v5129
      %6422 = vmatpush.msra.mxu0 %v5128
      %6423 = vmatpush.msra.mxu0 %v5127
      %6424 = vmatpush.msra.mxu0 %v5126
      %6425 = vmatmul.f32.gmra.mxu0 %v4443
      %v6426 = vpop.f32.mrf.mxu0
      %v6427 = vadd.f32 %v6404, %v6426
      %6428 = vmatmul.f32.gmra.mxu0 %v4507
      %v6429 = vpop.f32.mrf.mxu0
      %v6430 = vadd.f32 %v6407, %v6429
      %6431 = vdwg.mxu0
      %6432 = vmatpush.msra.mxu0 %v5157
      %6433 = vmatpush.msra.mxu0 %v5156
      %6434 = vmatpush.msra.mxu0 %v5155
      %6435 = vmatpush.msra.mxu0 %v5154
      %6436 = vmatpush.msra.mxu0 %v5153
      %6437 = vmatpush.msra.mxu0 %v5152
      %6438 = vmatpush.msra.mxu0 %v5151
      %6439 = vmatpush.msra.mxu0 %v5150
      %6440 = vmatpush.msra.mxu0 %v5149
      %6441 = vmatpush.msra.mxu0 %v5148
      %6442 = vmatpush.msra.mxu0 %v5147
      %6443 = vmatpush.msra.mxu0 %v5146
      %6444 = vmatpush.msra.mxu0 %v5145
      %6445 = vmatpush.msra.mxu0 %v5144
      %6446 = vmatpush.msra.mxu0 %v5143
      %6447 = vmatpush.msra.mxu0 %v5142
      %6448 = vmatmul.f32.gmra.mxu0 %v4444
      %v6449 = vpop.f32.mrf.mxu0
      %v6450 = vadd.f32 %v6427, %v6449
      %6451 = vmatmul.f32.gmra.mxu0 %v4508
      %v6452 = vpop.f32.mrf.mxu0
      %v6453 = vadd.f32 %v6430, %v6452
      %6454 = vdwg.mxu0
      %6455 = vmatpush.msra.mxu0 %v5173
      %6456 = vmatpush.msra.mxu0 %v5172
      %6457 = vmatpush.msra.mxu0 %v5171
      %6458 = vmatpush.msra.mxu0 %v5170
      %6459 = vmatpush.msra.mxu0 %v5169
      %6460 = vmatpush.msra.mxu0 %v5168
      %6461 = vmatpush.msra.mxu0 %v5167
      %6462 = vmatpush.msra.mxu0 %v5166
      %6463 = vmatpush.msra.mxu0 %v5165
      %6464 = vmatpush.msra.mxu0 %v5164
      %6465 = vmatpush.msra.mxu0 %v5163
      %6466 = vmatpush.msra.mxu0 %v5162
      %6467 = vmatpush.msra.mxu0 %v5161
      %6468 = vmatpush.msra.mxu0 %v5160
      %6469 = vmatpush.msra.mxu0 %v5159
      %6470 = vmatpush.msra.mxu0 %v5158
      %6471 = vmatmul.f32.gmra.mxu0 %v4445
      %v6472 = vpop.f32.mrf.mxu0
      %v6473 = vadd.f32 %v6450, %v6472
      %6474 = vmatmul.f32.gmra.mxu0 %v4509
      %v6475 = vpop.f32.mrf.mxu0
      %v6476 = vadd.f32 %v6453, %v6475
      %6477 = vdwg.mxu0
      %6478 = vmatpush.msra.mxu0 %v5189
      %6479 = vmatpush.msra.mxu0 %v5188
      %6480 = vmatpush.msra.mxu0 %v5187
      %6481 = vmatpush.msra.mxu0 %v5186
      %6482 = vmatpush.msra.mxu0 %v5185
      %6483 = vmatpush.msra.mxu0 %v5184
      %6484 = vmatpush.msra.mxu0 %v5183
      %6485 = vmatpush.msra.mxu0 %v5182
      %6486 = vmatpush.msra.mxu0 %v5181
      %6487 = vmatpush.msra.mxu0 %v5180
      %6488 = vmatpush.msra.mxu0 %v5179
      %6489 = vmatpush.msra.mxu0 %v5178
      %6490 = vmatpush.msra.mxu0 %v5177
      %6491 = vmatpush.msra.mxu0 %v5176
      %6492 = vmatpush.msra.mxu0 %v5175
      %6493 = vmatpush.msra.mxu0 %v5174
      %6494 = vmatmul.f32.gmra.mxu0 %v4446
      %v6495 = vpop.f32.mrf.mxu0
      %v6496 = vadd.f32 %v6473, %v6495
      %6497 = vmatmul.f32.gmra.mxu0 %v4510
      %v6498 = vpop.f32.mrf.mxu0
      %v6499 = vadd.f32 %v6476, %v6498
      %6500 = vdwg.mxu0
      %6501 = vmatpush.msra.mxu0 %v5205
      %6502 = vmatpush.msra.mxu0 %v5204
      %6503 = vmatpush.msra.mxu0 %v5203
      %6504 = vmatpush.msra.mxu0 %v5202
      %6505 = vmatpush.msra.mxu0 %v5201
      %6506 = vmatpush.msra.mxu0 %v5200
      %6507 = vmatpush.msra.mxu0 %v5199
      %6508 = vmatpush.msra.mxu0 %v5198
      %6509 = vmatpush.msra.mxu0 %v5197
      %6510 = vmatpush.msra.mxu0 %v5196
      %6511 = vmatpush.msra.mxu0 %v5195
      %6512 = vmatpush.msra.mxu0 %v5194
      %6513 = vmatpush.msra.mxu0 %v5193
      %6514 = vmatpush.msra.mxu0 %v5192
      %6515 = vmatpush.msra.mxu0 %v5191
      %6516 = vmatpush.msra.mxu0 %v5190
      %6517 = vmatmul.f32.gmra.mxu0 %v4447
      %v6518 = vpop.f32.mrf.mxu0
      %v6519 = vadd.f32 %v6496, %v6518
      %6520 = vmatmul.f32.gmra.mxu0 %v4511
      %v6521 = vpop.f32.mrf.mxu0
      %v6522 = vadd.f32 %v6499, %v6521
      %6523 = vdwg.mxu0
      %6524 = vmatpush.msra.mxu0 %v5221
      %6525 = vmatpush.msra.mxu0 %v5220
      %6526 = vmatpush.msra.mxu0 %v5219
      %6527 = vmatpush.msra.mxu0 %v5218
      %6528 = vmatpush.msra.mxu0 %v5217
      %6529 = vmatpush.msra.mxu0 %v5216
      %6530 = vmatpush.msra.mxu0 %v5215
      %6531 = vmatpush.msra.mxu0 %v5214
      %6532 = vmatpush.msra.mxu0 %v5213
      %6533 = vmatpush.msra.mxu0 %v5212
      %6534 = vmatpush.msra.mxu0 %v5211
      %6535 = vmatpush.msra.mxu0 %v5210
      %6536 = vmatpush.msra.mxu0 %v5209
      %6537 = vmatpush.msra.mxu0 %v5208
      %6538 = vmatpush.msra.mxu0 %v5207
      %6539 = vmatpush.msra.mxu0 %v5206
      %6540 = vmatmul.f32.gmra.mxu0 %v4448
      %v6541 = vpop.f32.mrf.mxu0
      %v6542 = vadd.f32 %v6519, %v6541
      %6543 = vmatmul.f32.gmra.mxu0 %v4512
      %v6544 = vpop.f32.mrf.mxu0
      %v6545 = vadd.f32 %v6522, %v6544
      %6546 = vdwg.mxu0
      %6547 = vmatpush.msra.mxu0 %v5237
      %6548 = vmatpush.msra.mxu0 %v5236
      %6549 = vmatpush.msra.mxu0 %v5235
      %6550 = vmatpush.msra.mxu0 %v5234
      %6551 = vmatpush.msra.mxu0 %v5233
      %6552 = vmatpush.msra.mxu0 %v5232
      %6553 = vmatpush.msra.mxu0 %v5231
      %6554 = vmatpush.msra.mxu0 %v5230
      %6555 = vmatpush.msra.mxu0 %v5229
      %6556 = vmatpush.msra.mxu0 %v5228
      %6557 = vmatpush.msra.mxu0 %v5227
      %6558 = vmatpush.msra.mxu0 %v5226
      %6559 = vmatpush.msra.mxu0 %v5225
      %6560 = vmatpush.msra.mxu0 %v5224
      %6561 = vmatpush.msra.mxu0 %v5223
      %6562 = vmatpush.msra.mxu0 %v5222
      %6563 = vmatmul.f32.gmra.mxu0 %v4449
      %v6564 = vpop.f32.mrf.mxu0
      %v6565 = vadd.f32 %v6542, %v6564
      %6566 = vmatmul.f32.gmra.mxu0 %v4513
      %v6567 = vpop.f32.mrf.mxu0
      %v6568 = vadd.f32 %v6545, %v6567
      %6569 = vdwg.mxu0
      %6570 = vmatpush.msra.mxu0 %v5253
      %6571 = vmatpush.msra.mxu0 %v5252
      %6572 = vmatpush.msra.mxu0 %v5251
      %6573 = vmatpush.msra.mxu0 %v5250
      %6574 = vmatpush.msra.mxu0 %v5249
      %6575 = vmatpush.msra.mxu0 %v5248
      %6576 = vmatpush.msra.mxu0 %v5247
      %6577 = vmatpush.msra.mxu0 %v5246
      %6578 = vmatpush.msra.mxu0 %v5245
      %6579 = vmatpush.msra.mxu0 %v5244
      %6580 = vmatpush.msra.mxu0 %v5243
      %6581 = vmatpush.msra.mxu0 %v5242
      %6582 = vmatpush.msra.mxu0 %v5241
      %6583 = vmatpush.msra.mxu0 %v5240
      %6584 = vmatpush.msra.mxu0 %v5239
      %6585 = vmatpush.msra.mxu0 %v5238
      %6586 = vmatmul.f32.gmra.mxu0 %v4450
      %v6587 = vpop.f32.mrf.mxu0
      %v6588 = vadd.f32 %v6565, %v6587
      %6589 = vmatmul.f32.gmra.mxu0 %v4514
      %v6590 = vpop.f32.mrf.mxu0
      %v6591 = vadd.f32 %v6568, %v6590
      %6592 = vdwg.mxu0
      %6593 = vmatpush.msra.mxu0 %v5269
      %6594 = vmatpush.msra.mxu0 %v5268
      %6595 = vmatpush.msra.mxu0 %v5267
      %6596 = vmatpush.msra.mxu0 %v5266
      %6597 = vmatpush.msra.mxu0 %v5265
      %6598 = vmatpush.msra.mxu0 %v5264
      %6599 = vmatpush.msra.mxu0 %v5263
      %6600 = vmatpush.msra.mxu0 %v5262
      %6601 = vmatpush.msra.mxu0 %v5261
      %6602 = vmatpush.msra.mxu0 %v5260
      %6603 = vmatpush.msra.mxu0 %v5259
      %6604 = vmatpush.msra.mxu0 %v5258
      %6605 = vmatpush.msra.mxu0 %v5257
      %6606 = vmatpush.msra.mxu0 %v5256
      %6607 = vmatpush.msra.mxu0 %v5255
      %6608 = vmatpush.msra.mxu0 %v5254
      %6609 = vmatmul.f32.gmra.mxu0 %v4451
      %v6610 = vpop.f32.mrf.mxu0
      %v6611 = vadd.f32 %v6588, %v6610
      %6612 = vmatmul.f32.gmra.mxu0 %v4515
      %v6613 = vpop.f32.mrf.mxu0
      %v6614 = vadd.f32 %v6591, %v6613
      %6615 = vdwg.mxu0
      %6616 = vmatpush.msra.mxu0 %v5285
      %6617 = vmatpush.msra.mxu0 %v5284
      %6618 = vmatpush.msra.mxu0 %v5283
      %6619 = vmatpush.msra.mxu0 %v5282
      %6620 = vmatpush.msra.mxu0 %v5281
      %6621 = vmatpush.msra.mxu0 %v5280
      %6622 = vmatpush.msra.mxu0 %v5279
      %6623 = vmatpush.msra.mxu0 %v5278
      %6624 = vmatpush.msra.mxu0 %v5277
      %6625 = vmatpush.msra.mxu0 %v5276
      %6626 = vmatpush.msra.mxu0 %v5275
      %6627 = vmatpush.msra.mxu0 %v5274
      %6628 = vmatpush.msra.mxu0 %v5273
      %6629 = vmatpush.msra.mxu0 %v5272
      %6630 = vmatpush.msra.mxu0 %v5271
      %6631 = vmatpush.msra.mxu0 %v5270
      %6632 = vmatmul.f32.gmra.mxu0 %v4452
      %v6633 = vpop.f32.mrf.mxu0
      %v6634 = vadd.f32 %v6611, %v6633
      %6635 = vmatmul.f32.gmra.mxu0 %v4516
      %v6636 = vpop.f32.mrf.mxu0
      %v6637 = vadd.f32 %v6614, %v6636
      %6638 = vdwg.mxu0
      %6639 = vmatpush.msra.mxu0 %v5301
      %6640 = vmatpush.msra.mxu0 %v5300
      %6641 = vmatpush.msra.mxu0 %v5299
      %6642 = vmatpush.msra.mxu0 %v5298
      %6643 = vmatpush.msra.mxu0 %v5297
      %6644 = vmatpush.msra.mxu0 %v5296
      %6645 = vmatpush.msra.mxu0 %v5295
      %6646 = vmatpush.msra.mxu0 %v5294
      %6647 = vmatpush.msra.mxu0 %v5293
      %6648 = vmatpush.msra.mxu0 %v5292
      %6649 = vmatpush.msra.mxu0 %v5291
      %6650 = vmatpush.msra.mxu0 %v5290
      %6651 = vmatpush.msra.mxu0 %v5289
      %6652 = vmatpush.msra.mxu0 %v5288
      %6653 = vmatpush.msra.mxu0 %v5287
      %6654 = vmatpush.msra.mxu0 %v5286
      %6655 = vmatmul.f32.gmra.mxu0 %v4453
      %v6656 = vpop.f32.mrf.mxu0
      %v6657 = vadd.f32 %v6634, %v6656
      %6658 = vmatmul.f32.gmra.mxu0 %v4517
      %v6659 = vpop.f32.mrf.mxu0
      %v6660 = vadd.f32 %v6637, %v6659
      %6661 = vdwg.mxu0
      %6662 = vmatpush.msra.mxu0 %v5317
      %6663 = vmatpush.msra.mxu0 %v5316
      %6664 = vmatpush.msra.mxu0 %v5315
      %6665 = vmatpush.msra.mxu0 %v5314
      %6666 = vmatpush.msra.mxu0 %v5313
      %6667 = vmatpush.msra.mxu0 %v5312
      %6668 = vmatpush.msra.mxu0 %v5311
      %6669 = vmatpush.msra.mxu0 %v5310
      %6670 = vmatpush.msra.mxu0 %v5309
      %6671 = vmatpush.msra.mxu0 %v5308
      %6672 = vmatpush.msra.mxu0 %v5307
      %6673 = vmatpush.msra.mxu0 %v5306
      %6674 = vmatpush.msra.mxu0 %v5305
      %6675 = vmatpush.msra.mxu0 %v5304
      %6676 = vmatpush.msra.mxu0 %v5303
      %6677 = vmatpush.msra.mxu0 %v5302
      %6678 = vmatmul.f32.gmra.mxu0 %v4454
      %v6679 = vpop.f32.mrf.mxu0
      %v6680 = vadd.f32 %v6657, %v6679
      %6681 = vmatmul.f32.gmra.mxu0 %v4518
      %v6682 = vpop.f32.mrf.mxu0
      %v6683 = vadd.f32 %v6660, %v6682
      %6684 = vdwg.mxu0
      %6685 = vmatpush.msra.mxu0 %v5333
      %6686 = vmatpush.msra.mxu0 %v5332
      %6687 = vmatpush.msra.mxu0 %v5331
      %6688 = vmatpush.msra.mxu0 %v5330
      %6689 = vmatpush.msra.mxu0 %v5329
      %6690 = vmatpush.msra.mxu0 %v5328
      %6691 = vmatpush.msra.mxu0 %v5327
      %6692 = vmatpush.msra.mxu0 %v5326
      %6693 = vmatpush.msra.mxu0 %v5325
      %6694 = vmatpush.msra.mxu0 %v5324
      %6695 = vmatpush.msra.mxu0 %v5323
      %6696 = vmatpush.msra.mxu0 %v5322
      %6697 = vmatpush.msra.mxu0 %v5321
      %6698 = vmatpush.msra.mxu0 %v5320
      %6699 = vmatpush.msra.mxu0 %v5319
      %6700 = vmatpush.msra.mxu0 %v5318
      %6701 = vmatmul.f32.gmra.mxu0 %v4455
      %v6702 = vpop.f32.mrf.mxu0
      %v6703 = vadd.f32 %v6680, %v6702
      %6704 = vmatmul.f32.gmra.mxu0 %v4519
      %v6705 = vpop.f32.mrf.mxu0
      %v6706 = vadd.f32 %v6683, %v6705
      %6707 = vdwg.mxu0
      %6708 = vmatpush.msra.mxu0 %v5349
      %6709 = vmatpush.msra.mxu0 %v5348
      %6710 = vmatpush.msra.mxu0 %v5347
      %6711 = vmatpush.msra.mxu0 %v5346
      %6712 = vmatpush.msra.mxu0 %v5345
      %6713 = vmatpush.msra.mxu0 %v5344
      %6714 = vmatpush.msra.mxu0 %v5343
      %6715 = vmatpush.msra.mxu0 %v5342
      %6716 = vmatpush.msra.mxu0 %v5341
      %6717 = vmatpush.msra.mxu0 %v5340
      %6718 = vmatpush.msra.mxu0 %v5339
      %6719 = vmatpush.msra.mxu0 %v5338
      %6720 = vmatpush.msra.mxu0 %v5337
      %6721 = vmatpush.msra.mxu0 %v5336
      %6722 = vmatpush.msra.mxu0 %v5335
      %6723 = vmatpush.msra.mxu0 %v5334
      %6724 = vmatmul.f32.gmra.mxu0 %v4456
      %v6725 = vpop.f32.mrf.mxu0
      %v6726 = vadd.f32 %v6703, %v6725
      %6727 = vmatmul.f32.gmra.mxu0 %v4520
      %v6728 = vpop.f32.mrf.mxu0
      %v6729 = vadd.f32 %v6706, %v6728
      %6730 = vdwg.mxu0
      %6731 = vmatpush.msra.mxu0 %v5365
      %6732 = vmatpush.msra.mxu0 %v5364
      %6733 = vmatpush.msra.mxu0 %v5363
      %6734 = vmatpush.msra.mxu0 %v5362
      %6735 = vmatpush.msra.mxu0 %v5361
      %6736 = vmatpush.msra.mxu0 %v5360
      %6737 = vmatpush.msra.mxu0 %v5359
      %6738 = vmatpush.msra.mxu0 %v5358
      %6739 = vmatpush.msra.mxu0 %v5357
      %6740 = vmatpush.msra.mxu0 %v5356
      %6741 = vmatpush.msra.mxu0 %v5355
      %6742 = vmatpush.msra.mxu0 %v5354
      %6743 = vmatpush.msra.mxu0 %v5353
      %6744 = vmatpush.msra.mxu0 %v5352
      %6745 = vmatpush.msra.mxu0 %v5351
      %6746 = vmatpush.msra.mxu0 %v5350
      %6747 = vmatmul.f32.gmra.mxu0 %v4457
      %v6748 = vpop.f32.mrf.mxu0
      %v6749 = vadd.f32 %v6726, %v6748
      %6750 = vmatmul.f32.gmra.mxu0 %v4521
      %v6751 = vpop.f32.mrf.mxu0
      %v6752 = vadd.f32 %v6729, %v6751
      %6753 = vdwg.mxu0
      %6754 = vmatpush.msra.mxu0 %v5381
      %6755 = vmatpush.msra.mxu0 %v5380
      %6756 = vmatpush.msra.mxu0 %v5379
      %6757 = vmatpush.msra.mxu0 %v5378
      %6758 = vmatpush.msra.mxu0 %v5377
      %6759 = vmatpush.msra.mxu0 %v5376
      %6760 = vmatpush.msra.mxu0 %v5375
      %6761 = vmatpush.msra.mxu0 %v5374
      %6762 = vmatpush.msra.mxu0 %v5373
      %6763 = vmatpush.msra.mxu0 %v5372
      %6764 = vmatpush.msra.mxu0 %v5371
      %6765 = vmatpush.msra.mxu0 %v5370
      %6766 = vmatpush.msra.mxu0 %v5369
      %6767 = vmatpush.msra.mxu0 %v5368
      %6768 = vmatpush.msra.mxu0 %v5367
      %6769 = vmatpush.msra.mxu0 %v5366
      %6770 = vmatmul.f32.gmra.mxu0 %v4458
      %v6771 = vpop.f32.mrf.mxu0
      %v6772 = vadd.f32 %v6749, %v6771
      %6773 = vmatmul.f32.gmra.mxu0 %v4522
      %v6774 = vpop.f32.mrf.mxu0
      %v6775 = vadd.f32 %v6752, %v6774
      %6776 = vdwg.mxu0
      %6777 = vmatpush.msra.mxu0 %v5397
      %6778 = vmatpush.msra.mxu0 %v5396
      %6779 = vmatpush.msra.mxu0 %v5395
      %6780 = vmatpush.msra.mxu0 %v5394
      %6781 = vmatpush.msra.mxu0 %v5393
      %6782 = vmatpush.msra.mxu0 %v5392
      %6783 = vmatpush.msra.mxu0 %v5391
      %6784 = vmatpush.msra.mxu0 %v5390
      %6785 = vmatpush.msra.mxu0 %v5389
      %6786 = vmatpush.msra.mxu0 %v5388
      %6787 = vmatpush.msra.mxu0 %v5387
      %6788 = vmatpush.msra.mxu0 %v5386
      %6789 = vmatpush.msra.mxu0 %v5385
      %6790 = vmatpush.msra.mxu0 %v5384
      %6791 = vmatpush.msra.mxu0 %v5383
      %6792 = vmatpush.msra.mxu0 %v5382
      %6793 = vmatmul.f32.gmra.mxu0 %v4459
      %v6794 = vpop.f32.mrf.mxu0
      %v6795 = vadd.f32 %v6772, %v6794
      %6796 = vmatmul.f32.gmra.mxu0 %v4523
      %v6797 = vpop.f32.mrf.mxu0
      %v6798 = vadd.f32 %v6775, %v6797
      %6799 = vdwg.mxu0
      %6800 = vmatpush.msra.mxu0 %v5413
      %6801 = vmatpush.msra.mxu0 %v5412
      %6802 = vmatpush.msra.mxu0 %v5411
      %6803 = vmatpush.msra.mxu0 %v5410
      %6804 = vmatpush.msra.mxu0 %v5409
      %6805 = vmatpush.msra.mxu0 %v5408
      %6806 = vmatpush.msra.mxu0 %v5407
      %6807 = vmatpush.msra.mxu0 %v5406
      %6808 = vmatpush.msra.mxu0 %v5405
      %6809 = vmatpush.msra.mxu0 %v5404
      %6810 = vmatpush.msra.mxu0 %v5403
      %6811 = vmatpush.msra.mxu0 %v5402
      %6812 = vmatpush.msra.mxu0 %v5401
      %6813 = vmatpush.msra.mxu0 %v5400
      %6814 = vmatpush.msra.mxu0 %v5399
      %6815 = vmatpush.msra.mxu0 %v5398
      %6816 = vmatmul.f32.gmra.mxu0 %v4460
      %v6817 = vpop.f32.mrf.mxu0
      %v6818 = vadd.f32 %v6795, %v6817
      %6819 = vmatmul.f32.gmra.mxu0 %v4524
      %v6820 = vpop.f32.mrf.mxu0
      %v6821 = vadd.f32 %v6798, %v6820
      %6822 = vdwg.mxu0
      %6823 = vmatpush.msra.mxu0 %v5429
      %6824 = vmatpush.msra.mxu0 %v5428
      %6825 = vmatpush.msra.mxu0 %v5427
      %6826 = vmatpush.msra.mxu0 %v5426
      %6827 = vmatpush.msra.mxu0 %v5425
      %6828 = vmatpush.msra.mxu0 %v5424
      %6829 = vmatpush.msra.mxu0 %v5423
      %6830 = vmatpush.msra.mxu0 %v5422
      %6831 = vmatpush.msra.mxu0 %v5421
      %6832 = vmatpush.msra.mxu0 %v5420
      %6833 = vmatpush.msra.mxu0 %v5419
      %6834 = vmatpush.msra.mxu0 %v5418
      %6835 = vmatpush.msra.mxu0 %v5417
      %6836 = vmatpush.msra.mxu0 %v5416
      %6837 = vmatpush.msra.mxu0 %v5415
      %6838 = vmatpush.msra.mxu0 %v5414
      %6839 = vmatmul.f32.gmra.mxu0 %v4461
      %v6840 = vpop.f32.mrf.mxu0
      %v6841 = vadd.f32 %v6818, %v6840
      %6842 = vmatmul.f32.gmra.mxu0 %v4525
      %v6843 = vpop.f32.mrf.mxu0
      %v6844 = vadd.f32 %v6821, %v6843
      %6845 = vdwg.mxu0
      %6846 = vmatpush.msra.mxu0 %v5445
      %6847 = vmatpush.msra.mxu0 %v5444
      %6848 = vmatpush.msra.mxu0 %v5443
      %6849 = vmatpush.msra.mxu0 %v5442
      %6850 = vmatpush.msra.mxu0 %v5441
      %6851 = vmatpush.msra.mxu0 %v5440
      %6852 = vmatpush.msra.mxu0 %v5439
      %6853 = vmatpush.msra.mxu0 %v5438
      %6854 = vmatpush.msra.mxu0 %v5437
      %6855 = vmatpush.msra.mxu0 %v5436
      %6856 = vmatpush.msra.mxu0 %v5435
      %6857 = vmatpush.msra.mxu0 %v5434
      %6858 = vmatpush.msra.mxu0 %v5433
      %6859 = vmatpush.msra.mxu0 %v5432
      %6860 = vmatpush.msra.mxu0 %v5431
      %6861 = vmatpush.msra.mxu0 %v5430
      %6862 = vmatmul.f32.gmra.mxu0 %v4462
      %v6863 = vpop.f32.mrf.mxu0
      %v6864 = vadd.f32 %v6841, %v6863
      %6865 = vmatmul.f32.gmra.mxu0 %v4526
      %v6866 = vpop.f32.mrf.mxu0
      %v6867 = vadd.f32 %v6844, %v6866
      %6868 = vdwg.mxu0
      %6869 = vmatpush.msra.mxu0 %v5461
      %6870 = vmatpush.msra.mxu0 %v5460
      %6871 = vmatpush.msra.mxu0 %v5459
      %6872 = vmatpush.msra.mxu0 %v5458
      %6873 = vmatpush.msra.mxu0 %v5457
      %6874 = vmatpush.msra.mxu0 %v5456
      %6875 = vmatpush.msra.mxu0 %v5455
      %6876 = vmatpush.msra.mxu0 %v5454
      %6877 = vmatpush.msra.mxu0 %v5453
      %6878 = vmatpush.msra.mxu0 %v5452
      %6879 = vmatpush.msra.mxu0 %v5451
      %6880 = vmatpush.msra.mxu0 %v5450
      %6881 = vmatpush.msra.mxu0 %v5449
      %6882 = vmatpush.msra.mxu0 %v5448
      %6883 = vmatpush.msra.mxu0 %v5447
      %6884 = vmatpush.msra.mxu0 %v5446
      %6885 = vmatmul.f32.gmra.mxu0 %v4463
      %v6886 = vpop.f32.mrf.mxu0
      %v6887 = vadd.f32 %v6864, %v6886
      %6888 = vmatmul.f32.gmra.mxu0 %v4527
      %v6889 = vpop.f32.mrf.mxu0
      %v6890 = vadd.f32 %v6867, %v6889
      %6891 = vdwg.mxu0
      %6892 = vmatpush.msra.mxu0 %v5477
      %6893 = vmatpush.msra.mxu0 %v5476
      %6894 = vmatpush.msra.mxu0 %v5475
      %6895 = vmatpush.msra.mxu0 %v5474
      %6896 = vmatpush.msra.mxu0 %v5473
      %6897 = vmatpush.msra.mxu0 %v5472
      %6898 = vmatpush.msra.mxu0 %v5471
      %6899 = vmatpush.msra.mxu0 %v5470
      %6900 = vmatpush.msra.mxu0 %v5469
      %6901 = vmatpush.msra.mxu0 %v5468
      %6902 = vmatpush.msra.mxu0 %v5467
      %6903 = vmatpush.msra.mxu0 %v5466
      %6904 = vmatpush.msra.mxu0 %v5465
      %6905 = vmatpush.msra.mxu0 %v5464
      %6906 = vmatpush.msra.mxu0 %v5463
      %6907 = vmatpush.msra.mxu0 %v5462
      %6908 = vmatmul.f32.gmra.mxu0 %v4464
      %v6909 = vpop.f32.mrf.mxu0
      %v6910 = vadd.f32 %v6887, %v6909
      %6911 = vmatmul.f32.gmra.mxu0 %v4528
      %v6912 = vpop.f32.mrf.mxu0
      %v6913 = vadd.f32 %v6890, %v6912
      %6914 = vdwg.mxu0
      %6915 = vmatpush.msra.mxu0 %v5493
      %6916 = vmatpush.msra.mxu0 %v5492
      %6917 = vmatpush.msra.mxu0 %v5491
      %6918 = vmatpush.msra.mxu0 %v5490
      %6919 = vmatpush.msra.mxu0 %v5489
      %6920 = vmatpush.msra.mxu0 %v5488
      %6921 = vmatpush.msra.mxu0 %v5487
      %6922 = vmatpush.msra.mxu0 %v5486
      %6923 = vmatpush.msra.mxu0 %v5485
      %6924 = vmatpush.msra.mxu0 %v5484
      %6925 = vmatpush.msra.mxu0 %v5483
      %6926 = vmatpush.msra.mxu0 %v5482
      %6927 = vmatpush.msra.mxu0 %v5481
      %6928 = vmatpush.msra.mxu0 %v5480
      %6929 = vmatpush.msra.mxu0 %v5479
      %6930 = vmatpush.msra.mxu0 %v5478
      %6931 = vmatmul.f32.gmra.mxu0 %v4465
      %v6932 = vpop.f32.mrf.mxu0
      %v6933 = vadd.f32 %v6910, %v6932
      %6934 = vmatmul.f32.gmra.mxu0 %v4529
      %v6935 = vpop.f32.mrf.mxu0
      %v6936 = vadd.f32 %v6913, %v6935
      %6937 = vdwg.mxu0
      %6938 = vmatpush.msra.mxu0 %v5509
      %6939 = vmatpush.msra.mxu0 %v5508
      %6940 = vmatpush.msra.mxu0 %v5507
      %6941 = vmatpush.msra.mxu0 %v5506
      %6942 = vmatpush.msra.mxu0 %v5505
      %6943 = vmatpush.msra.mxu0 %v5504
      %6944 = vmatpush.msra.mxu0 %v5503
      %6945 = vmatpush.msra.mxu0 %v5502
      %6946 = vmatpush.msra.mxu0 %v5501
      %6947 = vmatpush.msra.mxu0 %v5500
      %6948 = vmatpush.msra.mxu0 %v5499
      %6949 = vmatpush.msra.mxu0 %v5498
      %6950 = vmatpush.msra.mxu0 %v5497
      %6951 = vmatpush.msra.mxu0 %v5496
      %6952 = vmatpush.msra.mxu0 %v5495
      %6953 = vmatpush.msra.mxu0 %v5494
      %6954 = vmatmul.f32.gmra.mxu0 %v4466
      %v6955 = vpop.f32.mrf.mxu0
      %v6956 = vadd.f32 %v6933, %v6955
      %6957 = vmatmul.f32.gmra.mxu0 %v4530
      %v6958 = vpop.f32.mrf.mxu0
      %v6959 = vadd.f32 %v6936, %v6958
      %6960 = vdwg.mxu0
      %6961 = vmatpush.msra.mxu0 %v5525
      %6962 = vmatpush.msra.mxu0 %v5524
      %6963 = vmatpush.msra.mxu0 %v5523
      %6964 = vmatpush.msra.mxu0 %v5522
      %6965 = vmatpush.msra.mxu0 %v5521
      %6966 = vmatpush.msra.mxu0 %v5520
      %6967 = vmatpush.msra.mxu0 %v5519
      %6968 = vmatpush.msra.mxu0 %v5518
      %6969 = vmatpush.msra.mxu0 %v5517
      %6970 = vmatpush.msra.mxu0 %v5516
      %6971 = vmatpush.msra.mxu0 %v5515
      %6972 = vmatpush.msra.mxu0 %v5514
      %6973 = vmatpush.msra.mxu0 %v5513
      %6974 = vmatpush.msra.mxu0 %v5512
      %6975 = vmatpush.msra.mxu0 %v5511
      %6976 = vmatpush.msra.mxu0 %v5510
      %6977 = vmatmul.f32.gmra.mxu0 %v4467
      %v6978 = vpop.f32.mrf.mxu0
      %v6979 = vadd.f32 %v6956, %v6978
      %6980 = vmatmul.f32.gmra.mxu0 %v4531
      %v6981 = vpop.f32.mrf.mxu0
      %v6982 = vadd.f32 %v6959, %v6981
      %6983 = vdwg.mxu0
      %6984 = vmatpush.msra.mxu0 %v5541
      %6985 = vmatpush.msra.mxu0 %v5540
      %6986 = vmatpush.msra.mxu0 %v5539
      %6987 = vmatpush.msra.mxu0 %v5538
      %6988 = vmatpush.msra.mxu0 %v5537
      %6989 = vmatpush.msra.mxu0 %v5536
      %6990 = vmatpush.msra.mxu0 %v5535
      %6991 = vmatpush.msra.mxu0 %v5534
      %6992 = vmatpush.msra.mxu0 %v5533
      %6993 = vmatpush.msra.mxu0 %v5532
      %6994 = vmatpush.msra.mxu0 %v5531
      %6995 = vmatpush.msra.mxu0 %v5530
      %6996 = vmatpush.msra.mxu0 %v5529
      %6997 = vmatpush.msra.mxu0 %v5528
      %6998 = vmatpush.msra.mxu0 %v5527
      %6999 = vmatpush.msra.mxu0 %v5526
      %7000 = vmatmul.f32.gmra.mxu0 %v4468
      %v7001 = vpop.f32.mrf.mxu0
      %v7002 = vadd.f32 %v6979, %v7001
      %7003 = vmatmul.f32.gmra.mxu0 %v4532
      %v7004 = vpop.f32.mrf.mxu0
      %v7005 = vadd.f32 %v6982, %v7004
      %7006 = vdwg.mxu0
      %7007 = vmatpush.msra.mxu0 %v5557
      %7008 = vmatpush.msra.mxu0 %v5556
      %7009 = vmatpush.msra.mxu0 %v5555
      %7010 = vmatpush.msra.mxu0 %v5554
      %7011 = vmatpush.msra.mxu0 %v5553
      %7012 = vmatpush.msra.mxu0 %v5552
      %7013 = vmatpush.msra.mxu0 %v5551
      %7014 = vmatpush.msra.mxu0 %v5550
      %7015 = vmatpush.msra.mxu0 %v5549
      %7016 = vmatpush.msra.mxu0 %v5548
      %7017 = vmatpush.msra.mxu0 %v5547
      %7018 = vmatpush.msra.mxu0 %v5546
      %7019 = vmatpush.msra.mxu0 %v5545
      %7020 = vmatpush.msra.mxu0 %v5544
      %7021 = vmatpush.msra.mxu0 %v5543
      %7022 = vmatpush.msra.mxu0 %v5542
      %7023 = vmatmul.f32.gmra.mxu0 %v4469
      %v7024 = vpop.f32.mrf.mxu0
      %v7025 = vadd.f32 %v7002, %v7024
      %7026 = vmatmul.f32.gmra.mxu0 %v4533
      %v7027 = vpop.f32.mrf.mxu0
      %v7028 = vadd.f32 %v7005, %v7027
      %7029 = vdwg.mxu0
      %7030 = vst.msk [vmem:[%s683] sm:$0xff] %vm792, %v7025
      %7031 = vst.msk [vmem:[%s683 + $0x8] sm:$0xff] %vm792, %v7028
      %p7032 = scmp.lt.s32.totalorder %s33, 1
      %s7033 = scalar_select %p7032, %s33, 1
      %s7034 = smul.addr %s7033, 2
      %s7035 = smul.addr %s7034, 8
      %s7036 = scalar_lea.vmem %s22, %s7035
      // Predicated region
      $region109: #{_lambda_.2} parent=107 // pred_check
        %p7037 = pneg %p518
      $region110: #{_lambda_.2} parent=107 // pred_check_branch
        %7039 = sbr.rel (%p7037) target = $region112
      $region111: #{_lambda_.2} parent=107 // pred_region
        _
      $region112: #{_lambda_.2} parent=107 // pred_fallthru
        _
    $region108: #{_lambda_.2} parent=5 // pred_fallthru
      _
    %p7040 = scmp.le.s32.totalorder 2, %s28
    // Predicated region
    $region113: #{_lambda_.2} parent=5 // pred_check
      %p7041 = pneg %p7040
    $region114: #{_lambda_.2} parent=5 // pred_check_branch
      %7043 = sbr.rel (%p7041) target = $region116
    $region115: #{_lambda_.2} parent=5 // pred_region
      %s7044 = ssub.s32 %s28, 2
      // Predicated region
      $region117: #{_lambda_.2} parent=115 // pred_check
        %p7045 = pneg %p524
      $region118: #{_lambda_.2} parent=115 // pred_check_branch
        %7047 = sbr.rel (%p7045) target = $region120
      $region119: #{_lambda_.2} parent=115 // pred_region
        %p7048 = scmp.lt.s32.totalorder %s34, 1
        %s7049 = scalar_select %p7048, %s34, 1
        %s7050 = smul.addr %s7049, 2
        %s7051 = smul.addr %s7050, 8
        %s7052 = scalar_lea.vmem %s22, %s7051
      $region120: #{_lambda_.2} parent=115 // pred_fallthru
        _
    $region116: #{_lambda_.2} parent=5 // pred_fallthru
      _
  $region6: #{_lambda_.2} parent=0 // loop_footer
    %s32 = sadd.s32 1, %s28
  $region7: #{_lambda_.2} parent=0 // loop_footer_branch
    %27 = sbr.rel target = $region3
  $region8: #{_lambda_.2} parent=0 // loop_exit
    _

</llo_original>
